<compile_context>
chip_gen: v7x
topology: tpu7x:2x2x1
jax: 0.10.0
libtpu: 0.0.40
codegen_flags: <defaults>
</compile_context>

<pallas_src>
import functools

import jax
import jax.numpy as jnp
from jax.experimental import pallas as pl
from jax.experimental.pallas import tpu as pltpu

LANES = 128


# ----------------------------------------------------------------------------
# In-kernel helpers
# ----------------------------------------------------------------------------
def _pool2x2(y, B, H, W, C):
    """2x2 stride-2 max pool.  y: (B*H*W, C) with rows ordered (b, h, w).
    Returns (B, H//2, W//2, C)."""
    Ho, Wo = H // 2, W // 2
    yw = y.reshape(B * H * Wo, 2, C)
    yw = jnp.maximum(yw[:, 0, :], yw[:, 1, :])            # pool along W
    yh = yw.reshape(B * Ho, 2, Wo, C)
    yh = jnp.maximum(yh[:, 0, :, :], yh[:, 1, :, :])      # pool along H
    return yh.reshape(B, Ho, Wo, C)


# ----------------------------------------------------------------------------
# Fused whole-network kernel (B_TILE images per grid step)
# ----------------------------------------------------------------------------
def _fused_forward_kernel(p1_ref, w1_ref, b1_ref, w2_ref, b2_ref, w3_ref, b3_ref,
                          fw1_ref, fb1_ref, fw2_ref, fb2_ref,
                          o_ref,
                          pad2_ref, pad3_ref, patch2_ref, patch3_ref, flat_ref,
                          *, B, H, W):
    C1, C2, C3 = 32, 64, 128
    H2, W2 = H // 2, W // 2
    H3, W3 = H // 4, W // 4
    H4, W4 = H // 8, W // 8
    bf16 = jnp.bfloat16

    # Zero only the thin 'same'-padding border stripes (interiors are fully
    # overwritten below every step, so no full-buffer clear is needed).
    pad2_ref[:, 0:1, :, :] = jnp.zeros((B, 1, W2 + 2, C1), bf16)
    pad2_ref[:, H2 + 1:H2 + 2, :, :] = jnp.zeros((B, 1, W2 + 2, C1), bf16)
    pad2_ref[:, :, 0:1, :] = jnp.zeros((B, H2 + 2, 1, C1), bf16)
    pad2_ref[:, :, W2 + 1:W2 + 2, :] = jnp.zeros((B, H2 + 2, 1, C1), bf16)
    pad3_ref[:, H3:H3 + 1, :, :] = jnp.zeros((B, 1, W3 + 1, C2), bf16)
    pad3_ref[:, :, W3:W3 + 1, :] = jnp.zeros((B, H3 + 1, 1, C2), bf16)

    # ---- layer 1: conv5x5 'same' as ONE matmul (input pre-im2col'd) --------
    y = jnp.dot(p1_ref[...], w1_ref[...], preferred_element_type=jnp.float32)
    y = jnp.maximum(y + b1_ref[...], 0.0)                 # (B*H*W, 32)
    y1 = _pool2x2(y, B, H, W, C1)                         # (B, H2, W2, 32)

    # ---- layer 2: conv3x3 'same' via in-VMEM im2col + one K=288 matmul ------
    pad2_ref[:, 1:1 + H2, 1:1 + W2, :] = y1.astype(bf16)
    for kh in range(3):
        for kw in range(3):
            col = (kh * 3 + kw) * C1
            patch2_ref[:, :, :, col:col + C1] = (
                pad2_ref[:, kh:kh + H2, kw:kw + W2, :])
    p2 = patch2_ref[...].reshape(B * H2 * W2, 9 * C1)
    y = jnp.dot(p2, w2_ref[...], preferred_element_type=jnp.float32)
    y = jnp.maximum(y + b2_ref[...], 0.0)                 # (B*H2*W2, 64)
    y2 = _pool2x2(y, B, H2, W2, C2)                       # (B, H3, W3, 64)

    # ---- layer 3: conv2x2 'same' (right/bottom pad) via im2col + K=256 ------
    pad3_ref[:, 0:H3, 0:W3, :] = y2.astype(bf16)
    for kh in range(2):
        for kw in range(2):
            col = (kh * 2 + kw) * C2
            patch3_ref[:, :, :, col:col + C2] = (
                pad3_ref[:, kh:kh + H3, kw:kw + W3, :])
    p3 = patch3_ref[...].reshape(B * H3 * W3, 4 * C2)
    y = jnp.dot(p3, w3_ref[...], preferred_element_type=jnp.float32)
    y = jnp.maximum(y + b3_ref[...], 0.0)                 # (B*H3*W3, 128)
    y3 = _pool2x2(y, B, H3, W3, C3)                       # (B, H4, W4, 128)

    # ---- flatten (HWC order; fc1 rows pre-permuted) -> fc1 -> fc2 -----------
    # TODO(synk): nn.Dropout() treated as identity (eval/inference mode).
    for s in range(H4 * W4):
        sh, sw = divmod(s, W4)
        flat_ref[:, s * C3:(s + 1) * C3] = (
            y3[:, sh:sh + 1, sw:sw + 1, :].reshape(B, C3).astype(bf16))
    h = jnp.dot(flat_ref[...], fw1_ref[...],
                preferred_element_type=jnp.float32) + fb1_ref[...]
    out = jnp.dot(h.astype(bf16), fw2_ref[...],
                  preferred_element_type=jnp.float32) + fb2_ref[...]
    o_ref[...] = out                                      # lane-dense (B, OUT_W)


# ----------------------------------------------------------------------------
# Wrapper: layer-1 im2col + trace-time weight re-layouts + the fused call
# ----------------------------------------------------------------------------
def _im2col_same(x_nhwc, KH, KW):
    """PyTorch padding='same' im2col: (N,H,W,C) -> (N, H*W, KH*KW*C)."""
    N, H, W, C = x_nhwc.shape
    pt = (KH - 1) // 2
    pb = (KH - 1) - pt
    plft = (KW - 1) // 2
    pr = (KW - 1) - plft
    xp = jnp.pad(x_nhwc, ((0, 0), (pt, pb), (plft, pr), (0, 0)))
    cols = [xp[:, kh:kh + H, kw:kw + W, :]
            for kh in range(KH) for kw in range(KW)]
    return jnp.concatenate(cols, axis=-1).reshape(N, H * W, KH * KW * C)


def fused_forward(x_nhwc, params, b_tile=8):
    N, H, W, Cin = x_nhwc.shape
    assert H % 8 == 0 and W % 8 == 0, "image size must be divisible by 8"
    H2, W2 = H // 2, W // 2
    H3, W3 = H // 4, W // 4
    H4, W4 = H // 8, W // 8
    num_labels = params["fw2"].shape[1]
    OUT_W = pl.cdiv(num_labels, LANES) * LANES            # lane-dense output

    # -- batch tiling: B images per grid step; pad batch to a multiple of B ---
    B = int(min(b_tile, N))
    n_extra = (-N) % B
    if n_extra:
        x_nhwc = jnp.pad(x_nhwc, ((0, n_extra), (0, 0), (0, 0), (0, 0)))
    Np = N + n_extra

    # -- layer-1 im2col (cheap XLA op); contraction K padded 25*Cin -> mult 128
    K1 = 5 * 5 * Cin
    K1p = pl.cdiv(K1, LANES) * LANES
    p1 = _im2col_same(x_nhwc, 5, 5)
    p1 = jnp.pad(p1, ((0, 0), (0, 0), (0, K1p - K1))).astype(jnp.bfloat16)
    p1 = p1.reshape(Np * H * W, K1p)                      # batch folded into M

    # -- trace-time weight re-layouts (exact permutations/reshapes + bf16) ----
    w1f = jnp.pad(params["w1"].reshape(K1, 32),
                  ((0, K1p - K1), (0, 0))).astype(jnp.bfloat16)
    w2r = params["w2"].reshape(9 * 32, 64).astype(jnp.bfloat16)
    w3r = params["w3"].reshape(4 * 64, 128).astype(jnp.bfloat16)
    # fc1 rows permuted from NCHW-flatten order (PyTorch) to HWC row order.
    fw1p = (params["fw1"].reshape(128, H4, W4, 1000)
            .transpose(1, 2, 0, 3).reshape(H4 * W4 * 128, 1000)
            .astype(jnp.bfloat16))
    fw2p = jnp.pad(params["fw2"],
                   ((0, 0), (0, OUT_W - num_labels))).astype(jnp.bfloat16)
    b1r = params["b1"].reshape(1, 32)
    b2r = params["b2"].reshape(1, 64)
    b3r = params["b3"].reshape(1, 128)
    fb1r = params["fb1"].reshape(1, 1000)
    fb2p = jnp.pad(params["fb2"], (0, OUT_W - num_labels)).reshape(1, OUT_W)

    kern = functools.partial(_fused_forward_kernel, B=B, H=H, W=W)
    full2 = lambda n: (0, 0)

    out = pl.pallas_call(
        kern,
        out_shape=jax.ShapeDtypeStruct((Np, OUT_W), jnp.float32),
        grid=(Np // B,),
        in_specs=[
            pl.BlockSpec((B * H * W, K1p), lambda n: (n, 0)),
            pl.BlockSpec(w1f.shape, full2),
            pl.BlockSpec(b1r.shape, full2),
            pl.BlockSpec(w2r.shape, full2),
            pl.BlockSpec(b2r.shape, full2),
            pl.BlockSpec(w3r.shape, full2),
            pl.BlockSpec(b3r.shape, full2),
            pl.BlockSpec(fw1p.shape, full2),
            pl.BlockSpec(fb1r.shape, full2),
            pl.BlockSpec(fw2p.shape, full2),
            pl.BlockSpec(fb2p.shape, full2),
        ],
        out_specs=pl.BlockSpec((B, OUT_W), lambda n: (n, 0)),
        scratch_shapes=[
            pltpu.VMEM((B, H2 + 2, W2 + 2, 32), jnp.bfloat16),   # layer-2 'same' pad
            pltpu.VMEM((B, H3 + 1, W3 + 1, 64), jnp.bfloat16),   # layer-3 'same' pad
            pltpu.VMEM((B, H2, W2, 9 * 32), jnp.bfloat16),       # layer-2 im2col (K=288)
            pltpu.VMEM((B, H3, W3, 4 * 64), jnp.bfloat16),       # layer-3 im2col (K=256)
            pltpu.VMEM((B, H4 * W4 * 128), jnp.bfloat16),        # flattened fc1 input
        ],
        compiler_params=pltpu.CompilerParams(dimension_semantics=("parallel",)),
    )(p1, w1f, b1r, w2r, b2r, w3r, b3r, fw1p, fb1r, fw2p, fb2p)

    return out[:N, :num_labels]


# ----------------------------------------------------------------------------
# Parameter init (PyTorch-style uniform(-1/sqrt(fan_in), 1/sqrt(fan_in)))
# ----------------------------------------------------------------------------
def _init_conv(key, kh, kw, cin, cout):
    k1, k2 = jax.random.split(key)
    bound = 1.0 / float(jnp.sqrt(float(cin * kh * kw)))
    w = jax.random.uniform(k1, (kh, kw, cin, cout), jnp.float32, -bound, bound)
    b = jax.random.uniform(k2, (cout,), jnp.float32, -bound, bound)
    return w, b


def _init_linear(key, din, dout):
    k1, k2 = jax.random.split(key)
    bound = 1.0 / float(jnp.sqrt(float(din)))
    w = jax.random.uniform(k1, (din, dout), jnp.float32, -bound, bound)
    b = jax.random.uniform(k2, (dout,), jnp.float32, -bound, bound)
    return w, b


def init_params(key, num_channels, image_size, num_labels):
    ks = jax.random.split(key, 5)
    w1, b1 = _init_conv(ks[0], 5, 5, num_channels, 32)
    w2, b2 = _init_conv(ks[1], 3, 3, 32, 64)
    w3, b3 = _init_conv(ks[2], 2, 2, 64, 128)
    flat = (image_size[0] // 8) * (image_size[1] // 8) * 128
    fw1, fb1 = _init_linear(ks[3], flat, 1000)   # rows in NCHW-flatten order
    fw2, fb2 = _init_linear(ks[4], 1000, num_labels)
    return dict(w1=w1, b1=b1, w2=w2, b2=b2, w3=w3, b3=b3,
                fw1=fw1, fb1=fb1, fw2=fw2, fb2=fb2)


# ----------------------------------------------------------------------------
# Full forward pass (matches Model.forward; NCHW input like PyTorch)
# ----------------------------------------------------------------------------
@jax.jit
def model_forward(x_nchw, params):
    x = jnp.transpose(x_nchw.astype(jnp.float32), (0, 2, 3, 1))  # NCHW -> NHWC
    return fused_forward(x, params)


if __name__ == "__main__":
    # hyperpars: numberofchannels=4, image_size=(16, 16), numberoflabels=10
    NUM_CHANNELS = 4
    IMAGE_SIZE = (16, 16)
    NUM_LABELS = 10
    BATCH = 2

    key = jax.random.PRNGKey(0)
    kx, kp = jax.random.split(key)
    x = jax.random.normal(kx, (BATCH, NUM_CHANNELS, *IMAGE_SIZE), jnp.float32)
    params = init_params(kp, NUM_CHANNELS, IMAGE_SIZE, NUM_LABELS)

    out = model_forward(x, params)
    out = jax.block_until_ready(out)
    assert out.shape == (BATCH, NUM_LABELS)
    assert bool(jnp.all(jnp.isfinite(out)))
    print("KERNEL_OK")
</pallas_src>

<mosaic_0001>
module attributes {stable_mosaic.version = 11 : i64} {
  func.func @_fused_forward_kernel(%arg0: i32, %arg1: memref<512x128xbf16, #tpu.memory_space<vmem>>, %arg2: memref<128x32xbf16, #tpu.memory_space<vmem>>, %arg3: memref<1x32xf32, #tpu.memory_space<vmem>>, %arg4: memref<288x64xbf16, #tpu.memory_space<vmem>>, %arg5: memref<1x64xf32, #tpu.memory_space<vmem>>, %arg6: memref<256x128xbf16, #tpu.memory_space<vmem>>, %arg7: memref<1x128xf32, #tpu.memory_space<vmem>>, %arg8: memref<512x1000xbf16, #tpu.memory_space<vmem>>, %arg9: memref<1x1000xf32, #tpu.memory_space<vmem>>, %arg10: memref<1000x128xbf16, #tpu.memory_space<vmem>>, %arg11: memref<1x128xf32, #tpu.memory_space<vmem>>, %arg12: memref<2x128xf32, #tpu.memory_space<vmem>>, %arg13: memref<2x10x10x32xbf16, #tpu.memory_space<vmem>>, %arg14: memref<2x5x5x64xbf16, #tpu.memory_space<vmem>>, %arg15: memref<2x8x8x288xbf16, #tpu.memory_space<vmem>>, %arg16: memref<2x4x4x256xbf16, #tpu.memory_space<vmem>>, %arg17: memref<2x512xbf16, #tpu.memory_space<vmem>>) attributes {dimension_semantics = [#tpu.dimension_semantics<parallel>], iteration_bounds = array<i64: 1>, scalar_prefetch = 0 : i64, scratch_operands = 5 : i64, tpu.core_type = #tpu.core_type<tc>, window_params = [{transform_indices = @transform_0, window_bounds = array<i64: 512, 128>}, {pipeline_mode = #tpu.pipeline_mode<synchronous>, transform_indices = @transform_1, window_bounds = array<i64: 128, 32>}, {pipeline_mode = #tpu.pipeline_mode<synchronous>, transform_indices = @transform_2, window_bounds = array<i64: 1, 32>}, {pipeline_mode = #tpu.pipeline_mode<synchronous>, transform_indices = @transform_3, window_bounds = array<i64: 288, 64>}, {pipeline_mode = #tpu.pipeline_mode<synchronous>, transform_indices = @transform_4, window_bounds = array<i64: 1, 64>}, {pipeline_mode = #tpu.pipeline_mode<synchronous>, transform_indices = @transform_5, window_bounds = array<i64: 256, 128>}, {pipeline_mode = #tpu.pipeline_mode<synchronous>, transform_indices = @transform_6, window_bounds = array<i64: 1, 128>}, {pipeline_mode = #tpu.pipeline_mode<synchronous>, transform_indices = @transform_7, window_bounds = array<i64: 512, 1000>}, {pipeline_mode = #tpu.pipeline_mode<synchronous>, transform_indices = @transform_8, window_bounds = array<i64: 1, 1000>}, {pipeline_mode = #tpu.pipeline_mode<synchronous>, transform_indices = @transform_9, window_bounds = array<i64: 1000, 128>}, {pipeline_mode = #tpu.pipeline_mode<synchronous>, transform_indices = @transform_10, window_bounds = array<i64: 1, 128>}, {transform_indices = @transform_11, window_bounds = array<i64: 2, 128>}]} {
    %cst = arith.constant 0.000000e+00 : bf16
    %0 = vector.broadcast %cst : bf16 to vector<2x1x10x32xbf16>
    %c0 = arith.constant 0 : index
    %c0_0 = arith.constant 0 : index
    %c0_1 = arith.constant 0 : index
    %c0_2 = arith.constant 0 : index
    %1 = vector.load %arg13[%c0, %c0_0, %c0_1, %c0_2] : memref<2x10x10x32xbf16, #tpu.memory_space<vmem>>, vector<2x1x10x32xbf16>
    tpu.vector_store %arg13[%c0, %c0_0, %c0_1, %c0_2], %0 {strides = array<i32>} : memref<2x10x10x32xbf16, #tpu.memory_space<vmem>>, vector<2x1x10x32xbf16>,
    %cst_3 = arith.constant 0.000000e+00 : bf16
    %2 = vector.broadcast %cst_3 : bf16 to vector<2x1x10x32xbf16>
    %c0_4 = arith.constant 0 : index
    %c9 = arith.constant 9 : index
    %c0_5 = arith.constant 0 : index
    %c0_6 = arith.constant 0 : index
    %3 = vector.load %arg13[%c0_4, %c9, %c0_5, %c0_6] : memref<2x10x10x32xbf16, #tpu.memory_space<vmem>>, vector<2x1x10x32xbf16>
    tpu.vector_store %arg13[%c0_4, %c9, %c0_5, %c0_6], %2 {strides = array<i32>} : memref<2x10x10x32xbf16, #tpu.memory_space<vmem>>, vector<2x1x10x32xbf16>,
    %cst_7 = arith.constant 0.000000e+00 : bf16
    %4 = vector.broadcast %cst_7 : bf16 to vector<2x10x1x32xbf16>
    %c0_8 = arith.constant 0 : index
    %c0_9 = arith.constant 0 : index
    %c0_10 = arith.constant 0 : index
    %c0_11 = arith.constant 0 : index
    %5 = vector.load %arg13[%c0_8, %c0_9, %c0_10, %c0_11] : memref<2x10x10x32xbf16, #tpu.memory_space<vmem>>, vector<2x10x1x32xbf16>
    tpu.vector_store %arg13[%c0_8, %c0_9, %c0_10, %c0_11], %4 {strides = array<i32>} : memref<2x10x10x32xbf16, #tpu.memory_space<vmem>>, vector<2x10x1x32xbf16>,
    %cst_12 = arith.constant 0.000000e+00 : bf16
    %6 = vector.broadcast %cst_12 : bf16 to vector<2x10x1x32xbf16>
    %c0_13 = arith.constant 0 : index
    %c0_14 = arith.constant 0 : index
    %c9_15 = arith.constant 9 : index
    %c0_16 = arith.constant 0 : index
    %7 = vector.load %arg13[%c0_13, %c0_14, %c9_15, %c0_16] : memref<2x10x10x32xbf16, #tpu.memory_space<vmem>>, vector<2x10x1x32xbf16>
    tpu.vector_store %arg13[%c0_13, %c0_14, %c9_15, %c0_16], %6 {strides = array<i32>} : memref<2x10x10x32xbf16, #tpu.memory_space<vmem>>, vector<2x10x1x32xbf16>,
    %cst_17 = arith.constant 0.000000e+00 : bf16
    %8 = vector.broadcast %cst_17 : bf16 to vector<2x1x5x64xbf16>
    %c0_18 = arith.constant 0 : index
    %c4 = arith.constant 4 : index
    %c0_19 = arith.constant 0 : index
    %c0_20 = arith.constant 0 : index
    %9 = vector.load %arg14[%c0_18, %c4, %c0_19, %c0_20] : memref<2x5x5x64xbf16, #tpu.memory_space<vmem>>, vector<2x1x5x64xbf16>
    tpu.vector_store %arg14[%c0_18, %c4, %c0_19, %c0_20], %8 {strides = array<i32>} : memref<2x5x5x64xbf16, #tpu.memory_space<vmem>>, vector<2x1x5x64xbf16>,
    %cst_21 = arith.constant 0.000000e+00 : bf16
    %10 = vector.broadcast %cst_21 : bf16 to vector<2x5x1x64xbf16>
    %c0_22 = arith.constant 0 : index
    %c0_23 = arith.constant 0 : index
    %c4_24 = arith.constant 4 : index
    %c0_25 = arith.constant 0 : index
    %11 = vector.load %arg14[%c0_22, %c0_23, %c4_24, %c0_25] : memref<2x5x5x64xbf16, #tpu.memory_space<vmem>>, vector<2x5x1x64xbf16>
    tpu.vector_store %arg14[%c0_22, %c0_23, %c4_24, %c0_25], %10 {strides = array<i32>} : memref<2x5x5x64xbf16, #tpu.memory_space<vmem>>, vector<2x5x1x64xbf16>,
    %c0_26 = arith.constant 0 : index
    %c0_27 = arith.constant 0 : index
    %12 = vector.load %arg1[%c0_26, %c0_27] : memref<512x128xbf16, #tpu.memory_space<vmem>>, vector<512x128xbf16>
    %c0_28 = arith.constant 0 : index
    %c0_29 = arith.constant 0 : index
    %13 = vector.load %arg2[%c0_28, %c0_29] : memref<128x32xbf16, #tpu.memory_space<vmem>>, vector<128x32xbf16>
    %cst_30 = arith.constant dense<0.000000e+00> : vector<512x32xf32>
    %14 = tpu.matmul %12, %13, %cst_30 {dimension_numbers = #tpu.dot_dimension_numbers<[1], [0], [0], [1], [0, 0, 1, 1], [], []>} : vector<512x128xbf16>, vector<128x32xbf16>, vector<512x32xf32> -> vector<512x32xf32>
    %c0_31 = arith.constant 0 : index
    %c0_32 = arith.constant 0 : index
    %15 = vector.load %arg3[%c0_31, %c0_32] : memref<1x32xf32, #tpu.memory_space<vmem>>, vector<1x32xf32>
    %16 = vector.broadcast %15 : vector<1x32xf32> to vector<512x32xf32>
    %17 = arith.addf %14, %16 : vector<512x32xf32>
    %cst_33 = arith.constant 0.000000e+00 : f32
    %18 = vector.broadcast %cst_33 : f32 to vector<512x32xf32>
    %19 = arith.maximumf %17, %18 : vector<512x32xf32>
    %20 = vector.shape_cast %19 : vector<512x32xf32> to vector<256x2x32xf32>
    %21 = vector.extract_strided_slice %20 {offsets = [0, 0, 0], sizes = [256, 1, 32], strides = [1, 1, 1]} : vector<256x2x32xf32> to vector<256x1x32xf32>
    %22 = vector.shape_cast %21 : vector<256x1x32xf32> to vector<256x32xf32>
    %23 = vector.extract_strided_slice %20 {offsets = [0, 1, 0], sizes = [256, 1, 32], strides = [1, 1, 1]} : vector<256x2x32xf32> to vector<256x1x32xf32>
    %24 = vector.shape_cast %23 : vector<256x1x32xf32> to vector<256x32xf32>
    %25 = arith.maximumf %22, %24 : vector<256x32xf32>
    %26 = vector.shape_cast %25 : vector<256x32xf32> to vector<16x2x8x32xf32>
    %27 = vector.extract_strided_slice %26 {offsets = [0, 0, 0, 0], sizes = [16, 1, 8, 32], strides = [1, 1, 1, 1]} : vector<16x2x8x32xf32> to vector<16x1x8x32xf32>
    %28 = vector.shape_cast %27 : vector<16x1x8x32xf32> to vector<16x8x32xf32>
    %29 = vector.extract_strided_slice %26 {offsets = [0, 1, 0, 0], sizes = [16, 1, 8, 32], strides = [1, 1, 1, 1]} : vector<16x2x8x32xf32> to vector<16x1x8x32xf32>
    %30 = vector.shape_cast %29 : vector<16x1x8x32xf32> to vector<16x8x32xf32>
    %31 = arith.maximumf %28, %30 : vector<16x8x32xf32>
    %32 = vector.shape_cast %31 : vector<16x8x32xf32> to vector<2x8x8x32xf32>
    %33 = arith.truncf %32 : vector<2x8x8x32xf32> to vector<2x8x8x32xbf16>
    %c0_34 = arith.constant 0 : index
    %c1 = arith.constant 1 : index
    %c1_35 = arith.constant 1 : index
    %c0_36 = arith.constant 0 : index
    %34 = vector.load %arg13[%c0_34, %c1, %c1_35, %c0_36] : memref<2x10x10x32xbf16, #tpu.memory_space<vmem>>, vector<2x8x8x32xbf16>
    tpu.vector_store %arg13[%c0_34, %c1, %c1_35, %c0_36], %33 {strides = array<i32>} : memref<2x10x10x32xbf16, #tpu.memory_space<vmem>>, vector<2x8x8x32xbf16>,
    %c0_37 = arith.constant 0 : index
    %c0_38 = arith.constant 0 : index
    %c0_39 = arith.constant 0 : index
    %c0_40 = arith.constant 0 : index
    %35 = vector.load %arg13[%c0_37, %c0_38, %c0_39, %c0_40] : memref<2x10x10x32xbf16, #tpu.memory_space<vmem>>, vector<2x8x8x32xbf16>
    %c0_41 = arith.constant 0 : index
    %c0_42 = arith.constant 0 : index
    %c0_43 = arith.constant 0 : index
    %c0_44 = arith.constant 0 : index
    %36 = vector.load %arg15[%c0_41, %c0_42, %c0_43, %c0_44] : memref<2x8x8x288xbf16, #tpu.memory_space<vmem>>, vector<2x8x8x32xbf16>
    tpu.vector_store %arg15[%c0_41, %c0_42, %c0_43, %c0_44], %35 {strides = array<i32>} : memref<2x8x8x288xbf16, #tpu.memory_space<vmem>>, vector<2x8x8x32xbf16>,
    %c0_45 = arith.constant 0 : index
    %c0_46 = arith.constant 0 : index
    %c1_47 = arith.constant 1 : index
    %c0_48 = arith.constant 0 : index
    %37 = vector.load %arg13[%c0_45, %c0_46, %c1_47, %c0_48] : memref<2x10x10x32xbf16, #tpu.memory_space<vmem>>, vector<2x8x8x32xbf16>
    %c0_49 = arith.constant 0 : index
    %c0_50 = arith.constant 0 : index
    %c0_51 = arith.constant 0 : index
    %c32 = arith.constant 32 : index
    %38 = vector.load %arg15[%c0_49, %c0_50, %c0_51, %c32] : memref<2x8x8x288xbf16, #tpu.memory_space<vmem>>, vector<2x8x8x32xbf16>
    tpu.vector_store %arg15[%c0_49, %c0_50, %c0_51, %c32], %37 {strides = array<i32>} : memref<2x8x8x288xbf16, #tpu.memory_space<vmem>>, vector<2x8x8x32xbf16>,
    %c0_52 = arith.constant 0 : index
    %c0_53 = arith.constant 0 : index
    %c2 = arith.constant 2 : index
    %c0_54 = arith.constant 0 : index
    %39 = vector.load %arg13[%c0_52, %c0_53, %c2, %c0_54] : memref<2x10x10x32xbf16, #tpu.memory_space<vmem>>, vector<2x8x8x32xbf16>
    %c0_55 = arith.constant 0 : index
    %c0_56 = arith.constant 0 : index
    %c0_57 = arith.constant 0 : index
    %c64 = arith.constant 64 : index
    %40 = vector.load %arg15[%c0_55, %c0_56, %c0_57, %c64] : memref<2x8x8x288xbf16, #tpu.memory_space<vmem>>, vector<2x8x8x32xbf16>
    tpu.vector_store %arg15[%c0_55, %c0_56, %c0_57, %c64], %39 {strides = array<i32>} : memref<2x8x8x288xbf16, #tpu.memory_space<vmem>>, vector<2x8x8x32xbf16>,
    %c0_58 = arith.constant 0 : index
    %c1_59 = arith.constant 1 : index
    %c0_60 = arith.constant 0 : index
    %c0_61 = arith.constant 0 : index
    %41 = vector.load %arg13[%c0_58, %c1_59, %c0_60, %c0_61] : memref<2x10x10x32xbf16, #tpu.memory_space<vmem>>, vector<2x8x8x32xbf16>
    %c0_62 = arith.constant 0 : index
    %c0_63 = arith.constant 0 : index
    %c0_64 = arith.constant 0 : index
    %c96 = arith.constant 96 : index
    %42 = vector.load %arg15[%c0_62, %c0_63, %c0_64, %c96] : memref<2x8x8x288xbf16, #tpu.memory_space<vmem>>, vector<2x8x8x32xbf16>
    tpu.vector_store %arg15[%c0_62, %c0_63, %c0_64, %c96], %41 {strides = array<i32>} : memref<2x8x8x288xbf16, #tpu.memory_space<vmem>>, vector<2x8x8x32xbf16>,
    %c0_65 = arith.constant 0 : index
    %c1_66 = arith.constant 1 : index
    %c1_67 = arith.constant 1 : index
    %c0_68 = arith.constant 0 : index
    %43 = vector.load %arg13[%c0_65, %c1_66, %c1_67, %c0_68] : memref<2x10x10x32xbf16, #tpu.memory_space<vmem>>, vector<2x8x8x32xbf16>
    %c0_69 = arith.constant 0 : index
    %c0_70 = arith.constant 0 : index
    %c0_71 = arith.constant 0 : index
    %c128 = arith.constant 128 : index
    %44 = vector.load %arg15[%c0_69, %c0_70, %c0_71, %c128] : memref<2x8x8x288xbf16, #tpu.memory_space<vmem>>, vector<2x8x8x32xbf16>
    tpu.vector_store %arg15[%c0_69, %c0_70, %c0_71, %c128], %43 {strides = array<i32>} : memref<2x8x8x288xbf16, #tpu.memory_space<vmem>>, vector<2x8x8x32xbf16>,
    %c0_72 = arith.constant 0 : index
    %c1_73 = arith.constant 1 : index
    %c2_74 = arith.constant 2 : index
    %c0_75 = arith.constant 0 : index
    %45 = vector.load %arg13[%c0_72, %c1_73, %c2_74, %c0_75] : memref<2x10x10x32xbf16, #tpu.memory_space<vmem>>, vector<2x8x8x32xbf16>
    %c0_76 = arith.constant 0 : index
    %c0_77 = arith.constant 0 : index
    %c0_78 = arith.constant 0 : index
    %c160 = arith.constant 160 : index
    %46 = vector.load %arg15[%c0_76, %c0_77, %c0_78, %c160] : memref<2x8x8x288xbf16, #tpu.memory_space<vmem>>, vector<2x8x8x32xbf16>
    tpu.vector_store %arg15[%c0_76, %c0_77, %c0_78, %c160], %45 {strides = array<i32>} : memref<2x8x8x288xbf16, #tpu.memory_space<vmem>>, vector<2x8x8x32xbf16>,
    %c0_79 = arith.constant 0 : index
    %c2_80 = arith.constant 2 : index
    %c0_81 = arith.constant 0 : index
    %c0_82 = arith.constant 0 : index
    %47 = vector.load %arg13[%c0_79, %c2_80, %c0_81, %c0_82] : memref<2x10x10x32xbf16, #tpu.memory_space<vmem>>, vector<2x8x8x32xbf16>
    %c0_83 = arith.constant 0 : index
    %c0_84 = arith.constant 0 : index
    %c0_85 = arith.constant 0 : index
    %c192 = arith.constant 192 : index
    %48 = vector.load %arg15[%c0_83, %c0_84, %c0_85, %c192] : memref<2x8x8x288xbf16, #tpu.memory_space<vmem>>, vector<2x8x8x32xbf16>
    tpu.vector_store %arg15[%c0_83, %c0_84, %c0_85, %c192], %47 {strides = array<i32>} : memref<2x8x8x288xbf16, #tpu.memory_space<vmem>>, vector<2x8x8x32xbf16>,
    %c0_86 = arith.constant 0 : index
    %c2_87 = arith.constant 2 : index
    %c1_88 = arith.constant 1 : index
    %c0_89 = arith.constant 0 : index
    %49 = vector.load %arg13[%c0_86, %c2_87, %c1_88, %c0_89] : memref<2x10x10x32xbf16, #tpu.memory_space<vmem>>, vector<2x8x8x32xbf16>
    %c0_90 = arith.constant 0 : index
    %c0_91 = arith.constant 0 : index
    %c0_92 = arith.constant 0 : index
    %c224 = arith.constant 224 : index
    %50 = vector.load %arg15[%c0_90, %c0_91, %c0_92, %c224] : memref<2x8x8x288xbf16, #tpu.memory_space<vmem>>, vector<2x8x8x32xbf16>
    tpu.vector_store %arg15[%c0_90, %c0_91, %c0_92, %c224], %49 {strides = array<i32>} : memref<2x8x8x288xbf16, #tpu.memory_space<vmem>>, vector<2x8x8x32xbf16>,
    %c0_93 = arith.constant 0 : index
    %c2_94 = arith.constant 2 : index
    %c2_95 = arith.constant 2 : index
    %c0_96 = arith.constant 0 : index
    %51 = vector.load %arg13[%c0_93, %c2_94, %c2_95, %c0_96] : memref<2x10x10x32xbf16, #tpu.memory_space<vmem>>, vector<2x8x8x32xbf16>
    %c0_97 = arith.constant 0 : index
    %c0_98 = arith.constant 0 : index
    %c0_99 = arith.constant 0 : index
    %c256 = arith.constant 256 : index
    %52 = vector.load %arg15[%c0_97, %c0_98, %c0_99, %c256] : memref<2x8x8x288xbf16, #tpu.memory_space<vmem>>, vector<2x8x8x32xbf16>
    tpu.vector_store %arg15[%c0_97, %c0_98, %c0_99, %c256], %51 {strides = array<i32>} : memref<2x8x8x288xbf16, #tpu.memory_space<vmem>>, vector<2x8x8x32xbf16>,
    %c0_100 = arith.constant 0 : index
    %c0_101 = arith.constant 0 : index
    %c0_102 = arith.constant 0 : index
    %c0_103 = arith.constant 0 : index
    %53 = vector.load %arg15[%c0_100, %c0_101, %c0_102, %c0_103] : memref<2x8x8x288xbf16, #tpu.memory_space<vmem>>, vector<2x8x8x288xbf16>
    %54 = vector.shape_cast %53 : vector<2x8x8x288xbf16> to vector<128x288xbf16>
    %c0_104 = arith.constant 0 : index
    %c0_105 = arith.constant 0 : index
    %55 = vector.load %arg4[%c0_104, %c0_105] : memref<288x64xbf16, #tpu.memory_space<vmem>>, vector<288x64xbf16>
    %cst_106 = arith.constant dense<0.000000e+00> : vector<128x64xf32>
    %56 = tpu.matmul %54, %55, %cst_106 {dimension_numbers = #tpu.dot_dimension_numbers<[1], [0], [0], [1], [0, 0, 1, 1], [], []>} : vector<128x288xbf16>, vector<288x64xbf16>, vector<128x64xf32> -> vector<128x64xf32>
    %c0_107 = arith.constant 0 : index
    %c0_108 = arith.constant 0 : index
    %57 = vector.load %arg5[%c0_107, %c0_108] : memref<1x64xf32, #tpu.memory_space<vmem>>, vector<1x64xf32>
    %58 = vector.broadcast %57 : vector<1x64xf32> to vector<128x64xf32>
    %59 = arith.addf %56, %58 : vector<128x64xf32>
    %cst_109 = arith.constant 0.000000e+00 : f32
    %60 = vector.broadcast %cst_109 : f32 to vector<128x64xf32>
    %61 = arith.maximumf %59, %60 : vector<128x64xf32>
    %62 = vector.shape_cast %61 : vector<128x64xf32> to vector<64x2x64xf32>
    %63 = vector.extract_strided_slice %62 {offsets = [0, 0, 0], sizes = [64, 1, 64], strides = [1, 1, 1]} : vector<64x2x64xf32> to vector<64x1x64xf32>
    %64 = vector.shape_cast %63 : vector<64x1x64xf32> to vector<64x64xf32>
    %65 = vector.extract_strided_slice %62 {offsets = [0, 1, 0], sizes = [64, 1, 64], strides = [1, 1, 1]} : vector<64x2x64xf32> to vector<64x1x64xf32>
    %66 = vector.shape_cast %65 : vector<64x1x64xf32> to vector<64x64xf32>
    %67 = arith.maximumf %64, %66 : vector<64x64xf32>
    %68 = vector.shape_cast %67 : vector<64x64xf32> to vector<8x2x4x64xf32>
    %69 = vector.extract_strided_slice %68 {offsets = [0, 0, 0, 0], sizes = [8, 1, 4, 64], strides = [1, 1, 1, 1]} : vector<8x2x4x64xf32> to vector<8x1x4x64xf32>
    %70 = vector.shape_cast %69 : vector<8x1x4x64xf32> to vector<8x4x64xf32>
    %71 = vector.extract_strided_slice %68 {offsets = [0, 1, 0, 0], sizes = [8, 1, 4, 64], strides = [1, 1, 1, 1]} : vector<8x2x4x64xf32> to vector<8x1x4x64xf32>
    %72 = vector.shape_cast %71 : vector<8x1x4x64xf32> to vector<8x4x64xf32>
    %73 = arith.maximumf %70, %72 : vector<8x4x64xf32>
    %74 = vector.shape_cast %73 : vector<8x4x64xf32> to vector<2x4x4x64xf32>
    %75 = arith.truncf %74 : vector<2x4x4x64xf32> to vector<2x4x4x64xbf16>
    %c0_110 = arith.constant 0 : index
    %c0_111 = arith.constant 0 : index
    %c0_112 = arith.constant 0 : index
    %c0_113 = arith.constant 0 : index
    %76 = vector.load %arg14[%c0_110, %c0_111, %c0_112, %c0_113] : memref<2x5x5x64xbf16, #tpu.memory_space<vmem>>, vector<2x4x4x64xbf16>
    tpu.vector_store %arg14[%c0_110, %c0_111, %c0_112, %c0_113], %75 {strides = array<i32>} : memref<2x5x5x64xbf16, #tpu.memory_space<vmem>>, vector<2x4x4x64xbf16>,
    %c0_114 = arith.constant 0 : index
    %c0_115 = arith.constant 0 : index
    %c0_116 = arith.constant 0 : index
    %c0_117 = arith.constant 0 : index
    %77 = vector.load %arg14[%c0_114, %c0_115, %c0_116, %c0_117] : memref<2x5x5x64xbf16, #tpu.memory_space<vmem>>, vector<2x4x4x64xbf16>
    %c0_118 = arith.constant 0 : index
    %c0_119 = arith.constant 0 : index
    %c0_120 = arith.constant 0 : index
    %c0_121 = arith.constant 0 : index
    %78 = vector.load %arg16[%c0_118, %c0_119, %c0_120, %c0_121] : memref<2x4x4x256xbf16, #tpu.memory_space<vmem>>, vector<2x4x4x64xbf16>
    tpu.vector_store %arg16[%c0_118, %c0_119, %c0_120, %c0_121], %77 {strides = array<i32>} : memref<2x4x4x256xbf16, #tpu.memory_space<vmem>>, vector<2x4x4x64xbf16>,
    %c0_122 = arith.constant 0 : index
    %c0_123 = arith.constant 0 : index
    %c1_124 = arith.constant 1 : index
    %c0_125 = arith.constant 0 : index
    %79 = vector.load %arg14[%c0_122, %c0_123, %c1_124, %c0_125] : memref<2x5x5x64xbf16, #tpu.memory_space<vmem>>, vector<2x4x4x64xbf16>
    %c0_126 = arith.constant 0 : index
    %c0_127 = arith.constant 0 : index
    %c0_128 = arith.constant 0 : index
    %c64_129 = arith.constant 64 : index
    %80 = vector.load %arg16[%c0_126, %c0_127, %c0_128, %c64_129] : memref<2x4x4x256xbf16, #tpu.memory_space<vmem>>, vector<2x4x4x64xbf16>
    tpu.vector_store %arg16[%c0_126, %c0_127, %c0_128, %c64_129], %79 {strides = array<i32>} : memref<2x4x4x256xbf16, #tpu.memory_space<vmem>>, vector<2x4x4x64xbf16>,
    %c0_130 = arith.constant 0 : index
    %c1_131 = arith.constant 1 : index
    %c0_132 = arith.constant 0 : index
    %c0_133 = arith.constant 0 : index
    %81 = vector.load %arg14[%c0_130, %c1_131, %c0_132, %c0_133] : memref<2x5x5x64xbf16, #tpu.memory_space<vmem>>, vector<2x4x4x64xbf16>
    %c0_134 = arith.constant 0 : index
    %c0_135 = arith.constant 0 : index
    %c0_136 = arith.constant 0 : index
    %c128_137 = arith.constant 128 : index
    %82 = vector.load %arg16[%c0_134, %c0_135, %c0_136, %c128_137] : memref<2x4x4x256xbf16, #tpu.memory_space<vmem>>, vector<2x4x4x64xbf16>
    tpu.vector_store %arg16[%c0_134, %c0_135, %c0_136, %c128_137], %81 {strides = array<i32>} : memref<2x4x4x256xbf16, #tpu.memory_space<vmem>>, vector<2x4x4x64xbf16>,
    %c0_138 = arith.constant 0 : index
    %c1_139 = arith.constant 1 : index
    %c1_140 = arith.constant 1 : index
    %c0_141 = arith.constant 0 : index
    %83 = vector.load %arg14[%c0_138, %c1_139, %c1_140, %c0_141] : memref<2x5x5x64xbf16, #tpu.memory_space<vmem>>, vector<2x4x4x64xbf16>
    %c0_142 = arith.constant 0 : index
    %c0_143 = arith.constant 0 : index
    %c0_144 = arith.constant 0 : index
    %c192_145 = arith.constant 192 : index
    %84 = vector.load %arg16[%c0_142, %c0_143, %c0_144, %c192_145] : memref<2x4x4x256xbf16, #tpu.memory_space<vmem>>, vector<2x4x4x64xbf16>
    tpu.vector_store %arg16[%c0_142, %c0_143, %c0_144, %c192_145], %83 {strides = array<i32>} : memref<2x4x4x256xbf16, #tpu.memory_space<vmem>>, vector<2x4x4x64xbf16>,
    %c0_146 = arith.constant 0 : index
    %c0_147 = arith.constant 0 : index
    %c0_148 = arith.constant 0 : index
    %c0_149 = arith.constant 0 : index
    %85 = vector.load %arg16[%c0_146, %c0_147, %c0_148, %c0_149] : memref<2x4x4x256xbf16, #tpu.memory_space<vmem>>, vector<2x4x4x256xbf16>
    %86 = vector.shape_cast %85 : vector<2x4x4x256xbf16> to vector<32x256xbf16>
    %c0_150 = arith.constant 0 : index
    %c0_151 = arith.constant 0 : index
    %87 = vector.load %arg6[%c0_150, %c0_151] : memref<256x128xbf16, #tpu.memory_space<vmem>>, vector<256x128xbf16>
    %cst_152 = arith.constant dense<0.000000e+00> : vector<32x128xf32>
    %88 = tpu.matmul %86, %87, %cst_152 {dimension_numbers = #tpu.dot_dimension_numbers<[1], [0], [0], [1], [0, 0, 1, 1], [], []>} : vector<32x256xbf16>, vector<256x128xbf16>, vector<32x128xf32> -> vector<32x128xf32>
    %c0_153 = arith.constant 0 : index
    %c0_154 = arith.constant 0 : index
    %89 = vector.load %arg7[%c0_153, %c0_154] : memref<1x128xf32, #tpu.memory_space<vmem>>, vector<1x128xf32>
    %90 = vector.broadcast %89 : vector<1x128xf32> to vector<32x128xf32>
    %91 = arith.addf %88, %90 : vector<32x128xf32>
    %cst_155 = arith.constant 0.000000e+00 : f32
    %92 = vector.broadcast %cst_155 : f32 to vector<32x128xf32>
    %93 = arith.maximumf %91, %92 : vector<32x128xf32>
    %94 = vector.shape_cast %93 : vector<32x128xf32> to vector<16x2x128xf32>
    %95 = vector.extract_strided_slice %94 {offsets = [0, 0, 0], sizes = [16, 1, 128], strides = [1, 1, 1]} : vector<16x2x128xf32> to vector<16x1x128xf32>
    %96 = vector.shape_cast %95 : vector<16x1x128xf32> to vector<16x128xf32>
    %97 = vector.extract_strided_slice %94 {offsets = [0, 1, 0], sizes = [16, 1, 128], strides = [1, 1, 1]} : vector<16x2x128xf32> to vector<16x1x128xf32>
    %98 = vector.shape_cast %97 : vector<16x1x128xf32> to vector<16x128xf32>
    %99 = arith.maximumf %96, %98 : vector<16x128xf32>
    %100 = vector.shape_cast %99 : vector<16x128xf32> to vector<4x2x2x128xf32>
    %101 = vector.extract_strided_slice %100 {offsets = [0, 0, 0, 0], sizes = [4, 1, 2, 128], strides = [1, 1, 1, 1]} : vector<4x2x2x128xf32> to vector<4x1x2x128xf32>
    %102 = vector.shape_cast %101 : vector<4x1x2x128xf32> to vector<4x2x128xf32>
    %103 = vector.extract_strided_slice %100 {offsets = [0, 1, 0, 0], sizes = [4, 1, 2, 128], strides = [1, 1, 1, 1]} : vector<4x2x2x128xf32> to vector<4x1x2x128xf32>
    %104 = vector.shape_cast %103 : vector<4x1x2x128xf32> to vector<4x2x128xf32>
    %105 = arith.maximumf %102, %104 : vector<4x2x128xf32>
    %106 = vector.shape_cast %105 : vector<4x2x128xf32> to vector<2x2x2x128xf32>
    %107 = vector.extract_strided_slice %106 {offsets = [0, 0, 0, 0], sizes = [2, 1, 1, 128], strides = [1, 1, 1, 1]} : vector<2x2x2x128xf32> to vector<2x1x1x128xf32>
    %108 = vector.shape_cast %107 : vector<2x1x1x128xf32> to vector<2x128xf32>
    %109 = arith.truncf %108 : vector<2x128xf32> to vector<2x128xbf16>
    %c0_156 = arith.constant 0 : index
    %c0_157 = arith.constant 0 : index
    %110 = vector.load %arg17[%c0_156, %c0_157] : memref<2x512xbf16, #tpu.memory_space<vmem>>, vector<2x128xbf16>
    tpu.vector_store %arg17[%c0_156, %c0_157], %109 {strides = array<i32>} : memref<2x512xbf16, #tpu.memory_space<vmem>>, vector<2x128xbf16>,
    %111 = vector.extract_strided_slice %106 {offsets = [0, 0, 1, 0], sizes = [2, 1, 1, 128], strides = [1, 1, 1, 1]} : vector<2x2x2x128xf32> to vector<2x1x1x128xf32>
    %112 = vector.shape_cast %111 : vector<2x1x1x128xf32> to vector<2x128xf32>
    %113 = arith.truncf %112 : vector<2x128xf32> to vector<2x128xbf16>
    %c0_158 = arith.constant 0 : index
    %c128_159 = arith.constant 128 : index
    %114 = vector.load %arg17[%c0_158, %c128_159] : memref<2x512xbf16, #tpu.memory_space<vmem>>, vector<2x128xbf16>
    tpu.vector_store %arg17[%c0_158, %c128_159], %113 {strides = array<i32>} : memref<2x512xbf16, #tpu.memory_space<vmem>>, vector<2x128xbf16>,
    %115 = vector.extract_strided_slice %106 {offsets = [0, 1, 0, 0], sizes = [2, 1, 1, 128], strides = [1, 1, 1, 1]} : vector<2x2x2x128xf32> to vector<2x1x1x128xf32>
    %116 = vector.shape_cast %115 : vector<2x1x1x128xf32> to vector<2x128xf32>
    %117 = arith.truncf %116 : vector<2x128xf32> to vector<2x128xbf16>
    %c0_160 = arith.constant 0 : index
    %c256_161 = arith.constant 256 : index
    %118 = vector.load %arg17[%c0_160, %c256_161] : memref<2x512xbf16, #tpu.memory_space<vmem>>, vector<2x128xbf16>
    tpu.vector_store %arg17[%c0_160, %c256_161], %117 {strides = array<i32>} : memref<2x512xbf16, #tpu.memory_space<vmem>>, vector<2x128xbf16>,
    %119 = vector.extract_strided_slice %106 {offsets = [0, 1, 1, 0], sizes = [2, 1, 1, 128], strides = [1, 1, 1, 1]} : vector<2x2x2x128xf32> to vector<2x1x1x128xf32>
    %120 = vector.shape_cast %119 : vector<2x1x1x128xf32> to vector<2x128xf32>
    %121 = arith.truncf %120 : vector<2x128xf32> to vector<2x128xbf16>
    %c0_162 = arith.constant 0 : index
    %c384 = arith.constant 384 : index
    %122 = vector.load %arg17[%c0_162, %c384] : memref<2x512xbf16, #tpu.memory_space<vmem>>, vector<2x128xbf16>
    tpu.vector_store %arg17[%c0_162, %c384], %121 {strides = array<i32>} : memref<2x512xbf16, #tpu.memory_space<vmem>>, vector<2x128xbf16>,
    %c0_163 = arith.constant 0 : index
    %c0_164 = arith.constant 0 : index
    %123 = vector.load %arg17[%c0_163, %c0_164] : memref<2x512xbf16, #tpu.memory_space<vmem>>, vector<2x512xbf16>
    %c0_165 = arith.constant 0 : index
    %c0_166 = arith.constant 0 : index
    %124 = vector.load %arg8[%c0_165, %c0_166] : memref<512x1000xbf16, #tpu.memory_space<vmem>>, vector<512x1000xbf16>
    %cst_167 = arith.constant dense<0.000000e+00> : vector<2x1000xf32>
    %125 = tpu.matmul %123, %124, %cst_167 {dimension_numbers = #tpu.dot_dimension_numbers<[1], [0], [0], [1], [0, 0, 1, 1], [], []>} : vector<2x512xbf16>, vector<512x1000xbf16>, vector<2x1000xf32> -> vector<2x1000xf32>
    %c0_168 = arith.constant 0 : index
    %c0_169 = arith.constant 0 : index
    %126 = vector.load %arg9[%c0_168, %c0_169] : memref<1x1000xf32, #tpu.memory_space<vmem>>, vector<1x1000xf32>
    %127 = vector.broadcast %126 : vector<1x1000xf32> to vector<2x1000xf32>
    %128 = arith.addf %125, %127 : vector<2x1000xf32>
    %129 = arith.truncf %128 : vector<2x1000xf32> to vector<2x1000xbf16>
    %c0_170 = arith.constant 0 : index
    %c0_171 = arith.constant 0 : index
    %130 = vector.load %arg10[%c0_170, %c0_171] : memref<1000x128xbf16, #tpu.memory_space<vmem>>, vector<1000x128xbf16>
    %cst_172 = arith.constant dense<0.000000e+00> : vector<2x128xf32>
    %131 = tpu.matmul %129, %130, %cst_172 {dimension_numbers = #tpu.dot_dimension_numbers<[1], [0], [0], [1], [0, 0, 1, 1], [], []>} : vector<2x1000xbf16>, vector<1000x128xbf16>, vector<2x128xf32> -> vector<2x128xf32>
    %c0_173 = arith.constant 0 : index
    %c0_174 = arith.constant 0 : index
    %132 = vector.load %arg11[%c0_173, %c0_174] : memref<1x128xf32, #tpu.memory_space<vmem>>, vector<1x128xf32>
    %133 = vector.broadcast %132 : vector<1x128xf32> to vector<2x128xf32>
    %134 = arith.addf %131, %133 : vector<2x128xf32>
    %c0_175 = arith.constant 0 : index
    %c0_176 = arith.constant 0 : index
    %135 = vector.load %arg12[%c0_175, %c0_176] : memref<2x128xf32, #tpu.memory_space<vmem>>, vector<2x128xf32>
    tpu.vector_store %arg12[%c0_175, %c0_176], %134 {strides = array<i32>} : memref<2x128xf32, #tpu.memory_space<vmem>>, vector<2x128xf32>,
    return
  }
  func.func @transform_0(%arg0: i32) -> (i32, i32) {
    %c0_i32 = arith.constant 0 : i32
    %c0_i32_0 = arith.constant 0 : i32
    return %arg0, %c0_i32 : i32, i32
  }
  func.func @transform_1(%arg0: i32) -> (i32, i32) {
    %c0_i32 = arith.constant 0 : i32
    %c0_i32_0 = arith.constant 0 : i32
    %c0_i32_1 = arith.constant 0 : i32
    return %c0_i32, %c0_i32_0 : i32, i32
  }
  func.func @transform_2(%arg0: i32) -> (i32, i32) {
    %c0_i32 = arith.constant 0 : i32
    %c0_i32_0 = arith.constant 0 : i32
    %c0_i32_1 = arith.constant 0 : i32
    return %c0_i32, %c0_i32_0 : i32, i32
  }
  func.func @transform_3(%arg0: i32) -> (i32, i32) {
    %c0_i32 = arith.constant 0 : i32
    %c0_i32_0 = arith.constant 0 : i32
    %c0_i32_1 = arith.constant 0 : i32
    return %c0_i32, %c0_i32_0 : i32, i32
  }
  func.func @transform_4(%arg0: i32) -> (i32, i32) {
    %c0_i32 = arith.constant 0 : i32
    %c0_i32_0 = arith.constant 0 : i32
    %c0_i32_1 = arith.constant 0 : i32
    return %c0_i32, %c0_i32_0 : i32, i32
  }
  func.func @transform_5(%arg0: i32) -> (i32, i32) {
    %c0_i32 = arith.constant 0 : i32
    %c0_i32_0 = arith.constant 0 : i32
    %c0_i32_1 = arith.constant 0 : i32
    return %c0_i32, %c0_i32_0 : i32, i32
  }
  func.func @transform_6(%arg0: i32) -> (i32, i32) {
    %c0_i32 = arith.constant 0 : i32
    %c0_i32_0 = arith.constant 0 : i32
    %c0_i32_1 = arith.constant 0 : i32
    return %c0_i32, %c0_i32_0 : i32, i32
  }
  func.func @transform_7(%arg0: i32) -> (i32, i32) {
    %c0_i32 = arith.constant 0 : i32
    %c0_i32_0 = arith.constant 0 : i32
    %c0_i32_1 = arith.constant 0 : i32
    return %c0_i32, %c0_i32_0 : i32, i32
  }
  func.func @transform_8(%arg0: i32) -> (i32, i32) {
    %c0_i32 = arith.constant 0 : i32
    %c0_i32_0 = arith.constant 0 : i32
    %c0_i32_1 = arith.constant 0 : i32
    return %c0_i32, %c0_i32_0 : i32, i32
  }
  func.func @transform_9(%arg0: i32) -> (i32, i32) {
    %c0_i32 = arith.constant 0 : i32
    %c0_i32_0 = arith.constant 0 : i32
    %c0_i32_1 = arith.constant 0 : i32
    return %c0_i32, %c0_i32_0 : i32, i32
  }
  func.func @transform_10(%arg0: i32) -> (i32, i32) {
    %c0_i32 = arith.constant 0 : i32
    %c0_i32_0 = arith.constant 0 : i32
    %c0_i32_1 = arith.constant 0 : i32
    return %c0_i32, %c0_i32_0 : i32, i32
  }
  func.func @transform_11(%arg0: i32) -> (i32, i32) {
    %c0_i32 = arith.constant 0 : i32
    %c0_i32_0 = arith.constant 0 : i32
    return %arg0, %c0_i32 : i32, i32
  }
}

</mosaic_0001>

<llo_original>
// kernel: model_forward.1
$region0: #{model_forward.1}
  #allocation0 [shape = 'u32[]', space=smem, size = 0x4, offset = 0x4, fixed_abs, tag = 'smem constant byte address 0x4 - core index']
  #allocation1 [shape = 'u32[144,128]{1,0:T(1,128)}', space=vmem, size = 0x12000, scoped, tag = 'internal scratch']
  #allocation2 [shape = 'bf16[2,10,10,32]{3,2,1,0:T(8,128)(2,1)}', space=vmem, size = 0x14000, scoped, tag = 'scratch operand']
  #allocation3 [shape = 'bf16[2,5,5,64]{3,2,1,0:T(8,128)(2,1)}', space=vmem, size = 0x5000, scoped, tag = 'scratch operand']
  #allocation4 [shape = 'bf16[2,8,8,288]{3,2,1,0:T(8,128)(2,1)}', space=vmem, size = 0x18000, scoped, tag = 'scratch operand']
  #allocation5 [shape = 'bf16[2,4,4,256]{3,2,1,0:T(4,128)(2,1)}', space=vmem, size = 0x4000, scoped, tag = 'scratch operand']
  #allocation6 [shape = 'bf16[2,512]{1,0:T(2,128)(2,1)}', space=vmem, size = 0x800, scoped, tag = 'scratch operand']
  %s0 = inlined_call_operand.vmem [shape: bf16[512,128], index: 0, kind: input, shape index: {}]
  %s1 = inlined_call_operand.vmem [shape: bf16[128,32], index: 1, kind: input, shape index: {}]
  %s2 = inlined_call_operand.vmem [shape: f32[1,32], index: 2, kind: input, shape index: {}]
  %s3 = inlined_call_operand.vmem [shape: bf16[288,64], index: 3, kind: input, shape index: {}]
  %s4 = inlined_call_operand.vmem [shape: f32[1,64], index: 4, kind: input, shape index: {}]
  %s5 = inlined_call_operand.vmem [shape: bf16[256,128], index: 5, kind: input, shape index: {}]
  %s6 = inlined_call_operand.vmem [shape: f32[1,128], index: 6, kind: input, shape index: {}]
  %s7 = inlined_call_operand.vmem [shape: bf16[512,1000], index: 7, kind: input, shape index: {}]
  %s8 = inlined_call_operand.vmem [shape: f32[1,1000], index: 8, kind: input, shape index: {}]
  %s9 = inlined_call_operand.vmem [shape: bf16[1000,128], index: 9, kind: input, shape index: {}]
  %s10 = inlined_call_operand.vmem [shape: f32[1,128], index: 10, kind: input, shape index: {}]
  %s11 = inlined_call_operand.hbm [shape: f32[2,128], index: 11, kind: output, shape index: {}]
  %s12 = sld [smem:[#allocation0]]
  $region54: #{model_forward.1} parent=0
    _
  %s14 = ssub.s32 1, %s12
  %s15 = scalar_select 0, %s14, %s12
  $region1: #{model_forward.1} parent=0
    #allocation7 [shape = 'u8[1024]{0}', space=vmem, size = 0x400, scoped, tag = 'output window, operand 0, single buffered']
    #allocation8 [shape = 's32[1]{0}', space=sflag, size = 0x4, scoped, tag = 'scoped memory for model_forward.1']
    %16 = vsyncpa [#allocation8], 0
    // Predicated region
    $region2: #{model_forward.1} parent=1 // pred_check
      _
    $region3: #{model_forward.1} parent=1 // pred_check_branch
      %18 = sbr.rel (0) target = $region5
    $region4: #{model_forward.1} parent=1 // pred_region
      _
    $region5: #{model_forward.1} parent=1 // pred_fallthru
      _
    // Predicated region
    $region6: #{model_forward.1} parent=1 // pred_check
      _
    $region7: #{model_forward.1} parent=1 // pred_check_branch
      %20 = sbr.rel (0) target = $region9
    $region8: #{model_forward.1} parent=1 // pred_region
      _
    $region9: #{model_forward.1} parent=1 // pred_fallthru
      _
    // Predicated region
    $region10: #{model_forward.1} parent=1 // pred_check
      _
    $region11: #{model_forward.1} parent=1 // pred_check_branch
      %22 = sbr.rel (0) target = $region13
    $region12: #{model_forward.1} parent=1 // pred_region
      _
    $region13: #{model_forward.1} parent=1 // pred_fallthru
      _
    // Predicated region
    $region14: #{model_forward.1} parent=1 // pred_check
      _
    $region15: #{model_forward.1} parent=1 // pred_check_branch
      %24 = sbr.rel (0) target = $region17
    $region16: #{model_forward.1} parent=1 // pred_region
      _
    $region17: #{model_forward.1} parent=1 // pred_fallthru
      _
    // Predicated region
    $region18: #{model_forward.1} parent=1 // pred_check
      _
    $region19: #{model_forward.1} parent=1 // pred_check_branch
      %26 = sbr.rel (0) target = $region21
    $region20: #{model_forward.1} parent=1 // pred_region
      _
    $region21: #{model_forward.1} parent=1 // pred_fallthru
      _
    // Predicated region
    $region22: #{model_forward.1} parent=1 // pred_check
      _
    $region23: #{model_forward.1} parent=1 // pred_check_branch
      %28 = sbr.rel (0) target = $region25
    $region24: #{model_forward.1} parent=1 // pred_region
      _
    $region25: #{model_forward.1} parent=1 // pred_fallthru
      _
    // Predicated region
    $region26: #{model_forward.1} parent=1 // pred_check
      _
    $region27: #{model_forward.1} parent=1 // pred_check_branch
      %30 = sbr.rel (0) target = $region29
    $region28: #{model_forward.1} parent=1 // pred_region
      _
    $region29: #{model_forward.1} parent=1 // pred_fallthru
      _
    // Predicated region
    $region30: #{model_forward.1} parent=1 // pred_check
      _
    $region31: #{model_forward.1} parent=1 // pred_check_branch
      %32 = sbr.rel (0) target = $region33
    $region32: #{model_forward.1} parent=1 // pred_region
      _
    $region33: #{model_forward.1} parent=1 // pred_fallthru
      _
    // Predicated region
    $region34: #{model_forward.1} parent=1 // pred_check
      _
    $region35: #{model_forward.1} parent=1 // pred_check_branch
      %34 = sbr.rel (0) target = $region37
    $region36: #{model_forward.1} parent=1 // pred_region
      _
    $region37: #{model_forward.1} parent=1 // pred_fallthru
      _
    // Predicated region
    $region38: #{model_forward.1} parent=1 // pred_check
      _
    $region39: #{model_forward.1} parent=1 // pred_check_branch
      %36 = sbr.rel (0) target = $region41
    $region40: #{model_forward.1} parent=1 // pred_region
      _
    $region41: #{model_forward.1} parent=1 // pred_fallthru
      _
    // Predicated region
    $region42: #{model_forward.1} parent=1 // pred_check
      _
    $region43: #{model_forward.1} parent=1 // pred_check_branch
      %38 = sbr.rel (0) target = $region45
    $region44: #{model_forward.1} parent=1 // pred_region
      _
    $region45: #{model_forward.1} parent=1 // pred_fallthru
      _
    %vm40 = vcmask 257024
    %41 = vst.msk [vmem:[#allocation2] sm:$0xf] %vm40, 0
    %vm42 = vcmask 253952
    %43 = vst.msk [vmem:[#allocation2 + $0x4] sm:$0x1] %vm42, 0
    %44 = vst.msk [vmem:[#allocation2 + $0x50] sm:$0xf] %vm40, 0
    %45 = vst.msk [vmem:[#allocation2 + $0x54] sm:$0x1] %vm42, 0
    %s46 = scalar_lea.vmem [#allocation2], 72
    %47 = vst.msk [vmem:[%s46] sm:$0xf] %vm40, 0
    %48 = vst.msk [vmem:[%s46 + $0x4] sm:$0x1] %vm42, 0
    %49 = vst.msk [vmem:[%s46 + $0x50] sm:$0xf] %vm40, 0
    %50 = vst.msk [vmem:[%s46 + $0x54] sm:$0x1] %vm42, 0
    %vm51 = vcmask 253952
    %vm52 = vsmask.f32 256
    %vm53 = vmand %vm51, %vm52
    %v54 = vld [vmem:[#allocation2] sm:$0x1]
    %v55 = vsel %vm53, 0, %v54
    %56 = vst [vmem:[#allocation2] sm:$0x1] %v55
    %v57 = vld [vmem:[#allocation2 + $0x8] sm:$0x1]
    %v58 = vsel %vm53, 0, %v57
    %59 = vst [vmem:[#allocation2 + $0x8] sm:$0x1] %v58
    %v60 = vld [vmem:[#allocation2 + $0x10] sm:$0x1]
    %v61 = vsel %vm53, 0, %v60
    %62 = vst [vmem:[#allocation2 + $0x10] sm:$0x1] %v61
    %v63 = vld [vmem:[#allocation2 + $0x18] sm:$0x1]
    %v64 = vsel %vm53, 0, %v63
    %65 = vst [vmem:[#allocation2 + $0x18] sm:$0x1] %v64
    %v66 = vld [vmem:[#allocation2 + $0x20] sm:$0x1]
    %v67 = vsel %vm53, 0, %v66
    %68 = vst [vmem:[#allocation2 + $0x20] sm:$0x1] %v67
    %v69 = vld [vmem:[#allocation2 + $0x28] sm:$0x1]
    %v70 = vsel %vm53, 0, %v69
    %71 = vst [vmem:[#allocation2 + $0x28] sm:$0x1] %v70
    %v72 = vld [vmem:[#allocation2 + $0x30] sm:$0x1]
    %v73 = vsel %vm53, 0, %v72
    %74 = vst [vmem:[#allocation2 + $0x30] sm:$0x1] %v73
    %v75 = vld [vmem:[#allocation2 + $0x38] sm:$0x1]
    %v76 = vsel %vm53, 0, %v75
    %77 = vst [vmem:[#allocation2 + $0x38] sm:$0x1] %v76
    %v78 = vld [vmem:[#allocation2 + $0x40] sm:$0x1]
    %v79 = vsel %vm53, 0, %v78
    %80 = vst [vmem:[#allocation2 + $0x40] sm:$0x1] %v79
    %v81 = vld [vmem:[#allocation2 + $0x48] sm:$0x1]
    %v82 = vsel %vm53, 0, %v81
    %83 = vst [vmem:[#allocation2 + $0x48] sm:$0x1] %v82
    %v84 = vld [vmem:[#allocation2 + $0x50] sm:$0x1]
    %v85 = vsel %vm53, 0, %v84
    %86 = vst [vmem:[#allocation2 + $0x50] sm:$0x1] %v85
    %v87 = vld [vmem:[#allocation2 + $0x58] sm:$0x1]
    %v88 = vsel %vm53, 0, %v87
    %89 = vst [vmem:[#allocation2 + $0x58] sm:$0x1] %v88
    %v90 = vld [vmem:[#allocation2 + $0x60] sm:$0x1]
    %v91 = vsel %vm53, 0, %v90
    %92 = vst [vmem:[#allocation2 + $0x60] sm:$0x1] %v91
    %v93 = vld [vmem:[#allocation2 + $0x68] sm:$0x1]
    %v94 = vsel %vm53, 0, %v93
    %95 = vst [vmem:[#allocation2 + $0x68] sm:$0x1] %v94
    %v96 = vld [vmem:[#allocation2 + $0x70] sm:$0x1]
    %v97 = vsel %vm53, 0, %v96
    %98 = vst [vmem:[#allocation2 + $0x70] sm:$0x1] %v97
    %v99 = vld [vmem:[#allocation2 + $0x78] sm:$0x1]
    %v100 = vsel %vm53, 0, %v99
    %101 = vst [vmem:[#allocation2 + $0x78] sm:$0x1] %v100
    %v102 = vld [vmem:[#allocation2 + $0x80] sm:$0x1]
    %v103 = vsel %vm53, 0, %v102
    %104 = vst [vmem:[#allocation2 + $0x80] sm:$0x1] %v103
    %v105 = vld [vmem:[#allocation2 + $0x88] sm:$0x1]
    %v106 = vsel %vm53, 0, %v105
    %107 = vst [vmem:[#allocation2 + $0x88] sm:$0x1] %v106
    %v108 = vld [vmem:[#allocation2 + $0x90] sm:$0x1]
    %v109 = vsel %vm53, 0, %v108
    %110 = vst [vmem:[#allocation2 + $0x90] sm:$0x1] %v109
    %v111 = vld [vmem:[#allocation2 + $0x98] sm:$0x1]
    %v112 = vsel %vm53, 0, %v111
    %113 = vst [vmem:[#allocation2 + $0x98] sm:$0x1] %v112
    %vm114 = vsmask.f32 7938
    %vm115 = vmand %vm51, %vm114
    %v116 = vld [vmem:[#allocation2 + $0x4] sm:$0x1]
    %v117 = vsel %vm115, 0, %v116
    %118 = vst [vmem:[#allocation2 + $0x4] sm:$0x1] %v117
    %v119 = vld [vmem:[#allocation2 + $0xc] sm:$0x1]
    %v120 = vsel %vm115, 0, %v119
    %121 = vst [vmem:[#allocation2 + $0xc] sm:$0x1] %v120
    %v122 = vld [vmem:[#allocation2 + $0x14] sm:$0x1]
    %v123 = vsel %vm115, 0, %v122
    %124 = vst [vmem:[#allocation2 + $0x14] sm:$0x1] %v123
    %v125 = vld [vmem:[#allocation2 + $0x1c] sm:$0x1]
    %v126 = vsel %vm115, 0, %v125
    %127 = vst [vmem:[#allocation2 + $0x1c] sm:$0x1] %v126
    %v128 = vld [vmem:[#allocation2 + $0x24] sm:$0x1]
    %v129 = vsel %vm115, 0, %v128
    %130 = vst [vmem:[#allocation2 + $0x24] sm:$0x1] %v129
    %v131 = vld [vmem:[#allocation2 + $0x2c] sm:$0x1]
    %v132 = vsel %vm115, 0, %v131
    %133 = vst [vmem:[#allocation2 + $0x2c] sm:$0x1] %v132
    %v134 = vld [vmem:[#allocation2 + $0x34] sm:$0x1]
    %v135 = vsel %vm115, 0, %v134
    %136 = vst [vmem:[#allocation2 + $0x34] sm:$0x1] %v135
    %v137 = vld [vmem:[#allocation2 + $0x3c] sm:$0x1]
    %v138 = vsel %vm115, 0, %v137
    %139 = vst [vmem:[#allocation2 + $0x3c] sm:$0x1] %v138
    %v140 = vld [vmem:[#allocation2 + $0x44] sm:$0x1]
    %v141 = vsel %vm115, 0, %v140
    %142 = vst [vmem:[#allocation2 + $0x44] sm:$0x1] %v141
    %v143 = vld [vmem:[#allocation2 + $0x4c] sm:$0x1]
    %v144 = vsel %vm115, 0, %v143
    %145 = vst [vmem:[#allocation2 + $0x4c] sm:$0x1] %v144
    %v146 = vld [vmem:[#allocation2 + $0x54] sm:$0x1]
    %v147 = vsel %vm115, 0, %v146
    %148 = vst [vmem:[#allocation2 + $0x54] sm:$0x1] %v147
    %v149 = vld [vmem:[#allocation2 + $0x5c] sm:$0x1]
    %v150 = vsel %vm115, 0, %v149
    %151 = vst [vmem:[#allocation2 + $0x5c] sm:$0x1] %v150
    %v152 = vld [vmem:[#allocation2 + $0x64] sm:$0x1]
    %v153 = vsel %vm115, 0, %v152
    %154 = vst [vmem:[#allocation2 + $0x64] sm:$0x1] %v153
    %v155 = vld [vmem:[#allocation2 + $0x6c] sm:$0x1]
    %v156 = vsel %vm115, 0, %v155
    %157 = vst [vmem:[#allocation2 + $0x6c] sm:$0x1] %v156
    %v158 = vld [vmem:[#allocation2 + $0x74] sm:$0x1]
    %v159 = vsel %vm115, 0, %v158
    %160 = vst [vmem:[#allocation2 + $0x74] sm:$0x1] %v159
    %v161 = vld [vmem:[#allocation2 + $0x7c] sm:$0x1]
    %v162 = vsel %vm115, 0, %v161
    %163 = vst [vmem:[#allocation2 + $0x7c] sm:$0x1] %v162
    %v164 = vld [vmem:[#allocation2 + $0x84] sm:$0x1]
    %v165 = vsel %vm115, 0, %v164
    %166 = vst [vmem:[#allocation2 + $0x84] sm:$0x1] %v165
    %v167 = vld [vmem:[#allocation2 + $0x8c] sm:$0x1]
    %v168 = vsel %vm115, 0, %v167
    %169 = vst [vmem:[#allocation2 + $0x8c] sm:$0x1] %v168
    %v170 = vld [vmem:[#allocation2 + $0x94] sm:$0x1]
    %v171 = vsel %vm115, 0, %v170
    %172 = vst [vmem:[#allocation2 + $0x94] sm:$0x1] %v171
    %v173 = vld [vmem:[#allocation2 + $0x9c] sm:$0x1]
    %v174 = vsel %vm115, 0, %v173
    %175 = vst [vmem:[#allocation2 + $0x9c] sm:$0x1] %v174
    %s176 = scalar_lea.vmem [#allocation3], 16
    %vm177 = vcmask 518144
    %vm178 = vsmask.f32 2304
    %vm179 = vmand %vm177, %vm178
    %v180 = vld [vmem:[%s176] sm:$0x7]
    %v181 = vsel %vm179, 0, %v180
    %182 = vst [vmem:[%s176] sm:$0x7] %v181
    %v183 = vld [vmem:[%s176 + $0x14] sm:$0x7]
    %v184 = vsel %vm179, 0, %v183
    %185 = vst [vmem:[%s176 + $0x14] sm:$0x7] %v184
    %vm186 = vcmask 518146
    %vm187 = vmand %vm186, %vm178
    %v188 = vld [vmem:[#allocation3] sm:$0x4]
    %v189 = vsel %vm187, 0, %v188
    %190 = vst [vmem:[#allocation3] sm:$0x4] %v189
    %v191 = vld [vmem:[#allocation3 + $0x4] sm:$0x4]
    %v192 = vsel %vm187, 0, %v191
    %193 = vst [vmem:[#allocation3 + $0x4] sm:$0x4] %v192
    %v194 = vld [vmem:[#allocation3 + $0x8] sm:$0x4]
    %v195 = vsel %vm187, 0, %v194
    %196 = vst [vmem:[#allocation3 + $0x8] sm:$0x4] %v195
    %v197 = vld [vmem:[#allocation3 + $0xc] sm:$0x4]
    %v198 = vsel %vm187, 0, %v197
    %199 = vst [vmem:[#allocation3 + $0xc] sm:$0x4] %v198
    %v200 = vld [vmem:[#allocation3 + $0x10] sm:$0x4]
    %v201 = vsel %vm187, 0, %v200
    %202 = vst [vmem:[#allocation3 + $0x10] sm:$0x4] %v201
    %v203 = vld [vmem:[#allocation3 + $0x14] sm:$0x4]
    %v204 = vsel %vm187, 0, %v203
    %205 = vst [vmem:[#allocation3 + $0x14] sm:$0x4] %v204
    %v206 = vld [vmem:[#allocation3 + $0x18] sm:$0x4]
    %v207 = vsel %vm187, 0, %v206
    %208 = vst [vmem:[#allocation3 + $0x18] sm:$0x4] %v207
    %v209 = vld [vmem:[#allocation3 + $0x1c] sm:$0x4]
    %v210 = vsel %vm187, 0, %v209
    %211 = vst [vmem:[#allocation3 + $0x1c] sm:$0x4] %v210
    %v212 = vld [vmem:[#allocation3 + $0x20] sm:$0x4]
    %v213 = vsel %vm187, 0, %v212
    %214 = vst [vmem:[#allocation3 + $0x20] sm:$0x4] %v213
    %v215 = vld [vmem:[#allocation3 + $0x24] sm:$0x4]
    %v216 = vsel %vm187, 0, %v215
    %217 = vst [vmem:[#allocation3 + $0x24] sm:$0x4] %v216
    %v218 = vld [vmem:[%s0] sm:$0xf]
    %v219 = vld [vmem:[%s0 + $0x4] sm:$0xf]
    %v220 = vld [vmem:[%s0 + $0x8] sm:$0xf]
    %v221 = vld [vmem:[%s0 + $0xc] sm:$0xf]
    %v222 = vld [vmem:[%s0 + $0x10] sm:$0xf]
    %v223 = vld [vmem:[%s0 + $0x14] sm:$0xf]
    %v224 = vld [vmem:[%s0 + $0x18] sm:$0xf]
    %v225 = vld [vmem:[%s0 + $0x1c] sm:$0xf]
    %v226 = vld [vmem:[%s0 + $0x20] sm:$0xf]
    %v227 = vld [vmem:[%s0 + $0x24] sm:$0xf]
    %v228 = vld [vmem:[%s0 + $0x28] sm:$0xf]
    %v229 = vld [vmem:[%s0 + $0x2c] sm:$0xf]
    %v230 = vld [vmem:[%s0 + $0x30] sm:$0xf]
    %v231 = vld [vmem:[%s0 + $0x34] sm:$0xf]
    %v232 = vld [vmem:[%s0 + $0x38] sm:$0xf]
    %v233 = vld [vmem:[%s0 + $0x3c] sm:$0xf]
    %v234 = vld [vmem:[%s0 + $0x40] sm:$0xf]
    %v235 = vld [vmem:[%s0 + $0x44] sm:$0xf]
    %v236 = vld [vmem:[%s0 + $0x48] sm:$0xf]
    %v237 = vld [vmem:[%s0 + $0x4c] sm:$0xf]
    %v238 = vld [vmem:[%s0 + $0x50] sm:$0xf]
    %v239 = vld [vmem:[%s0 + $0x54] sm:$0xf]
    %v240 = vld [vmem:[%s0 + $0x58] sm:$0xf]
    %v241 = vld [vmem:[%s0 + $0x5c] sm:$0xf]
    %v242 = vld [vmem:[%s0 + $0x60] sm:$0xf]
    %v243 = vld [vmem:[%s0 + $0x64] sm:$0xf]
    %v244 = vld [vmem:[%s0 + $0x68] sm:$0xf]
    %v245 = vld [vmem:[%s0 + $0x6c] sm:$0xf]
    %v246 = vld [vmem:[%s0 + $0x70] sm:$0xf]
    %v247 = vld [vmem:[%s0 + $0x74] sm:$0xf]
    %v248 = vld [vmem:[%s0 + $0x78] sm:$0xf]
    %v249 = vld [vmem:[%s0 + $0x7c] sm:$0xf]
    %v250 = vld [vmem:[%s0 + $0x80] sm:$0xf]
    %v251 = vld [vmem:[%s0 + $0x84] sm:$0xf]
    %v252 = vld [vmem:[%s0 + $0x88] sm:$0xf]
    %v253 = vld [vmem:[%s0 + $0x8c] sm:$0xf]
    %v254 = vld [vmem:[%s0 + $0x90] sm:$0xf]
    %v255 = vld [vmem:[%s0 + $0x94] sm:$0xf]
    %v256 = vld [vmem:[%s0 + $0x98] sm:$0xf]
    %v257 = vld [vmem:[%s0 + $0x9c] sm:$0xf]
    %v258 = vld [vmem:[%s0 + $0xa0] sm:$0xf]
    %v259 = vld [vmem:[%s0 + $0xa4] sm:$0xf]
    %v260 = vld [vmem:[%s0 + $0xa8] sm:$0xf]
    %v261 = vld [vmem:[%s0 + $0xac] sm:$0xf]
    %v262 = vld [vmem:[%s0 + $0xb0] sm:$0xf]
    %v263 = vld [vmem:[%s0 + $0xb4] sm:$0xf]
    %v264 = vld [vmem:[%s0 + $0xb8] sm:$0xf]
    %v265 = vld [vmem:[%s0 + $0xbc] sm:$0xf]
    %v266 = vld [vmem:[%s0 + $0xc0] sm:$0xf]
    %v267 = vld [vmem:[%s0 + $0xc4] sm:$0xf]
    %v268 = vld [vmem:[%s0 + $0xc8] sm:$0xf]
    %v269 = vld [vmem:[%s0 + $0xcc] sm:$0xf]
    %v270 = vld [vmem:[%s0 + $0xd0] sm:$0xf]
    %v271 = vld [vmem:[%s0 + $0xd4] sm:$0xf]
    %v272 = vld [vmem:[%s0 + $0xd8] sm:$0xf]
    %v273 = vld [vmem:[%s0 + $0xdc] sm:$0xf]
    %v274 = vld [vmem:[%s0 + $0xe0] sm:$0xf]
    %v275 = vld [vmem:[%s0 + $0xe4] sm:$0xf]
    %v276 = vld [vmem:[%s0 + $0xe8] sm:$0xf]
    %v277 = vld [vmem:[%s0 + $0xec] sm:$0xf]
    %v278 = vld [vmem:[%s0 + $0xf0] sm:$0xf]
    %v279 = vld [vmem:[%s0 + $0xf4] sm:$0xf]
    %v280 = vld [vmem:[%s0 + $0xf8] sm:$0xf]
    %v281 = vld [vmem:[%s0 + $0xfc] sm:$0xf]
    %v282 = vld [vmem:[%s1] sm:$0xf]
    %v283 = vld [vmem:[%s1 + $0x4] sm:$0xf]
    %v284 = vld [vmem:[%s1 + $0x8] sm:$0xf]
    %v285 = vld [vmem:[%s1 + $0xc] sm:$0xf]
    %v286 = vld [vmem:[%s1 + $0x10] sm:$0xf]
    %v287 = vld [vmem:[%s1 + $0x14] sm:$0xf]
    %v288 = vld [vmem:[%s1 + $0x18] sm:$0xf]
    %v289 = vld [vmem:[%s1 + $0x1c] sm:$0xf]
    %v290 = vld [vmem:[%s1 + $0x20] sm:$0xf]
    %v291 = vld [vmem:[%s1 + $0x24] sm:$0xf]
    %v292 = vld [vmem:[%s1 + $0x28] sm:$0xf]
    %v293 = vld [vmem:[%s1 + $0x2c] sm:$0xf]
    %v294 = vld [vmem:[%s1 + $0x30] sm:$0xf]
    %v295 = vld [vmem:[%s1 + $0x34] sm:$0xf]
    %v296 = vld [vmem:[%s1 + $0x38] sm:$0xf]
    %v297 = vld [vmem:[%s1 + $0x3c] sm:$0xf]
    %v298 = vld [vmem:[%s2] sm:$0x1]
    %v300 = vlaneseq
    %v301 = vshrl.u32 %v300, 7
    %v302 = vsub.s32 0, %v301
    %v303 = vrot.slane %v298, %v302
    %v369 = vunpack.c.l.b16 %v218
    %v370 = vunpack.c.l.b16 %v219
    %v371 = vunpack.c.l.b16 %v220
    %v372 = vunpack.c.l.b16 %v221
    %v373 = vunpack.c.l.b16 %v222
    %v374 = vunpack.c.l.b16 %v223
    %v375 = vunpack.c.l.b16 %v224
    %v376 = vunpack.c.l.b16 %v225
    %v377 = vunpack.c.l.b16 %v226
    %v378 = vunpack.c.l.b16 %v227
    %v379 = vunpack.c.l.b16 %v228
    %v380 = vunpack.c.l.b16 %v229
    %v381 = vunpack.c.l.b16 %v230
    %v382 = vunpack.c.l.b16 %v231
    %v383 = vunpack.c.l.b16 %v232
    %v384 = vunpack.c.l.b16 %v233
    %v385 = vunpack.c.l.b16 %v234
    %v386 = vunpack.c.l.b16 %v235
    %v387 = vunpack.c.l.b16 %v236
    %v388 = vunpack.c.l.b16 %v237
    %v389 = vunpack.c.l.b16 %v238
    %v390 = vunpack.c.l.b16 %v239
    %v391 = vunpack.c.l.b16 %v240
    %v392 = vunpack.c.l.b16 %v241
    %v393 = vunpack.c.l.b16 %v242
    %v394 = vunpack.c.l.b16 %v243
    %v395 = vunpack.c.l.b16 %v244
    %v396 = vunpack.c.l.b16 %v245
    %v397 = vunpack.c.l.b16 %v246
    %v398 = vunpack.c.l.b16 %v247
    %v399 = vunpack.c.l.b16 %v248
    %v400 = vunpack.c.l.b16 %v249
    %v401 = vunpack.c.l.b16 %v250
    %v402 = vunpack.c.l.b16 %v251
    %v403 = vunpack.c.l.b16 %v252
    %v404 = vunpack.c.l.b16 %v253
    %v405 = vunpack.c.l.b16 %v254
    %v406 = vunpack.c.l.b16 %v255
    %v407 = vunpack.c.l.b16 %v256
    %v408 = vunpack.c.l.b16 %v257
    %v409 = vunpack.c.l.b16 %v258
    %v410 = vunpack.c.l.b16 %v259
    %v411 = vunpack.c.l.b16 %v260
    %v412 = vunpack.c.l.b16 %v261
    %v413 = vunpack.c.l.b16 %v262
    %v414 = vunpack.c.l.b16 %v263
    %v415 = vunpack.c.l.b16 %v264
    %v416 = vunpack.c.l.b16 %v265
    %v417 = vunpack.c.l.b16 %v266
    %v418 = vunpack.c.l.b16 %v267
    %v419 = vunpack.c.l.b16 %v268
    %v420 = vunpack.c.l.b16 %v269
    %v421 = vunpack.c.l.b16 %v270
    %v422 = vunpack.c.l.b16 %v271
    %v423 = vunpack.c.l.b16 %v272
    %v424 = vunpack.c.l.b16 %v273
    %v425 = vunpack.c.l.b16 %v274
    %v426 = vunpack.c.l.b16 %v275
    %v427 = vunpack.c.l.b16 %v276
    %v428 = vunpack.c.l.b16 %v277
    %v429 = vunpack.c.l.b16 %v278
    %v430 = vunpack.c.l.b16 %v279
    %v431 = vunpack.c.l.b16 %v280
    %v432 = vunpack.c.l.b16 %v281
    %v433 = vpack.c.b16 %v370, %v369
    %v434 = vpack.c.b16 %v372, %v371
    %v435 = vpack.c.b16 %v374, %v373
    %v436 = vpack.c.b16 %v376, %v375
    %v437 = vpack.c.b16 %v378, %v377
    %v438 = vpack.c.b16 %v380, %v379
    %v439 = vpack.c.b16 %v382, %v381
    %v440 = vpack.c.b16 %v384, %v383
    %v441 = vpack.c.b16 %v386, %v385
    %v442 = vpack.c.b16 %v388, %v387
    %v443 = vpack.c.b16 %v390, %v389
    %v444 = vpack.c.b16 %v392, %v391
    %v445 = vpack.c.b16 %v394, %v393
    %v446 = vpack.c.b16 %v396, %v395
    %v447 = vpack.c.b16 %v398, %v397
    %v448 = vpack.c.b16 %v400, %v399
    %v449 = vpack.c.b16 %v402, %v401
    %v450 = vpack.c.b16 %v404, %v403
    %v451 = vpack.c.b16 %v406, %v405
    %v452 = vpack.c.b16 %v408, %v407
    %v453 = vpack.c.b16 %v410, %v409
    %v454 = vpack.c.b16 %v412, %v411
    %v455 = vpack.c.b16 %v414, %v413
    %v456 = vpack.c.b16 %v416, %v415
    %v457 = vpack.c.b16 %v418, %v417
    %v458 = vpack.c.b16 %v420, %v419
    %v459 = vpack.c.b16 %v422, %v421
    %v460 = vpack.c.b16 %v424, %v423
    %v461 = vpack.c.b16 %v426, %v425
    %v462 = vpack.c.b16 %v428, %v427
    %v463 = vpack.c.b16 %v430, %v429
    %v464 = vpack.c.b16 %v432, %v431
    %v513 = vunpack.c.l.b16 %v282
    %v514 = vunpack.c.l.b16 %v283
    %v515 = vunpack.c.l.b16 %v284
    %v516 = vunpack.c.l.b16 %v285
    %v517 = vunpack.c.l.b16 %v286
    %v518 = vunpack.c.l.b16 %v287
    %v519 = vunpack.c.l.b16 %v288
    %v520 = vunpack.c.l.b16 %v289
    %v521 = vunpack.c.l.b16 %v290
    %v522 = vunpack.c.l.b16 %v291
    %v523 = vunpack.c.l.b16 %v292
    %v524 = vunpack.c.l.b16 %v293
    %v525 = vunpack.c.l.b16 %v294
    %v526 = vunpack.c.l.b16 %v295
    %v527 = vunpack.c.l.b16 %v296
    %v528 = vunpack.c.l.b16 %v297
    %v529 = vpack.c.b16 %v514, %v513
    %v530 = vpack.c.b16 %v516, %v515
    %v531 = vpack.c.b16 %v518, %v517
    %v532 = vpack.c.b16 %v520, %v519
    %v533 = vpack.c.b16 %v522, %v521
    %v534 = vpack.c.b16 %v524, %v523
    %v535 = vpack.c.b16 %v526, %v525
    %v536 = vpack.c.b16 %v528, %v527
    %545 = vmatprep.subr.bf16.mxu0 0
    %546 = vmatpush1.bf16.msra.mxu0 %v529
    %547 = vmatprep.subr.bf16.mxu0 0
    %548 = vmatpush1.bf16.msra.mxu0 %v530
    %549 = vmatprep.subr.bf16.mxu0 0
    %550 = vmatpush1.bf16.msra.mxu0 %v531
    %551 = vmatprep.subr.bf16.mxu0 0
    %552 = vmatpush1.bf16.msra.mxu0 %v532
    %553 = vmatprep.subr.bf16.mxu0 0
    %554 = vmatpush1.bf16.msra.mxu0 %v533
    %555 = vmatprep.subr.bf16.mxu0 0
    %556 = vmatpush1.bf16.msra.mxu0 %v534
    %557 = vmatprep.subr.bf16.mxu0 0
    %558 = vmatpush1.bf16.msra.mxu0 %v535
    %559 = vmatprep.subr.bf16.mxu0 0
    %560 = vmatpush1.bf16.msra.mxu0 %v536
    %561 = vmatprep.subr.bf16.mxu0 0
    %562 = vmatpush1.bf16.msra.mxu0 0
    %563 = vmatprep.subr.bf16.mxu0 0
    %564 = vmatpush1.bf16.msra.mxu0 0
    %565 = vmatprep.subr.bf16.mxu0 0
    %566 = vmatpush1.bf16.msra.mxu0 0
    %567 = vmatprep.subr.bf16.mxu0 0
    %568 = vmatpush1.bf16.msra.mxu0 0
    %569 = vmatprep.subr.bf16.mxu0 0
    %570 = vmatpush1.bf16.msra.mxu0 0
    %571 = vmatprep.subr.bf16.mxu0 0
    %572 = vmatpush1.bf16.msra.mxu0 0
    %573 = vmatprep.subr.bf16.mxu0 0
    %574 = vmatpush1.bf16.msra.mxu0 0
    %575 = vmatprep.subr.bf16.mxu0 0
    %576 = vmatpush1.bf16.msra.mxu0 0
    %577 = vmatprep.mubr.bf16.mxu0 0
    %578 = vmatmul.mubr.bf16.gmra.mrb[0].mxu0 %v433
    %v579 = vpop.f32.mrb[0].mxu0
    %v580 = vadd.f32 %v303, %v579
    %v581 = vpop.f32.mrb[0].mxu0
    %v582 = vpop.f32.mrb[0].mxu0
    %v583 = vadd.f32 %v303, %v582
    %v584 = vpop.f32.mrb[0].mxu0
    %585 = vmatprep.mubr.bf16.mxu0 0
    %586 = vmatmul.mubr.bf16.gmra.mrb[0].mxu0 %v434
    %v587 = vpop.f32.mrb[0].mxu0
    %v588 = vadd.f32 %v303, %v587
    %v589 = vpop.f32.mrb[0].mxu0
    %v590 = vpop.f32.mrb[0].mxu0
    %v591 = vadd.f32 %v303, %v590
    %v592 = vpop.f32.mrb[0].mxu0
    %593 = vmatprep.mubr.bf16.mxu0 0
    %594 = vmatmul.mubr.bf16.gmra.mrb[0].mxu0 %v435
    %v595 = vpop.f32.mrb[0].mxu0
    %v596 = vadd.f32 %v303, %v595
    %v597 = vpop.f32.mrb[0].mxu0
    %v598 = vpop.f32.mrb[0].mxu0
    %v599 = vadd.f32 %v303, %v598
    %v600 = vpop.f32.mrb[0].mxu0
    %601 = vmatprep.mubr.bf16.mxu0 0
    %602 = vmatmul.mubr.bf16.gmra.mrb[0].mxu0 %v436
    %v603 = vpop.f32.mrb[0].mxu0
    %v604 = vadd.f32 %v303, %v603
    %v605 = vpop.f32.mrb[0].mxu0
    %v606 = vpop.f32.mrb[0].mxu0
    %v607 = vadd.f32 %v303, %v606
    %v608 = vpop.f32.mrb[0].mxu0
    %609 = vmatprep.mubr.bf16.mxu0 0
    %610 = vmatmul.mubr.bf16.gmra.mrb[0].mxu0 %v437
    %v611 = vpop.f32.mrb[0].mxu0
    %v612 = vadd.f32 %v303, %v611
    %v613 = vpop.f32.mrb[0].mxu0
    %v614 = vpop.f32.mrb[0].mxu0
    %v615 = vadd.f32 %v303, %v614
    %v616 = vpop.f32.mrb[0].mxu0
    %617 = vmatprep.mubr.bf16.mxu0 0
    %618 = vmatmul.mubr.bf16.gmra.mrb[0].mxu0 %v438
    %v619 = vpop.f32.mrb[0].mxu0
    %v620 = vadd.f32 %v303, %v619
    %v621 = vpop.f32.mrb[0].mxu0
    %v622 = vpop.f32.mrb[0].mxu0
    %v623 = vadd.f32 %v303, %v622
    %v624 = vpop.f32.mrb[0].mxu0
    %625 = vmatprep.mubr.bf16.mxu0 0
    %626 = vmatmul.mubr.bf16.gmra.mrb[0].mxu0 %v439
    %v627 = vpop.f32.mrb[0].mxu0
    %v628 = vadd.f32 %v303, %v627
    %v629 = vpop.f32.mrb[0].mxu0
    %v630 = vpop.f32.mrb[0].mxu0
    %v631 = vadd.f32 %v303, %v630
    %v632 = vpop.f32.mrb[0].mxu0
    %633 = vmatprep.mubr.bf16.mxu0 0
    %634 = vmatmul.mubr.bf16.gmra.mrb[0].mxu0 %v440
    %v635 = vpop.f32.mrb[0].mxu0
    %v636 = vadd.f32 %v303, %v635
    %v637 = vpop.f32.mrb[0].mxu0
    %v638 = vpop.f32.mrb[0].mxu0
    %v639 = vadd.f32 %v303, %v638
    %v640 = vpop.f32.mrb[0].mxu0
    %641 = vmatprep.mubr.bf16.mxu0 0
    %642 = vmatmul.mubr.bf16.gmra.mrb[0].mxu0 %v441
    %v643 = vpop.f32.mrb[0].mxu0
    %v644 = vadd.f32 %v303, %v643
    %v645 = vpop.f32.mrb[0].mxu0
    %v646 = vpop.f32.mrb[0].mxu0
    %v647 = vadd.f32 %v303, %v646
    %v648 = vpop.f32.mrb[0].mxu0
    %649 = vmatprep.mubr.bf16.mxu0 0
    %650 = vmatmul.mubr.bf16.gmra.mrb[0].mxu0 %v442
    %v651 = vpop.f32.mrb[0].mxu0
    %v652 = vadd.f32 %v303, %v651
    %v653 = vpop.f32.mrb[0].mxu0
    %v654 = vpop.f32.mrb[0].mxu0
    %v655 = vadd.f32 %v303, %v654
    %v656 = vpop.f32.mrb[0].mxu0
    %657 = vmatprep.mubr.bf16.mxu0 0
    %658 = vmatmul.mubr.bf16.gmra.mrb[0].mxu0 %v443
    %v659 = vpop.f32.mrb[0].mxu0
    %v660 = vadd.f32 %v303, %v659
    %v661 = vpop.f32.mrb[0].mxu0
    %v662 = vpop.f32.mrb[0].mxu0
    %v663 = vadd.f32 %v303, %v662
    %v664 = vpop.f32.mrb[0].mxu0
    %665 = vmatprep.mubr.bf16.mxu0 0
    %666 = vmatmul.mubr.bf16.gmra.mrb[0].mxu0 %v444
    %v667 = vpop.f32.mrb[0].mxu0
    %v668 = vadd.f32 %v303, %v667
    %v669 = vpop.f32.mrb[0].mxu0
    %v670 = vpop.f32.mrb[0].mxu0
    %v671 = vadd.f32 %v303, %v670
    %v672 = vpop.f32.mrb[0].mxu0
    %673 = vmatprep.mubr.bf16.mxu0 0
    %674 = vmatmul.mubr.bf16.gmra.mrb[0].mxu0 %v445
    %v675 = vpop.f32.mrb[0].mxu0
    %v676 = vadd.f32 %v303, %v675
    %v677 = vpop.f32.mrb[0].mxu0
    %v678 = vpop.f32.mrb[0].mxu0
    %v679 = vadd.f32 %v303, %v678
    %v680 = vpop.f32.mrb[0].mxu0
    %681 = vmatprep.mubr.bf16.mxu0 0
    %682 = vmatmul.mubr.bf16.gmra.mrb[0].mxu0 %v446
    %v683 = vpop.f32.mrb[0].mxu0
    %v684 = vadd.f32 %v303, %v683
    %v685 = vpop.f32.mrb[0].mxu0
    %v686 = vpop.f32.mrb[0].mxu0
    %v687 = vadd.f32 %v303, %v686
    %v688 = vpop.f32.mrb[0].mxu0
    %689 = vmatprep.mubr.bf16.mxu0 0
    %690 = vmatmul.mubr.bf16.gmra.mrb[0].mxu0 %v447
    %v691 = vpop.f32.mrb[0].mxu0
    %v692 = vadd.f32 %v303, %v691
    %v693 = vpop.f32.mrb[0].mxu0
    %v694 = vpop.f32.mrb[0].mxu0
    %v695 = vadd.f32 %v303, %v694
    %v696 = vpop.f32.mrb[0].mxu0
    %697 = vmatprep.mubr.bf16.mxu0 0
    %698 = vmatmul.mubr.bf16.gmra.mrb[0].mxu0 %v448
    %v699 = vpop.f32.mrb[0].mxu0
    %v700 = vadd.f32 %v303, %v699
    %v701 = vpop.f32.mrb[0].mxu0
    %v702 = vpop.f32.mrb[0].mxu0
    %v703 = vadd.f32 %v303, %v702
    %v704 = vpop.f32.mrb[0].mxu0
    %705 = vmatprep.mubr.bf16.mxu0 0
    %706 = vmatmul.mubr.bf16.gmra.mrb[0].mxu0 %v449
    %v707 = vpop.f32.mrb[0].mxu0
    %v708 = vadd.f32 %v303, %v707
    %v709 = vpop.f32.mrb[0].mxu0
    %v710 = vpop.f32.mrb[0].mxu0
    %v711 = vadd.f32 %v303, %v710
    %v712 = vpop.f32.mrb[0].mxu0
    %713 = vmatprep.mubr.bf16.mxu0 0
    %714 = vmatmul.mubr.bf16.gmra.mrb[0].mxu0 %v450
    %v715 = vpop.f32.mrb[0].mxu0
    %v716 = vadd.f32 %v303, %v715
    %v717 = vpop.f32.mrb[0].mxu0
    %v718 = vpop.f32.mrb[0].mxu0
    %v719 = vadd.f32 %v303, %v718
    %v720 = vpop.f32.mrb[0].mxu0
    %721 = vmatprep.mubr.bf16.mxu0 0
    %722 = vmatmul.mubr.bf16.gmra.mrb[0].mxu0 %v451
    %v723 = vpop.f32.mrb[0].mxu0
    %v724 = vadd.f32 %v303, %v723
    %v725 = vpop.f32.mrb[0].mxu0
    %v726 = vpop.f32.mrb[0].mxu0
    %v727 = vadd.f32 %v303, %v726
    %v728 = vpop.f32.mrb[0].mxu0
    %729 = vmatprep.mubr.bf16.mxu0 0
    %730 = vmatmul.mubr.bf16.gmra.mrb[0].mxu0 %v452
    %v731 = vpop.f32.mrb[0].mxu0
    %v732 = vadd.f32 %v303, %v731
    %v733 = vpop.f32.mrb[0].mxu0
    %v734 = vpop.f32.mrb[0].mxu0
    %v735 = vadd.f32 %v303, %v734
    %v736 = vpop.f32.mrb[0].mxu0
    %737 = vmatprep.mubr.bf16.mxu0 0
    %738 = vmatmul.mubr.bf16.gmra.mrb[0].mxu0 %v453
    %v739 = vpop.f32.mrb[0].mxu0
    %v740 = vadd.f32 %v303, %v739
    %v741 = vpop.f32.mrb[0].mxu0
    %v742 = vpop.f32.mrb[0].mxu0
    %v743 = vadd.f32 %v303, %v742
    %v744 = vpop.f32.mrb[0].mxu0
    %745 = vmatprep.mubr.bf16.mxu0 0
    %746 = vmatmul.mubr.bf16.gmra.mrb[0].mxu0 %v454
    %v747 = vpop.f32.mrb[0].mxu0
    %v748 = vadd.f32 %v303, %v747
    %v749 = vpop.f32.mrb[0].mxu0
    %v750 = vpop.f32.mrb[0].mxu0
    %v751 = vadd.f32 %v303, %v750
    %v752 = vpop.f32.mrb[0].mxu0
    %753 = vmatprep.mubr.bf16.mxu0 0
    %754 = vmatmul.mubr.bf16.gmra.mrb[0].mxu0 %v455
    %v755 = vpop.f32.mrb[0].mxu0
    %v756 = vadd.f32 %v303, %v755
    %v757 = vpop.f32.mrb[0].mxu0
    %v758 = vpop.f32.mrb[0].mxu0
    %v759 = vadd.f32 %v303, %v758
    %v760 = vpop.f32.mrb[0].mxu0
    %761 = vmatprep.mubr.bf16.mxu0 0
    %762 = vmatmul.mubr.bf16.gmra.mrb[0].mxu0 %v456
    %v763 = vpop.f32.mrb[0].mxu0
    %v764 = vadd.f32 %v303, %v763
    %v765 = vpop.f32.mrb[0].mxu0
    %v766 = vpop.f32.mrb[0].mxu0
    %v767 = vadd.f32 %v303, %v766
    %v768 = vpop.f32.mrb[0].mxu0
    %769 = vmatprep.mubr.bf16.mxu0 0
    %770 = vmatmul.mubr.bf16.gmra.mrb[0].mxu0 %v457
    %v771 = vpop.f32.mrb[0].mxu0
    %v772 = vadd.f32 %v303, %v771
    %v773 = vpop.f32.mrb[0].mxu0
    %v774 = vpop.f32.mrb[0].mxu0
    %v775 = vadd.f32 %v303, %v774
    %v776 = vpop.f32.mrb[0].mxu0
    %777 = vmatprep.mubr.bf16.mxu0 0
    %778 = vmatmul.mubr.bf16.gmra.mrb[0].mxu0 %v458
    %v779 = vpop.f32.mrb[0].mxu0
    %v780 = vadd.f32 %v303, %v779
    %v781 = vpop.f32.mrb[0].mxu0
    %v782 = vpop.f32.mrb[0].mxu0
    %v783 = vadd.f32 %v303, %v782
    %v784 = vpop.f32.mrb[0].mxu0
    %785 = vmatprep.mubr.bf16.mxu0 0
    %786 = vmatmul.mubr.bf16.gmra.mrb[0].mxu0 %v459
    %v787 = vpop.f32.mrb[0].mxu0
    %v788 = vadd.f32 %v303, %v787
    %v789 = vpop.f32.mrb[0].mxu0
    %v790 = vpop.f32.mrb[0].mxu0
    %v791 = vadd.f32 %v303, %v790
    %v792 = vpop.f32.mrb[0].mxu0
    %793 = vmatprep.mubr.bf16.mxu0 0
    %794 = vmatmul.mubr.bf16.gmra.mrb[0].mxu0 %v460
    %v795 = vpop.f32.mrb[0].mxu0
    %v796 = vadd.f32 %v303, %v795
    %v797 = vpop.f32.mrb[0].mxu0
    %v798 = vpop.f32.mrb[0].mxu0
    %v799 = vadd.f32 %v303, %v798
    %v800 = vpop.f32.mrb[0].mxu0
    %801 = vmatprep.mubr.bf16.mxu0 0
    %802 = vmatmul.mubr.bf16.gmra.mrb[0].mxu0 %v461
    %v803 = vpop.f32.mrb[0].mxu0
    %v804 = vadd.f32 %v303, %v803
    %v805 = vpop.f32.mrb[0].mxu0
    %v806 = vpop.f32.mrb[0].mxu0
    %v807 = vadd.f32 %v303, %v806
    %v808 = vpop.f32.mrb[0].mxu0
    %809 = vmatprep.mubr.bf16.mxu0 0
    %810 = vmatmul.mubr.bf16.gmra.mrb[0].mxu0 %v462
    %v811 = vpop.f32.mrb[0].mxu0
    %v812 = vadd.f32 %v303, %v811
    %v813 = vpop.f32.mrb[0].mxu0
    %v814 = vpop.f32.mrb[0].mxu0
    %v815 = vadd.f32 %v303, %v814
    %v816 = vpop.f32.mrb[0].mxu0
    %817 = vmatprep.mubr.bf16.mxu0 0
    %818 = vmatmul.mubr.bf16.gmra.mrb[0].mxu0 %v463
    %v819 = vpop.f32.mrb[0].mxu0
    %v820 = vadd.f32 %v303, %v819
    %v821 = vpop.f32.mrb[0].mxu0
    %v822 = vpop.f32.mrb[0].mxu0
    %v823 = vadd.f32 %v303, %v822
    %v824 = vpop.f32.mrb[0].mxu0
    %825 = vmatprep.mubr.bf16.mxu0 0
    %826 = vmatmul.mubr.bf16.gmra.mrb[0].mxu0 %v464
    %v827 = vpop.f32.mrb[0].mxu0
    %v828 = vadd.f32 %v303, %v827
    %v829 = vpop.f32.mrb[0].mxu0
    %v830 = vpop.f32.mrb[0].mxu0
    %v831 = vadd.f32 %v303, %v830
    %v832 = vpop.f32.mrb[0].mxu0
    %833 = vdwg.mxu0
    %v834 = vmax.f32 %v580, 0.0
    %v835 = vmax.f32 %v583, 0.0
    %v836 = vmax.f32 %v588, 0.0
    %v837 = vmax.f32 %v591, 0.0
    %v838 = vmax.f32 %v596, 0.0
    %v839 = vmax.f32 %v599, 0.0
    %v840 = vmax.f32 %v604, 0.0
    %v841 = vmax.f32 %v607, 0.0
    %v842 = vmax.f32 %v612, 0.0
    %v843 = vmax.f32 %v615, 0.0
    %v844 = vmax.f32 %v620, 0.0
    %v845 = vmax.f32 %v623, 0.0
    %v846 = vmax.f32 %v628, 0.0
    %v847 = vmax.f32 %v631, 0.0
    %v848 = vmax.f32 %v636, 0.0
    %v849 = vmax.f32 %v639, 0.0
    %v850 = vmax.f32 %v644, 0.0
    %v851 = vmax.f32 %v647, 0.0
    %v852 = vmax.f32 %v652, 0.0
    %v853 = vmax.f32 %v655, 0.0
    %v854 = vmax.f32 %v660, 0.0
    %v855 = vmax.f32 %v663, 0.0
    %v856 = vmax.f32 %v668, 0.0
    %v857 = vmax.f32 %v671, 0.0
    %v858 = vmax.f32 %v676, 0.0
    %v859 = vmax.f32 %v679, 0.0
    %v860 = vmax.f32 %v684, 0.0
    %v861 = vmax.f32 %v687, 0.0
    %v862 = vmax.f32 %v692, 0.0
    %v863 = vmax.f32 %v695, 0.0
    %v864 = vmax.f32 %v700, 0.0
    %v865 = vmax.f32 %v703, 0.0
    %v866 = vmax.f32 %v708, 0.0
    %v867 = vmax.f32 %v711, 0.0
    %v868 = vmax.f32 %v716, 0.0
    %v869 = vmax.f32 %v719, 0.0
    %v870 = vmax.f32 %v724, 0.0
    %v871 = vmax.f32 %v727, 0.0
    %v872 = vmax.f32 %v732, 0.0
    %v873 = vmax.f32 %v735, 0.0
    %v874 = vmax.f32 %v740, 0.0
    %v875 = vmax.f32 %v743, 0.0
    %v876 = vmax.f32 %v748, 0.0
    %v877 = vmax.f32 %v751, 0.0
    %v878 = vmax.f32 %v756, 0.0
    %v879 = vmax.f32 %v759, 0.0
    %v880 = vmax.f32 %v764, 0.0
    %v881 = vmax.f32 %v767, 0.0
    %v882 = vmax.f32 %v772, 0.0
    %v883 = vmax.f32 %v775, 0.0
    %v884 = vmax.f32 %v780, 0.0
    %v885 = vmax.f32 %v783, 0.0
    %v886 = vmax.f32 %v788, 0.0
    %v887 = vmax.f32 %v791, 0.0
    %v888 = vmax.f32 %v796, 0.0
    %v889 = vmax.f32 %v799, 0.0
    %v890 = vmax.f32 %v804, 0.0
    %v891 = vmax.f32 %v807, 0.0
    %v892 = vmax.f32 %v812, 0.0
    %v893 = vmax.f32 %v815, 0.0
    %v894 = vmax.f32 %v820, 0.0
    %v895 = vmax.f32 %v823, 0.0
    %v896 = vmax.f32 %v828, 0.0
    %v897 = vmax.f32 %v831, 0.0
    %v962 = vcombine.high %v834, %v834
    %v964 = vunpack.c.l.s4 1983009808
    %v965 = vunpack.c.0.s8 %v964
    %v966 = vlaneseq
    %v967 = vshrl.u32 %v966, 7
    %v968 = vsub.s32 %v965, %v967
    %v969 = vrot.slane %v834, %v968
    %v971 = vunpack.c.l.s4 1983009808
    %v972 = vunpack.c.0.s8 %v971
    %v973 = vlaneseq
    %v974 = vshrl.u32 %v973, 7
    %v975 = vsub.s32 %v972, %v974
    %v976 = vrot.slane %v962, %v975
    %v977 = vcombine.high %v969, %v969
    %v978 = vcombine.high %v976, %v976
    %v979 = vcombine.high %v835, %v835
    %v981 = vunpack.c.l.s4 1983009808
    %v982 = vunpack.c.0.s8 %v981
    %v983 = vlaneseq
    %v984 = vshrl.u32 %v983, 7
    %v985 = vsub.s32 %v982, %v984
    %v986 = vrot.slane %v835, %v985
    %v988 = vunpack.c.l.s4 1983009808
    %v989 = vunpack.c.0.s8 %v988
    %v990 = vlaneseq
    %v991 = vshrl.u32 %v990, 7
    %v992 = vsub.s32 %v989, %v991
    %v993 = vrot.slane %v979, %v992
    %v994 = vcombine.high %v986, %v986
    %v995 = vcombine.high %v993, %v993
    %v996 = vcombine.high %v836, %v836
    %v998 = vunpack.c.l.s4 1983009808
    %v999 = vunpack.c.0.s8 %v998
    %v1000 = vlaneseq
    %v1001 = vshrl.u32 %v1000, 7
    %v1002 = vsub.s32 %v999, %v1001
    %v1003 = vrot.slane %v836, %v1002
    %v1005 = vunpack.c.l.s4 1983009808
    %v1006 = vunpack.c.0.s8 %v1005
    %v1007 = vlaneseq
    %v1008 = vshrl.u32 %v1007, 7
    %v1009 = vsub.s32 %v1006, %v1008
    %v1010 = vrot.slane %v996, %v1009
    %v1011 = vcombine.high %v1003, %v1003
    %v1012 = vcombine.high %v1010, %v1010
    %v1013 = vcombine.high %v837, %v837
    %v1015 = vunpack.c.l.s4 1983009808
    %v1016 = vunpack.c.0.s8 %v1015
    %v1017 = vlaneseq
    %v1018 = vshrl.u32 %v1017, 7
    %v1019 = vsub.s32 %v1016, %v1018
    %v1020 = vrot.slane %v837, %v1019
    %v1022 = vunpack.c.l.s4 1983009808
    %v1023 = vunpack.c.0.s8 %v1022
    %v1024 = vlaneseq
    %v1025 = vshrl.u32 %v1024, 7
    %v1026 = vsub.s32 %v1023, %v1025
    %v1027 = vrot.slane %v1013, %v1026
    %v1028 = vcombine.high %v1020, %v1020
    %v1029 = vcombine.high %v1027, %v1027
    %v1030 = vcombine.high %v838, %v838
    %v1032 = vunpack.c.l.s4 1983009808
    %v1033 = vunpack.c.0.s8 %v1032
    %v1034 = vlaneseq
    %v1035 = vshrl.u32 %v1034, 7
    %v1036 = vsub.s32 %v1033, %v1035
    %v1037 = vrot.slane %v838, %v1036
    %v1039 = vunpack.c.l.s4 1983009808
    %v1040 = vunpack.c.0.s8 %v1039
    %v1041 = vlaneseq
    %v1042 = vshrl.u32 %v1041, 7
    %v1043 = vsub.s32 %v1040, %v1042
    %v1044 = vrot.slane %v1030, %v1043
    %v1045 = vcombine.high %v1037, %v1037
    %v1046 = vcombine.high %v1044, %v1044
    %v1047 = vcombine.high %v839, %v839
    %v1049 = vunpack.c.l.s4 1983009808
    %v1050 = vunpack.c.0.s8 %v1049
    %v1051 = vlaneseq
    %v1052 = vshrl.u32 %v1051, 7
    %v1053 = vsub.s32 %v1050, %v1052
    %v1054 = vrot.slane %v839, %v1053
    %v1056 = vunpack.c.l.s4 1983009808
    %v1057 = vunpack.c.0.s8 %v1056
    %v1058 = vlaneseq
    %v1059 = vshrl.u32 %v1058, 7
    %v1060 = vsub.s32 %v1057, %v1059
    %v1061 = vrot.slane %v1047, %v1060
    %v1062 = vcombine.high %v1054, %v1054
    %v1063 = vcombine.high %v1061, %v1061
    %v1064 = vcombine.high %v840, %v840
    %v1066 = vunpack.c.l.s4 1983009808
    %v1067 = vunpack.c.0.s8 %v1066
    %v1068 = vlaneseq
    %v1069 = vshrl.u32 %v1068, 7
    %v1070 = vsub.s32 %v1067, %v1069
    %v1071 = vrot.slane %v840, %v1070
    %v1073 = vunpack.c.l.s4 1983009808
    %v1074 = vunpack.c.0.s8 %v1073
    %v1075 = vlaneseq
    %v1076 = vshrl.u32 %v1075, 7
    %v1077 = vsub.s32 %v1074, %v1076
    %v1078 = vrot.slane %v1064, %v1077
    %v1079 = vcombine.high %v1071, %v1071
    %v1080 = vcombine.high %v1078, %v1078
    %v1081 = vcombine.high %v841, %v841
    %v1083 = vunpack.c.l.s4 1983009808
    %v1084 = vunpack.c.0.s8 %v1083
    %v1085 = vlaneseq
    %v1086 = vshrl.u32 %v1085, 7
    %v1087 = vsub.s32 %v1084, %v1086
    %v1088 = vrot.slane %v841, %v1087
    %v1090 = vunpack.c.l.s4 1983009808
    %v1091 = vunpack.c.0.s8 %v1090
    %v1092 = vlaneseq
    %v1093 = vshrl.u32 %v1092, 7
    %v1094 = vsub.s32 %v1091, %v1093
    %v1095 = vrot.slane %v1081, %v1094
    %v1096 = vcombine.high %v1088, %v1088
    %v1097 = vcombine.high %v1095, %v1095
    %v1098 = vcombine.high %v842, %v842
    %v1100 = vunpack.c.l.s4 1983009808
    %v1101 = vunpack.c.0.s8 %v1100
    %v1102 = vlaneseq
    %v1103 = vshrl.u32 %v1102, 7
    %v1104 = vsub.s32 %v1101, %v1103
    %v1105 = vrot.slane %v842, %v1104
    %v1107 = vunpack.c.l.s4 1983009808
    %v1108 = vunpack.c.0.s8 %v1107
    %v1109 = vlaneseq
    %v1110 = vshrl.u32 %v1109, 7
    %v1111 = vsub.s32 %v1108, %v1110
    %v1112 = vrot.slane %v1098, %v1111
    %v1113 = vcombine.high %v1105, %v1105
    %v1114 = vcombine.high %v1112, %v1112
    %v1115 = vcombine.high %v843, %v843
    %v1117 = vunpack.c.l.s4 1983009808
    %v1118 = vunpack.c.0.s8 %v1117
    %v1119 = vlaneseq
    %v1120 = vshrl.u32 %v1119, 7
    %v1121 = vsub.s32 %v1118, %v1120
    %v1122 = vrot.slane %v843, %v1121
    %v1124 = vunpack.c.l.s4 1983009808
    %v1125 = vunpack.c.0.s8 %v1124
    %v1126 = vlaneseq
    %v1127 = vshrl.u32 %v1126, 7
    %v1128 = vsub.s32 %v1125, %v1127
    %v1129 = vrot.slane %v1115, %v1128
    %v1130 = vcombine.high %v1122, %v1122
    %v1131 = vcombine.high %v1129, %v1129
    %v1132 = vcombine.high %v844, %v844
    %v1134 = vunpack.c.l.s4 1983009808
    %v1135 = vunpack.c.0.s8 %v1134
    %v1136 = vlaneseq
    %v1137 = vshrl.u32 %v1136, 7
    %v1138 = vsub.s32 %v1135, %v1137
    %v1139 = vrot.slane %v844, %v1138
    %v1141 = vunpack.c.l.s4 1983009808
    %v1142 = vunpack.c.0.s8 %v1141
    %v1143 = vlaneseq
    %v1144 = vshrl.u32 %v1143, 7
    %v1145 = vsub.s32 %v1142, %v1144
    %v1146 = vrot.slane %v1132, %v1145
    %v1147 = vcombine.high %v1139, %v1139
    %v1148 = vcombine.high %v1146, %v1146
    %v1149 = vcombine.high %v845, %v845
    %v1151 = vunpack.c.l.s4 1983009808
    %v1152 = vunpack.c.0.s8 %v1151
    %v1153 = vlaneseq
    %v1154 = vshrl.u32 %v1153, 7
    %v1155 = vsub.s32 %v1152, %v1154
    %v1156 = vrot.slane %v845, %v1155
    %v1158 = vunpack.c.l.s4 1983009808
    %v1159 = vunpack.c.0.s8 %v1158
    %v1160 = vlaneseq
    %v1161 = vshrl.u32 %v1160, 7
    %v1162 = vsub.s32 %v1159, %v1161
    %v1163 = vrot.slane %v1149, %v1162
    %v1164 = vcombine.high %v1156, %v1156
    %v1165 = vcombine.high %v1163, %v1163
    %v1166 = vcombine.high %v846, %v846
    %v1168 = vunpack.c.l.s4 1983009808
    %v1169 = vunpack.c.0.s8 %v1168
    %v1170 = vlaneseq
    %v1171 = vshrl.u32 %v1170, 7
    %v1172 = vsub.s32 %v1169, %v1171
    %v1173 = vrot.slane %v846, %v1172
    %v1175 = vunpack.c.l.s4 1983009808
    %v1176 = vunpack.c.0.s8 %v1175
    %v1177 = vlaneseq
    %v1178 = vshrl.u32 %v1177, 7
    %v1179 = vsub.s32 %v1176, %v1178
    %v1180 = vrot.slane %v1166, %v1179
    %v1181 = vcombine.high %v1173, %v1173
    %v1182 = vcombine.high %v1180, %v1180
    %v1183 = vcombine.high %v847, %v847
    %v1185 = vunpack.c.l.s4 1983009808
    %v1186 = vunpack.c.0.s8 %v1185
    %v1187 = vlaneseq
    %v1188 = vshrl.u32 %v1187, 7
    %v1189 = vsub.s32 %v1186, %v1188
    %v1190 = vrot.slane %v847, %v1189
    %v1192 = vunpack.c.l.s4 1983009808
    %v1193 = vunpack.c.0.s8 %v1192
    %v1194 = vlaneseq
    %v1195 = vshrl.u32 %v1194, 7
    %v1196 = vsub.s32 %v1193, %v1195
    %v1197 = vrot.slane %v1183, %v1196
    %v1198 = vcombine.high %v1190, %v1190
    %v1199 = vcombine.high %v1197, %v1197
    %v1200 = vcombine.high %v848, %v848
    %v1202 = vunpack.c.l.s4 1983009808
    %v1203 = vunpack.c.0.s8 %v1202
    %v1204 = vlaneseq
    %v1205 = vshrl.u32 %v1204, 7
    %v1206 = vsub.s32 %v1203, %v1205
    %v1207 = vrot.slane %v848, %v1206
    %v1209 = vunpack.c.l.s4 1983009808
    %v1210 = vunpack.c.0.s8 %v1209
    %v1211 = vlaneseq
    %v1212 = vshrl.u32 %v1211, 7
    %v1213 = vsub.s32 %v1210, %v1212
    %v1214 = vrot.slane %v1200, %v1213
    %v1215 = vcombine.high %v1207, %v1207
    %v1216 = vcombine.high %v1214, %v1214
    %v1217 = vcombine.high %v849, %v849
    %v1219 = vunpack.c.l.s4 1983009808
    %v1220 = vunpack.c.0.s8 %v1219
    %v1221 = vlaneseq
    %v1222 = vshrl.u32 %v1221, 7
    %v1223 = vsub.s32 %v1220, %v1222
    %v1224 = vrot.slane %v849, %v1223
    %v1226 = vunpack.c.l.s4 1983009808
    %v1227 = vunpack.c.0.s8 %v1226
    %v1228 = vlaneseq
    %v1229 = vshrl.u32 %v1228, 7
    %v1230 = vsub.s32 %v1227, %v1229
    %v1231 = vrot.slane %v1217, %v1230
    %v1232 = vcombine.high %v1224, %v1224
    %v1233 = vcombine.high %v1231, %v1231
    %v1234 = vcombine.high %v850, %v850
    %v1236 = vunpack.c.l.s4 1983009808
    %v1237 = vunpack.c.0.s8 %v1236
    %v1238 = vlaneseq
    %v1239 = vshrl.u32 %v1238, 7
    %v1240 = vsub.s32 %v1237, %v1239
    %v1241 = vrot.slane %v850, %v1240
    %v1243 = vunpack.c.l.s4 1983009808
    %v1244 = vunpack.c.0.s8 %v1243
    %v1245 = vlaneseq
    %v1246 = vshrl.u32 %v1245, 7
    %v1247 = vsub.s32 %v1244, %v1246
    %v1248 = vrot.slane %v1234, %v1247
    %v1249 = vcombine.high %v1241, %v1241
    %v1250 = vcombine.high %v1248, %v1248
    %v1251 = vcombine.high %v851, %v851
    %v1253 = vunpack.c.l.s4 1983009808
    %v1254 = vunpack.c.0.s8 %v1253
    %v1255 = vlaneseq
    %v1256 = vshrl.u32 %v1255, 7
    %v1257 = vsub.s32 %v1254, %v1256
    %v1258 = vrot.slane %v851, %v1257
    %v1260 = vunpack.c.l.s4 1983009808
    %v1261 = vunpack.c.0.s8 %v1260
    %v1262 = vlaneseq
    %v1263 = vshrl.u32 %v1262, 7
    %v1264 = vsub.s32 %v1261, %v1263
    %v1265 = vrot.slane %v1251, %v1264
    %v1266 = vcombine.high %v1258, %v1258
    %v1267 = vcombine.high %v1265, %v1265
    %v1268 = vcombine.high %v852, %v852
    %v1270 = vunpack.c.l.s4 1983009808
    %v1271 = vunpack.c.0.s8 %v1270
    %v1272 = vlaneseq
    %v1273 = vshrl.u32 %v1272, 7
    %v1274 = vsub.s32 %v1271, %v1273
    %v1275 = vrot.slane %v852, %v1274
    %v1277 = vunpack.c.l.s4 1983009808
    %v1278 = vunpack.c.0.s8 %v1277
    %v1279 = vlaneseq
    %v1280 = vshrl.u32 %v1279, 7
    %v1281 = vsub.s32 %v1278, %v1280
    %v1282 = vrot.slane %v1268, %v1281
    %v1283 = vcombine.high %v1275, %v1275
    %v1284 = vcombine.high %v1282, %v1282
    %v1285 = vcombine.high %v853, %v853
    %v1287 = vunpack.c.l.s4 1983009808
    %v1288 = vunpack.c.0.s8 %v1287
    %v1289 = vlaneseq
    %v1290 = vshrl.u32 %v1289, 7
    %v1291 = vsub.s32 %v1288, %v1290
    %v1292 = vrot.slane %v853, %v1291
    %v1294 = vunpack.c.l.s4 1983009808
    %v1295 = vunpack.c.0.s8 %v1294
    %v1296 = vlaneseq
    %v1297 = vshrl.u32 %v1296, 7
    %v1298 = vsub.s32 %v1295, %v1297
    %v1299 = vrot.slane %v1285, %v1298
    %v1300 = vcombine.high %v1292, %v1292
    %v1301 = vcombine.high %v1299, %v1299
    %v1302 = vcombine.high %v854, %v854
    %v1304 = vunpack.c.l.s4 1983009808
    %v1305 = vunpack.c.0.s8 %v1304
    %v1306 = vlaneseq
    %v1307 = vshrl.u32 %v1306, 7
    %v1308 = vsub.s32 %v1305, %v1307
    %v1309 = vrot.slane %v854, %v1308
    %v1311 = vunpack.c.l.s4 1983009808
    %v1312 = vunpack.c.0.s8 %v1311
    %v1313 = vlaneseq
    %v1314 = vshrl.u32 %v1313, 7
    %v1315 = vsub.s32 %v1312, %v1314
    %v1316 = vrot.slane %v1302, %v1315
    %v1317 = vcombine.high %v1309, %v1309
    %v1318 = vcombine.high %v1316, %v1316
    %v1319 = vcombine.high %v855, %v855
    %v1321 = vunpack.c.l.s4 1983009808
    %v1322 = vunpack.c.0.s8 %v1321
    %v1323 = vlaneseq
    %v1324 = vshrl.u32 %v1323, 7
    %v1325 = vsub.s32 %v1322, %v1324
    %v1326 = vrot.slane %v855, %v1325
    %v1328 = vunpack.c.l.s4 1983009808
    %v1329 = vunpack.c.0.s8 %v1328
    %v1330 = vlaneseq
    %v1331 = vshrl.u32 %v1330, 7
    %v1332 = vsub.s32 %v1329, %v1331
    %v1333 = vrot.slane %v1319, %v1332
    %v1334 = vcombine.high %v1326, %v1326
    %v1335 = vcombine.high %v1333, %v1333
    %v1336 = vcombine.high %v856, %v856
    %v1338 = vunpack.c.l.s4 1983009808
    %v1339 = vunpack.c.0.s8 %v1338
    %v1340 = vlaneseq
    %v1341 = vshrl.u32 %v1340, 7
    %v1342 = vsub.s32 %v1339, %v1341
    %v1343 = vrot.slane %v856, %v1342
    %v1345 = vunpack.c.l.s4 1983009808
    %v1346 = vunpack.c.0.s8 %v1345
    %v1347 = vlaneseq
    %v1348 = vshrl.u32 %v1347, 7
    %v1349 = vsub.s32 %v1346, %v1348
    %v1350 = vrot.slane %v1336, %v1349
    %v1351 = vcombine.high %v1343, %v1343
    %v1352 = vcombine.high %v1350, %v1350
    %v1353 = vcombine.high %v857, %v857
    %v1355 = vunpack.c.l.s4 1983009808
    %v1356 = vunpack.c.0.s8 %v1355
    %v1357 = vlaneseq
    %v1358 = vshrl.u32 %v1357, 7
    %v1359 = vsub.s32 %v1356, %v1358
    %v1360 = vrot.slane %v857, %v1359
    %v1362 = vunpack.c.l.s4 1983009808
    %v1363 = vunpack.c.0.s8 %v1362
    %v1364 = vlaneseq
    %v1365 = vshrl.u32 %v1364, 7
    %v1366 = vsub.s32 %v1363, %v1365
    %v1367 = vrot.slane %v1353, %v1366
    %v1368 = vcombine.high %v1360, %v1360
    %v1369 = vcombine.high %v1367, %v1367
    %v1370 = vcombine.high %v858, %v858
    %v1372 = vunpack.c.l.s4 1983009808
    %v1373 = vunpack.c.0.s8 %v1372
    %v1374 = vlaneseq
    %v1375 = vshrl.u32 %v1374, 7
    %v1376 = vsub.s32 %v1373, %v1375
    %v1377 = vrot.slane %v858, %v1376
    %v1379 = vunpack.c.l.s4 1983009808
    %v1380 = vunpack.c.0.s8 %v1379
    %v1381 = vlaneseq
    %v1382 = vshrl.u32 %v1381, 7
    %v1383 = vsub.s32 %v1380, %v1382
    %v1384 = vrot.slane %v1370, %v1383
    %v1385 = vcombine.high %v1377, %v1377
    %v1386 = vcombine.high %v1384, %v1384
    %v1387 = vcombine.high %v859, %v859
    %v1389 = vunpack.c.l.s4 1983009808
    %v1390 = vunpack.c.0.s8 %v1389
    %v1391 = vlaneseq
    %v1392 = vshrl.u32 %v1391, 7
    %v1393 = vsub.s32 %v1390, %v1392
    %v1394 = vrot.slane %v859, %v1393
    %v1396 = vunpack.c.l.s4 1983009808
    %v1397 = vunpack.c.0.s8 %v1396
    %v1398 = vlaneseq
    %v1399 = vshrl.u32 %v1398, 7
    %v1400 = vsub.s32 %v1397, %v1399
    %v1401 = vrot.slane %v1387, %v1400
    %v1402 = vcombine.high %v1394, %v1394
    %v1403 = vcombine.high %v1401, %v1401
    %v1404 = vcombine.high %v860, %v860
    %v1406 = vunpack.c.l.s4 1983009808
    %v1407 = vunpack.c.0.s8 %v1406
    %v1408 = vlaneseq
    %v1409 = vshrl.u32 %v1408, 7
    %v1410 = vsub.s32 %v1407, %v1409
    %v1411 = vrot.slane %v860, %v1410
    %v1413 = vunpack.c.l.s4 1983009808
    %v1414 = vunpack.c.0.s8 %v1413
    %v1415 = vlaneseq
    %v1416 = vshrl.u32 %v1415, 7
    %v1417 = vsub.s32 %v1414, %v1416
    %v1418 = vrot.slane %v1404, %v1417
    %v1419 = vcombine.high %v1411, %v1411
    %v1420 = vcombine.high %v1418, %v1418
    %v1421 = vcombine.high %v861, %v861
    %v1423 = vunpack.c.l.s4 1983009808
    %v1424 = vunpack.c.0.s8 %v1423
    %v1425 = vlaneseq
    %v1426 = vshrl.u32 %v1425, 7
    %v1427 = vsub.s32 %v1424, %v1426
    %v1428 = vrot.slane %v861, %v1427
    %v1430 = vunpack.c.l.s4 1983009808
    %v1431 = vunpack.c.0.s8 %v1430
    %v1432 = vlaneseq
    %v1433 = vshrl.u32 %v1432, 7
    %v1434 = vsub.s32 %v1431, %v1433
    %v1435 = vrot.slane %v1421, %v1434
    %v1436 = vcombine.high %v1428, %v1428
    %v1437 = vcombine.high %v1435, %v1435
    %v1438 = vcombine.high %v862, %v862
    %v1440 = vunpack.c.l.s4 1983009808
    %v1441 = vunpack.c.0.s8 %v1440
    %v1442 = vlaneseq
    %v1443 = vshrl.u32 %v1442, 7
    %v1444 = vsub.s32 %v1441, %v1443
    %v1445 = vrot.slane %v862, %v1444
    %v1447 = vunpack.c.l.s4 1983009808
    %v1448 = vunpack.c.0.s8 %v1447
    %v1449 = vlaneseq
    %v1450 = vshrl.u32 %v1449, 7
    %v1451 = vsub.s32 %v1448, %v1450
    %v1452 = vrot.slane %v1438, %v1451
    %v1453 = vcombine.high %v1445, %v1445
    %v1454 = vcombine.high %v1452, %v1452
    %v1455 = vcombine.high %v863, %v863
    %v1457 = vunpack.c.l.s4 1983009808
    %v1458 = vunpack.c.0.s8 %v1457
    %v1459 = vlaneseq
    %v1460 = vshrl.u32 %v1459, 7
    %v1461 = vsub.s32 %v1458, %v1460
    %v1462 = vrot.slane %v863, %v1461
    %v1464 = vunpack.c.l.s4 1983009808
    %v1465 = vunpack.c.0.s8 %v1464
    %v1466 = vlaneseq
    %v1467 = vshrl.u32 %v1466, 7
    %v1468 = vsub.s32 %v1465, %v1467
    %v1469 = vrot.slane %v1455, %v1468
    %v1470 = vcombine.high %v1462, %v1462
    %v1471 = vcombine.high %v1469, %v1469
    %v1472 = vcombine.high %v864, %v864
    %v1474 = vunpack.c.l.s4 1983009808
    %v1475 = vunpack.c.0.s8 %v1474
    %v1476 = vlaneseq
    %v1477 = vshrl.u32 %v1476, 7
    %v1478 = vsub.s32 %v1475, %v1477
    %v1479 = vrot.slane %v864, %v1478
    %v1481 = vunpack.c.l.s4 1983009808
    %v1482 = vunpack.c.0.s8 %v1481
    %v1483 = vlaneseq
    %v1484 = vshrl.u32 %v1483, 7
    %v1485 = vsub.s32 %v1482, %v1484
    %v1486 = vrot.slane %v1472, %v1485
    %v1487 = vcombine.high %v1479, %v1479
    %v1488 = vcombine.high %v1486, %v1486
    %v1489 = vcombine.high %v865, %v865
    %v1491 = vunpack.c.l.s4 1983009808
    %v1492 = vunpack.c.0.s8 %v1491
    %v1493 = vlaneseq
    %v1494 = vshrl.u32 %v1493, 7
    %v1495 = vsub.s32 %v1492, %v1494
    %v1496 = vrot.slane %v865, %v1495
    %v1498 = vunpack.c.l.s4 1983009808
    %v1499 = vunpack.c.0.s8 %v1498
    %v1500 = vlaneseq
    %v1501 = vshrl.u32 %v1500, 7
    %v1502 = vsub.s32 %v1499, %v1501
    %v1503 = vrot.slane %v1489, %v1502
    %v1504 = vcombine.high %v1496, %v1496
    %v1505 = vcombine.high %v1503, %v1503
    %v1506 = vcombine.high %v866, %v866
    %v1508 = vunpack.c.l.s4 1983009808
    %v1509 = vunpack.c.0.s8 %v1508
    %v1510 = vlaneseq
    %v1511 = vshrl.u32 %v1510, 7
    %v1512 = vsub.s32 %v1509, %v1511
    %v1513 = vrot.slane %v866, %v1512
    %v1515 = vunpack.c.l.s4 1983009808
    %v1516 = vunpack.c.0.s8 %v1515
    %v1517 = vlaneseq
    %v1518 = vshrl.u32 %v1517, 7
    %v1519 = vsub.s32 %v1516, %v1518
    %v1520 = vrot.slane %v1506, %v1519
    %v1521 = vcombine.high %v1513, %v1513
    %v1522 = vcombine.high %v1520, %v1520
    %v1523 = vcombine.high %v867, %v867
    %v1525 = vunpack.c.l.s4 1983009808
    %v1526 = vunpack.c.0.s8 %v1525
    %v1527 = vlaneseq
    %v1528 = vshrl.u32 %v1527, 7
    %v1529 = vsub.s32 %v1526, %v1528
    %v1530 = vrot.slane %v867, %v1529
    %v1532 = vunpack.c.l.s4 1983009808
    %v1533 = vunpack.c.0.s8 %v1532
    %v1534 = vlaneseq
    %v1535 = vshrl.u32 %v1534, 7
    %v1536 = vsub.s32 %v1533, %v1535
    %v1537 = vrot.slane %v1523, %v1536
    %v1538 = vcombine.high %v1530, %v1530
    %v1539 = vcombine.high %v1537, %v1537
    %v1540 = vcombine.high %v868, %v868
    %v1542 = vunpack.c.l.s4 1983009808
    %v1543 = vunpack.c.0.s8 %v1542
    %v1544 = vlaneseq
    %v1545 = vshrl.u32 %v1544, 7
    %v1546 = vsub.s32 %v1543, %v1545
    %v1547 = vrot.slane %v868, %v1546
    %v1549 = vunpack.c.l.s4 1983009808
    %v1550 = vunpack.c.0.s8 %v1549
    %v1551 = vlaneseq
    %v1552 = vshrl.u32 %v1551, 7
    %v1553 = vsub.s32 %v1550, %v1552
    %v1554 = vrot.slane %v1540, %v1553
    %v1555 = vcombine.high %v1547, %v1547
    %v1556 = vcombine.high %v1554, %v1554
    %v1557 = vcombine.high %v869, %v869
    %v1559 = vunpack.c.l.s4 1983009808
    %v1560 = vunpack.c.0.s8 %v1559
    %v1561 = vlaneseq
    %v1562 = vshrl.u32 %v1561, 7
    %v1563 = vsub.s32 %v1560, %v1562
    %v1564 = vrot.slane %v869, %v1563
    %v1566 = vunpack.c.l.s4 1983009808
    %v1567 = vunpack.c.0.s8 %v1566
    %v1568 = vlaneseq
    %v1569 = vshrl.u32 %v1568, 7
    %v1570 = vsub.s32 %v1567, %v1569
    %v1571 = vrot.slane %v1557, %v1570
    %v1572 = vcombine.high %v1564, %v1564
    %v1573 = vcombine.high %v1571, %v1571
    %v1574 = vcombine.high %v870, %v870
    %v1576 = vunpack.c.l.s4 1983009808
    %v1577 = vunpack.c.0.s8 %v1576
    %v1578 = vlaneseq
    %v1579 = vshrl.u32 %v1578, 7
    %v1580 = vsub.s32 %v1577, %v1579
    %v1581 = vrot.slane %v870, %v1580
    %v1583 = vunpack.c.l.s4 1983009808
    %v1584 = vunpack.c.0.s8 %v1583
    %v1585 = vlaneseq
    %v1586 = vshrl.u32 %v1585, 7
    %v1587 = vsub.s32 %v1584, %v1586
    %v1588 = vrot.slane %v1574, %v1587
    %v1589 = vcombine.high %v1581, %v1581
    %v1590 = vcombine.high %v1588, %v1588
    %v1591 = vcombine.high %v871, %v871
    %v1593 = vunpack.c.l.s4 1983009808
    %v1594 = vunpack.c.0.s8 %v1593
    %v1595 = vlaneseq
    %v1596 = vshrl.u32 %v1595, 7
    %v1597 = vsub.s32 %v1594, %v1596
    %v1598 = vrot.slane %v871, %v1597
    %v1600 = vunpack.c.l.s4 1983009808
    %v1601 = vunpack.c.0.s8 %v1600
    %v1602 = vlaneseq
    %v1603 = vshrl.u32 %v1602, 7
    %v1604 = vsub.s32 %v1601, %v1603
    %v1605 = vrot.slane %v1591, %v1604
    %v1606 = vcombine.high %v1598, %v1598
    %v1607 = vcombine.high %v1605, %v1605
    %v1608 = vcombine.high %v872, %v872
    %v1610 = vunpack.c.l.s4 1983009808
    %v1611 = vunpack.c.0.s8 %v1610
    %v1612 = vlaneseq
    %v1613 = vshrl.u32 %v1612, 7
    %v1614 = vsub.s32 %v1611, %v1613
    %v1615 = vrot.slane %v872, %v1614
    %v1617 = vunpack.c.l.s4 1983009808
    %v1618 = vunpack.c.0.s8 %v1617
    %v1619 = vlaneseq
    %v1620 = vshrl.u32 %v1619, 7
    %v1621 = vsub.s32 %v1618, %v1620
    %v1622 = vrot.slane %v1608, %v1621
    %v1623 = vcombine.high %v1615, %v1615
    %v1624 = vcombine.high %v1622, %v1622
    %v1625 = vcombine.high %v873, %v873
    %v1627 = vunpack.c.l.s4 1983009808
    %v1628 = vunpack.c.0.s8 %v1627
    %v1629 = vlaneseq
    %v1630 = vshrl.u32 %v1629, 7
    %v1631 = vsub.s32 %v1628, %v1630
    %v1632 = vrot.slane %v873, %v1631
    %v1634 = vunpack.c.l.s4 1983009808
    %v1635 = vunpack.c.0.s8 %v1634
    %v1636 = vlaneseq
    %v1637 = vshrl.u32 %v1636, 7
    %v1638 = vsub.s32 %v1635, %v1637
    %v1639 = vrot.slane %v1625, %v1638
    %v1640 = vcombine.high %v1632, %v1632
    %v1641 = vcombine.high %v1639, %v1639
    %v1642 = vcombine.high %v874, %v874
    %v1644 = vunpack.c.l.s4 1983009808
    %v1645 = vunpack.c.0.s8 %v1644
    %v1646 = vlaneseq
    %v1647 = vshrl.u32 %v1646, 7
    %v1648 = vsub.s32 %v1645, %v1647
    %v1649 = vrot.slane %v874, %v1648
    %v1651 = vunpack.c.l.s4 1983009808
    %v1652 = vunpack.c.0.s8 %v1651
    %v1653 = vlaneseq
    %v1654 = vshrl.u32 %v1653, 7
    %v1655 = vsub.s32 %v1652, %v1654
    %v1656 = vrot.slane %v1642, %v1655
    %v1657 = vcombine.high %v1649, %v1649
    %v1658 = vcombine.high %v1656, %v1656
    %v1659 = vcombine.high %v875, %v875
    %v1661 = vunpack.c.l.s4 1983009808
    %v1662 = vunpack.c.0.s8 %v1661
    %v1663 = vlaneseq
    %v1664 = vshrl.u32 %v1663, 7
    %v1665 = vsub.s32 %v1662, %v1664
    %v1666 = vrot.slane %v875, %v1665
    %v1668 = vunpack.c.l.s4 1983009808
    %v1669 = vunpack.c.0.s8 %v1668
    %v1670 = vlaneseq
    %v1671 = vshrl.u32 %v1670, 7
    %v1672 = vsub.s32 %v1669, %v1671
    %v1673 = vrot.slane %v1659, %v1672
    %v1674 = vcombine.high %v1666, %v1666
    %v1675 = vcombine.high %v1673, %v1673
    %v1676 = vcombine.high %v876, %v876
    %v1678 = vunpack.c.l.s4 1983009808
    %v1679 = vunpack.c.0.s8 %v1678
    %v1680 = vlaneseq
    %v1681 = vshrl.u32 %v1680, 7
    %v1682 = vsub.s32 %v1679, %v1681
    %v1683 = vrot.slane %v876, %v1682
    %v1685 = vunpack.c.l.s4 1983009808
    %v1686 = vunpack.c.0.s8 %v1685
    %v1687 = vlaneseq
    %v1688 = vshrl.u32 %v1687, 7
    %v1689 = vsub.s32 %v1686, %v1688
    %v1690 = vrot.slane %v1676, %v1689
    %v1691 = vcombine.high %v1683, %v1683
    %v1692 = vcombine.high %v1690, %v1690
    %v1693 = vcombine.high %v877, %v877
    %v1695 = vunpack.c.l.s4 1983009808
    %v1696 = vunpack.c.0.s8 %v1695
    %v1697 = vlaneseq
    %v1698 = vshrl.u32 %v1697, 7
    %v1699 = vsub.s32 %v1696, %v1698
    %v1700 = vrot.slane %v877, %v1699
    %v1702 = vunpack.c.l.s4 1983009808
    %v1703 = vunpack.c.0.s8 %v1702
    %v1704 = vlaneseq
    %v1705 = vshrl.u32 %v1704, 7
    %v1706 = vsub.s32 %v1703, %v1705
    %v1707 = vrot.slane %v1693, %v1706
    %v1708 = vcombine.high %v1700, %v1700
    %v1709 = vcombine.high %v1707, %v1707
    %v1710 = vcombine.high %v878, %v878
    %v1712 = vunpack.c.l.s4 1983009808
    %v1713 = vunpack.c.0.s8 %v1712
    %v1714 = vlaneseq
    %v1715 = vshrl.u32 %v1714, 7
    %v1716 = vsub.s32 %v1713, %v1715
    %v1717 = vrot.slane %v878, %v1716
    %v1719 = vunpack.c.l.s4 1983009808
    %v1720 = vunpack.c.0.s8 %v1719
    %v1721 = vlaneseq
    %v1722 = vshrl.u32 %v1721, 7
    %v1723 = vsub.s32 %v1720, %v1722
    %v1724 = vrot.slane %v1710, %v1723
    %v1725 = vcombine.high %v1717, %v1717
    %v1726 = vcombine.high %v1724, %v1724
    %v1727 = vcombine.high %v879, %v879
    %v1729 = vunpack.c.l.s4 1983009808
    %v1730 = vunpack.c.0.s8 %v1729
    %v1731 = vlaneseq
    %v1732 = vshrl.u32 %v1731, 7
    %v1733 = vsub.s32 %v1730, %v1732
    %v1734 = vrot.slane %v879, %v1733
    %v1736 = vunpack.c.l.s4 1983009808
    %v1737 = vunpack.c.0.s8 %v1736
    %v1738 = vlaneseq
    %v1739 = vshrl.u32 %v1738, 7
    %v1740 = vsub.s32 %v1737, %v1739
    %v1741 = vrot.slane %v1727, %v1740
    %v1742 = vcombine.high %v1734, %v1734
    %v1743 = vcombine.high %v1741, %v1741
    %v1744 = vcombine.high %v880, %v880
    %v1746 = vunpack.c.l.s4 1983009808
    %v1747 = vunpack.c.0.s8 %v1746
    %v1748 = vlaneseq
    %v1749 = vshrl.u32 %v1748, 7
    %v1750 = vsub.s32 %v1747, %v1749
    %v1751 = vrot.slane %v880, %v1750
    %v1753 = vunpack.c.l.s4 1983009808
    %v1754 = vunpack.c.0.s8 %v1753
    %v1755 = vlaneseq
    %v1756 = vshrl.u32 %v1755, 7
    %v1757 = vsub.s32 %v1754, %v1756
    %v1758 = vrot.slane %v1744, %v1757
    %v1759 = vcombine.high %v1751, %v1751
    %v1760 = vcombine.high %v1758, %v1758
    %v1761 = vcombine.high %v881, %v881
    %v1763 = vunpack.c.l.s4 1983009808
    %v1764 = vunpack.c.0.s8 %v1763
    %v1765 = vlaneseq
    %v1766 = vshrl.u32 %v1765, 7
    %v1767 = vsub.s32 %v1764, %v1766
    %v1768 = vrot.slane %v881, %v1767
    %v1770 = vunpack.c.l.s4 1983009808
    %v1771 = vunpack.c.0.s8 %v1770
    %v1772 = vlaneseq
    %v1773 = vshrl.u32 %v1772, 7
    %v1774 = vsub.s32 %v1771, %v1773
    %v1775 = vrot.slane %v1761, %v1774
    %v1776 = vcombine.high %v1768, %v1768
    %v1777 = vcombine.high %v1775, %v1775
    %v1778 = vcombine.high %v882, %v882
    %v1780 = vunpack.c.l.s4 1983009808
    %v1781 = vunpack.c.0.s8 %v1780
    %v1782 = vlaneseq
    %v1783 = vshrl.u32 %v1782, 7
    %v1784 = vsub.s32 %v1781, %v1783
    %v1785 = vrot.slane %v882, %v1784
    %v1787 = vunpack.c.l.s4 1983009808
    %v1788 = vunpack.c.0.s8 %v1787
    %v1789 = vlaneseq
    %v1790 = vshrl.u32 %v1789, 7
    %v1791 = vsub.s32 %v1788, %v1790
    %v1792 = vrot.slane %v1778, %v1791
    %v1793 = vcombine.high %v1785, %v1785
    %v1794 = vcombine.high %v1792, %v1792
    %v1795 = vcombine.high %v883, %v883
    %v1797 = vunpack.c.l.s4 1983009808
    %v1798 = vunpack.c.0.s8 %v1797
    %v1799 = vlaneseq
    %v1800 = vshrl.u32 %v1799, 7
    %v1801 = vsub.s32 %v1798, %v1800
    %v1802 = vrot.slane %v883, %v1801
    %v1804 = vunpack.c.l.s4 1983009808
    %v1805 = vunpack.c.0.s8 %v1804
    %v1806 = vlaneseq
    %v1807 = vshrl.u32 %v1806, 7
    %v1808 = vsub.s32 %v1805, %v1807
    %v1809 = vrot.slane %v1795, %v1808
    %v1810 = vcombine.high %v1802, %v1802
    %v1811 = vcombine.high %v1809, %v1809
    %v1812 = vcombine.high %v884, %v884
    %v1814 = vunpack.c.l.s4 1983009808
    %v1815 = vunpack.c.0.s8 %v1814
    %v1816 = vlaneseq
    %v1817 = vshrl.u32 %v1816, 7
    %v1818 = vsub.s32 %v1815, %v1817
    %v1819 = vrot.slane %v884, %v1818
    %v1821 = vunpack.c.l.s4 1983009808
    %v1822 = vunpack.c.0.s8 %v1821
    %v1823 = vlaneseq
    %v1824 = vshrl.u32 %v1823, 7
    %v1825 = vsub.s32 %v1822, %v1824
    %v1826 = vrot.slane %v1812, %v1825
    %v1827 = vcombine.high %v1819, %v1819
    %v1828 = vcombine.high %v1826, %v1826
    %v1829 = vcombine.high %v885, %v885
    %v1831 = vunpack.c.l.s4 1983009808
    %v1832 = vunpack.c.0.s8 %v1831
    %v1833 = vlaneseq
    %v1834 = vshrl.u32 %v1833, 7
    %v1835 = vsub.s32 %v1832, %v1834
    %v1836 = vrot.slane %v885, %v1835
    %v1838 = vunpack.c.l.s4 1983009808
    %v1839 = vunpack.c.0.s8 %v1838
    %v1840 = vlaneseq
    %v1841 = vshrl.u32 %v1840, 7
    %v1842 = vsub.s32 %v1839, %v1841
    %v1843 = vrot.slane %v1829, %v1842
    %v1844 = vcombine.high %v1836, %v1836
    %v1845 = vcombine.high %v1843, %v1843
    %v1846 = vcombine.high %v886, %v886
    %v1848 = vunpack.c.l.s4 1983009808
    %v1849 = vunpack.c.0.s8 %v1848
    %v1850 = vlaneseq
    %v1851 = vshrl.u32 %v1850, 7
    %v1852 = vsub.s32 %v1849, %v1851
    %v1853 = vrot.slane %v886, %v1852
    %v1855 = vunpack.c.l.s4 1983009808
    %v1856 = vunpack.c.0.s8 %v1855
    %v1857 = vlaneseq
    %v1858 = vshrl.u32 %v1857, 7
    %v1859 = vsub.s32 %v1856, %v1858
    %v1860 = vrot.slane %v1846, %v1859
    %v1861 = vcombine.high %v1853, %v1853
    %v1862 = vcombine.high %v1860, %v1860
    %v1863 = vcombine.high %v887, %v887
    %v1865 = vunpack.c.l.s4 1983009808
    %v1866 = vunpack.c.0.s8 %v1865
    %v1867 = vlaneseq
    %v1868 = vshrl.u32 %v1867, 7
    %v1869 = vsub.s32 %v1866, %v1868
    %v1870 = vrot.slane %v887, %v1869
    %v1872 = vunpack.c.l.s4 1983009808
    %v1873 = vunpack.c.0.s8 %v1872
    %v1874 = vlaneseq
    %v1875 = vshrl.u32 %v1874, 7
    %v1876 = vsub.s32 %v1873, %v1875
    %v1877 = vrot.slane %v1863, %v1876
    %v1878 = vcombine.high %v1870, %v1870
    %v1879 = vcombine.high %v1877, %v1877
    %v1880 = vcombine.high %v888, %v888
    %v1882 = vunpack.c.l.s4 1983009808
    %v1883 = vunpack.c.0.s8 %v1882
    %v1884 = vlaneseq
    %v1885 = vshrl.u32 %v1884, 7
    %v1886 = vsub.s32 %v1883, %v1885
    %v1887 = vrot.slane %v888, %v1886
    %v1889 = vunpack.c.l.s4 1983009808
    %v1890 = vunpack.c.0.s8 %v1889
    %v1891 = vlaneseq
    %v1892 = vshrl.u32 %v1891, 7
    %v1893 = vsub.s32 %v1890, %v1892
    %v1894 = vrot.slane %v1880, %v1893
    %v1895 = vcombine.high %v1887, %v1887
    %v1896 = vcombine.high %v1894, %v1894
    %v1897 = vcombine.high %v889, %v889
    %v1899 = vunpack.c.l.s4 1983009808
    %v1900 = vunpack.c.0.s8 %v1899
    %v1901 = vlaneseq
    %v1902 = vshrl.u32 %v1901, 7
    %v1903 = vsub.s32 %v1900, %v1902
    %v1904 = vrot.slane %v889, %v1903
    %v1906 = vunpack.c.l.s4 1983009808
    %v1907 = vunpack.c.0.s8 %v1906
    %v1908 = vlaneseq
    %v1909 = vshrl.u32 %v1908, 7
    %v1910 = vsub.s32 %v1907, %v1909
    %v1911 = vrot.slane %v1897, %v1910
    %v1912 = vcombine.high %v1904, %v1904
    %v1913 = vcombine.high %v1911, %v1911
    %v1914 = vcombine.high %v890, %v890
    %v1916 = vunpack.c.l.s4 1983009808
    %v1917 = vunpack.c.0.s8 %v1916
    %v1918 = vlaneseq
    %v1919 = vshrl.u32 %v1918, 7
    %v1920 = vsub.s32 %v1917, %v1919
    %v1921 = vrot.slane %v890, %v1920
    %v1923 = vunpack.c.l.s4 1983009808
    %v1924 = vunpack.c.0.s8 %v1923
    %v1925 = vlaneseq
    %v1926 = vshrl.u32 %v1925, 7
    %v1927 = vsub.s32 %v1924, %v1926
    %v1928 = vrot.slane %v1914, %v1927
    %v1929 = vcombine.high %v1921, %v1921
    %v1930 = vcombine.high %v1928, %v1928
    %v1931 = vcombine.high %v891, %v891
    %v1933 = vunpack.c.l.s4 1983009808
    %v1934 = vunpack.c.0.s8 %v1933
    %v1935 = vlaneseq
    %v1936 = vshrl.u32 %v1935, 7
    %v1937 = vsub.s32 %v1934, %v1936
    %v1938 = vrot.slane %v891, %v1937
    %v1940 = vunpack.c.l.s4 1983009808
    %v1941 = vunpack.c.0.s8 %v1940
    %v1942 = vlaneseq
    %v1943 = vshrl.u32 %v1942, 7
    %v1944 = vsub.s32 %v1941, %v1943
    %v1945 = vrot.slane %v1931, %v1944
    %v1946 = vcombine.high %v1938, %v1938
    %v1947 = vcombine.high %v1945, %v1945
    %v1948 = vcombine.high %v892, %v892
    %v1950 = vunpack.c.l.s4 1983009808
    %v1951 = vunpack.c.0.s8 %v1950
    %v1952 = vlaneseq
    %v1953 = vshrl.u32 %v1952, 7
    %v1954 = vsub.s32 %v1951, %v1953
    %v1955 = vrot.slane %v892, %v1954
    %v1957 = vunpack.c.l.s4 1983009808
    %v1958 = vunpack.c.0.s8 %v1957
    %v1959 = vlaneseq
    %v1960 = vshrl.u32 %v1959, 7
    %v1961 = vsub.s32 %v1958, %v1960
    %v1962 = vrot.slane %v1948, %v1961
    %v1963 = vcombine.high %v1955, %v1955
    %v1964 = vcombine.high %v1962, %v1962
    %v1965 = vcombine.high %v893, %v893
    %v1967 = vunpack.c.l.s4 1983009808
    %v1968 = vunpack.c.0.s8 %v1967
    %v1969 = vlaneseq
    %v1970 = vshrl.u32 %v1969, 7
    %v1971 = vsub.s32 %v1968, %v1970
    %v1972 = vrot.slane %v893, %v1971
    %v1974 = vunpack.c.l.s4 1983009808
    %v1975 = vunpack.c.0.s8 %v1974
    %v1976 = vlaneseq
    %v1977 = vshrl.u32 %v1976, 7
    %v1978 = vsub.s32 %v1975, %v1977
    %v1979 = vrot.slane %v1965, %v1978
    %v1980 = vcombine.high %v1972, %v1972
    %v1981 = vcombine.high %v1979, %v1979
    %v1982 = vcombine.high %v894, %v894
    %v1984 = vunpack.c.l.s4 1983009808
    %v1985 = vunpack.c.0.s8 %v1984
    %v1986 = vlaneseq
    %v1987 = vshrl.u32 %v1986, 7
    %v1988 = vsub.s32 %v1985, %v1987
    %v1989 = vrot.slane %v894, %v1988
    %v1991 = vunpack.c.l.s4 1983009808
    %v1992 = vunpack.c.0.s8 %v1991
    %v1993 = vlaneseq
    %v1994 = vshrl.u32 %v1993, 7
    %v1995 = vsub.s32 %v1992, %v1994
    %v1996 = vrot.slane %v1982, %v1995
    %v1997 = vcombine.high %v1989, %v1989
    %v1998 = vcombine.high %v1996, %v1996
    %v1999 = vcombine.high %v895, %v895
    %v2001 = vunpack.c.l.s4 1983009808
    %v2002 = vunpack.c.0.s8 %v2001
    %v2003 = vlaneseq
    %v2004 = vshrl.u32 %v2003, 7
    %v2005 = vsub.s32 %v2002, %v2004
    %v2006 = vrot.slane %v895, %v2005
    %v2008 = vunpack.c.l.s4 1983009808
    %v2009 = vunpack.c.0.s8 %v2008
    %v2010 = vlaneseq
    %v2011 = vshrl.u32 %v2010, 7
    %v2012 = vsub.s32 %v2009, %v2011
    %v2013 = vrot.slane %v1999, %v2012
    %v2014 = vcombine.high %v2006, %v2006
    %v2015 = vcombine.high %v2013, %v2013
    %v2016 = vcombine.high %v896, %v896
    %v2018 = vunpack.c.l.s4 1983009808
    %v2019 = vunpack.c.0.s8 %v2018
    %v2020 = vlaneseq
    %v2021 = vshrl.u32 %v2020, 7
    %v2022 = vsub.s32 %v2019, %v2021
    %v2023 = vrot.slane %v896, %v2022
    %v2025 = vunpack.c.l.s4 1983009808
    %v2026 = vunpack.c.0.s8 %v2025
    %v2027 = vlaneseq
    %v2028 = vshrl.u32 %v2027, 7
    %v2029 = vsub.s32 %v2026, %v2028
    %v2030 = vrot.slane %v2016, %v2029
    %v2031 = vcombine.high %v2023, %v2023
    %v2032 = vcombine.high %v2030, %v2030
    %v2033 = vcombine.high %v897, %v897
    %v2035 = vunpack.c.l.s4 1983009808
    %v2036 = vunpack.c.0.s8 %v2035
    %v2037 = vlaneseq
    %v2038 = vshrl.u32 %v2037, 7
    %v2039 = vsub.s32 %v2036, %v2038
    %v2040 = vrot.slane %v897, %v2039
    %v2042 = vunpack.c.l.s4 1983009808
    %v2043 = vunpack.c.0.s8 %v2042
    %v2044 = vlaneseq
    %v2045 = vshrl.u32 %v2044, 7
    %v2046 = vsub.s32 %v2043, %v2045
    %v2047 = vrot.slane %v2033, %v2046
    %v2048 = vcombine.high %v2040, %v2040
    %v2049 = vcombine.high %v2047, %v2047
    %v2306 = vrot.slane %v969, 7
    %v2307 = vrot.slane %v2306, 2
    %v2308 = vrot.slane %v977, 7
    %v2309 = vrot.slane %v2308, 2
    %v2310 = vrot.slane %v976, 7
    %v2311 = vrot.slane %v2310, 2
    %v2312 = vrot.slane %v978, 7
    %v2313 = vrot.slane %v2312, 2
    %v2314 = vrot.slane %v986, 7
    %v2315 = vrot.slane %v2314, 2
    %v2316 = vrot.slane %v994, 7
    %v2317 = vrot.slane %v2316, 2
    %v2318 = vrot.slane %v993, 7
    %v2319 = vrot.slane %v2318, 2
    %v2320 = vrot.slane %v995, 7
    %v2321 = vrot.slane %v2320, 2
    %v2322 = vrot.slane %v1003, 7
    %v2323 = vrot.slane %v2322, 2
    %v2324 = vrot.slane %v1011, 7
    %v2325 = vrot.slane %v2324, 2
    %v2326 = vrot.slane %v1010, 7
    %v2327 = vrot.slane %v2326, 2
    %v2328 = vrot.slane %v1012, 7
    %v2329 = vrot.slane %v2328, 2
    %v2330 = vrot.slane %v1020, 7
    %v2331 = vrot.slane %v2330, 2
    %v2332 = vrot.slane %v1028, 7
    %v2333 = vrot.slane %v2332, 2
    %v2334 = vrot.slane %v1027, 7
    %v2335 = vrot.slane %v2334, 2
    %v2336 = vrot.slane %v1029, 7
    %v2337 = vrot.slane %v2336, 2
    %v2338 = vrot.slane %v1037, 7
    %v2339 = vrot.slane %v2338, 2
    %v2340 = vrot.slane %v1045, 7
    %v2341 = vrot.slane %v2340, 2
    %v2342 = vrot.slane %v1044, 7
    %v2343 = vrot.slane %v2342, 2
    %v2344 = vrot.slane %v1046, 7
    %v2345 = vrot.slane %v2344, 2
    %v2346 = vrot.slane %v1054, 7
    %v2347 = vrot.slane %v2346, 2
    %v2348 = vrot.slane %v1062, 7
    %v2349 = vrot.slane %v2348, 2
    %v2350 = vrot.slane %v1061, 7
    %v2351 = vrot.slane %v2350, 2
    %v2352 = vrot.slane %v1063, 7
    %v2353 = vrot.slane %v2352, 2
    %v2354 = vrot.slane %v1071, 7
    %v2355 = vrot.slane %v2354, 2
    %v2356 = vrot.slane %v1079, 7
    %v2357 = vrot.slane %v2356, 2
    %v2358 = vrot.slane %v1078, 7
    %v2359 = vrot.slane %v2358, 2
    %v2360 = vrot.slane %v1080, 7
    %v2361 = vrot.slane %v2360, 2
    %v2362 = vrot.slane %v1088, 7
    %v2363 = vrot.slane %v2362, 2
    %v2364 = vrot.slane %v1096, 7
    %v2365 = vrot.slane %v2364, 2
    %v2366 = vrot.slane %v1095, 7
    %v2367 = vrot.slane %v2366, 2
    %v2368 = vrot.slane %v1097, 7
    %v2369 = vrot.slane %v2368, 2
    %v2370 = vrot.slane %v1105, 7
    %v2371 = vrot.slane %v2370, 2
    %v2372 = vrot.slane %v1113, 7
    %v2373 = vrot.slane %v2372, 2
    %v2374 = vrot.slane %v1112, 7
    %v2375 = vrot.slane %v2374, 2
    %v2376 = vrot.slane %v1114, 7
    %v2377 = vrot.slane %v2376, 2
    %v2378 = vrot.slane %v1122, 7
    %v2379 = vrot.slane %v2378, 2
    %v2380 = vrot.slane %v1130, 7
    %v2381 = vrot.slane %v2380, 2
    %v2382 = vrot.slane %v1129, 7
    %v2383 = vrot.slane %v2382, 2
    %v2384 = vrot.slane %v1131, 7
    %v2385 = vrot.slane %v2384, 2
    %v2386 = vrot.slane %v1139, 7
    %v2387 = vrot.slane %v2386, 2
    %v2388 = vrot.slane %v1147, 7
    %v2389 = vrot.slane %v2388, 2
    %v2390 = vrot.slane %v1146, 7
    %v2391 = vrot.slane %v2390, 2
    %v2392 = vrot.slane %v1148, 7
    %v2393 = vrot.slane %v2392, 2
    %v2394 = vrot.slane %v1156, 7
    %v2395 = vrot.slane %v2394, 2
    %v2396 = vrot.slane %v1164, 7
    %v2397 = vrot.slane %v2396, 2
    %v2398 = vrot.slane %v1163, 7
    %v2399 = vrot.slane %v2398, 2
    %v2400 = vrot.slane %v1165, 7
    %v2401 = vrot.slane %v2400, 2
    %v2402 = vrot.slane %v1173, 7
    %v2403 = vrot.slane %v2402, 2
    %v2404 = vrot.slane %v1181, 7
    %v2405 = vrot.slane %v2404, 2
    %v2406 = vrot.slane %v1180, 7
    %v2407 = vrot.slane %v2406, 2
    %v2408 = vrot.slane %v1182, 7
    %v2409 = vrot.slane %v2408, 2
    %v2410 = vrot.slane %v1190, 7
    %v2411 = vrot.slane %v2410, 2
    %v2412 = vrot.slane %v1198, 7
    %v2413 = vrot.slane %v2412, 2
    %v2414 = vrot.slane %v1197, 7
    %v2415 = vrot.slane %v2414, 2
    %v2416 = vrot.slane %v1199, 7
    %v2417 = vrot.slane %v2416, 2
    %v2418 = vrot.slane %v1207, 7
    %v2419 = vrot.slane %v2418, 2
    %v2420 = vrot.slane %v1215, 7
    %v2421 = vrot.slane %v2420, 2
    %v2422 = vrot.slane %v1214, 7
    %v2423 = vrot.slane %v2422, 2
    %v2424 = vrot.slane %v1216, 7
    %v2425 = vrot.slane %v2424, 2
    %v2426 = vrot.slane %v1224, 7
    %v2427 = vrot.slane %v2426, 2
    %v2428 = vrot.slane %v1232, 7
    %v2429 = vrot.slane %v2428, 2
    %v2430 = vrot.slane %v1231, 7
    %v2431 = vrot.slane %v2430, 2
    %v2432 = vrot.slane %v1233, 7
    %v2433 = vrot.slane %v2432, 2
    %v2434 = vrot.slane %v1241, 7
    %v2435 = vrot.slane %v2434, 2
    %v2436 = vrot.slane %v1249, 7
    %v2437 = vrot.slane %v2436, 2
    %v2438 = vrot.slane %v1248, 7
    %v2439 = vrot.slane %v2438, 2
    %v2440 = vrot.slane %v1250, 7
    %v2441 = vrot.slane %v2440, 2
    %v2442 = vrot.slane %v1258, 7
    %v2443 = vrot.slane %v2442, 2
    %v2444 = vrot.slane %v1266, 7
    %v2445 = vrot.slane %v2444, 2
    %v2446 = vrot.slane %v1265, 7
    %v2447 = vrot.slane %v2446, 2
    %v2448 = vrot.slane %v1267, 7
    %v2449 = vrot.slane %v2448, 2
    %v2450 = vrot.slane %v1275, 7
    %v2451 = vrot.slane %v2450, 2
    %v2452 = vrot.slane %v1283, 7
    %v2453 = vrot.slane %v2452, 2
    %v2454 = vrot.slane %v1282, 7
    %v2455 = vrot.slane %v2454, 2
    %v2456 = vrot.slane %v1284, 7
    %v2457 = vrot.slane %v2456, 2
    %v2458 = vrot.slane %v1292, 7
    %v2459 = vrot.slane %v2458, 2
    %v2460 = vrot.slane %v1300, 7
    %v2461 = vrot.slane %v2460, 2
    %v2462 = vrot.slane %v1299, 7
    %v2463 = vrot.slane %v2462, 2
    %v2464 = vrot.slane %v1301, 7
    %v2465 = vrot.slane %v2464, 2
    %v2466 = vrot.slane %v1309, 7
    %v2467 = vrot.slane %v2466, 2
    %v2468 = vrot.slane %v1317, 7
    %v2469 = vrot.slane %v2468, 2
    %v2470 = vrot.slane %v1316, 7
    %v2471 = vrot.slane %v2470, 2
    %v2472 = vrot.slane %v1318, 7
    %v2473 = vrot.slane %v2472, 2
    %v2474 = vrot.slane %v1326, 7
    %v2475 = vrot.slane %v2474, 2
    %v2476 = vrot.slane %v1334, 7
    %v2477 = vrot.slane %v2476, 2
    %v2478 = vrot.slane %v1333, 7
    %v2479 = vrot.slane %v2478, 2
    %v2480 = vrot.slane %v1335, 7
    %v2481 = vrot.slane %v2480, 2
    %v2482 = vrot.slane %v1343, 7
    %v2483 = vrot.slane %v2482, 2
    %v2484 = vrot.slane %v1351, 7
    %v2485 = vrot.slane %v2484, 2
    %v2486 = vrot.slane %v1350, 7
    %v2487 = vrot.slane %v2486, 2
    %v2488 = vrot.slane %v1352, 7
    %v2489 = vrot.slane %v2488, 2
    %v2490 = vrot.slane %v1360, 7
    %v2491 = vrot.slane %v2490, 2
    %v2492 = vrot.slane %v1368, 7
    %v2493 = vrot.slane %v2492, 2
    %v2494 = vrot.slane %v1367, 7
    %v2495 = vrot.slane %v2494, 2
    %v2496 = vrot.slane %v1369, 7
    %v2497 = vrot.slane %v2496, 2
    %v2498 = vrot.slane %v1377, 7
    %v2499 = vrot.slane %v2498, 2
    %v2500 = vrot.slane %v1385, 7
    %v2501 = vrot.slane %v2500, 2
    %v2502 = vrot.slane %v1384, 7
    %v2503 = vrot.slane %v2502, 2
    %v2504 = vrot.slane %v1386, 7
    %v2505 = vrot.slane %v2504, 2
    %v2506 = vrot.slane %v1394, 7
    %v2507 = vrot.slane %v2506, 2
    %v2508 = vrot.slane %v1402, 7
    %v2509 = vrot.slane %v2508, 2
    %v2510 = vrot.slane %v1401, 7
    %v2511 = vrot.slane %v2510, 2
    %v2512 = vrot.slane %v1403, 7
    %v2513 = vrot.slane %v2512, 2
    %v2514 = vrot.slane %v1411, 7
    %v2515 = vrot.slane %v2514, 2
    %v2516 = vrot.slane %v1419, 7
    %v2517 = vrot.slane %v2516, 2
    %v2518 = vrot.slane %v1418, 7
    %v2519 = vrot.slane %v2518, 2
    %v2520 = vrot.slane %v1420, 7
    %v2521 = vrot.slane %v2520, 2
    %v2522 = vrot.slane %v1428, 7
    %v2523 = vrot.slane %v2522, 2
    %v2524 = vrot.slane %v1436, 7
    %v2525 = vrot.slane %v2524, 2
    %v2526 = vrot.slane %v1435, 7
    %v2527 = vrot.slane %v2526, 2
    %v2528 = vrot.slane %v1437, 7
    %v2529 = vrot.slane %v2528, 2
    %v2530 = vrot.slane %v1445, 7
    %v2531 = vrot.slane %v2530, 2
    %v2532 = vrot.slane %v1453, 7
    %v2533 = vrot.slane %v2532, 2
    %v2534 = vrot.slane %v1452, 7
    %v2535 = vrot.slane %v2534, 2
    %v2536 = vrot.slane %v1454, 7
    %v2537 = vrot.slane %v2536, 2
    %v2538 = vrot.slane %v1462, 7
    %v2539 = vrot.slane %v2538, 2
    %v2540 = vrot.slane %v1470, 7
    %v2541 = vrot.slane %v2540, 2
    %v2542 = vrot.slane %v1469, 7
    %v2543 = vrot.slane %v2542, 2
    %v2544 = vrot.slane %v1471, 7
    %v2545 = vrot.slane %v2544, 2
    %v2546 = vrot.slane %v1479, 7
    %v2547 = vrot.slane %v2546, 2
    %v2548 = vrot.slane %v1487, 7
    %v2549 = vrot.slane %v2548, 2
    %v2550 = vrot.slane %v1486, 7
    %v2551 = vrot.slane %v2550, 2
    %v2552 = vrot.slane %v1488, 7
    %v2553 = vrot.slane %v2552, 2
    %v2554 = vrot.slane %v1496, 7
    %v2555 = vrot.slane %v2554, 2
    %v2556 = vrot.slane %v1504, 7
    %v2557 = vrot.slane %v2556, 2
    %v2558 = vrot.slane %v1503, 7
    %v2559 = vrot.slane %v2558, 2
    %v2560 = vrot.slane %v1505, 7
    %v2561 = vrot.slane %v2560, 2
    %v2562 = vrot.slane %v1513, 7
    %v2563 = vrot.slane %v2562, 2
    %v2564 = vrot.slane %v1521, 7
    %v2565 = vrot.slane %v2564, 2
    %v2566 = vrot.slane %v1520, 7
    %v2567 = vrot.slane %v2566, 2
    %v2568 = vrot.slane %v1522, 7
    %v2569 = vrot.slane %v2568, 2
    %v2570 = vrot.slane %v1530, 7
    %v2571 = vrot.slane %v2570, 2
    %v2572 = vrot.slane %v1538, 7
    %v2573 = vrot.slane %v2572, 2
    %v2574 = vrot.slane %v1537, 7
    %v2575 = vrot.slane %v2574, 2
    %v2576 = vrot.slane %v1539, 7
    %v2577 = vrot.slane %v2576, 2
    %v2578 = vrot.slane %v1547, 7
    %v2579 = vrot.slane %v2578, 2
    %v2580 = vrot.slane %v1555, 7
    %v2581 = vrot.slane %v2580, 2
    %v2582 = vrot.slane %v1554, 7
    %v2583 = vrot.slane %v2582, 2
    %v2584 = vrot.slane %v1556, 7
    %v2585 = vrot.slane %v2584, 2
    %v2586 = vrot.slane %v1564, 7
    %v2587 = vrot.slane %v2586, 2
    %v2588 = vrot.slane %v1572, 7
    %v2589 = vrot.slane %v2588, 2
    %v2590 = vrot.slane %v1571, 7
    %v2591 = vrot.slane %v2590, 2
    %v2592 = vrot.slane %v1573, 7
    %v2593 = vrot.slane %v2592, 2
    %v2594 = vrot.slane %v1581, 7
    %v2595 = vrot.slane %v2594, 2
    %v2596 = vrot.slane %v1589, 7
    %v2597 = vrot.slane %v2596, 2
    %v2598 = vrot.slane %v1588, 7
    %v2599 = vrot.slane %v2598, 2
    %v2600 = vrot.slane %v1590, 7
    %v2601 = vrot.slane %v2600, 2
    %v2602 = vrot.slane %v1598, 7
    %v2603 = vrot.slane %v2602, 2
    %v2604 = vrot.slane %v1606, 7
    %v2605 = vrot.slane %v2604, 2
    %v2606 = vrot.slane %v1605, 7
    %v2607 = vrot.slane %v2606, 2
    %v2608 = vrot.slane %v1607, 7
    %v2609 = vrot.slane %v2608, 2
    %v2610 = vrot.slane %v1615, 7
    %v2611 = vrot.slane %v2610, 2
    %v2612 = vrot.slane %v1623, 7
    %v2613 = vrot.slane %v2612, 2
    %v2614 = vrot.slane %v1622, 7
    %v2615 = vrot.slane %v2614, 2
    %v2616 = vrot.slane %v1624, 7
    %v2617 = vrot.slane %v2616, 2
    %v2618 = vrot.slane %v1632, 7
    %v2619 = vrot.slane %v2618, 2
    %v2620 = vrot.slane %v1640, 7
    %v2621 = vrot.slane %v2620, 2
    %v2622 = vrot.slane %v1639, 7
    %v2623 = vrot.slane %v2622, 2
    %v2624 = vrot.slane %v1641, 7
    %v2625 = vrot.slane %v2624, 2
    %v2626 = vrot.slane %v1649, 7
    %v2627 = vrot.slane %v2626, 2
    %v2628 = vrot.slane %v1657, 7
    %v2629 = vrot.slane %v2628, 2
    %v2630 = vrot.slane %v1656, 7
    %v2631 = vrot.slane %v2630, 2
    %v2632 = vrot.slane %v1658, 7
    %v2633 = vrot.slane %v2632, 2
    %v2634 = vrot.slane %v1666, 7
    %v2635 = vrot.slane %v2634, 2
    %v2636 = vrot.slane %v1674, 7
    %v2637 = vrot.slane %v2636, 2
    %v2638 = vrot.slane %v1673, 7
    %v2639 = vrot.slane %v2638, 2
    %v2640 = vrot.slane %v1675, 7
    %v2641 = vrot.slane %v2640, 2
    %v2642 = vrot.slane %v1683, 7
    %v2643 = vrot.slane %v2642, 2
    %v2644 = vrot.slane %v1691, 7
    %v2645 = vrot.slane %v2644, 2
    %v2646 = vrot.slane %v1690, 7
    %v2647 = vrot.slane %v2646, 2
    %v2648 = vrot.slane %v1692, 7
    %v2649 = vrot.slane %v2648, 2
    %v2650 = vrot.slane %v1700, 7
    %v2651 = vrot.slane %v2650, 2
    %v2652 = vrot.slane %v1708, 7
    %v2653 = vrot.slane %v2652, 2
    %v2654 = vrot.slane %v1707, 7
    %v2655 = vrot.slane %v2654, 2
    %v2656 = vrot.slane %v1709, 7
    %v2657 = vrot.slane %v2656, 2
    %v2658 = vrot.slane %v1717, 7
    %v2659 = vrot.slane %v2658, 2
    %v2660 = vrot.slane %v1725, 7
    %v2661 = vrot.slane %v2660, 2
    %v2662 = vrot.slane %v1724, 7
    %v2663 = vrot.slane %v2662, 2
    %v2664 = vrot.slane %v1726, 7
    %v2665 = vrot.slane %v2664, 2
    %v2666 = vrot.slane %v1734, 7
    %v2667 = vrot.slane %v2666, 2
    %v2668 = vrot.slane %v1742, 7
    %v2669 = vrot.slane %v2668, 2
    %v2670 = vrot.slane %v1741, 7
    %v2671 = vrot.slane %v2670, 2
    %v2672 = vrot.slane %v1743, 7
    %v2673 = vrot.slane %v2672, 2
    %v2674 = vrot.slane %v1751, 7
    %v2675 = vrot.slane %v2674, 2
    %v2676 = vrot.slane %v1759, 7
    %v2677 = vrot.slane %v2676, 2
    %v2678 = vrot.slane %v1758, 7
    %v2679 = vrot.slane %v2678, 2
    %v2680 = vrot.slane %v1760, 7
    %v2681 = vrot.slane %v2680, 2
    %v2682 = vrot.slane %v1768, 7
    %v2683 = vrot.slane %v2682, 2
    %v2684 = vrot.slane %v1776, 7
    %v2685 = vrot.slane %v2684, 2
    %v2686 = vrot.slane %v1775, 7
    %v2687 = vrot.slane %v2686, 2
    %v2688 = vrot.slane %v1777, 7
    %v2689 = vrot.slane %v2688, 2
    %v2690 = vrot.slane %v1785, 7
    %v2691 = vrot.slane %v2690, 2
    %v2692 = vrot.slane %v1793, 7
    %v2693 = vrot.slane %v2692, 2
    %v2694 = vrot.slane %v1792, 7
    %v2695 = vrot.slane %v2694, 2
    %v2696 = vrot.slane %v1794, 7
    %v2697 = vrot.slane %v2696, 2
    %v2698 = vrot.slane %v1802, 7
    %v2699 = vrot.slane %v2698, 2
    %v2700 = vrot.slane %v1810, 7
    %v2701 = vrot.slane %v2700, 2
    %v2702 = vrot.slane %v1809, 7
    %v2703 = vrot.slane %v2702, 2
    %v2704 = vrot.slane %v1811, 7
    %v2705 = vrot.slane %v2704, 2
    %v2706 = vrot.slane %v1819, 7
    %v2707 = vrot.slane %v2706, 2
    %v2708 = vrot.slane %v1827, 7
    %v2709 = vrot.slane %v2708, 2
    %v2710 = vrot.slane %v1826, 7
    %v2711 = vrot.slane %v2710, 2
    %v2712 = vrot.slane %v1828, 7
    %v2713 = vrot.slane %v2712, 2
    %v2714 = vrot.slane %v1836, 7
    %v2715 = vrot.slane %v2714, 2
    %v2716 = vrot.slane %v1844, 7
    %v2717 = vrot.slane %v2716, 2
    %v2718 = vrot.slane %v1843, 7
    %v2719 = vrot.slane %v2718, 2
    %v2720 = vrot.slane %v1845, 7
    %v2721 = vrot.slane %v2720, 2
    %v2722 = vrot.slane %v1853, 7
    %v2723 = vrot.slane %v2722, 2
    %v2724 = vrot.slane %v1861, 7
    %v2725 = vrot.slane %v2724, 2
    %v2726 = vrot.slane %v1860, 7
    %v2727 = vrot.slane %v2726, 2
    %v2728 = vrot.slane %v1862, 7
    %v2729 = vrot.slane %v2728, 2
    %v2730 = vrot.slane %v1870, 7
    %v2731 = vrot.slane %v2730, 2
    %v2732 = vrot.slane %v1878, 7
    %v2733 = vrot.slane %v2732, 2
    %v2734 = vrot.slane %v1877, 7
    %v2735 = vrot.slane %v2734, 2
    %v2736 = vrot.slane %v1879, 7
    %v2737 = vrot.slane %v2736, 2
    %v2738 = vrot.slane %v1887, 7
    %v2739 = vrot.slane %v2738, 2
    %v2740 = vrot.slane %v1895, 7
    %v2741 = vrot.slane %v2740, 2
    %v2742 = vrot.slane %v1894, 7
    %v2743 = vrot.slane %v2742, 2
    %v2744 = vrot.slane %v1896, 7
    %v2745 = vrot.slane %v2744, 2
    %v2746 = vrot.slane %v1904, 7
    %v2747 = vrot.slane %v2746, 2
    %v2748 = vrot.slane %v1912, 7
    %v2749 = vrot.slane %v2748, 2
    %v2750 = vrot.slane %v1911, 7
    %v2751 = vrot.slane %v2750, 2
    %v2752 = vrot.slane %v1913, 7
    %v2753 = vrot.slane %v2752, 2
    %v2754 = vrot.slane %v1921, 7
    %v2755 = vrot.slane %v2754, 2
    %v2756 = vrot.slane %v1929, 7
    %v2757 = vrot.slane %v2756, 2
    %v2758 = vrot.slane %v1928, 7
    %v2759 = vrot.slane %v2758, 2
    %v2760 = vrot.slane %v1930, 7
    %v2761 = vrot.slane %v2760, 2
    %v2762 = vrot.slane %v1938, 7
    %v2763 = vrot.slane %v2762, 2
    %v2764 = vrot.slane %v1946, 7
    %v2765 = vrot.slane %v2764, 2
    %v2766 = vrot.slane %v1945, 7
    %v2767 = vrot.slane %v2766, 2
    %v2768 = vrot.slane %v1947, 7
    %v2769 = vrot.slane %v2768, 2
    %v2770 = vrot.slane %v1955, 7
    %v2771 = vrot.slane %v2770, 2
    %v2772 = vrot.slane %v1963, 7
    %v2773 = vrot.slane %v2772, 2
    %v2774 = vrot.slane %v1962, 7
    %v2775 = vrot.slane %v2774, 2
    %v2776 = vrot.slane %v1964, 7
    %v2777 = vrot.slane %v2776, 2
    %v2778 = vrot.slane %v1972, 7
    %v2779 = vrot.slane %v2778, 2
    %v2780 = vrot.slane %v1980, 7
    %v2781 = vrot.slane %v2780, 2
    %v2782 = vrot.slane %v1979, 7
    %v2783 = vrot.slane %v2782, 2
    %v2784 = vrot.slane %v1981, 7
    %v2785 = vrot.slane %v2784, 2
    %v2786 = vrot.slane %v1989, 7
    %v2787 = vrot.slane %v2786, 2
    %v2788 = vrot.slane %v1997, 7
    %v2789 = vrot.slane %v2788, 2
    %v2790 = vrot.slane %v1996, 7
    %v2791 = vrot.slane %v2790, 2
    %v2792 = vrot.slane %v1998, 7
    %v2793 = vrot.slane %v2792, 2
    %v2794 = vrot.slane %v2006, 7
    %v2795 = vrot.slane %v2794, 2
    %v2796 = vrot.slane %v2014, 7
    %v2797 = vrot.slane %v2796, 2
    %v2798 = vrot.slane %v2013, 7
    %v2799 = vrot.slane %v2798, 2
    %v2800 = vrot.slane %v2015, 7
    %v2801 = vrot.slane %v2800, 2
    %v2802 = vrot.slane %v2023, 7
    %v2803 = vrot.slane %v2802, 2
    %v2804 = vrot.slane %v2031, 7
    %v2805 = vrot.slane %v2804, 2
    %v2806 = vrot.slane %v2030, 7
    %v2807 = vrot.slane %v2806, 2
    %v2808 = vrot.slane %v2032, 7
    %v2809 = vrot.slane %v2808, 2
    %v2810 = vrot.slane %v2040, 7
    %v2811 = vrot.slane %v2810, 2
    %v2812 = vrot.slane %v2048, 7
    %v2813 = vrot.slane %v2812, 2
    %v2814 = vrot.slane %v2047, 7
    %v2815 = vrot.slane %v2814, 2
    %v2816 = vrot.slane %v2049, 7
    %v2817 = vrot.slane %v2816, 2
    %v3074 = vmax.f32 %v969, %v2307
    %v3075 = vmax.f32 %v977, %v2309
    %v3076 = vmax.f32 %v976, %v2311
    %v3077 = vmax.f32 %v978, %v2313
    %v3078 = vmax.f32 %v986, %v2315
    %v3079 = vmax.f32 %v994, %v2317
    %v3080 = vmax.f32 %v993, %v2319
    %v3081 = vmax.f32 %v995, %v2321
    %v3082 = vmax.f32 %v1003, %v2323
    %v3083 = vmax.f32 %v1011, %v2325
    %v3084 = vmax.f32 %v1010, %v2327
    %v3085 = vmax.f32 %v1012, %v2329
    %v3086 = vmax.f32 %v1020, %v2331
    %v3087 = vmax.f32 %v1028, %v2333
    %v3088 = vmax.f32 %v1027, %v2335
    %v3089 = vmax.f32 %v1029, %v2337
    %v3090 = vmax.f32 %v1037, %v2339
    %v3091 = vmax.f32 %v1045, %v2341
    %v3092 = vmax.f32 %v1044, %v2343
    %v3093 = vmax.f32 %v1046, %v2345
    %v3094 = vmax.f32 %v1054, %v2347
    %v3095 = vmax.f32 %v1062, %v2349
    %v3096 = vmax.f32 %v1061, %v2351
    %v3097 = vmax.f32 %v1063, %v2353
    %v3098 = vmax.f32 %v1071, %v2355
    %v3099 = vmax.f32 %v1079, %v2357
    %v3100 = vmax.f32 %v1078, %v2359
    %v3101 = vmax.f32 %v1080, %v2361
    %v3102 = vmax.f32 %v1088, %v2363
    %v3103 = vmax.f32 %v1096, %v2365
    %v3104 = vmax.f32 %v1095, %v2367
    %v3105 = vmax.f32 %v1097, %v2369
    %v3106 = vmax.f32 %v1105, %v2371
    %v3107 = vmax.f32 %v1113, %v2373
    %v3108 = vmax.f32 %v1112, %v2375
    %v3109 = vmax.f32 %v1114, %v2377
    %v3110 = vmax.f32 %v1122, %v2379
    %v3111 = vmax.f32 %v1130, %v2381
    %v3112 = vmax.f32 %v1129, %v2383
    %v3113 = vmax.f32 %v1131, %v2385
    %v3114 = vmax.f32 %v1139, %v2387
    %v3115 = vmax.f32 %v1147, %v2389
    %v3116 = vmax.f32 %v1146, %v2391
    %v3117 = vmax.f32 %v1148, %v2393
    %v3118 = vmax.f32 %v1156, %v2395
    %v3119 = vmax.f32 %v1164, %v2397
    %v3120 = vmax.f32 %v1163, %v2399
    %v3121 = vmax.f32 %v1165, %v2401
    %v3122 = vmax.f32 %v1173, %v2403
    %v3123 = vmax.f32 %v1181, %v2405
    %v3124 = vmax.f32 %v1180, %v2407
    %v3125 = vmax.f32 %v1182, %v2409
    %v3126 = vmax.f32 %v1190, %v2411
    %v3127 = vmax.f32 %v1198, %v2413
    %v3128 = vmax.f32 %v1197, %v2415
    %v3129 = vmax.f32 %v1199, %v2417
    %v3130 = vmax.f32 %v1207, %v2419
    %v3131 = vmax.f32 %v1215, %v2421
    %v3132 = vmax.f32 %v1214, %v2423
    %v3133 = vmax.f32 %v1216, %v2425
    %v3134 = vmax.f32 %v1224, %v2427
    %v3135 = vmax.f32 %v1232, %v2429
    %v3136 = vmax.f32 %v1231, %v2431
    %v3137 = vmax.f32 %v1233, %v2433
    %v3138 = vmax.f32 %v1241, %v2435
    %v3139 = vmax.f32 %v1249, %v2437
    %v3140 = vmax.f32 %v1248, %v2439
    %v3141 = vmax.f32 %v1250, %v2441
    %v3142 = vmax.f32 %v1258, %v2443
    %v3143 = vmax.f32 %v1266, %v2445
    %v3144 = vmax.f32 %v1265, %v2447
    %v3145 = vmax.f32 %v1267, %v2449
    %v3146 = vmax.f32 %v1275, %v2451
    %v3147 = vmax.f32 %v1283, %v2453
    %v3148 = vmax.f32 %v1282, %v2455
    %v3149 = vmax.f32 %v1284, %v2457
    %v3150 = vmax.f32 %v1292, %v2459
    %v3151 = vmax.f32 %v1300, %v2461
    %v3152 = vmax.f32 %v1299, %v2463
    %v3153 = vmax.f32 %v1301, %v2465
    %v3154 = vmax.f32 %v1309, %v2467
    %v3155 = vmax.f32 %v1317, %v2469
    %v3156 = vmax.f32 %v1316, %v2471
    %v3157 = vmax.f32 %v1318, %v2473
    %v3158 = vmax.f32 %v1326, %v2475
    %v3159 = vmax.f32 %v1334, %v2477
    %v3160 = vmax.f32 %v1333, %v2479
    %v3161 = vmax.f32 %v1335, %v2481
    %v3162 = vmax.f32 %v1343, %v2483
    %v3163 = vmax.f32 %v1351, %v2485
    %v3164 = vmax.f32 %v1350, %v2487
    %v3165 = vmax.f32 %v1352, %v2489
    %v3166 = vmax.f32 %v1360, %v2491
    %v3167 = vmax.f32 %v1368, %v2493
    %v3168 = vmax.f32 %v1367, %v2495
    %v3169 = vmax.f32 %v1369, %v2497
    %v3170 = vmax.f32 %v1377, %v2499
    %v3171 = vmax.f32 %v1385, %v2501
    %v3172 = vmax.f32 %v1384, %v2503
    %v3173 = vmax.f32 %v1386, %v2505
    %v3174 = vmax.f32 %v1394, %v2507
    %v3175 = vmax.f32 %v1402, %v2509
    %v3176 = vmax.f32 %v1401, %v2511
    %v3177 = vmax.f32 %v1403, %v2513
    %v3178 = vmax.f32 %v1411, %v2515
    %v3179 = vmax.f32 %v1419, %v2517
    %v3180 = vmax.f32 %v1418, %v2519
    %v3181 = vmax.f32 %v1420, %v2521
    %v3182 = vmax.f32 %v1428, %v2523
    %v3183 = vmax.f32 %v1436, %v2525
    %v3184 = vmax.f32 %v1435, %v2527
    %v3185 = vmax.f32 %v1437, %v2529
    %v3186 = vmax.f32 %v1445, %v2531
    %v3187 = vmax.f32 %v1453, %v2533
    %v3188 = vmax.f32 %v1452, %v2535
    %v3189 = vmax.f32 %v1454, %v2537
    %v3190 = vmax.f32 %v1462, %v2539
    %v3191 = vmax.f32 %v1470, %v2541
    %v3192 = vmax.f32 %v1469, %v2543
    %v3193 = vmax.f32 %v1471, %v2545
    %v3194 = vmax.f32 %v1479, %v2547
    %v3195 = vmax.f32 %v1487, %v2549
    %v3196 = vmax.f32 %v1486, %v2551
    %v3197 = vmax.f32 %v1488, %v2553
    %v3198 = vmax.f32 %v1496, %v2555
    %v3199 = vmax.f32 %v1504, %v2557
    %v3200 = vmax.f32 %v1503, %v2559
    %v3201 = vmax.f32 %v1505, %v2561
    %v3202 = vmax.f32 %v1513, %v2563
    %v3203 = vmax.f32 %v1521, %v2565
    %v3204 = vmax.f32 %v1520, %v2567
    %v3205 = vmax.f32 %v1522, %v2569
    %v3206 = vmax.f32 %v1530, %v2571
    %v3207 = vmax.f32 %v1538, %v2573
    %v3208 = vmax.f32 %v1537, %v2575
    %v3209 = vmax.f32 %v1539, %v2577
    %v3210 = vmax.f32 %v1547, %v2579
    %v3211 = vmax.f32 %v1555, %v2581
    %v3212 = vmax.f32 %v1554, %v2583
    %v3213 = vmax.f32 %v1556, %v2585
    %v3214 = vmax.f32 %v1564, %v2587
    %v3215 = vmax.f32 %v1572, %v2589
    %v3216 = vmax.f32 %v1571, %v2591
    %v3217 = vmax.f32 %v1573, %v2593
    %v3218 = vmax.f32 %v1581, %v2595
    %v3219 = vmax.f32 %v1589, %v2597
    %v3220 = vmax.f32 %v1588, %v2599
    %v3221 = vmax.f32 %v1590, %v2601
    %v3222 = vmax.f32 %v1598, %v2603
    %v3223 = vmax.f32 %v1606, %v2605
    %v3224 = vmax.f32 %v1605, %v2607
    %v3225 = vmax.f32 %v1607, %v2609
    %v3226 = vmax.f32 %v1615, %v2611
    %v3227 = vmax.f32 %v1623, %v2613
    %v3228 = vmax.f32 %v1622, %v2615
    %v3229 = vmax.f32 %v1624, %v2617
    %v3230 = vmax.f32 %v1632, %v2619
    %v3231 = vmax.f32 %v1640, %v2621
    %v3232 = vmax.f32 %v1639, %v2623
    %v3233 = vmax.f32 %v1641, %v2625
    %v3234 = vmax.f32 %v1649, %v2627
    %v3235 = vmax.f32 %v1657, %v2629
    %v3236 = vmax.f32 %v1656, %v2631
    %v3237 = vmax.f32 %v1658, %v2633
    %v3238 = vmax.f32 %v1666, %v2635
    %v3239 = vmax.f32 %v1674, %v2637
    %v3240 = vmax.f32 %v1673, %v2639
    %v3241 = vmax.f32 %v1675, %v2641
    %v3242 = vmax.f32 %v1683, %v2643
    %v3243 = vmax.f32 %v1691, %v2645
    %v3244 = vmax.f32 %v1690, %v2647
    %v3245 = vmax.f32 %v1692, %v2649
    %v3246 = vmax.f32 %v1700, %v2651
    %v3247 = vmax.f32 %v1708, %v2653
    %v3248 = vmax.f32 %v1707, %v2655
    %v3249 = vmax.f32 %v1709, %v2657
    %v3250 = vmax.f32 %v1717, %v2659
    %v3251 = vmax.f32 %v1725, %v2661
    %v3252 = vmax.f32 %v1724, %v2663
    %v3253 = vmax.f32 %v1726, %v2665
    %v3254 = vmax.f32 %v1734, %v2667
    %v3255 = vmax.f32 %v1742, %v2669
    %v3256 = vmax.f32 %v1741, %v2671
    %v3257 = vmax.f32 %v1743, %v2673
    %v3258 = vmax.f32 %v1751, %v2675
    %v3259 = vmax.f32 %v1759, %v2677
    %v3260 = vmax.f32 %v1758, %v2679
    %v3261 = vmax.f32 %v1760, %v2681
    %v3262 = vmax.f32 %v1768, %v2683
    %v3263 = vmax.f32 %v1776, %v2685
    %v3264 = vmax.f32 %v1775, %v2687
    %v3265 = vmax.f32 %v1777, %v2689
    %v3266 = vmax.f32 %v1785, %v2691
    %v3267 = vmax.f32 %v1793, %v2693
    %v3268 = vmax.f32 %v1792, %v2695
    %v3269 = vmax.f32 %v1794, %v2697
    %v3270 = vmax.f32 %v1802, %v2699
    %v3271 = vmax.f32 %v1810, %v2701
    %v3272 = vmax.f32 %v1809, %v2703
    %v3273 = vmax.f32 %v1811, %v2705
    %v3274 = vmax.f32 %v1819, %v2707
    %v3275 = vmax.f32 %v1827, %v2709
    %v3276 = vmax.f32 %v1826, %v2711
    %v3277 = vmax.f32 %v1828, %v2713
    %v3278 = vmax.f32 %v1836, %v2715
    %v3279 = vmax.f32 %v1844, %v2717
    %v3280 = vmax.f32 %v1843, %v2719
    %v3281 = vmax.f32 %v1845, %v2721
    %v3282 = vmax.f32 %v1853, %v2723
    %v3283 = vmax.f32 %v1861, %v2725
    %v3284 = vmax.f32 %v1860, %v2727
    %v3285 = vmax.f32 %v1862, %v2729
    %v3286 = vmax.f32 %v1870, %v2731
    %v3287 = vmax.f32 %v1878, %v2733
    %v3288 = vmax.f32 %v1877, %v2735
    %v3289 = vmax.f32 %v1879, %v2737
    %v3290 = vmax.f32 %v1887, %v2739
    %v3291 = vmax.f32 %v1895, %v2741
    %v3292 = vmax.f32 %v1894, %v2743
    %v3293 = vmax.f32 %v1896, %v2745
    %v3294 = vmax.f32 %v1904, %v2747
    %v3295 = vmax.f32 %v1912, %v2749
    %v3296 = vmax.f32 %v1911, %v2751
    %v3297 = vmax.f32 %v1913, %v2753
    %v3298 = vmax.f32 %v1921, %v2755
    %v3299 = vmax.f32 %v1929, %v2757
    %v3300 = vmax.f32 %v1928, %v2759
    %v3301 = vmax.f32 %v1930, %v2761
    %v3302 = vmax.f32 %v1938, %v2763
    %v3303 = vmax.f32 %v1946, %v2765
    %v3304 = vmax.f32 %v1945, %v2767
    %v3305 = vmax.f32 %v1947, %v2769
    %v3306 = vmax.f32 %v1955, %v2771
    %v3307 = vmax.f32 %v1963, %v2773
    %v3308 = vmax.f32 %v1962, %v2775
    %v3309 = vmax.f32 %v1964, %v2777
    %v3310 = vmax.f32 %v1972, %v2779
    %v3311 = vmax.f32 %v1980, %v2781
    %v3312 = vmax.f32 %v1979, %v2783
    %v3313 = vmax.f32 %v1981, %v2785
    %v3314 = vmax.f32 %v1989, %v2787
    %v3315 = vmax.f32 %v1997, %v2789
    %v3316 = vmax.f32 %v1996, %v2791
    %v3317 = vmax.f32 %v1998, %v2793
    %v3318 = vmax.f32 %v2006, %v2795
    %v3319 = vmax.f32 %v2014, %v2797
    %v3320 = vmax.f32 %v2013, %v2799
    %v3321 = vmax.f32 %v2015, %v2801
    %v3322 = vmax.f32 %v2023, %v2803
    %v3323 = vmax.f32 %v2031, %v2805
    %v3324 = vmax.f32 %v2030, %v2807
    %v3325 = vmax.f32 %v2032, %v2809
    %v3326 = vmax.f32 %v2040, %v2811
    %v3327 = vmax.f32 %v2048, %v2813
    %v3328 = vmax.f32 %v2047, %v2815
    %v3329 = vmax.f32 %v2049, %v2817
    %v3330 = vmax.f32 %v3074, %v3082
    %v3331 = vmax.f32 %v3075, %v3083
    %v3332 = vmax.f32 %v3076, %v3084
    %v3333 = vmax.f32 %v3077, %v3085
    %v3334 = vmax.f32 %v3078, %v3086
    %v3335 = vmax.f32 %v3079, %v3087
    %v3336 = vmax.f32 %v3080, %v3088
    %v3337 = vmax.f32 %v3081, %v3089
    %v3338 = vmax.f32 %v3090, %v3098
    %v3339 = vmax.f32 %v3091, %v3099
    %v3340 = vmax.f32 %v3092, %v3100
    %v3341 = vmax.f32 %v3093, %v3101
    %v3342 = vmax.f32 %v3094, %v3102
    %v3343 = vmax.f32 %v3095, %v3103
    %v3344 = vmax.f32 %v3096, %v3104
    %v3345 = vmax.f32 %v3097, %v3105
    %v3346 = vmax.f32 %v3106, %v3114
    %v3347 = vmax.f32 %v3107, %v3115
    %v3348 = vmax.f32 %v3108, %v3116
    %v3349 = vmax.f32 %v3109, %v3117
    %v3350 = vmax.f32 %v3110, %v3118
    %v3351 = vmax.f32 %v3111, %v3119
    %v3352 = vmax.f32 %v3112, %v3120
    %v3353 = vmax.f32 %v3113, %v3121
    %v3354 = vmax.f32 %v3122, %v3130
    %v3355 = vmax.f32 %v3123, %v3131
    %v3356 = vmax.f32 %v3124, %v3132
    %v3357 = vmax.f32 %v3125, %v3133
    %v3358 = vmax.f32 %v3126, %v3134
    %v3359 = vmax.f32 %v3127, %v3135
    %v3360 = vmax.f32 %v3128, %v3136
    %v3361 = vmax.f32 %v3129, %v3137
    %v3362 = vmax.f32 %v3138, %v3146
    %v3363 = vmax.f32 %v3139, %v3147
    %v3364 = vmax.f32 %v3140, %v3148
    %v3365 = vmax.f32 %v3141, %v3149
    %v3366 = vmax.f32 %v3142, %v3150
    %v3367 = vmax.f32 %v3143, %v3151
    %v3368 = vmax.f32 %v3144, %v3152
    %v3369 = vmax.f32 %v3145, %v3153
    %v3370 = vmax.f32 %v3154, %v3162
    %v3371 = vmax.f32 %v3155, %v3163
    %v3372 = vmax.f32 %v3156, %v3164
    %v3373 = vmax.f32 %v3157, %v3165
    %v3374 = vmax.f32 %v3158, %v3166
    %v3375 = vmax.f32 %v3159, %v3167
    %v3376 = vmax.f32 %v3160, %v3168
    %v3377 = vmax.f32 %v3161, %v3169
    %v3378 = vmax.f32 %v3170, %v3178
    %v3379 = vmax.f32 %v3171, %v3179
    %v3380 = vmax.f32 %v3172, %v3180
    %v3381 = vmax.f32 %v3173, %v3181
    %v3382 = vmax.f32 %v3174, %v3182
    %v3383 = vmax.f32 %v3175, %v3183
    %v3384 = vmax.f32 %v3176, %v3184
    %v3385 = vmax.f32 %v3177, %v3185
    %v3386 = vmax.f32 %v3186, %v3194
    %v3387 = vmax.f32 %v3187, %v3195
    %v3388 = vmax.f32 %v3188, %v3196
    %v3389 = vmax.f32 %v3189, %v3197
    %v3390 = vmax.f32 %v3190, %v3198
    %v3391 = vmax.f32 %v3191, %v3199
    %v3392 = vmax.f32 %v3192, %v3200
    %v3393 = vmax.f32 %v3193, %v3201
    %v3394 = vmax.f32 %v3202, %v3210
    %v3395 = vmax.f32 %v3203, %v3211
    %v3396 = vmax.f32 %v3204, %v3212
    %v3397 = vmax.f32 %v3205, %v3213
    %v3398 = vmax.f32 %v3206, %v3214
    %v3399 = vmax.f32 %v3207, %v3215
    %v3400 = vmax.f32 %v3208, %v3216
    %v3401 = vmax.f32 %v3209, %v3217
    %v3402 = vmax.f32 %v3218, %v3226
    %v3403 = vmax.f32 %v3219, %v3227
    %v3404 = vmax.f32 %v3220, %v3228
    %v3405 = vmax.f32 %v3221, %v3229
    %v3406 = vmax.f32 %v3222, %v3230
    %v3407 = vmax.f32 %v3223, %v3231
    %v3408 = vmax.f32 %v3224, %v3232
    %v3409 = vmax.f32 %v3225, %v3233
    %v3410 = vmax.f32 %v3234, %v3242
    %v3411 = vmax.f32 %v3235, %v3243
    %v3412 = vmax.f32 %v3236, %v3244
    %v3413 = vmax.f32 %v3237, %v3245
    %v3414 = vmax.f32 %v3238, %v3246
    %v3415 = vmax.f32 %v3239, %v3247
    %v3416 = vmax.f32 %v3240, %v3248
    %v3417 = vmax.f32 %v3241, %v3249
    %v3418 = vmax.f32 %v3250, %v3258
    %v3419 = vmax.f32 %v3251, %v3259
    %v3420 = vmax.f32 %v3252, %v3260
    %v3421 = vmax.f32 %v3253, %v3261
    %v3422 = vmax.f32 %v3254, %v3262
    %v3423 = vmax.f32 %v3255, %v3263
    %v3424 = vmax.f32 %v3256, %v3264
    %v3425 = vmax.f32 %v3257, %v3265
    %v3426 = vmax.f32 %v3266, %v3274
    %v3427 = vmax.f32 %v3267, %v3275
    %v3428 = vmax.f32 %v3268, %v3276
    %v3429 = vmax.f32 %v3269, %v3277
    %v3430 = vmax.f32 %v3270, %v3278
    %v3431 = vmax.f32 %v3271, %v3279
    %v3432 = vmax.f32 %v3272, %v3280
    %v3433 = vmax.f32 %v3273, %v3281
    %v3434 = vmax.f32 %v3282, %v3290
    %v3435 = vmax.f32 %v3283, %v3291
    %v3436 = vmax.f32 %v3284, %v3292
    %v3437 = vmax.f32 %v3285, %v3293
    %v3438 = vmax.f32 %v3286, %v3294
    %v3439 = vmax.f32 %v3287, %v3295
    %v3440 = vmax.f32 %v3288, %v3296
    %v3441 = vmax.f32 %v3289, %v3297
    %v3442 = vmax.f32 %v3298, %v3306
    %v3443 = vmax.f32 %v3299, %v3307
    %v3444 = vmax.f32 %v3300, %v3308
    %v3445 = vmax.f32 %v3301, %v3309
    %v3446 = vmax.f32 %v3302, %v3310
    %v3447 = vmax.f32 %v3303, %v3311
    %v3448 = vmax.f32 %v3304, %v3312
    %v3449 = vmax.f32 %v3305, %v3313
    %v3450 = vmax.f32 %v3314, %v3322
    %v3451 = vmax.f32 %v3315, %v3323
    %v3452 = vmax.f32 %v3316, %v3324
    %v3453 = vmax.f32 %v3317, %v3325
    %v3454 = vmax.f32 %v3318, %v3326
    %v3455 = vmax.f32 %v3319, %v3327
    %v3456 = vmax.f32 %v3320, %v3328
    %v3457 = vmax.f32 %v3321, %v3329
    %v3458 = vpack.c.bf16 %v3330, %v3330
    %v3459 = vpack.c.bf16 %v3331, %v3331
    %v3460 = vpack.c.bf16 %v3332, %v3332
    %v3461 = vpack.c.bf16 %v3333, %v3333
    %v3462 = vpack.c.bf16 %v3334, %v3334
    %v3463 = vpack.c.bf16 %v3335, %v3335
    %v3464 = vpack.c.bf16 %v3336, %v3336
    %v3465 = vpack.c.bf16 %v3337, %v3337
    %v3466 = vpack.c.bf16 %v3338, %v3338
    %v3467 = vpack.c.bf16 %v3339, %v3339
    %v3468 = vpack.c.bf16 %v3340, %v3340
    %v3469 = vpack.c.bf16 %v3341, %v3341
    %v3470 = vpack.c.bf16 %v3342, %v3342
    %v3471 = vpack.c.bf16 %v3343, %v3343
    %v3472 = vpack.c.bf16 %v3344, %v3344
    %v3473 = vpack.c.bf16 %v3345, %v3345
    %v3474 = vpack.c.bf16 %v3346, %v3346
    %v3475 = vpack.c.bf16 %v3347, %v3347
    %v3476 = vpack.c.bf16 %v3348, %v3348
    %v3477 = vpack.c.bf16 %v3349, %v3349
    %v3478 = vpack.c.bf16 %v3350, %v3350
    %v3479 = vpack.c.bf16 %v3351, %v3351
    %v3480 = vpack.c.bf16 %v3352, %v3352
    %v3481 = vpack.c.bf16 %v3353, %v3353
    %v3482 = vpack.c.bf16 %v3354, %v3354
    %v3483 = vpack.c.bf16 %v3355, %v3355
    %v3484 = vpack.c.bf16 %v3356, %v3356
    %v3485 = vpack.c.bf16 %v3357, %v3357
    %v3486 = vpack.c.bf16 %v3358, %v3358
    %v3487 = vpack.c.bf16 %v3359, %v3359
    %v3488 = vpack.c.bf16 %v3360, %v3360
    %v3489 = vpack.c.bf16 %v3361, %v3361
    %v3490 = vpack.c.bf16 %v3362, %v3362
    %v3491 = vpack.c.bf16 %v3363, %v3363
    %v3492 = vpack.c.bf16 %v3364, %v3364
    %v3493 = vpack.c.bf16 %v3365, %v3365
    %v3494 = vpack.c.bf16 %v3366, %v3366
    %v3495 = vpack.c.bf16 %v3367, %v3367
    %v3496 = vpack.c.bf16 %v3368, %v3368
    %v3497 = vpack.c.bf16 %v3369, %v3369
    %v3498 = vpack.c.bf16 %v3370, %v3370
    %v3499 = vpack.c.bf16 %v3371, %v3371
    %v3500 = vpack.c.bf16 %v3372, %v3372
    %v3501 = vpack.c.bf16 %v3373, %v3373
    %v3502 = vpack.c.bf16 %v3374, %v3374
    %v3503 = vpack.c.bf16 %v3375, %v3375
    %v3504 = vpack.c.bf16 %v3376, %v3376
    %v3505 = vpack.c.bf16 %v3377, %v3377
    %v3506 = vpack.c.bf16 %v3378, %v3378
    %v3507 = vpack.c.bf16 %v3379, %v3379
    %v3508 = vpack.c.bf16 %v3380, %v3380
    %v3509 = vpack.c.bf16 %v3381, %v3381
    %v3510 = vpack.c.bf16 %v3382, %v3382
    %v3511 = vpack.c.bf16 %v3383, %v3383
    %v3512 = vpack.c.bf16 %v3384, %v3384
    %v3513 = vpack.c.bf16 %v3385, %v3385
    %v3514 = vpack.c.bf16 %v3386, %v3386
    %v3515 = vpack.c.bf16 %v3387, %v3387
    %v3516 = vpack.c.bf16 %v3388, %v3388
    %v3517 = vpack.c.bf16 %v3389, %v3389
    %v3518 = vpack.c.bf16 %v3390, %v3390
    %v3519 = vpack.c.bf16 %v3391, %v3391
    %v3520 = vpack.c.bf16 %v3392, %v3392
    %v3521 = vpack.c.bf16 %v3393, %v3393
    %v3522 = vpack.c.bf16 %v3394, %v3394
    %v3523 = vpack.c.bf16 %v3395, %v3395
    %v3524 = vpack.c.bf16 %v3396, %v3396
    %v3525 = vpack.c.bf16 %v3397, %v3397
    %v3526 = vpack.c.bf16 %v3398, %v3398
    %v3527 = vpack.c.bf16 %v3399, %v3399
    %v3528 = vpack.c.bf16 %v3400, %v3400
    %v3529 = vpack.c.bf16 %v3401, %v3401
    %v3530 = vpack.c.bf16 %v3402, %v3402
    %v3531 = vpack.c.bf16 %v3403, %v3403
    %v3532 = vpack.c.bf16 %v3404, %v3404
    %v3533 = vpack.c.bf16 %v3405, %v3405
    %v3534 = vpack.c.bf16 %v3406, %v3406
    %v3535 = vpack.c.bf16 %v3407, %v3407
    %v3536 = vpack.c.bf16 %v3408, %v3408
    %v3537 = vpack.c.bf16 %v3409, %v3409
    %v3538 = vpack.c.bf16 %v3410, %v3410
    %v3539 = vpack.c.bf16 %v3411, %v3411
    %v3540 = vpack.c.bf16 %v3412, %v3412
    %v3541 = vpack.c.bf16 %v3413, %v3413
    %v3542 = vpack.c.bf16 %v3414, %v3414
    %v3543 = vpack.c.bf16 %v3415, %v3415
    %v3544 = vpack.c.bf16 %v3416, %v3416
    %v3545 = vpack.c.bf16 %v3417, %v3417
    %v3546 = vpack.c.bf16 %v3418, %v3418
    %v3547 = vpack.c.bf16 %v3419, %v3419
    %v3548 = vpack.c.bf16 %v3420, %v3420
    %v3549 = vpack.c.bf16 %v3421, %v3421
    %v3550 = vpack.c.bf16 %v3422, %v3422
    %v3551 = vpack.c.bf16 %v3423, %v3423
    %v3552 = vpack.c.bf16 %v3424, %v3424
    %v3553 = vpack.c.bf16 %v3425, %v3425
    %v3554 = vpack.c.bf16 %v3426, %v3426
    %v3555 = vpack.c.bf16 %v3427, %v3427
    %v3556 = vpack.c.bf16 %v3428, %v3428
    %v3557 = vpack.c.bf16 %v3429, %v3429
    %v3558 = vpack.c.bf16 %v3430, %v3430
    %v3559 = vpack.c.bf16 %v3431, %v3431
    %v3560 = vpack.c.bf16 %v3432, %v3432
    %v3561 = vpack.c.bf16 %v3433, %v3433
    %v3562 = vpack.c.bf16 %v3434, %v3434
    %v3563 = vpack.c.bf16 %v3435, %v3435
    %v3564 = vpack.c.bf16 %v3436, %v3436
    %v3565 = vpack.c.bf16 %v3437, %v3437
    %v3566 = vpack.c.bf16 %v3438, %v3438
    %v3567 = vpack.c.bf16 %v3439, %v3439
    %v3568 = vpack.c.bf16 %v3440, %v3440
    %v3569 = vpack.c.bf16 %v3441, %v3441
    %v3570 = vpack.c.bf16 %v3442, %v3442
    %v3571 = vpack.c.bf16 %v3443, %v3443
    %v3572 = vpack.c.bf16 %v3444, %v3444
    %v3573 = vpack.c.bf16 %v3445, %v3445
    %v3574 = vpack.c.bf16 %v3446, %v3446
    %v3575 = vpack.c.bf16 %v3447, %v3447
    %v3576 = vpack.c.bf16 %v3448, %v3448
    %v3577 = vpack.c.bf16 %v3449, %v3449
    %v3578 = vpack.c.bf16 %v3450, %v3450
    %v3579 = vpack.c.bf16 %v3451, %v3451
    %v3580 = vpack.c.bf16 %v3452, %v3452
    %v3581 = vpack.c.bf16 %v3453, %v3453
    %v3582 = vpack.c.bf16 %v3454, %v3454
    %v3583 = vpack.c.bf16 %v3455, %v3455
    %v3584 = vpack.c.bf16 %v3456, %v3456
    %v3585 = vpack.c.bf16 %v3457, %v3457
    %v3714 = vunpack.c.l.b16 %v3458
    %v3715 = vunpack.c.l.b16 %v3459
    %v3716 = vunpack.c.l.b16 %v3460
    %v3717 = vunpack.c.l.b16 %v3461
    %v3718 = vunpack.c.l.b16 %v3462
    %v3719 = vunpack.c.l.b16 %v3463
    %v3720 = vunpack.c.l.b16 %v3464
    %v3721 = vunpack.c.l.b16 %v3465
    %v3722 = vunpack.c.l.b16 %v3466
    %v3723 = vunpack.c.l.b16 %v3467
    %v3724 = vunpack.c.l.b16 %v3468
    %v3725 = vunpack.c.l.b16 %v3469
    %v3726 = vunpack.c.l.b16 %v3470
    %v3727 = vunpack.c.l.b16 %v3471
    %v3728 = vunpack.c.l.b16 %v3472
    %v3729 = vunpack.c.l.b16 %v3473
    %v3730 = vunpack.c.l.b16 %v3474
    %v3731 = vunpack.c.l.b16 %v3475
    %v3732 = vunpack.c.l.b16 %v3476
    %v3733 = vunpack.c.l.b16 %v3477
    %v3734 = vunpack.c.l.b16 %v3478
    %v3735 = vunpack.c.l.b16 %v3479
    %v3736 = vunpack.c.l.b16 %v3480
    %v3737 = vunpack.c.l.b16 %v3481
    %v3738 = vunpack.c.l.b16 %v3482
    %v3739 = vunpack.c.l.b16 %v3483
    %v3740 = vunpack.c.l.b16 %v3484
    %v3741 = vunpack.c.l.b16 %v3485
    %v3742 = vunpack.c.l.b16 %v3486
    %v3743 = vunpack.c.l.b16 %v3487
    %v3744 = vunpack.c.l.b16 %v3488
    %v3745 = vunpack.c.l.b16 %v3489
    %v3746 = vunpack.c.l.b16 %v3490
    %v3747 = vunpack.c.l.b16 %v3491
    %v3748 = vunpack.c.l.b16 %v3492
    %v3749 = vunpack.c.l.b16 %v3493
    %v3750 = vunpack.c.l.b16 %v3494
    %v3751 = vunpack.c.l.b16 %v3495
    %v3752 = vunpack.c.l.b16 %v3496
    %v3753 = vunpack.c.l.b16 %v3497
    %v3754 = vunpack.c.l.b16 %v3498
    %v3755 = vunpack.c.l.b16 %v3499
    %v3756 = vunpack.c.l.b16 %v3500
    %v3757 = vunpack.c.l.b16 %v3501
    %v3758 = vunpack.c.l.b16 %v3502
    %v3759 = vunpack.c.l.b16 %v3503
    %v3760 = vunpack.c.l.b16 %v3504
    %v3761 = vunpack.c.l.b16 %v3505
    %v3762 = vunpack.c.l.b16 %v3506
    %v3763 = vunpack.c.l.b16 %v3507
    %v3764 = vunpack.c.l.b16 %v3508
    %v3765 = vunpack.c.l.b16 %v3509
    %v3766 = vunpack.c.l.b16 %v3510
    %v3767 = vunpack.c.l.b16 %v3511
    %v3768 = vunpack.c.l.b16 %v3512
    %v3769 = vunpack.c.l.b16 %v3513
    %v3770 = vunpack.c.l.b16 %v3514
    %v3771 = vunpack.c.l.b16 %v3515
    %v3772 = vunpack.c.l.b16 %v3516
    %v3773 = vunpack.c.l.b16 %v3517
    %v3774 = vunpack.c.l.b16 %v3518
    %v3775 = vunpack.c.l.b16 %v3519
    %v3776 = vunpack.c.l.b16 %v3520
    %v3777 = vunpack.c.l.b16 %v3521
    %v3778 = vunpack.c.l.b16 %v3522
    %v3779 = vunpack.c.l.b16 %v3523
    %v3780 = vunpack.c.l.b16 %v3524
    %v3781 = vunpack.c.l.b16 %v3525
    %v3782 = vunpack.c.l.b16 %v3526
    %v3783 = vunpack.c.l.b16 %v3527
    %v3784 = vunpack.c.l.b16 %v3528
    %v3785 = vunpack.c.l.b16 %v3529
    %v3786 = vunpack.c.l.b16 %v3530
    %v3787 = vunpack.c.l.b16 %v3531
    %v3788 = vunpack.c.l.b16 %v3532
    %v3789 = vunpack.c.l.b16 %v3533
    %v3790 = vunpack.c.l.b16 %v3534
    %v3791 = vunpack.c.l.b16 %v3535
    %v3792 = vunpack.c.l.b16 %v3536
    %v3793 = vunpack.c.l.b16 %v3537
    %v3794 = vunpack.c.l.b16 %v3538
    %v3795 = vunpack.c.l.b16 %v3539
    %v3796 = vunpack.c.l.b16 %v3540
    %v3797 = vunpack.c.l.b16 %v3541
    %v3798 = vunpack.c.l.b16 %v3542
    %v3799 = vunpack.c.l.b16 %v3543
    %v3800 = vunpack.c.l.b16 %v3544
    %v3801 = vunpack.c.l.b16 %v3545
    %v3802 = vunpack.c.l.b16 %v3546
    %v3803 = vunpack.c.l.b16 %v3547
    %v3804 = vunpack.c.l.b16 %v3548
    %v3805 = vunpack.c.l.b16 %v3549
    %v3806 = vunpack.c.l.b16 %v3550
    %v3807 = vunpack.c.l.b16 %v3551
    %v3808 = vunpack.c.l.b16 %v3552
    %v3809 = vunpack.c.l.b16 %v3553
    %v3810 = vunpack.c.l.b16 %v3554
    %v3811 = vunpack.c.l.b16 %v3555
    %v3812 = vunpack.c.l.b16 %v3556
    %v3813 = vunpack.c.l.b16 %v3557
    %v3814 = vunpack.c.l.b16 %v3558
    %v3815 = vunpack.c.l.b16 %v3559
    %v3816 = vunpack.c.l.b16 %v3560
    %v3817 = vunpack.c.l.b16 %v3561
    %v3818 = vunpack.c.l.b16 %v3562
    %v3819 = vunpack.c.l.b16 %v3563
    %v3820 = vunpack.c.l.b16 %v3564
    %v3821 = vunpack.c.l.b16 %v3565
    %v3822 = vunpack.c.l.b16 %v3566
    %v3823 = vunpack.c.l.b16 %v3567
    %v3824 = vunpack.c.l.b16 %v3568
    %v3825 = vunpack.c.l.b16 %v3569
    %v3826 = vunpack.c.l.b16 %v3570
    %v3827 = vunpack.c.l.b16 %v3571
    %v3828 = vunpack.c.l.b16 %v3572
    %v3829 = vunpack.c.l.b16 %v3573
    %v3830 = vunpack.c.l.b16 %v3574
    %v3831 = vunpack.c.l.b16 %v3575
    %v3832 = vunpack.c.l.b16 %v3576
    %v3833 = vunpack.c.l.b16 %v3577
    %v3834 = vunpack.c.l.b16 %v3578
    %v3835 = vunpack.c.l.b16 %v3579
    %v3836 = vunpack.c.l.b16 %v3580
    %v3837 = vunpack.c.l.b16 %v3581
    %v3838 = vunpack.c.l.b16 %v3582
    %v3839 = vunpack.c.l.b16 %v3583
    %v3840 = vunpack.c.l.b16 %v3584
    %v3841 = vunpack.c.l.b16 %v3585
    %v3842 = vpack.c.b16 %v3714, %v3714
    %v3843 = vpack.c.b16 %v3715, %v3715
    %v3844 = vpack.c.b16 %v3716, %v3716
    %v3845 = vpack.c.b16 %v3717, %v3717
    %v3846 = vpack.c.b16 %v3718, %v3718
    %v3847 = vpack.c.b16 %v3719, %v3719
    %v3848 = vpack.c.b16 %v3720, %v3720
    %v3849 = vpack.c.b16 %v3721, %v3721
    %v3850 = vpack.c.b16 %v3722, %v3722
    %v3851 = vpack.c.b16 %v3723, %v3723
    %v3852 = vpack.c.b16 %v3724, %v3724
    %v3853 = vpack.c.b16 %v3725, %v3725
    %v3854 = vpack.c.b16 %v3726, %v3726
    %v3855 = vpack.c.b16 %v3727, %v3727
    %v3856 = vpack.c.b16 %v3728, %v3728
    %v3857 = vpack.c.b16 %v3729, %v3729
    %v3858 = vpack.c.b16 %v3730, %v3730
    %v3859 = vpack.c.b16 %v3731, %v3731
    %v3860 = vpack.c.b16 %v3732, %v3732
    %v3861 = vpack.c.b16 %v3733, %v3733
    %v3862 = vpack.c.b16 %v3734, %v3734
    %v3863 = vpack.c.b16 %v3735, %v3735
    %v3864 = vpack.c.b16 %v3736, %v3736
    %v3865 = vpack.c.b16 %v3737, %v3737
    %v3866 = vpack.c.b16 %v3738, %v3738
    %v3867 = vpack.c.b16 %v3739, %v3739
    %v3868 = vpack.c.b16 %v3740, %v3740
    %v3869 = vpack.c.b16 %v3741, %v3741
    %v3870 = vpack.c.b16 %v3742, %v3742
    %v3871 = vpack.c.b16 %v3743, %v3743
    %v3872 = vpack.c.b16 %v3744, %v3744
    %v3873 = vpack.c.b16 %v3745, %v3745
    %v3874 = vpack.c.b16 %v3746, %v3746
    %v3875 = vpack.c.b16 %v3747, %v3747
    %v3876 = vpack.c.b16 %v3748, %v3748
    %v3877 = vpack.c.b16 %v3749, %v3749
    %v3878 = vpack.c.b16 %v3750, %v3750
    %v3879 = vpack.c.b16 %v3751, %v3751
    %v3880 = vpack.c.b16 %v3752, %v3752
    %v3881 = vpack.c.b16 %v3753, %v3753
    %v3882 = vpack.c.b16 %v3754, %v3754
    %v3883 = vpack.c.b16 %v3755, %v3755
    %v3884 = vpack.c.b16 %v3756, %v3756
    %v3885 = vpack.c.b16 %v3757, %v3757
    %v3886 = vpack.c.b16 %v3758, %v3758
    %v3887 = vpack.c.b16 %v3759, %v3759
    %v3888 = vpack.c.b16 %v3760, %v3760
    %v3889 = vpack.c.b16 %v3761, %v3761
    %v3890 = vpack.c.b16 %v3762, %v3762
    %v3891 = vpack.c.b16 %v3763, %v3763
    %v3892 = vpack.c.b16 %v3764, %v3764
    %v3893 = vpack.c.b16 %v3765, %v3765
    %v3894 = vpack.c.b16 %v3766, %v3766
    %v3895 = vpack.c.b16 %v3767, %v3767
    %v3896 = vpack.c.b16 %v3768, %v3768
    %v3897 = vpack.c.b16 %v3769, %v3769
    %v3898 = vpack.c.b16 %v3770, %v3770
    %v3899 = vpack.c.b16 %v3771, %v3771
    %v3900 = vpack.c.b16 %v3772, %v3772
    %v3901 = vpack.c.b16 %v3773, %v3773
    %v3902 = vpack.c.b16 %v3774, %v3774
    %v3903 = vpack.c.b16 %v3775, %v3775
    %v3904 = vpack.c.b16 %v3776, %v3776
    %v3905 = vpack.c.b16 %v3777, %v3777
    %v3906 = vpack.c.b16 %v3778, %v3778
    %v3907 = vpack.c.b16 %v3779, %v3779
    %v3908 = vpack.c.b16 %v3780, %v3780
    %v3909 = vpack.c.b16 %v3781, %v3781
    %v3910 = vpack.c.b16 %v3782, %v3782
    %v3911 = vpack.c.b16 %v3783, %v3783
    %v3912 = vpack.c.b16 %v3784, %v3784
    %v3913 = vpack.c.b16 %v3785, %v3785
    %v3914 = vpack.c.b16 %v3786, %v3786
    %v3915 = vpack.c.b16 %v3787, %v3787
    %v3916 = vpack.c.b16 %v3788, %v3788
    %v3917 = vpack.c.b16 %v3789, %v3789
    %v3918 = vpack.c.b16 %v3790, %v3790
    %v3919 = vpack.c.b16 %v3791, %v3791
    %v3920 = vpack.c.b16 %v3792, %v3792
    %v3921 = vpack.c.b16 %v3793, %v3793
    %v3922 = vpack.c.b16 %v3794, %v3794
    %v3923 = vpack.c.b16 %v3795, %v3795
    %v3924 = vpack.c.b16 %v3796, %v3796
    %v3925 = vpack.c.b16 %v3797, %v3797
    %v3926 = vpack.c.b16 %v3798, %v3798
    %v3927 = vpack.c.b16 %v3799, %v3799
    %v3928 = vpack.c.b16 %v3800, %v3800
    %v3929 = vpack.c.b16 %v3801, %v3801
    %v3930 = vpack.c.b16 %v3802, %v3802
    %v3931 = vpack.c.b16 %v3803, %v3803
    %v3932 = vpack.c.b16 %v3804, %v3804
    %v3933 = vpack.c.b16 %v3805, %v3805
    %v3934 = vpack.c.b16 %v3806, %v3806
    %v3935 = vpack.c.b16 %v3807, %v3807
    %v3936 = vpack.c.b16 %v3808, %v3808
    %v3937 = vpack.c.b16 %v3809, %v3809
    %v3938 = vpack.c.b16 %v3810, %v3810
    %v3939 = vpack.c.b16 %v3811, %v3811
    %v3940 = vpack.c.b16 %v3812, %v3812
    %v3941 = vpack.c.b16 %v3813, %v3813
    %v3942 = vpack.c.b16 %v3814, %v3814
    %v3943 = vpack.c.b16 %v3815, %v3815
    %v3944 = vpack.c.b16 %v3816, %v3816
    %v3945 = vpack.c.b16 %v3817, %v3817
    %v3946 = vpack.c.b16 %v3818, %v3818
    %v3947 = vpack.c.b16 %v3819, %v3819
    %v3948 = vpack.c.b16 %v3820, %v3820
    %v3949 = vpack.c.b16 %v3821, %v3821
    %v3950 = vpack.c.b16 %v3822, %v3822
    %v3951 = vpack.c.b16 %v3823, %v3823
    %v3952 = vpack.c.b16 %v3824, %v3824
    %v3953 = vpack.c.b16 %v3825, %v3825
    %v3954 = vpack.c.b16 %v3826, %v3826
    %v3955 = vpack.c.b16 %v3827, %v3827
    %v3956 = vpack.c.b16 %v3828, %v3828
    %v3957 = vpack.c.b16 %v3829, %v3829
    %v3958 = vpack.c.b16 %v3830, %v3830
    %v3959 = vpack.c.b16 %v3831, %v3831
    %v3960 = vpack.c.b16 %v3832, %v3832
    %v3961 = vpack.c.b16 %v3833, %v3833
    %v3962 = vpack.c.b16 %v3834, %v3834
    %v3963 = vpack.c.b16 %v3835, %v3835
    %v3964 = vpack.c.b16 %v3836, %v3836
    %v3965 = vpack.c.b16 %v3837, %v3837
    %v3966 = vpack.c.b16 %v3838, %v3838
    %v3967 = vpack.c.b16 %v3839, %v3839
    %v3968 = vpack.c.b16 %v3840, %v3840
    %v3969 = vpack.c.b16 %v3841, %v3841
    %v3970 = vunpack.c.l.b16 %v3842
    %v3971 = vunpack.c.l.b16 %v3843
    %v3972 = vunpack.c.l.b16 %v3844
    %v3973 = vunpack.c.l.b16 %v3845
    %v3974 = vunpack.c.l.b16 %v3846
    %v3975 = vunpack.c.l.b16 %v3847
    %v3976 = vunpack.c.l.b16 %v3848
    %v3977 = vunpack.c.l.b16 %v3849
    %v3978 = vunpack.c.l.b16 %v3850
    %v3979 = vunpack.c.l.b16 %v3851
    %v3980 = vunpack.c.l.b16 %v3852
    %v3981 = vunpack.c.l.b16 %v3853
    %v3982 = vunpack.c.l.b16 %v3854
    %v3983 = vunpack.c.l.b16 %v3855
    %v3984 = vunpack.c.l.b16 %v3856
    %v3985 = vunpack.c.l.b16 %v3857
    %v3986 = vunpack.c.l.b16 %v3858
    %v3987 = vunpack.c.l.b16 %v3859
    %v3988 = vunpack.c.l.b16 %v3860
    %v3989 = vunpack.c.l.b16 %v3861
    %v3990 = vunpack.c.l.b16 %v3862
    %v3991 = vunpack.c.l.b16 %v3863
    %v3992 = vunpack.c.l.b16 %v3864
    %v3993 = vunpack.c.l.b16 %v3865
    %v3994 = vunpack.c.l.b16 %v3866
    %v3995 = vunpack.c.l.b16 %v3867
    %v3996 = vunpack.c.l.b16 %v3868
    %v3997 = vunpack.c.l.b16 %v3869
    %v3998 = vunpack.c.l.b16 %v3870
    %v3999 = vunpack.c.l.b16 %v3871
    %v4000 = vunpack.c.l.b16 %v3872
    %v4001 = vunpack.c.l.b16 %v3873
    %v4002 = vunpack.c.l.b16 %v3874
    %v4003 = vunpack.c.l.b16 %v3875
    %v4004 = vunpack.c.l.b16 %v3876
    %v4005 = vunpack.c.l.b16 %v3877
    %v4006 = vunpack.c.l.b16 %v3878
    %v4007 = vunpack.c.l.b16 %v3879
    %v4008 = vunpack.c.l.b16 %v3880
    %v4009 = vunpack.c.l.b16 %v3881
    %v4010 = vunpack.c.l.b16 %v3882
    %v4011 = vunpack.c.l.b16 %v3883
    %v4012 = vunpack.c.l.b16 %v3884
    %v4013 = vunpack.c.l.b16 %v3885
    %v4014 = vunpack.c.l.b16 %v3886
    %v4015 = vunpack.c.l.b16 %v3887
    %v4016 = vunpack.c.l.b16 %v3888
    %v4017 = vunpack.c.l.b16 %v3889
    %v4018 = vunpack.c.l.b16 %v3890
    %v4019 = vunpack.c.l.b16 %v3891
    %v4020 = vunpack.c.l.b16 %v3892
    %v4021 = vunpack.c.l.b16 %v3893
    %v4022 = vunpack.c.l.b16 %v3894
    %v4023 = vunpack.c.l.b16 %v3895
    %v4024 = vunpack.c.l.b16 %v3896
    %v4025 = vunpack.c.l.b16 %v3897
    %v4026 = vunpack.c.l.b16 %v3898
    %v4027 = vunpack.c.l.b16 %v3899
    %v4028 = vunpack.c.l.b16 %v3900
    %v4029 = vunpack.c.l.b16 %v3901
    %v4030 = vunpack.c.l.b16 %v3902
    %v4031 = vunpack.c.l.b16 %v3903
    %v4032 = vunpack.c.l.b16 %v3904
    %v4033 = vunpack.c.l.b16 %v3905
    %v4034 = vunpack.c.l.b16 %v3906
    %v4035 = vunpack.c.l.b16 %v3907
    %v4036 = vunpack.c.l.b16 %v3908
    %v4037 = vunpack.c.l.b16 %v3909
    %v4038 = vunpack.c.l.b16 %v3910
    %v4039 = vunpack.c.l.b16 %v3911
    %v4040 = vunpack.c.l.b16 %v3912
    %v4041 = vunpack.c.l.b16 %v3913
    %v4042 = vunpack.c.l.b16 %v3914
    %v4043 = vunpack.c.l.b16 %v3915
    %v4044 = vunpack.c.l.b16 %v3916
    %v4045 = vunpack.c.l.b16 %v3917
    %v4046 = vunpack.c.l.b16 %v3918
    %v4047 = vunpack.c.l.b16 %v3919
    %v4048 = vunpack.c.l.b16 %v3920
    %v4049 = vunpack.c.l.b16 %v3921
    %v4050 = vunpack.c.l.b16 %v3922
    %v4051 = vunpack.c.l.b16 %v3923
    %v4052 = vunpack.c.l.b16 %v3924
    %v4053 = vunpack.c.l.b16 %v3925
    %v4054 = vunpack.c.l.b16 %v3926
    %v4055 = vunpack.c.l.b16 %v3927
    %v4056 = vunpack.c.l.b16 %v3928
    %v4057 = vunpack.c.l.b16 %v3929
    %v4058 = vunpack.c.l.b16 %v3930
    %v4059 = vunpack.c.l.b16 %v3931
    %v4060 = vunpack.c.l.b16 %v3932
    %v4061 = vunpack.c.l.b16 %v3933
    %v4062 = vunpack.c.l.b16 %v3934
    %v4063 = vunpack.c.l.b16 %v3935
    %v4064 = vunpack.c.l.b16 %v3936
    %v4065 = vunpack.c.l.b16 %v3937
    %v4066 = vunpack.c.l.b16 %v3938
    %v4067 = vunpack.c.l.b16 %v3939
    %v4068 = vunpack.c.l.b16 %v3940
    %v4069 = vunpack.c.l.b16 %v3941
    %v4070 = vunpack.c.l.b16 %v3942
    %v4071 = vunpack.c.l.b16 %v3943
    %v4072 = vunpack.c.l.b16 %v3944
    %v4073 = vunpack.c.l.b16 %v3945
    %v4074 = vunpack.c.l.b16 %v3946
    %v4075 = vunpack.c.l.b16 %v3947
    %v4076 = vunpack.c.l.b16 %v3948
    %v4077 = vunpack.c.l.b16 %v3949
    %v4078 = vunpack.c.l.b16 %v3950
    %v4079 = vunpack.c.l.b16 %v3951
    %v4080 = vunpack.c.l.b16 %v3952
    %v4081 = vunpack.c.l.b16 %v3953
    %v4082 = vunpack.c.l.b16 %v3954
    %v4083 = vunpack.c.l.b16 %v3955
    %v4084 = vunpack.c.l.b16 %v3956
    %v4085 = vunpack.c.l.b16 %v3957
    %v4086 = vunpack.c.l.b16 %v3958
    %v4087 = vunpack.c.l.b16 %v3959
    %v4088 = vunpack.c.l.b16 %v3960
    %v4089 = vunpack.c.l.b16 %v3961
    %v4090 = vunpack.c.l.b16 %v3962
    %v4091 = vunpack.c.l.b16 %v3963
    %v4092 = vunpack.c.l.b16 %v3964
    %v4093 = vunpack.c.l.b16 %v3965
    %v4094 = vunpack.c.l.b16 %v3966
    %v4095 = vunpack.c.l.b16 %v3967
    %v4096 = vunpack.c.l.b16 %v3968
    %v4097 = vunpack.c.l.b16 %v3969
    %v4098 = vrot.slane %v3970, 7
    %v4099 = vrot.slane %v3971, 6
    %vm4100 = vcmask 1042434
    %v4101 = vsel %vm4100, %v4099, %v4098
    %v4102 = vrot.slane %v3972, 5
    %vm4103 = vcmask 1043459
    %v4104 = vsel %vm4103, %v4102, %v4101
    %v4105 = vrot.slane %v3973, 4
    %vm4106 = vcmask 1044484
    %v4107 = vsel %vm4106, %v4105, %v4104
    %v4108 = vrot.slane %v3974, 3
    %vm4109 = vcmask 1045509
    %v4110 = vsel %vm4109, %v4108, %v4107
    %v4111 = vrot.slane %v3975, 2
    %vm4112 = vcmask 1046534
    %v4113 = vsel %vm4112, %v4111, %v4110
    %v4114 = vrot.slane %v3976, 1
    %vm4115 = vcmask 1047559
    %v4116 = vsel %vm4115, %v4114, %v4113
    %v4117 = vrot.slane %v3978, 7
    %v4118 = vrot.slane %v3979, 6
    %v4119 = vsel %vm4100, %v4118, %v4117
    %v4120 = vrot.slane %v3980, 5
    %v4121 = vsel %vm4103, %v4120, %v4119
    %v4122 = vrot.slane %v3981, 4
    %v4123 = vsel %vm4106, %v4122, %v4121
    %v4124 = vrot.slane %v3982, 3
    %v4125 = vsel %vm4109, %v4124, %v4123
    %v4126 = vrot.slane %v3983, 2
    %v4127 = vsel %vm4112, %v4126, %v4125
    %v4128 = vrot.slane %v3984, 1
    %v4129 = vsel %vm4115, %v4128, %v4127
    %v4130 = vrot.slane %v3986, 7
    %v4131 = vrot.slane %v3987, 6
    %v4132 = vsel %vm4100, %v4131, %v4130
    %v4133 = vrot.slane %v3988, 5
    %v4134 = vsel %vm4103, %v4133, %v4132
    %v4135 = vrot.slane %v3989, 4
    %v4136 = vsel %vm4106, %v4135, %v4134
    %v4137 = vrot.slane %v3990, 3
    %v4138 = vsel %vm4109, %v4137, %v4136
    %v4139 = vrot.slane %v3991, 2
    %v4140 = vsel %vm4112, %v4139, %v4138
    %v4141 = vrot.slane %v3992, 1
    %v4142 = vsel %vm4115, %v4141, %v4140
    %v4143 = vrot.slane %v3994, 7
    %v4144 = vrot.slane %v3995, 6
    %v4145 = vsel %vm4100, %v4144, %v4143
    %v4146 = vrot.slane %v3996, 5
    %v4147 = vsel %vm4103, %v4146, %v4145
    %v4148 = vrot.slane %v3997, 4
    %v4149 = vsel %vm4106, %v4148, %v4147
    %v4150 = vrot.slane %v3998, 3
    %v4151 = vsel %vm4109, %v4150, %v4149
    %v4152 = vrot.slane %v3999, 2
    %v4153 = vsel %vm4112, %v4152, %v4151
    %v4154 = vrot.slane %v4000, 1
    %v4155 = vsel %vm4115, %v4154, %v4153
    %v4156 = vrot.slane %v4002, 7
    %v4157 = vrot.slane %v4003, 6
    %v4158 = vsel %vm4100, %v4157, %v4156
    %v4159 = vrot.slane %v4004, 5
    %v4160 = vsel %vm4103, %v4159, %v4158
    %v4161 = vrot.slane %v4005, 4
    %v4162 = vsel %vm4106, %v4161, %v4160
    %v4163 = vrot.slane %v4006, 3
    %v4164 = vsel %vm4109, %v4163, %v4162
    %v4165 = vrot.slane %v4007, 2
    %v4166 = vsel %vm4112, %v4165, %v4164
    %v4167 = vrot.slane %v4008, 1
    %v4168 = vsel %vm4115, %v4167, %v4166
    %v4169 = vrot.slane %v4010, 7
    %v4170 = vrot.slane %v4011, 6
    %v4171 = vsel %vm4100, %v4170, %v4169
    %v4172 = vrot.slane %v4012, 5
    %v4173 = vsel %vm4103, %v4172, %v4171
    %v4174 = vrot.slane %v4013, 4
    %v4175 = vsel %vm4106, %v4174, %v4173
    %v4176 = vrot.slane %v4014, 3
    %v4177 = vsel %vm4109, %v4176, %v4175
    %v4178 = vrot.slane %v4015, 2
    %v4179 = vsel %vm4112, %v4178, %v4177
    %v4180 = vrot.slane %v4016, 1
    %v4181 = vsel %vm4115, %v4180, %v4179
    %v4182 = vrot.slane %v4018, 7
    %v4183 = vrot.slane %v4019, 6
    %v4184 = vsel %vm4100, %v4183, %v4182
    %v4185 = vrot.slane %v4020, 5
    %v4186 = vsel %vm4103, %v4185, %v4184
    %v4187 = vrot.slane %v4021, 4
    %v4188 = vsel %vm4106, %v4187, %v4186
    %v4189 = vrot.slane %v4022, 3
    %v4190 = vsel %vm4109, %v4189, %v4188
    %v4191 = vrot.slane %v4023, 2
    %v4192 = vsel %vm4112, %v4191, %v4190
    %v4193 = vrot.slane %v4024, 1
    %v4194 = vsel %vm4115, %v4193, %v4192
    %v4195 = vrot.slane %v4026, 7
    %v4196 = vrot.slane %v4027, 6
    %v4197 = vsel %vm4100, %v4196, %v4195
    %v4198 = vrot.slane %v4028, 5
    %v4199 = vsel %vm4103, %v4198, %v4197
    %v4200 = vrot.slane %v4029, 4
    %v4201 = vsel %vm4106, %v4200, %v4199
    %v4202 = vrot.slane %v4030, 3
    %v4203 = vsel %vm4109, %v4202, %v4201
    %v4204 = vrot.slane %v4031, 2
    %v4205 = vsel %vm4112, %v4204, %v4203
    %v4206 = vrot.slane %v4032, 1
    %v4207 = vsel %vm4115, %v4206, %v4205
    %v4208 = vrot.slane %v4034, 7
    %v4209 = vrot.slane %v4035, 6
    %v4210 = vsel %vm4100, %v4209, %v4208
    %v4211 = vrot.slane %v4036, 5
    %v4212 = vsel %vm4103, %v4211, %v4210
    %v4213 = vrot.slane %v4037, 4
    %v4214 = vsel %vm4106, %v4213, %v4212
    %v4215 = vrot.slane %v4038, 3
    %v4216 = vsel %vm4109, %v4215, %v4214
    %v4217 = vrot.slane %v4039, 2
    %v4218 = vsel %vm4112, %v4217, %v4216
    %v4219 = vrot.slane %v4040, 1
    %v4220 = vsel %vm4115, %v4219, %v4218
    %v4221 = vrot.slane %v4042, 7
    %v4222 = vrot.slane %v4043, 6
    %v4223 = vsel %vm4100, %v4222, %v4221
    %v4224 = vrot.slane %v4044, 5
    %v4225 = vsel %vm4103, %v4224, %v4223
    %v4226 = vrot.slane %v4045, 4
    %v4227 = vsel %vm4106, %v4226, %v4225
    %v4228 = vrot.slane %v4046, 3
    %v4229 = vsel %vm4109, %v4228, %v4227
    %v4230 = vrot.slane %v4047, 2
    %v4231 = vsel %vm4112, %v4230, %v4229
    %v4232 = vrot.slane %v4048, 1
    %v4233 = vsel %vm4115, %v4232, %v4231
    %v4234 = vrot.slane %v4050, 7
    %v4235 = vrot.slane %v4051, 6
    %v4236 = vsel %vm4100, %v4235, %v4234
    %v4237 = vrot.slane %v4052, 5
    %v4238 = vsel %vm4103, %v4237, %v4236
    %v4239 = vrot.slane %v4053, 4
    %v4240 = vsel %vm4106, %v4239, %v4238
    %v4241 = vrot.slane %v4054, 3
    %v4242 = vsel %vm4109, %v4241, %v4240
    %v4243 = vrot.slane %v4055, 2
    %v4244 = vsel %vm4112, %v4243, %v4242
    %v4245 = vrot.slane %v4056, 1
    %v4246 = vsel %vm4115, %v4245, %v4244
    %v4247 = vrot.slane %v4058, 7
    %v4248 = vrot.slane %v4059, 6
    %v4249 = vsel %vm4100, %v4248, %v4247
    %v4250 = vrot.slane %v4060, 5
    %v4251 = vsel %vm4103, %v4250, %v4249
    %v4252 = vrot.slane %v4061, 4
    %v4253 = vsel %vm4106, %v4252, %v4251
    %v4254 = vrot.slane %v4062, 3
    %v4255 = vsel %vm4109, %v4254, %v4253
    %v4256 = vrot.slane %v4063, 2
    %v4257 = vsel %vm4112, %v4256, %v4255
    %v4258 = vrot.slane %v4064, 1
    %v4259 = vsel %vm4115, %v4258, %v4257
    %v4260 = vrot.slane %v4066, 7
    %v4261 = vrot.slane %v4067, 6
    %v4262 = vsel %vm4100, %v4261, %v4260
    %v4263 = vrot.slane %v4068, 5
    %v4264 = vsel %vm4103, %v4263, %v4262
    %v4265 = vrot.slane %v4069, 4
    %v4266 = vsel %vm4106, %v4265, %v4264
    %v4267 = vrot.slane %v4070, 3
    %v4268 = vsel %vm4109, %v4267, %v4266
    %v4269 = vrot.slane %v4071, 2
    %v4270 = vsel %vm4112, %v4269, %v4268
    %v4271 = vrot.slane %v4072, 1
    %v4272 = vsel %vm4115, %v4271, %v4270
    %v4273 = vrot.slane %v4074, 7
    %v4274 = vrot.slane %v4075, 6
    %v4275 = vsel %vm4100, %v4274, %v4273
    %v4276 = vrot.slane %v4076, 5
    %v4277 = vsel %vm4103, %v4276, %v4275
    %v4278 = vrot.slane %v4077, 4
    %v4279 = vsel %vm4106, %v4278, %v4277
    %v4280 = vrot.slane %v4078, 3
    %v4281 = vsel %vm4109, %v4280, %v4279
    %v4282 = vrot.slane %v4079, 2
    %v4283 = vsel %vm4112, %v4282, %v4281
    %v4284 = vrot.slane %v4080, 1
    %v4285 = vsel %vm4115, %v4284, %v4283
    %v4286 = vrot.slane %v4082, 7
    %v4287 = vrot.slane %v4083, 6
    %v4288 = vsel %vm4100, %v4287, %v4286
    %v4289 = vrot.slane %v4084, 5
    %v4290 = vsel %vm4103, %v4289, %v4288
    %v4291 = vrot.slane %v4085, 4
    %v4292 = vsel %vm4106, %v4291, %v4290
    %v4293 = vrot.slane %v4086, 3
    %v4294 = vsel %vm4109, %v4293, %v4292
    %v4295 = vrot.slane %v4087, 2
    %v4296 = vsel %vm4112, %v4295, %v4294
    %v4297 = vrot.slane %v4088, 1
    %v4298 = vsel %vm4115, %v4297, %v4296
    %v4299 = vrot.slane %v4090, 7
    %v4300 = vrot.slane %v4091, 6
    %v4301 = vsel %vm4100, %v4300, %v4299
    %v4302 = vrot.slane %v4092, 5
    %v4303 = vsel %vm4103, %v4302, %v4301
    %v4304 = vrot.slane %v4093, 4
    %v4305 = vsel %vm4106, %v4304, %v4303
    %v4306 = vrot.slane %v4094, 3
    %v4307 = vsel %vm4109, %v4306, %v4305
    %v4308 = vrot.slane %v4095, 2
    %v4309 = vsel %vm4112, %v4308, %v4307
    %v4310 = vrot.slane %v4096, 1
    %v4311 = vsel %vm4115, %v4310, %v4309
    %v4312 = vpack.c.b16 %v4116, %v4116
    %v4313 = vpack.c.b16 %v3977, %v3977
    %v4314 = vpack.c.b16 %v4129, %v4129
    %v4315 = vpack.c.b16 %v3985, %v3985
    %v4316 = vpack.c.b16 %v4142, %v4142
    %v4317 = vpack.c.b16 %v3993, %v3993
    %v4318 = vpack.c.b16 %v4155, %v4155
    %v4319 = vpack.c.b16 %v4001, %v4001
    %v4320 = vpack.c.b16 %v4168, %v4168
    %v4321 = vpack.c.b16 %v4009, %v4009
    %v4322 = vpack.c.b16 %v4181, %v4181
    %v4323 = vpack.c.b16 %v4017, %v4017
    %v4324 = vpack.c.b16 %v4194, %v4194
    %v4325 = vpack.c.b16 %v4025, %v4025
    %v4326 = vpack.c.b16 %v4207, %v4207
    %v4327 = vpack.c.b16 %v4033, %v4033
    %v4328 = vpack.c.b16 %v4220, %v4220
    %v4329 = vpack.c.b16 %v4041, %v4041
    %v4330 = vpack.c.b16 %v4233, %v4233
    %v4331 = vpack.c.b16 %v4049, %v4049
    %v4332 = vpack.c.b16 %v4246, %v4246
    %v4333 = vpack.c.b16 %v4057, %v4057
    %v4334 = vpack.c.b16 %v4259, %v4259
    %v4335 = vpack.c.b16 %v4065, %v4065
    %v4336 = vpack.c.b16 %v4272, %v4272
    %v4337 = vpack.c.b16 %v4073, %v4073
    %v4338 = vpack.c.b16 %v4285, %v4285
    %v4339 = vpack.c.b16 %v4081, %v4081
    %v4340 = vpack.c.b16 %v4298, %v4298
    %v4341 = vpack.c.b16 %v4089, %v4089
    %v4342 = vpack.c.b16 %v4311, %v4311
    %v4343 = vpack.c.b16 %v4097, %v4097
    %s4376 = scalar_lea.vmem [#allocation2], 8
    %vm4377 = vcmask 257024
    %vm4378 = vmand %vm4377, %vm114
    %v4379 = vld [vmem:[%s4376] sm:$0xf]
    %v4380 = vsel %vm4378, %v4312, %v4379
    %4381 = vst [vmem:[%s4376] sm:$0xf] %v4380
    %v4382 = vld [vmem:[%s4376 + $0x4] sm:$0x1]
    %v4383 = vsel %vm53, %v4313, %v4382
    %4384 = vst [vmem:[%s4376 + $0x4] sm:$0x1] %v4383
    %v4385 = vld [vmem:[%s4376 + $0x8] sm:$0xf]
    %v4386 = vsel %vm4378, %v4314, %v4385
    %4387 = vst [vmem:[%s4376 + $0x8] sm:$0xf] %v4386
    %v4388 = vld [vmem:[%s4376 + $0xc] sm:$0x1]
    %v4389 = vsel %vm53, %v4315, %v4388
    %4390 = vst [vmem:[%s4376 + $0xc] sm:$0x1] %v4389
    %v4391 = vld [vmem:[%s4376 + $0x10] sm:$0xf]
    %v4392 = vsel %vm4378, %v4316, %v4391
    %4393 = vst [vmem:[%s4376 + $0x10] sm:$0xf] %v4392
    %v4394 = vld [vmem:[%s4376 + $0x14] sm:$0x1]
    %v4395 = vsel %vm53, %v4317, %v4394
    %4396 = vst [vmem:[%s4376 + $0x14] sm:$0x1] %v4395
    %v4397 = vld [vmem:[%s4376 + $0x18] sm:$0xf]
    %v4398 = vsel %vm4378, %v4318, %v4397
    %4399 = vst [vmem:[%s4376 + $0x18] sm:$0xf] %v4398
    %v4400 = vld [vmem:[%s4376 + $0x1c] sm:$0x1]
    %v4401 = vsel %vm53, %v4319, %v4400
    %4402 = vst [vmem:[%s4376 + $0x1c] sm:$0x1] %v4401
    %v4403 = vld [vmem:[%s4376 + $0x20] sm:$0xf]
    %v4404 = vsel %vm4378, %v4320, %v4403
    %4405 = vst [vmem:[%s4376 + $0x20] sm:$0xf] %v4404
    %v4406 = vld [vmem:[%s4376 + $0x24] sm:$0x1]
    %v4407 = vsel %vm53, %v4321, %v4406
    %4408 = vst [vmem:[%s4376 + $0x24] sm:$0x1] %v4407
    %v4409 = vld [vmem:[%s4376 + $0x28] sm:$0xf]
    %v4410 = vsel %vm4378, %v4322, %v4409
    %4411 = vst [vmem:[%s4376 + $0x28] sm:$0xf] %v4410
    %v4412 = vld [vmem:[%s4376 + $0x2c] sm:$0x1]
    %v4413 = vsel %vm53, %v4323, %v4412
    %4414 = vst [vmem:[%s4376 + $0x2c] sm:$0x1] %v4413
    %v4415 = vld [vmem:[%s4376 + $0x30] sm:$0xf]
    %v4416 = vsel %vm4378, %v4324, %v4415
    %4417 = vst [vmem:[%s4376 + $0x30] sm:$0xf] %v4416
    %v4418 = vld [vmem:[%s4376 + $0x34] sm:$0x1]
    %v4419 = vsel %vm53, %v4325, %v4418
    %4420 = vst [vmem:[%s4376 + $0x34] sm:$0x1] %v4419
    %v4421 = vld [vmem:[%s4376 + $0x38] sm:$0xf]
    %v4422 = vsel %vm4378, %v4326, %v4421
    %4423 = vst [vmem:[%s4376 + $0x38] sm:$0xf] %v4422
    %v4424 = vld [vmem:[%s4376 + $0x3c] sm:$0x1]
    %v4425 = vsel %vm53, %v4327, %v4424
    %4426 = vst [vmem:[%s4376 + $0x3c] sm:$0x1] %v4425
    %v4427 = vld [vmem:[%s4376 + $0x50] sm:$0xf]
    %v4428 = vsel %vm4378, %v4328, %v4427
    %4429 = vst [vmem:[%s4376 + $0x50] sm:$0xf] %v4428
    %v4430 = vld [vmem:[%s4376 + $0x54] sm:$0x1]
    %v4431 = vsel %vm53, %v4329, %v4430
    %4432 = vst [vmem:[%s4376 + $0x54] sm:$0x1] %v4431
    %v4433 = vld [vmem:[%s4376 + $0x58] sm:$0xf]
    %v4434 = vsel %vm4378, %v4330, %v4433
    %4435 = vst [vmem:[%s4376 + $0x58] sm:$0xf] %v4434
    %v4436 = vld [vmem:[%s4376 + $0x5c] sm:$0x1]
    %v4437 = vsel %vm53, %v4331, %v4436
    %4438 = vst [vmem:[%s4376 + $0x5c] sm:$0x1] %v4437
    %v4439 = vld [vmem:[%s4376 + $0x60] sm:$0xf]
    %v4440 = vsel %vm4378, %v4332, %v4439
    %4441 = vst [vmem:[%s4376 + $0x60] sm:$0xf] %v4440
    %v4442 = vld [vmem:[%s4376 + $0x64] sm:$0x1]
    %v4443 = vsel %vm53, %v4333, %v4442
    %4444 = vst [vmem:[%s4376 + $0x64] sm:$0x1] %v4443
    %v4445 = vld [vmem:[%s4376 + $0x68] sm:$0xf]
    %v4446 = vsel %vm4378, %v4334, %v4445
    %4447 = vst [vmem:[%s4376 + $0x68] sm:$0xf] %v4446
    %v4448 = vld [vmem:[%s4376 + $0x6c] sm:$0x1]
    %v4449 = vsel %vm53, %v4335, %v4448
    %4450 = vst [vmem:[%s4376 + $0x6c] sm:$0x1] %v4449
    %v4451 = vld [vmem:[%s4376 + $0x70] sm:$0xf]
    %v4452 = vsel %vm4378, %v4336, %v4451
    %4453 = vst [vmem:[%s4376 + $0x70] sm:$0xf] %v4452
    %v4454 = vld [vmem:[%s4376 + $0x74] sm:$0x1]
    %v4455 = vsel %vm53, %v4337, %v4454
    %4456 = vst [vmem:[%s4376 + $0x74] sm:$0x1] %v4455
    %v4457 = vld [vmem:[%s4376 + $0x78] sm:$0xf]
    %v4458 = vsel %vm4378, %v4338, %v4457
    %4459 = vst [vmem:[%s4376 + $0x78] sm:$0xf] %v4458
    %v4460 = vld [vmem:[%s4376 + $0x7c] sm:$0x1]
    %v4461 = vsel %vm53, %v4339, %v4460
    %4462 = vst [vmem:[%s4376 + $0x7c] sm:$0x1] %v4461
    %v4463 = vld [vmem:[%s4376 + $0x80] sm:$0xf]
    %v4464 = vsel %vm4378, %v4340, %v4463
    %4465 = vst [vmem:[%s4376 + $0x80] sm:$0xf] %v4464
    %v4466 = vld [vmem:[%s4376 + $0x84] sm:$0x1]
    %v4467 = vsel %vm53, %v4341, %v4466
    %4468 = vst [vmem:[%s4376 + $0x84] sm:$0x1] %v4467
    %v4469 = vld [vmem:[%s4376 + $0x88] sm:$0xf]
    %v4470 = vsel %vm4378, %v4342, %v4469
    %4471 = vst [vmem:[%s4376 + $0x88] sm:$0xf] %v4470
    %v4472 = vld [vmem:[%s4376 + $0x8c] sm:$0x1]
    %v4473 = vsel %vm53, %v4343, %v4472
    %4474 = vst [vmem:[%s4376 + $0x8c] sm:$0x1] %v4473
    %v4475 = vld [vmem:[#allocation2] sm:$0xf]
    %v4476 = vld [vmem:[#allocation2 + $0x8] sm:$0xf]
    %v4477 = vld [vmem:[#allocation2 + $0x10] sm:$0xf]
    %v4478 = vld [vmem:[#allocation2 + $0x18] sm:$0xf]
    %v4479 = vld [vmem:[#allocation2 + $0x20] sm:$0xf]
    %v4480 = vld [vmem:[#allocation2 + $0x28] sm:$0xf]
    %v4481 = vld [vmem:[#allocation2 + $0x30] sm:$0xf]
    %v4482 = vld [vmem:[#allocation2 + $0x38] sm:$0xf]
    %v4483 = vld [vmem:[#allocation2 + $0x50] sm:$0xf]
    %v4484 = vld [vmem:[#allocation2 + $0x58] sm:$0xf]
    %v4485 = vld [vmem:[#allocation2 + $0x60] sm:$0xf]
    %v4486 = vld [vmem:[#allocation2 + $0x68] sm:$0xf]
    %v4487 = vld [vmem:[#allocation2 + $0x70] sm:$0xf]
    %v4488 = vld [vmem:[#allocation2 + $0x78] sm:$0xf]
    %v4489 = vld [vmem:[#allocation2 + $0x80] sm:$0xf]
    %v4490 = vld [vmem:[#allocation2 + $0x88] sm:$0xf]
    %4491 = vst.msk [vmem:[#allocation4] sm:$0xf] %vm40, %v4475
    %4492 = vst.msk [vmem:[#allocation4 + $0xc] sm:$0xf] %vm40, %v4476
    %4493 = vst.msk [vmem:[#allocation4 + $0x18] sm:$0xf] %vm40, %v4477
    %4494 = vst.msk [vmem:[#allocation4 + $0x24] sm:$0xf] %vm40, %v4478
    %4495 = vst.msk [vmem:[#allocation4 + $0x30] sm:$0xf] %vm40, %v4479
    %4496 = vst.msk [vmem:[#allocation4 + $0x3c] sm:$0xf] %vm40, %v4480
    %4497 = vst.msk [vmem:[#allocation4 + $0x48] sm:$0xf] %vm40, %v4481
    %4498 = vst.msk [vmem:[#allocation4 + $0x54] sm:$0xf] %vm40, %v4482
    %4499 = vst.msk [vmem:[#allocation4 + $0x60] sm:$0xf] %vm40, %v4483
    %4500 = vst.msk [vmem:[#allocation4 + $0x6c] sm:$0xf] %vm40, %v4484
    %4501 = vst.msk [vmem:[#allocation4 + $0x78] sm:$0xf] %vm40, %v4485
    %4502 = vst.msk [vmem:[#allocation4 + $0x84] sm:$0xf] %vm40, %v4486
    %4503 = vst.msk [vmem:[#allocation4 + $0x90] sm:$0xf] %vm40, %v4487
    %4504 = vst.msk [vmem:[#allocation4 + $0x9c] sm:$0xf] %vm40, %v4488
    %4505 = vst.msk [vmem:[#allocation4 + $0xa8] sm:$0xf] %vm40, %v4489
    %4506 = vst.msk [vmem:[#allocation4 + $0xb4] sm:$0xf] %vm40, %v4490
    %v4507 = vld [vmem:[#allocation2] sm:$0xf]
    %v4508 = vld [vmem:[#allocation2 + $0x4] sm:$0x1]
    %v4509 = vld [vmem:[#allocation2 + $0x8] sm:$0xf]
    %v4510 = vld [vmem:[#allocation2 + $0xc] sm:$0x1]
    %v4511 = vld [vmem:[#allocation2 + $0x10] sm:$0xf]
    %v4512 = vld [vmem:[#allocation2 + $0x14] sm:$0x1]
    %v4513 = vld [vmem:[#allocation2 + $0x18] sm:$0xf]
    %v4514 = vld [vmem:[#allocation2 + $0x1c] sm:$0x1]
    %v4515 = vld [vmem:[#allocation2 + $0x20] sm:$0xf]
    %v4516 = vld [vmem:[#allocation2 + $0x24] sm:$0x1]
    %v4517 = vld [vmem:[#allocation2 + $0x28] sm:$0xf]
    %v4518 = vld [vmem:[#allocation2 + $0x2c] sm:$0x1]
    %v4519 = vld [vmem:[#allocation2 + $0x30] sm:$0xf]
    %v4520 = vld [vmem:[#allocation2 + $0x34] sm:$0x1]
    %v4521 = vld [vmem:[#allocation2 + $0x38] sm:$0xf]
    %v4522 = vld [vmem:[#allocation2 + $0x3c] sm:$0x1]
    %v4523 = vld [vmem:[#allocation2 + $0x50] sm:$0xf]
    %v4524 = vld [vmem:[#allocation2 + $0x54] sm:$0x1]
    %v4525 = vld [vmem:[#allocation2 + $0x58] sm:$0xf]
    %v4526 = vld [vmem:[#allocation2 + $0x5c] sm:$0x1]
    %v4527 = vld [vmem:[#allocation2 + $0x60] sm:$0xf]
    %v4528 = vld [vmem:[#allocation2 + $0x64] sm:$0x1]
    %v4529 = vld [vmem:[#allocation2 + $0x68] sm:$0xf]
    %v4530 = vld [vmem:[#allocation2 + $0x6c] sm:$0x1]
    %v4531 = vld [vmem:[#allocation2 + $0x70] sm:$0xf]
    %v4532 = vld [vmem:[#allocation2 + $0x74] sm:$0x1]
    %v4533 = vld [vmem:[#allocation2 + $0x78] sm:$0xf]
    %v4534 = vld [vmem:[#allocation2 + $0x7c] sm:$0x1]
    %v4535 = vld [vmem:[#allocation2 + $0x80] sm:$0xf]
    %v4536 = vld [vmem:[#allocation2 + $0x84] sm:$0x1]
    %v4537 = vld [vmem:[#allocation2 + $0x88] sm:$0xf]
    %v4538 = vld [vmem:[#allocation2 + $0x8c] sm:$0x1]
    %vm4539 = vsmask.f32 3328
    %vm4540 = vsmask.f32 7440
    %vm4541 = vmor %vm4539, %vm4540
    %v4543 = vshrl.u32 %v4507, 16
    %v4545 = vrot.slane %v4543, 4
    %v4546 = vshll.u32 %v4507, 16
    %v4548 = vrot.slane %v4546, 5
    %v4549 = vor.u32 %v4545, %v4548
    %v4550 = vrot.slane %v4549, 4
    %v4552 = vshll.u32 %v4508, 16
    %v4554 = vrot.slane %v4552, 5
    %v4555 = vsel %vm4541, %v4550, %v4554
    %v4557 = vshrl.u32 %v4509, 16
    %v4559 = vrot.slane %v4557, 4
    %v4560 = vshll.u32 %v4509, 16
    %v4562 = vrot.slane %v4560, 5
    %v4563 = vor.u32 %v4559, %v4562
    %v4564 = vrot.slane %v4563, 4
    %v4566 = vshll.u32 %v4510, 16
    %v4568 = vrot.slane %v4566, 5
    %v4569 = vsel %vm4541, %v4564, %v4568
    %v4571 = vshrl.u32 %v4511, 16
    %v4573 = vrot.slane %v4571, 4
    %v4574 = vshll.u32 %v4511, 16
    %v4576 = vrot.slane %v4574, 5
    %v4577 = vor.u32 %v4573, %v4576
    %v4578 = vrot.slane %v4577, 4
    %v4580 = vshll.u32 %v4512, 16
    %v4582 = vrot.slane %v4580, 5
    %v4583 = vsel %vm4541, %v4578, %v4582
    %v4585 = vshrl.u32 %v4513, 16
    %v4587 = vrot.slane %v4585, 4
    %v4588 = vshll.u32 %v4513, 16
    %v4590 = vrot.slane %v4588, 5
    %v4591 = vor.u32 %v4587, %v4590
    %v4592 = vrot.slane %v4591, 4
    %v4594 = vshll.u32 %v4514, 16
    %v4596 = vrot.slane %v4594, 5
    %v4597 = vsel %vm4541, %v4592, %v4596
    %v4599 = vshrl.u32 %v4515, 16
    %v4601 = vrot.slane %v4599, 4
    %v4602 = vshll.u32 %v4515, 16
    %v4604 = vrot.slane %v4602, 5
    %v4605 = vor.u32 %v4601, %v4604
    %v4606 = vrot.slane %v4605, 4
    %v4608 = vshll.u32 %v4516, 16
    %v4610 = vrot.slane %v4608, 5
    %v4611 = vsel %vm4541, %v4606, %v4610
    %v4613 = vshrl.u32 %v4517, 16
    %v4615 = vrot.slane %v4613, 4
    %v4616 = vshll.u32 %v4517, 16
    %v4618 = vrot.slane %v4616, 5
    %v4619 = vor.u32 %v4615, %v4618
    %v4620 = vrot.slane %v4619, 4
    %v4622 = vshll.u32 %v4518, 16
    %v4624 = vrot.slane %v4622, 5
    %v4625 = vsel %vm4541, %v4620, %v4624
    %v4627 = vshrl.u32 %v4519, 16
    %v4629 = vrot.slane %v4627, 4
    %v4630 = vshll.u32 %v4519, 16
    %v4632 = vrot.slane %v4630, 5
    %v4633 = vor.u32 %v4629, %v4632
    %v4634 = vrot.slane %v4633, 4
    %v4636 = vshll.u32 %v4520, 16
    %v4638 = vrot.slane %v4636, 5
    %v4639 = vsel %vm4541, %v4634, %v4638
    %v4641 = vshrl.u32 %v4521, 16
    %v4643 = vrot.slane %v4641, 4
    %v4644 = vshll.u32 %v4521, 16
    %v4646 = vrot.slane %v4644, 5
    %v4647 = vor.u32 %v4643, %v4646
    %v4648 = vrot.slane %v4647, 4
    %v4650 = vshll.u32 %v4522, 16
    %v4652 = vrot.slane %v4650, 5
    %v4653 = vsel %vm4541, %v4648, %v4652
    %v4655 = vshrl.u32 %v4523, 16
    %v4657 = vrot.slane %v4655, 4
    %v4658 = vshll.u32 %v4523, 16
    %v4660 = vrot.slane %v4658, 5
    %v4661 = vor.u32 %v4657, %v4660
    %v4662 = vrot.slane %v4661, 4
    %v4664 = vshll.u32 %v4524, 16
    %v4666 = vrot.slane %v4664, 5
    %v4667 = vsel %vm4541, %v4662, %v4666
    %v4669 = vshrl.u32 %v4525, 16
    %v4671 = vrot.slane %v4669, 4
    %v4672 = vshll.u32 %v4525, 16
    %v4674 = vrot.slane %v4672, 5
    %v4675 = vor.u32 %v4671, %v4674
    %v4676 = vrot.slane %v4675, 4
    %v4678 = vshll.u32 %v4526, 16
    %v4680 = vrot.slane %v4678, 5
    %v4681 = vsel %vm4541, %v4676, %v4680
    %v4683 = vshrl.u32 %v4527, 16
    %v4685 = vrot.slane %v4683, 4
    %v4686 = vshll.u32 %v4527, 16
    %v4688 = vrot.slane %v4686, 5
    %v4689 = vor.u32 %v4685, %v4688
    %v4690 = vrot.slane %v4689, 4
    %v4692 = vshll.u32 %v4528, 16
    %v4694 = vrot.slane %v4692, 5
    %v4695 = vsel %vm4541, %v4690, %v4694
    %v4697 = vshrl.u32 %v4529, 16
    %v4699 = vrot.slane %v4697, 4
    %v4700 = vshll.u32 %v4529, 16
    %v4702 = vrot.slane %v4700, 5
    %v4703 = vor.u32 %v4699, %v4702
    %v4704 = vrot.slane %v4703, 4
    %v4706 = vshll.u32 %v4530, 16
    %v4708 = vrot.slane %v4706, 5
    %v4709 = vsel %vm4541, %v4704, %v4708
    %v4711 = vshrl.u32 %v4531, 16
    %v4713 = vrot.slane %v4711, 4
    %v4714 = vshll.u32 %v4531, 16
    %v4716 = vrot.slane %v4714, 5
    %v4717 = vor.u32 %v4713, %v4716
    %v4718 = vrot.slane %v4717, 4
    %v4720 = vshll.u32 %v4532, 16
    %v4722 = vrot.slane %v4720, 5
    %v4723 = vsel %vm4541, %v4718, %v4722
    %v4725 = vshrl.u32 %v4533, 16
    %v4727 = vrot.slane %v4725, 4
    %v4728 = vshll.u32 %v4533, 16
    %v4730 = vrot.slane %v4728, 5
    %v4731 = vor.u32 %v4727, %v4730
    %v4732 = vrot.slane %v4731, 4
    %v4734 = vshll.u32 %v4534, 16
    %v4736 = vrot.slane %v4734, 5
    %v4737 = vsel %vm4541, %v4732, %v4736
    %v4739 = vshrl.u32 %v4535, 16
    %v4741 = vrot.slane %v4739, 4
    %v4742 = vshll.u32 %v4535, 16
    %v4744 = vrot.slane %v4742, 5
    %v4745 = vor.u32 %v4741, %v4744
    %v4746 = vrot.slane %v4745, 4
    %v4748 = vshll.u32 %v4536, 16
    %v4750 = vrot.slane %v4748, 5
    %v4751 = vsel %vm4541, %v4746, %v4750
    %v4753 = vshrl.u32 %v4537, 16
    %v4755 = vrot.slane %v4753, 4
    %v4756 = vshll.u32 %v4537, 16
    %v4758 = vrot.slane %v4756, 5
    %v4759 = vor.u32 %v4755, %v4758
    %v4760 = vrot.slane %v4759, 4
    %v4762 = vshll.u32 %v4538, 16
    %v4764 = vrot.slane %v4762, 5
    %v4765 = vsel %vm4541, %v4760, %v4764
    %4766 = vrot.lane.b32.xlu0 %v4555, 32
    %v4767 = vpop.permute.xlu0 %4766
    %4768 = vrot.lane.b32.xlu0 %v4569, 32
    %v4769 = vpop.permute.xlu0 %4768
    %4770 = vrot.lane.b32.xlu0 %v4583, 32
    %v4771 = vpop.permute.xlu0 %4770
    %4772 = vrot.lane.b32.xlu0 %v4597, 32
    %v4773 = vpop.permute.xlu0 %4772
    %4774 = vrot.lane.b32.xlu0 %v4611, 32
    %v4775 = vpop.permute.xlu0 %4774
    %4776 = vrot.lane.b32.xlu0 %v4625, 32
    %v4777 = vpop.permute.xlu0 %4776
    %4778 = vrot.lane.b32.xlu0 %v4639, 32
    %v4779 = vpop.permute.xlu0 %4778
    %4780 = vrot.lane.b32.xlu0 %v4653, 32
    %v4781 = vpop.permute.xlu0 %4780
    %4782 = vrot.lane.b32.xlu0 %v4667, 32
    %v4783 = vpop.permute.xlu0 %4782
    %4784 = vrot.lane.b32.xlu0 %v4681, 32
    %v4785 = vpop.permute.xlu0 %4784
    %4786 = vrot.lane.b32.xlu0 %v4695, 32
    %v4787 = vpop.permute.xlu0 %4786
    %4788 = vrot.lane.b32.xlu0 %v4709, 32
    %v4789 = vpop.permute.xlu0 %4788
    %4790 = vrot.lane.b32.xlu0 %v4723, 32
    %v4791 = vpop.permute.xlu0 %4790
    %4792 = vrot.lane.b32.xlu0 %v4737, 32
    %v4793 = vpop.permute.xlu0 %4792
    %4794 = vrot.lane.b32.xlu0 %v4751, 32
    %v4795 = vpop.permute.xlu0 %4794
    %4796 = vrot.lane.b32.xlu0 %v4765, 32
    %v4797 = vpop.permute.xlu0 %4796
    %vm4814 = vcmask 519424
    %4815 = vst.msk [vmem:[#allocation4] sm:$0xf] %vm4814, %v4767
    %4816 = vst.msk [vmem:[#allocation4 + $0xc] sm:$0xf] %vm4814, %v4769
    %4817 = vst.msk [vmem:[#allocation4 + $0x18] sm:$0xf] %vm4814, %v4771
    %4818 = vst.msk [vmem:[#allocation4 + $0x24] sm:$0xf] %vm4814, %v4773
    %4819 = vst.msk [vmem:[#allocation4 + $0x30] sm:$0xf] %vm4814, %v4775
    %4820 = vst.msk [vmem:[#allocation4 + $0x3c] sm:$0xf] %vm4814, %v4777
    %4821 = vst.msk [vmem:[#allocation4 + $0x48] sm:$0xf] %vm4814, %v4779
    %4822 = vst.msk [vmem:[#allocation4 + $0x54] sm:$0xf] %vm4814, %v4781
    %4823 = vst.msk [vmem:[#allocation4 + $0x60] sm:$0xf] %vm4814, %v4783
    %4824 = vst.msk [vmem:[#allocation4 + $0x6c] sm:$0xf] %vm4814, %v4785
    %4825 = vst.msk [vmem:[#allocation4 + $0x78] sm:$0xf] %vm4814, %v4787
    %4826 = vst.msk [vmem:[#allocation4 + $0x84] sm:$0xf] %vm4814, %v4789
    %4827 = vst.msk [vmem:[#allocation4 + $0x90] sm:$0xf] %vm4814, %v4791
    %4828 = vst.msk [vmem:[#allocation4 + $0x9c] sm:$0xf] %vm4814, %v4793
    %4829 = vst.msk [vmem:[#allocation4 + $0xa8] sm:$0xf] %vm4814, %v4795
    %4830 = vst.msk [vmem:[#allocation4 + $0xb4] sm:$0xf] %vm4814, %v4797
    %v4831 = vld [vmem:[#allocation2] sm:$0xe]
    %v4832 = vld [vmem:[#allocation2 + $0x4] sm:$0x1]
    %v4833 = vld [vmem:[#allocation2 + $0x8] sm:$0xe]
    %v4834 = vld [vmem:[#allocation2 + $0xc] sm:$0x1]
    %v4835 = vld [vmem:[#allocation2 + $0x10] sm:$0xe]
    %v4836 = vld [vmem:[#allocation2 + $0x14] sm:$0x1]
    %v4837 = vld [vmem:[#allocation2 + $0x18] sm:$0xe]
    %v4838 = vld [vmem:[#allocation2 + $0x1c] sm:$0x1]
    %v4839 = vld [vmem:[#allocation2 + $0x20] sm:$0xe]
    %v4840 = vld [vmem:[#allocation2 + $0x24] sm:$0x1]
    %v4841 = vld [vmem:[#allocation2 + $0x28] sm:$0xe]
    %v4842 = vld [vmem:[#allocation2 + $0x2c] sm:$0x1]
    %v4843 = vld [vmem:[#allocation2 + $0x30] sm:$0xe]
    %v4844 = vld [vmem:[#allocation2 + $0x34] sm:$0x1]
    %v4845 = vld [vmem:[#allocation2 + $0x38] sm:$0xe]
    %v4846 = vld [vmem:[#allocation2 + $0x3c] sm:$0x1]
    %v4847 = vld [vmem:[#allocation2 + $0x50] sm:$0xe]
    %v4848 = vld [vmem:[#allocation2 + $0x54] sm:$0x1]
    %v4849 = vld [vmem:[#allocation2 + $0x58] sm:$0xe]
    %v4850 = vld [vmem:[#allocation2 + $0x5c] sm:$0x1]
    %v4851 = vld [vmem:[#allocation2 + $0x60] sm:$0xe]
    %v4852 = vld [vmem:[#allocation2 + $0x64] sm:$0x1]
    %v4853 = vld [vmem:[#allocation2 + $0x68] sm:$0xe]
    %v4854 = vld [vmem:[#allocation2 + $0x6c] sm:$0x1]
    %v4855 = vld [vmem:[#allocation2 + $0x70] sm:$0xe]
    %v4856 = vld [vmem:[#allocation2 + $0x74] sm:$0x1]
    %v4857 = vld [vmem:[#allocation2 + $0x78] sm:$0xe]
    %v4858 = vld [vmem:[#allocation2 + $0x7c] sm:$0x1]
    %v4859 = vld [vmem:[#allocation2 + $0x80] sm:$0xe]
    %v4860 = vld [vmem:[#allocation2 + $0x84] sm:$0x1]
    %v4861 = vld [vmem:[#allocation2 + $0x88] sm:$0xe]
    %v4862 = vld [vmem:[#allocation2 + $0x8c] sm:$0x1]
    %vm4895 = vcmask 1042432
    %vm4896 = vcmask 1046532
    %vm4897 = vmor %vm4895, %vm4896
    %v4898 = vrot.slane %v4831, 5
    %v4899 = vrot.slane %v4898, 4
    %v4900 = vrot.slane %v4832, 5
    %v4901 = vsel %vm4897, %v4899, %v4900
    %v4902 = vrot.slane %v4833, 5
    %v4903 = vrot.slane %v4902, 4
    %v4904 = vrot.slane %v4834, 5
    %v4905 = vsel %vm4897, %v4903, %v4904
    %v4906 = vrot.slane %v4835, 5
    %v4907 = vrot.slane %v4906, 4
    %v4908 = vrot.slane %v4836, 5
    %v4909 = vsel %vm4897, %v4907, %v4908
    %v4910 = vrot.slane %v4837, 5
    %v4911 = vrot.slane %v4910, 4
    %v4912 = vrot.slane %v4838, 5
    %v4913 = vsel %vm4897, %v4911, %v4912
    %v4914 = vrot.slane %v4839, 5
    %v4915 = vrot.slane %v4914, 4
    %v4916 = vrot.slane %v4840, 5
    %v4917 = vsel %vm4897, %v4915, %v4916
    %v4918 = vrot.slane %v4841, 5
    %v4919 = vrot.slane %v4918, 4
    %v4920 = vrot.slane %v4842, 5
    %v4921 = vsel %vm4897, %v4919, %v4920
    %v4922 = vrot.slane %v4843, 5
    %v4923 = vrot.slane %v4922, 4
    %v4924 = vrot.slane %v4844, 5
    %v4925 = vsel %vm4897, %v4923, %v4924
    %v4926 = vrot.slane %v4845, 5
    %v4927 = vrot.slane %v4926, 4
    %v4928 = vrot.slane %v4846, 5
    %v4929 = vsel %vm4897, %v4927, %v4928
    %v4930 = vrot.slane %v4847, 5
    %v4931 = vrot.slane %v4930, 4
    %v4932 = vrot.slane %v4848, 5
    %v4933 = vsel %vm4897, %v4931, %v4932
    %v4934 = vrot.slane %v4849, 5
    %v4935 = vrot.slane %v4934, 4
    %v4936 = vrot.slane %v4850, 5
    %v4937 = vsel %vm4897, %v4935, %v4936
    %v4938 = vrot.slane %v4851, 5
    %v4939 = vrot.slane %v4938, 4
    %v4940 = vrot.slane %v4852, 5
    %v4941 = vsel %vm4897, %v4939, %v4940
    %v4942 = vrot.slane %v4853, 5
    %v4943 = vrot.slane %v4942, 4
    %v4944 = vrot.slane %v4854, 5
    %v4945 = vsel %vm4897, %v4943, %v4944
    %v4946 = vrot.slane %v4855, 5
    %v4947 = vrot.slane %v4946, 4
    %v4948 = vrot.slane %v4856, 5
    %v4949 = vsel %vm4897, %v4947, %v4948
    %v4950 = vrot.slane %v4857, 5
    %v4951 = vrot.slane %v4950, 4
    %v4952 = vrot.slane %v4858, 5
    %v4953 = vsel %vm4897, %v4951, %v4952
    %v4954 = vrot.slane %v4859, 5
    %v4955 = vrot.slane %v4954, 4
    %v4956 = vrot.slane %v4860, 5
    %v4957 = vsel %vm4897, %v4955, %v4956
    %v4958 = vrot.slane %v4861, 5
    %v4959 = vrot.slane %v4958, 4
    %v4960 = vrot.slane %v4862, 5
    %v4961 = vsel %vm4897, %v4959, %v4960
    %4962 = vrot.lane.b32.xlu0 %v4901, 64
    %v4963 = vpop.permute.xlu0 %4962
    %4964 = vrot.lane.b32.xlu0 %v4905, 64
    %v4965 = vpop.permute.xlu0 %4964
    %4966 = vrot.lane.b32.xlu0 %v4909, 64
    %v4967 = vpop.permute.xlu0 %4966
    %4968 = vrot.lane.b32.xlu0 %v4913, 64
    %v4969 = vpop.permute.xlu0 %4968
    %4970 = vrot.lane.b32.xlu0 %v4917, 64
    %v4971 = vpop.permute.xlu0 %4970
    %4972 = vrot.lane.b32.xlu0 %v4921, 64
    %v4973 = vpop.permute.xlu0 %4972
    %4974 = vrot.lane.b32.xlu0 %v4925, 64
    %v4975 = vpop.permute.xlu0 %4974
    %4976 = vrot.lane.b32.xlu0 %v4929, 64
    %v4977 = vpop.permute.xlu0 %4976
    %4978 = vrot.lane.b32.xlu0 %v4933, 64
    %v4979 = vpop.permute.xlu0 %4978
    %4980 = vrot.lane.b32.xlu0 %v4937, 64
    %v4981 = vpop.permute.xlu0 %4980
    %4982 = vrot.lane.b32.xlu0 %v4941, 64
    %v4983 = vpop.permute.xlu0 %4982
    %4984 = vrot.lane.b32.xlu0 %v4945, 64
    %v4985 = vpop.permute.xlu0 %4984
    %4986 = vrot.lane.b32.xlu0 %v4949, 64
    %v4987 = vpop.permute.xlu0 %4986
    %4988 = vrot.lane.b32.xlu0 %v4953, 64
    %v4989 = vpop.permute.xlu0 %4988
    %4990 = vrot.lane.b32.xlu0 %v4957, 64
    %v4991 = vpop.permute.xlu0 %4990
    %4992 = vrot.lane.b32.xlu0 %v4961, 64
    %v4993 = vpop.permute.xlu0 %4992
    %vm5010 = vcmask 781824
    %5011 = vst.msk [vmem:[#allocation4] sm:$0xf] %vm5010, %v4963
    %5012 = vst.msk [vmem:[#allocation4 + $0xc] sm:$0xf] %vm5010, %v4965
    %5013 = vst.msk [vmem:[#allocation4 + $0x18] sm:$0xf] %vm5010, %v4967
    %5014 = vst.msk [vmem:[#allocation4 + $0x24] sm:$0xf] %vm5010, %v4969
    %5015 = vst.msk [vmem:[#allocation4 + $0x30] sm:$0xf] %vm5010, %v4971
    %5016 = vst.msk [vmem:[#allocation4 + $0x3c] sm:$0xf] %vm5010, %v4973
    %5017 = vst.msk [vmem:[#allocation4 + $0x48] sm:$0xf] %vm5010, %v4975
    %5018 = vst.msk [vmem:[#allocation4 + $0x54] sm:$0xf] %vm5010, %v4977
    %5019 = vst.msk [vmem:[#allocation4 + $0x60] sm:$0xf] %vm5010, %v4979
    %5020 = vst.msk [vmem:[#allocation4 + $0x6c] sm:$0xf] %vm5010, %v4981
    %5021 = vst.msk [vmem:[#allocation4 + $0x78] sm:$0xf] %vm5010, %v4983
    %5022 = vst.msk [vmem:[#allocation4 + $0x84] sm:$0xf] %vm5010, %v4985
    %5023 = vst.msk [vmem:[#allocation4 + $0x90] sm:$0xf] %vm5010, %v4987
    %5024 = vst.msk [vmem:[#allocation4 + $0x9c] sm:$0xf] %vm5010, %v4989
    %5025 = vst.msk [vmem:[#allocation4 + $0xa8] sm:$0xf] %vm5010, %v4991
    %5026 = vst.msk [vmem:[#allocation4 + $0xb4] sm:$0xf] %vm5010, %v4993
    %v5027 = vld [vmem:[%s4376] sm:$0xf]
    %v5028 = vld [vmem:[%s4376 + $0x8] sm:$0xf]
    %v5029 = vld [vmem:[%s4376 + $0x10] sm:$0xf]
    %v5030 = vld [vmem:[%s4376 + $0x18] sm:$0xf]
    %v5031 = vld [vmem:[%s4376 + $0x20] sm:$0xf]
    %v5032 = vld [vmem:[%s4376 + $0x28] sm:$0xf]
    %v5033 = vld [vmem:[%s4376 + $0x30] sm:$0xf]
    %v5034 = vld [vmem:[%s4376 + $0x38] sm:$0xf]
    %v5035 = vld [vmem:[%s4376 + $0x50] sm:$0xf]
    %v5036 = vld [vmem:[%s4376 + $0x58] sm:$0xf]
    %v5037 = vld [vmem:[%s4376 + $0x60] sm:$0xf]
    %v5038 = vld [vmem:[%s4376 + $0x68] sm:$0xf]
    %v5039 = vld [vmem:[%s4376 + $0x70] sm:$0xf]
    %v5040 = vld [vmem:[%s4376 + $0x78] sm:$0xf]
    %v5041 = vld [vmem:[%s4376 + $0x80] sm:$0xf]
    %v5042 = vld [vmem:[%s4376 + $0x88] sm:$0xf]
    %5059 = vrot.lane.b32.xlu0 %v5027, 96
    %v5060 = vpop.permute.xlu0 %5059
    %5061 = vrot.lane.b32.xlu0 %v5028, 96
    %v5062 = vpop.permute.xlu0 %5061
    %5063 = vrot.lane.b32.xlu0 %v5029, 96
    %v5064 = vpop.permute.xlu0 %5063
    %5065 = vrot.lane.b32.xlu0 %v5030, 96
    %v5066 = vpop.permute.xlu0 %5065
    %5067 = vrot.lane.b32.xlu0 %v5031, 96
    %v5068 = vpop.permute.xlu0 %5067
    %5069 = vrot.lane.b32.xlu0 %v5032, 96
    %v5070 = vpop.permute.xlu0 %5069
    %5071 = vrot.lane.b32.xlu0 %v5033, 96
    %v5072 = vpop.permute.xlu0 %5071
    %5073 = vrot.lane.b32.xlu0 %v5034, 96
    %v5074 = vpop.permute.xlu0 %5073
    %5075 = vrot.lane.b32.xlu0 %v5035, 96
    %v5076 = vpop.permute.xlu0 %5075
    %5077 = vrot.lane.b32.xlu0 %v5036, 96
    %v5078 = vpop.permute.xlu0 %5077
    %5079 = vrot.lane.b32.xlu0 %v5037, 96
    %v5080 = vpop.permute.xlu0 %5079
    %5081 = vrot.lane.b32.xlu0 %v5038, 96
    %v5082 = vpop.permute.xlu0 %5081
    %5083 = vrot.lane.b32.xlu0 %v5039, 96
    %v5084 = vpop.permute.xlu0 %5083
    %5085 = vrot.lane.b32.xlu0 %v5040, 96
    %v5086 = vpop.permute.xlu0 %5085
    %5087 = vrot.lane.b32.xlu0 %v5041, 96
    %v5088 = vpop.permute.xlu0 %5087
    %5089 = vrot.lane.b32.xlu0 %v5042, 96
    %v5090 = vpop.permute.xlu0 %5089
    %vm5107 = vcmask 1044224
    %5108 = vst.msk [vmem:[#allocation4] sm:$0xf] %vm5107, %v5060
    %5109 = vst.msk [vmem:[#allocation4 + $0xc] sm:$0xf] %vm5107, %v5062
    %5110 = vst.msk [vmem:[#allocation4 + $0x18] sm:$0xf] %vm5107, %v5064
    %5111 = vst.msk [vmem:[#allocation4 + $0x24] sm:$0xf] %vm5107, %v5066
    %5112 = vst.msk [vmem:[#allocation4 + $0x30] sm:$0xf] %vm5107, %v5068
    %5113 = vst.msk [vmem:[#allocation4 + $0x3c] sm:$0xf] %vm5107, %v5070
    %5114 = vst.msk [vmem:[#allocation4 + $0x48] sm:$0xf] %vm5107, %v5072
    %5115 = vst.msk [vmem:[#allocation4 + $0x54] sm:$0xf] %vm5107, %v5074
    %5116 = vst.msk [vmem:[#allocation4 + $0x60] sm:$0xf] %vm5107, %v5076
    %5117 = vst.msk [vmem:[#allocation4 + $0x6c] sm:$0xf] %vm5107, %v5078
    %5118 = vst.msk [vmem:[#allocation4 + $0x78] sm:$0xf] %vm5107, %v5080
    %5119 = vst.msk [vmem:[#allocation4 + $0x84] sm:$0xf] %vm5107, %v5082
    %5120 = vst.msk [vmem:[#allocation4 + $0x90] sm:$0xf] %vm5107, %v5084
    %5121 = vst.msk [vmem:[#allocation4 + $0x9c] sm:$0xf] %vm5107, %v5086
    %5122 = vst.msk [vmem:[#allocation4 + $0xa8] sm:$0xf] %vm5107, %v5088
    %5123 = vst.msk [vmem:[#allocation4 + $0xb4] sm:$0xf] %vm5107, %v5090
    %v5124 = vld [vmem:[%s4376] sm:$0xf]
    %v5125 = vld [vmem:[%s4376 + $0x4] sm:$0x1]
    %v5126 = vld [vmem:[%s4376 + $0x8] sm:$0xf]
    %v5127 = vld [vmem:[%s4376 + $0xc] sm:$0x1]
    %v5128 = vld [vmem:[%s4376 + $0x10] sm:$0xf]
    %v5129 = vld [vmem:[%s4376 + $0x14] sm:$0x1]
    %v5130 = vld [vmem:[%s4376 + $0x18] sm:$0xf]
    %v5131 = vld [vmem:[%s4376 + $0x1c] sm:$0x1]
    %v5132 = vld [vmem:[%s4376 + $0x20] sm:$0xf]
    %v5133 = vld [vmem:[%s4376 + $0x24] sm:$0x1]
    %v5134 = vld [vmem:[%s4376 + $0x28] sm:$0xf]
    %v5135 = vld [vmem:[%s4376 + $0x2c] sm:$0x1]
    %v5136 = vld [vmem:[%s4376 + $0x30] sm:$0xf]
    %v5137 = vld [vmem:[%s4376 + $0x34] sm:$0x1]
    %v5138 = vld [vmem:[%s4376 + $0x38] sm:$0xf]
    %v5139 = vld [vmem:[%s4376 + $0x3c] sm:$0x1]
    %v5140 = vld [vmem:[%s4376 + $0x50] sm:$0xf]
    %v5141 = vld [vmem:[%s4376 + $0x54] sm:$0x1]
    %v5142 = vld [vmem:[%s4376 + $0x58] sm:$0xf]
    %v5143 = vld [vmem:[%s4376 + $0x5c] sm:$0x1]
    %v5144 = vld [vmem:[%s4376 + $0x60] sm:$0xf]
    %v5145 = vld [vmem:[%s4376 + $0x64] sm:$0x1]
    %v5146 = vld [vmem:[%s4376 + $0x68] sm:$0xf]
    %v5147 = vld [vmem:[%s4376 + $0x6c] sm:$0x1]
    %v5148 = vld [vmem:[%s4376 + $0x70] sm:$0xf]
    %v5149 = vld [vmem:[%s4376 + $0x74] sm:$0x1]
    %v5150 = vld [vmem:[%s4376 + $0x78] sm:$0xf]
    %v5151 = vld [vmem:[%s4376 + $0x7c] sm:$0x1]
    %v5152 = vld [vmem:[%s4376 + $0x80] sm:$0xf]
    %v5153 = vld [vmem:[%s4376 + $0x84] sm:$0x1]
    %v5154 = vld [vmem:[%s4376 + $0x88] sm:$0xf]
    %v5155 = vld [vmem:[%s4376 + $0x8c] sm:$0x1]
    %v5157 = vshrl.u32 %v5124, 16
    %v5159 = vrot.slane %v5157, 4
    %v5160 = vshll.u32 %v5124, 16
    %v5162 = vrot.slane %v5160, 5
    %v5163 = vor.u32 %v5159, %v5162
    %v5164 = vrot.slane %v5163, 4
    %v5166 = vshll.u32 %v5125, 16
    %v5168 = vrot.slane %v5166, 5
    %v5169 = vsel %vm4541, %v5164, %v5168
    %v5171 = vshrl.u32 %v5126, 16
    %v5173 = vrot.slane %v5171, 4
    %v5174 = vshll.u32 %v5126, 16
    %v5176 = vrot.slane %v5174, 5
    %v5177 = vor.u32 %v5173, %v5176
    %v5178 = vrot.slane %v5177, 4
    %v5180 = vshll.u32 %v5127, 16
    %v5182 = vrot.slane %v5180, 5
    %v5183 = vsel %vm4541, %v5178, %v5182
    %v5185 = vshrl.u32 %v5128, 16
    %v5187 = vrot.slane %v5185, 4
    %v5188 = vshll.u32 %v5128, 16
    %v5190 = vrot.slane %v5188, 5
    %v5191 = vor.u32 %v5187, %v5190
    %v5192 = vrot.slane %v5191, 4
    %v5194 = vshll.u32 %v5129, 16
    %v5196 = vrot.slane %v5194, 5
    %v5197 = vsel %vm4541, %v5192, %v5196
    %v5199 = vshrl.u32 %v5130, 16
    %v5201 = vrot.slane %v5199, 4
    %v5202 = vshll.u32 %v5130, 16
    %v5204 = vrot.slane %v5202, 5
    %v5205 = vor.u32 %v5201, %v5204
    %v5206 = vrot.slane %v5205, 4
    %v5208 = vshll.u32 %v5131, 16
    %v5210 = vrot.slane %v5208, 5
    %v5211 = vsel %vm4541, %v5206, %v5210
    %v5213 = vshrl.u32 %v5132, 16
    %v5215 = vrot.slane %v5213, 4
    %v5216 = vshll.u32 %v5132, 16
    %v5218 = vrot.slane %v5216, 5
    %v5219 = vor.u32 %v5215, %v5218
    %v5220 = vrot.slane %v5219, 4
    %v5222 = vshll.u32 %v5133, 16
    %v5224 = vrot.slane %v5222, 5
    %v5225 = vsel %vm4541, %v5220, %v5224
    %v5227 = vshrl.u32 %v5134, 16
    %v5229 = vrot.slane %v5227, 4
    %v5230 = vshll.u32 %v5134, 16
    %v5232 = vrot.slane %v5230, 5
    %v5233 = vor.u32 %v5229, %v5232
    %v5234 = vrot.slane %v5233, 4
    %v5236 = vshll.u32 %v5135, 16
    %v5238 = vrot.slane %v5236, 5
    %v5239 = vsel %vm4541, %v5234, %v5238
    %v5241 = vshrl.u32 %v5136, 16
    %v5243 = vrot.slane %v5241, 4
    %v5244 = vshll.u32 %v5136, 16
    %v5246 = vrot.slane %v5244, 5
    %v5247 = vor.u32 %v5243, %v5246
    %v5248 = vrot.slane %v5247, 4
    %v5250 = vshll.u32 %v5137, 16
    %v5252 = vrot.slane %v5250, 5
    %v5253 = vsel %vm4541, %v5248, %v5252
    %v5255 = vshrl.u32 %v5138, 16
    %v5257 = vrot.slane %v5255, 4
    %v5258 = vshll.u32 %v5138, 16
    %v5260 = vrot.slane %v5258, 5
    %v5261 = vor.u32 %v5257, %v5260
    %v5262 = vrot.slane %v5261, 4
    %v5264 = vshll.u32 %v5139, 16
    %v5266 = vrot.slane %v5264, 5
    %v5267 = vsel %vm4541, %v5262, %v5266
    %v5269 = vshrl.u32 %v5140, 16
    %v5271 = vrot.slane %v5269, 4
    %v5272 = vshll.u32 %v5140, 16
    %v5274 = vrot.slane %v5272, 5
    %v5275 = vor.u32 %v5271, %v5274
    %v5276 = vrot.slane %v5275, 4
    %v5278 = vshll.u32 %v5141, 16
    %v5280 = vrot.slane %v5278, 5
    %v5281 = vsel %vm4541, %v5276, %v5280
    %v5283 = vshrl.u32 %v5142, 16
    %v5285 = vrot.slane %v5283, 4
    %v5286 = vshll.u32 %v5142, 16
    %v5288 = vrot.slane %v5286, 5
    %v5289 = vor.u32 %v5285, %v5288
    %v5290 = vrot.slane %v5289, 4
    %v5292 = vshll.u32 %v5143, 16
    %v5294 = vrot.slane %v5292, 5
    %v5295 = vsel %vm4541, %v5290, %v5294
    %v5297 = vshrl.u32 %v5144, 16
    %v5299 = vrot.slane %v5297, 4
    %v5300 = vshll.u32 %v5144, 16
    %v5302 = vrot.slane %v5300, 5
    %v5303 = vor.u32 %v5299, %v5302
    %v5304 = vrot.slane %v5303, 4
    %v5306 = vshll.u32 %v5145, 16
    %v5308 = vrot.slane %v5306, 5
    %v5309 = vsel %vm4541, %v5304, %v5308
    %v5311 = vshrl.u32 %v5146, 16
    %v5313 = vrot.slane %v5311, 4
    %v5314 = vshll.u32 %v5146, 16
    %v5316 = vrot.slane %v5314, 5
    %v5317 = vor.u32 %v5313, %v5316
    %v5318 = vrot.slane %v5317, 4
    %v5320 = vshll.u32 %v5147, 16
    %v5322 = vrot.slane %v5320, 5
    %v5323 = vsel %vm4541, %v5318, %v5322
    %v5325 = vshrl.u32 %v5148, 16
    %v5327 = vrot.slane %v5325, 4
    %v5328 = vshll.u32 %v5148, 16
    %v5330 = vrot.slane %v5328, 5
    %v5331 = vor.u32 %v5327, %v5330
    %v5332 = vrot.slane %v5331, 4
    %v5334 = vshll.u32 %v5149, 16
    %v5336 = vrot.slane %v5334, 5
    %v5337 = vsel %vm4541, %v5332, %v5336
    %v5339 = vshrl.u32 %v5150, 16
    %v5341 = vrot.slane %v5339, 4
    %v5342 = vshll.u32 %v5150, 16
    %v5344 = vrot.slane %v5342, 5
    %v5345 = vor.u32 %v5341, %v5344
    %v5346 = vrot.slane %v5345, 4
    %v5348 = vshll.u32 %v5151, 16
    %v5350 = vrot.slane %v5348, 5
    %v5351 = vsel %vm4541, %v5346, %v5350
    %v5353 = vshrl.u32 %v5152, 16
    %v5355 = vrot.slane %v5353, 4
    %v5356 = vshll.u32 %v5152, 16
    %v5358 = vrot.slane %v5356, 5
    %v5359 = vor.u32 %v5355, %v5358
    %v5360 = vrot.slane %v5359, 4
    %v5362 = vshll.u32 %v5153, 16
    %v5364 = vrot.slane %v5362, 5
    %v5365 = vsel %vm4541, %v5360, %v5364
    %v5367 = vshrl.u32 %v5154, 16
    %v5369 = vrot.slane %v5367, 4
    %v5370 = vshll.u32 %v5154, 16
    %v5372 = vrot.slane %v5370, 5
    %v5373 = vor.u32 %v5369, %v5372
    %v5374 = vrot.slane %v5373, 4
    %v5376 = vshll.u32 %v5155, 16
    %v5378 = vrot.slane %v5376, 5
    %v5379 = vsel %vm4541, %v5374, %v5378
    %5396 = vst.msk [vmem:[#allocation4 + $0x4] sm:$0xf] %vm40, %v5169
    %5397 = vst.msk [vmem:[#allocation4 + $0x10] sm:$0xf] %vm40, %v5183
    %5398 = vst.msk [vmem:[#allocation4 + $0x1c] sm:$0xf] %vm40, %v5197
    %5399 = vst.msk [vmem:[#allocation4 + $0x28] sm:$0xf] %vm40, %v5211
    %5400 = vst.msk [vmem:[#allocation4 + $0x34] sm:$0xf] %vm40, %v5225
    %5401 = vst.msk [vmem:[#allocation4 + $0x40] sm:$0xf] %vm40, %v5239
    %5402 = vst.msk [vmem:[#allocation4 + $0x4c] sm:$0xf] %vm40, %v5253
    %5403 = vst.msk [vmem:[#allocation4 + $0x58] sm:$0xf] %vm40, %v5267
    %5404 = vst.msk [vmem:[#allocation4 + $0x64] sm:$0xf] %vm40, %v5281
    %5405 = vst.msk [vmem:[#allocation4 + $0x70] sm:$0xf] %vm40, %v5295
    %5406 = vst.msk [vmem:[#allocation4 + $0x7c] sm:$0xf] %vm40, %v5309
    %5407 = vst.msk [vmem:[#allocation4 + $0x88] sm:$0xf] %vm40, %v5323
    %5408 = vst.msk [vmem:[#allocation4 + $0x94] sm:$0xf] %vm40, %v5337
    %5409 = vst.msk [vmem:[#allocation4 + $0xa0] sm:$0xf] %vm40, %v5351
    %5410 = vst.msk [vmem:[#allocation4 + $0xac] sm:$0xf] %vm40, %v5365
    %5411 = vst.msk [vmem:[#allocation4 + $0xb8] sm:$0xf] %vm40, %v5379
    %v5412 = vld [vmem:[%s4376] sm:$0xe]
    %v5413 = vld [vmem:[%s4376 + $0x4] sm:$0x1]
    %v5414 = vld [vmem:[%s4376 + $0x8] sm:$0xe]
    %v5415 = vld [vmem:[%s4376 + $0xc] sm:$0x1]
    %v5416 = vld [vmem:[%s4376 + $0x10] sm:$0xe]
    %v5417 = vld [vmem:[%s4376 + $0x14] sm:$0x1]
    %v5418 = vld [vmem:[%s4376 + $0x18] sm:$0xe]
    %v5419 = vld [vmem:[%s4376 + $0x1c] sm:$0x1]
    %v5420 = vld [vmem:[%s4376 + $0x20] sm:$0xe]
    %v5421 = vld [vmem:[%s4376 + $0x24] sm:$0x1]
    %v5422 = vld [vmem:[%s4376 + $0x28] sm:$0xe]
    %v5423 = vld [vmem:[%s4376 + $0x2c] sm:$0x1]
    %v5424 = vld [vmem:[%s4376 + $0x30] sm:$0xe]
    %v5425 = vld [vmem:[%s4376 + $0x34] sm:$0x1]
    %v5426 = vld [vmem:[%s4376 + $0x38] sm:$0xe]
    %v5427 = vld [vmem:[%s4376 + $0x3c] sm:$0x1]
    %v5428 = vld [vmem:[%s4376 + $0x50] sm:$0xe]
    %v5429 = vld [vmem:[%s4376 + $0x54] sm:$0x1]
    %v5430 = vld [vmem:[%s4376 + $0x58] sm:$0xe]
    %v5431 = vld [vmem:[%s4376 + $0x5c] sm:$0x1]
    %v5432 = vld [vmem:[%s4376 + $0x60] sm:$0xe]
    %v5433 = vld [vmem:[%s4376 + $0x64] sm:$0x1]
    %v5434 = vld [vmem:[%s4376 + $0x68] sm:$0xe]
    %v5435 = vld [vmem:[%s4376 + $0x6c] sm:$0x1]
    %v5436 = vld [vmem:[%s4376 + $0x70] sm:$0xe]
    %v5437 = vld [vmem:[%s4376 + $0x74] sm:$0x1]
    %v5438 = vld [vmem:[%s4376 + $0x78] sm:$0xe]
    %v5439 = vld [vmem:[%s4376 + $0x7c] sm:$0x1]
    %v5440 = vld [vmem:[%s4376 + $0x80] sm:$0xe]
    %v5441 = vld [vmem:[%s4376 + $0x84] sm:$0x1]
    %v5442 = vld [vmem:[%s4376 + $0x88] sm:$0xe]
    %v5443 = vld [vmem:[%s4376 + $0x8c] sm:$0x1]
    %v5476 = vrot.slane %v5412, 5
    %v5477 = vrot.slane %v5476, 4
    %v5478 = vrot.slane %v5413, 5
    %v5479 = vsel %vm4897, %v5477, %v5478
    %v5480 = vrot.slane %v5414, 5
    %v5481 = vrot.slane %v5480, 4
    %v5482 = vrot.slane %v5415, 5
    %v5483 = vsel %vm4897, %v5481, %v5482
    %v5484 = vrot.slane %v5416, 5
    %v5485 = vrot.slane %v5484, 4
    %v5486 = vrot.slane %v5417, 5
    %v5487 = vsel %vm4897, %v5485, %v5486
    %v5488 = vrot.slane %v5418, 5
    %v5489 = vrot.slane %v5488, 4
    %v5490 = vrot.slane %v5419, 5
    %v5491 = vsel %vm4897, %v5489, %v5490
    %v5492 = vrot.slane %v5420, 5
    %v5493 = vrot.slane %v5492, 4
    %v5494 = vrot.slane %v5421, 5
    %v5495 = vsel %vm4897, %v5493, %v5494
    %v5496 = vrot.slane %v5422, 5
    %v5497 = vrot.slane %v5496, 4
    %v5498 = vrot.slane %v5423, 5
    %v5499 = vsel %vm4897, %v5497, %v5498
    %v5500 = vrot.slane %v5424, 5
    %v5501 = vrot.slane %v5500, 4
    %v5502 = vrot.slane %v5425, 5
    %v5503 = vsel %vm4897, %v5501, %v5502
    %v5504 = vrot.slane %v5426, 5
    %v5505 = vrot.slane %v5504, 4
    %v5506 = vrot.slane %v5427, 5
    %v5507 = vsel %vm4897, %v5505, %v5506
    %v5508 = vrot.slane %v5428, 5
    %v5509 = vrot.slane %v5508, 4
    %v5510 = vrot.slane %v5429, 5
    %v5511 = vsel %vm4897, %v5509, %v5510
    %v5512 = vrot.slane %v5430, 5
    %v5513 = vrot.slane %v5512, 4
    %v5514 = vrot.slane %v5431, 5
    %v5515 = vsel %vm4897, %v5513, %v5514
    %v5516 = vrot.slane %v5432, 5
    %v5517 = vrot.slane %v5516, 4
    %v5518 = vrot.slane %v5433, 5
    %v5519 = vsel %vm4897, %v5517, %v5518
    %v5520 = vrot.slane %v5434, 5
    %v5521 = vrot.slane %v5520, 4
    %v5522 = vrot.slane %v5435, 5
    %v5523 = vsel %vm4897, %v5521, %v5522
    %v5524 = vrot.slane %v5436, 5
    %v5525 = vrot.slane %v5524, 4
    %v5526 = vrot.slane %v5437, 5
    %v5527 = vsel %vm4897, %v5525, %v5526
    %v5528 = vrot.slane %v5438, 5
    %v5529 = vrot.slane %v5528, 4
    %v5530 = vrot.slane %v5439, 5
    %v5531 = vsel %vm4897, %v5529, %v5530
    %v5532 = vrot.slane %v5440, 5
    %v5533 = vrot.slane %v5532, 4
    %v5534 = vrot.slane %v5441, 5
    %v5535 = vsel %vm4897, %v5533, %v5534
    %v5536 = vrot.slane %v5442, 5
    %v5537 = vrot.slane %v5536, 4
    %v5538 = vrot.slane %v5443, 5
    %v5539 = vsel %vm4897, %v5537, %v5538
    %5540 = vrot.lane.b32.xlu0 %v5479, 32
    %v5541 = vpop.permute.xlu0 %5540
    %5542 = vrot.lane.b32.xlu0 %v5483, 32
    %v5543 = vpop.permute.xlu0 %5542
    %5544 = vrot.lane.b32.xlu0 %v5487, 32
    %v5545 = vpop.permute.xlu0 %5544
    %5546 = vrot.lane.b32.xlu0 %v5491, 32
    %v5547 = vpop.permute.xlu0 %5546
    %5548 = vrot.lane.b32.xlu0 %v5495, 32
    %v5549 = vpop.permute.xlu0 %5548
    %5550 = vrot.lane.b32.xlu0 %v5499, 32
    %v5551 = vpop.permute.xlu0 %5550
    %5552 = vrot.lane.b32.xlu0 %v5503, 32
    %v5553 = vpop.permute.xlu0 %5552
    %5554 = vrot.lane.b32.xlu0 %v5507, 32
    %v5555 = vpop.permute.xlu0 %5554
    %5556 = vrot.lane.b32.xlu0 %v5511, 32
    %v5557 = vpop.permute.xlu0 %5556
    %5558 = vrot.lane.b32.xlu0 %v5515, 32
    %v5559 = vpop.permute.xlu0 %5558
    %5560 = vrot.lane.b32.xlu0 %v5519, 32
    %v5561 = vpop.permute.xlu0 %5560
    %5562 = vrot.lane.b32.xlu0 %v5523, 32
    %v5563 = vpop.permute.xlu0 %5562
    %5564 = vrot.lane.b32.xlu0 %v5527, 32
    %v5565 = vpop.permute.xlu0 %5564
    %5566 = vrot.lane.b32.xlu0 %v5531, 32
    %v5567 = vpop.permute.xlu0 %5566
    %5568 = vrot.lane.b32.xlu0 %v5535, 32
    %v5569 = vpop.permute.xlu0 %5568
    %5570 = vrot.lane.b32.xlu0 %v5539, 32
    %v5571 = vpop.permute.xlu0 %5570
    %5588 = vst.msk [vmem:[#allocation4 + $0x4] sm:$0xf] %vm4814, %v5541
    %5589 = vst.msk [vmem:[#allocation4 + $0x10] sm:$0xf] %vm4814, %v5543
    %5590 = vst.msk [vmem:[#allocation4 + $0x1c] sm:$0xf] %vm4814, %v5545
    %5591 = vst.msk [vmem:[#allocation4 + $0x28] sm:$0xf] %vm4814, %v5547
    %5592 = vst.msk [vmem:[#allocation4 + $0x34] sm:$0xf] %vm4814, %v5549
    %5593 = vst.msk [vmem:[#allocation4 + $0x40] sm:$0xf] %vm4814, %v5551
    %5594 = vst.msk [vmem:[#allocation4 + $0x4c] sm:$0xf] %vm4814, %v5553
    %5595 = vst.msk [vmem:[#allocation4 + $0x58] sm:$0xf] %vm4814, %v5555
    %5596 = vst.msk [vmem:[#allocation4 + $0x64] sm:$0xf] %vm4814, %v5557
    %5597 = vst.msk [vmem:[#allocation4 + $0x70] sm:$0xf] %vm4814, %v5559
    %5598 = vst.msk [vmem:[#allocation4 + $0x7c] sm:$0xf] %vm4814, %v5561
    %5599 = vst.msk [vmem:[#allocation4 + $0x88] sm:$0xf] %vm4814, %v5563
    %5600 = vst.msk [vmem:[#allocation4 + $0x94] sm:$0xf] %vm4814, %v5565
    %5601 = vst.msk [vmem:[#allocation4 + $0xa0] sm:$0xf] %vm4814, %v5567
    %5602 = vst.msk [vmem:[#allocation4 + $0xac] sm:$0xf] %vm4814, %v5569
    %5603 = vst.msk [vmem:[#allocation4 + $0xb8] sm:$0xf] %vm4814, %v5571
    %s5604 = scalar_lea.vmem [#allocation2], 16
    %v5605 = vld [vmem:[%s5604] sm:$0xf]
    %v5606 = vld [vmem:[%s5604 + $0x8] sm:$0xf]
    %v5607 = vld [vmem:[%s5604 + $0x10] sm:$0xf]
    %v5608 = vld [vmem:[%s5604 + $0x18] sm:$0xf]
    %v5609 = vld [vmem:[%s5604 + $0x20] sm:$0xf]
    %v5610 = vld [vmem:[%s5604 + $0x28] sm:$0xf]
    %v5611 = vld [vmem:[%s5604 + $0x30] sm:$0xf]
    %v5612 = vld [vmem:[%s5604 + $0x38] sm:$0xf]
    %v5613 = vld [vmem:[%s5604 + $0x50] sm:$0xf]
    %v5614 = vld [vmem:[%s5604 + $0x58] sm:$0xf]
    %v5615 = vld [vmem:[%s5604 + $0x60] sm:$0xf]
    %v5616 = vld [vmem:[%s5604 + $0x68] sm:$0xf]
    %v5617 = vld [vmem:[%s5604 + $0x70] sm:$0xf]
    %v5618 = vld [vmem:[%s5604 + $0x78] sm:$0xf]
    %v5619 = vld [vmem:[%s5604 + $0x80] sm:$0xf]
    %v5620 = vld [vmem:[%s5604 + $0x88] sm:$0xf]
    %5637 = vrot.lane.b32.xlu0 %v5605, 64
    %v5638 = vpop.permute.xlu0 %5637
    %5639 = vrot.lane.b32.xlu0 %v5606, 64
    %v5640 = vpop.permute.xlu0 %5639
    %5641 = vrot.lane.b32.xlu0 %v5607, 64
    %v5642 = vpop.permute.xlu0 %5641
    %5643 = vrot.lane.b32.xlu0 %v5608, 64
    %v5644 = vpop.permute.xlu0 %5643
    %5645 = vrot.lane.b32.xlu0 %v5609, 64
    %v5646 = vpop.permute.xlu0 %5645
    %5647 = vrot.lane.b32.xlu0 %v5610, 64
    %v5648 = vpop.permute.xlu0 %5647
    %5649 = vrot.lane.b32.xlu0 %v5611, 64
    %v5650 = vpop.permute.xlu0 %5649
    %5651 = vrot.lane.b32.xlu0 %v5612, 64
    %v5652 = vpop.permute.xlu0 %5651
    %5653 = vrot.lane.b32.xlu0 %v5613, 64
    %v5654 = vpop.permute.xlu0 %5653
    %5655 = vrot.lane.b32.xlu0 %v5614, 64
    %v5656 = vpop.permute.xlu0 %5655
    %5657 = vrot.lane.b32.xlu0 %v5615, 64
    %v5658 = vpop.permute.xlu0 %5657
    %5659 = vrot.lane.b32.xlu0 %v5616, 64
    %v5660 = vpop.permute.xlu0 %5659
    %5661 = vrot.lane.b32.xlu0 %v5617, 64
    %v5662 = vpop.permute.xlu0 %5661
    %5663 = vrot.lane.b32.xlu0 %v5618, 64
    %v5664 = vpop.permute.xlu0 %5663
    %5665 = vrot.lane.b32.xlu0 %v5619, 64
    %v5666 = vpop.permute.xlu0 %5665
    %5667 = vrot.lane.b32.xlu0 %v5620, 64
    %v5668 = vpop.permute.xlu0 %5667
    %5685 = vst.msk [vmem:[#allocation4 + $0x4] sm:$0xf] %vm5010, %v5638
    %5686 = vst.msk [vmem:[#allocation4 + $0x10] sm:$0xf] %vm5010, %v5640
    %5687 = vst.msk [vmem:[#allocation4 + $0x1c] sm:$0xf] %vm5010, %v5642
    %5688 = vst.msk [vmem:[#allocation4 + $0x28] sm:$0xf] %vm5010, %v5644
    %5689 = vst.msk [vmem:[#allocation4 + $0x34] sm:$0xf] %vm5010, %v5646
    %5690 = vst.msk [vmem:[#allocation4 + $0x40] sm:$0xf] %vm5010, %v5648
    %5691 = vst.msk [vmem:[#allocation4 + $0x4c] sm:$0xf] %vm5010, %v5650
    %5692 = vst.msk [vmem:[#allocation4 + $0x58] sm:$0xf] %vm5010, %v5652
    %5693 = vst.msk [vmem:[#allocation4 + $0x64] sm:$0xf] %vm5010, %v5654
    %5694 = vst.msk [vmem:[#allocation4 + $0x70] sm:$0xf] %vm5010, %v5656
    %5695 = vst.msk [vmem:[#allocation4 + $0x7c] sm:$0xf] %vm5010, %v5658
    %5696 = vst.msk [vmem:[#allocation4 + $0x88] sm:$0xf] %vm5010, %v5660
    %5697 = vst.msk [vmem:[#allocation4 + $0x94] sm:$0xf] %vm5010, %v5662
    %5698 = vst.msk [vmem:[#allocation4 + $0xa0] sm:$0xf] %vm5010, %v5664
    %5699 = vst.msk [vmem:[#allocation4 + $0xac] sm:$0xf] %vm5010, %v5666
    %5700 = vst.msk [vmem:[#allocation4 + $0xb8] sm:$0xf] %vm5010, %v5668
    %v5701 = vld [vmem:[%s5604] sm:$0xf]
    %v5702 = vld [vmem:[%s5604 + $0x4] sm:$0x1]
    %v5703 = vld [vmem:[%s5604 + $0x8] sm:$0xf]
    %v5704 = vld [vmem:[%s5604 + $0xc] sm:$0x1]
    %v5705 = vld [vmem:[%s5604 + $0x10] sm:$0xf]
    %v5706 = vld [vmem:[%s5604 + $0x14] sm:$0x1]
    %v5707 = vld [vmem:[%s5604 + $0x18] sm:$0xf]
    %v5708 = vld [vmem:[%s5604 + $0x1c] sm:$0x1]
    %v5709 = vld [vmem:[%s5604 + $0x20] sm:$0xf]
    %v5710 = vld [vmem:[%s5604 + $0x24] sm:$0x1]
    %v5711 = vld [vmem:[%s5604 + $0x28] sm:$0xf]
    %v5712 = vld [vmem:[%s5604 + $0x2c] sm:$0x1]
    %v5713 = vld [vmem:[%s5604 + $0x30] sm:$0xf]
    %v5714 = vld [vmem:[%s5604 + $0x34] sm:$0x1]
    %v5715 = vld [vmem:[%s5604 + $0x38] sm:$0xf]
    %v5716 = vld [vmem:[%s5604 + $0x3c] sm:$0x1]
    %v5717 = vld [vmem:[%s5604 + $0x50] sm:$0xf]
    %v5718 = vld [vmem:[%s5604 + $0x54] sm:$0x1]
    %v5719 = vld [vmem:[%s5604 + $0x58] sm:$0xf]
    %v5720 = vld [vmem:[%s5604 + $0x5c] sm:$0x1]
    %v5721 = vld [vmem:[%s5604 + $0x60] sm:$0xf]
    %v5722 = vld [vmem:[%s5604 + $0x64] sm:$0x1]
    %v5723 = vld [vmem:[%s5604 + $0x68] sm:$0xf]
    %v5724 = vld [vmem:[%s5604 + $0x6c] sm:$0x1]
    %v5725 = vld [vmem:[%s5604 + $0x70] sm:$0xf]
    %v5726 = vld [vmem:[%s5604 + $0x74] sm:$0x1]
    %v5727 = vld [vmem:[%s5604 + $0x78] sm:$0xf]
    %v5728 = vld [vmem:[%s5604 + $0x7c] sm:$0x1]
    %v5729 = vld [vmem:[%s5604 + $0x80] sm:$0xf]
    %v5730 = vld [vmem:[%s5604 + $0x84] sm:$0x1]
    %v5731 = vld [vmem:[%s5604 + $0x88] sm:$0xf]
    %v5732 = vld [vmem:[%s5604 + $0x8c] sm:$0x1]
    %v5734 = vshrl.u32 %v5701, 16
    %v5736 = vrot.slane %v5734, 4
    %v5737 = vshll.u32 %v5701, 16
    %v5739 = vrot.slane %v5737, 5
    %v5740 = vor.u32 %v5736, %v5739
    %v5741 = vrot.slane %v5740, 4
    %v5743 = vshll.u32 %v5702, 16
    %v5745 = vrot.slane %v5743, 5
    %v5746 = vsel %vm4541, %v5741, %v5745
    %v5748 = vshrl.u32 %v5703, 16
    %v5750 = vrot.slane %v5748, 4
    %v5751 = vshll.u32 %v5703, 16
    %v5753 = vrot.slane %v5751, 5
    %v5754 = vor.u32 %v5750, %v5753
    %v5755 = vrot.slane %v5754, 4
    %v5757 = vshll.u32 %v5704, 16
    %v5759 = vrot.slane %v5757, 5
    %v5760 = vsel %vm4541, %v5755, %v5759
    %v5762 = vshrl.u32 %v5705, 16
    %v5764 = vrot.slane %v5762, 4
    %v5765 = vshll.u32 %v5705, 16
    %v5767 = vrot.slane %v5765, 5
    %v5768 = vor.u32 %v5764, %v5767
    %v5769 = vrot.slane %v5768, 4
    %v5771 = vshll.u32 %v5706, 16
    %v5773 = vrot.slane %v5771, 5
    %v5774 = vsel %vm4541, %v5769, %v5773
    %v5776 = vshrl.u32 %v5707, 16
    %v5778 = vrot.slane %v5776, 4
    %v5779 = vshll.u32 %v5707, 16
    %v5781 = vrot.slane %v5779, 5
    %v5782 = vor.u32 %v5778, %v5781
    %v5783 = vrot.slane %v5782, 4
    %v5785 = vshll.u32 %v5708, 16
    %v5787 = vrot.slane %v5785, 5
    %v5788 = vsel %vm4541, %v5783, %v5787
    %v5790 = vshrl.u32 %v5709, 16
    %v5792 = vrot.slane %v5790, 4
    %v5793 = vshll.u32 %v5709, 16
    %v5795 = vrot.slane %v5793, 5
    %v5796 = vor.u32 %v5792, %v5795
    %v5797 = vrot.slane %v5796, 4
    %v5799 = vshll.u32 %v5710, 16
    %v5801 = vrot.slane %v5799, 5
    %v5802 = vsel %vm4541, %v5797, %v5801
    %v5804 = vshrl.u32 %v5711, 16
    %v5806 = vrot.slane %v5804, 4
    %v5807 = vshll.u32 %v5711, 16
    %v5809 = vrot.slane %v5807, 5
    %v5810 = vor.u32 %v5806, %v5809
    %v5811 = vrot.slane %v5810, 4
    %v5813 = vshll.u32 %v5712, 16
    %v5815 = vrot.slane %v5813, 5
    %v5816 = vsel %vm4541, %v5811, %v5815
    %v5818 = vshrl.u32 %v5713, 16
    %v5820 = vrot.slane %v5818, 4
    %v5821 = vshll.u32 %v5713, 16
    %v5823 = vrot.slane %v5821, 5
    %v5824 = vor.u32 %v5820, %v5823
    %v5825 = vrot.slane %v5824, 4
    %v5827 = vshll.u32 %v5714, 16
    %v5829 = vrot.slane %v5827, 5
    %v5830 = vsel %vm4541, %v5825, %v5829
    %v5832 = vshrl.u32 %v5715, 16
    %v5834 = vrot.slane %v5832, 4
    %v5835 = vshll.u32 %v5715, 16
    %v5837 = vrot.slane %v5835, 5
    %v5838 = vor.u32 %v5834, %v5837
    %v5839 = vrot.slane %v5838, 4
    %v5841 = vshll.u32 %v5716, 16
    %v5843 = vrot.slane %v5841, 5
    %v5844 = vsel %vm4541, %v5839, %v5843
    %v5846 = vshrl.u32 %v5717, 16
    %v5848 = vrot.slane %v5846, 4
    %v5849 = vshll.u32 %v5717, 16
    %v5851 = vrot.slane %v5849, 5
    %v5852 = vor.u32 %v5848, %v5851
    %v5853 = vrot.slane %v5852, 4
    %v5855 = vshll.u32 %v5718, 16
    %v5857 = vrot.slane %v5855, 5
    %v5858 = vsel %vm4541, %v5853, %v5857
    %v5860 = vshrl.u32 %v5719, 16
    %v5862 = vrot.slane %v5860, 4
    %v5863 = vshll.u32 %v5719, 16
    %v5865 = vrot.slane %v5863, 5
    %v5866 = vor.u32 %v5862, %v5865
    %v5867 = vrot.slane %v5866, 4
    %v5869 = vshll.u32 %v5720, 16
    %v5871 = vrot.slane %v5869, 5
    %v5872 = vsel %vm4541, %v5867, %v5871
    %v5874 = vshrl.u32 %v5721, 16
    %v5876 = vrot.slane %v5874, 4
    %v5877 = vshll.u32 %v5721, 16
    %v5879 = vrot.slane %v5877, 5
    %v5880 = vor.u32 %v5876, %v5879
    %v5881 = vrot.slane %v5880, 4
    %v5883 = vshll.u32 %v5722, 16
    %v5885 = vrot.slane %v5883, 5
    %v5886 = vsel %vm4541, %v5881, %v5885
    %v5888 = vshrl.u32 %v5723, 16
    %v5890 = vrot.slane %v5888, 4
    %v5891 = vshll.u32 %v5723, 16
    %v5893 = vrot.slane %v5891, 5
    %v5894 = vor.u32 %v5890, %v5893
    %v5895 = vrot.slane %v5894, 4
    %v5897 = vshll.u32 %v5724, 16
    %v5899 = vrot.slane %v5897, 5
    %v5900 = vsel %vm4541, %v5895, %v5899
    %v5902 = vshrl.u32 %v5725, 16
    %v5904 = vrot.slane %v5902, 4
    %v5905 = vshll.u32 %v5725, 16
    %v5907 = vrot.slane %v5905, 5
    %v5908 = vor.u32 %v5904, %v5907
    %v5909 = vrot.slane %v5908, 4
    %v5911 = vshll.u32 %v5726, 16
    %v5913 = vrot.slane %v5911, 5
    %v5914 = vsel %vm4541, %v5909, %v5913
    %v5916 = vshrl.u32 %v5727, 16
    %v5918 = vrot.slane %v5916, 4
    %v5919 = vshll.u32 %v5727, 16
    %v5921 = vrot.slane %v5919, 5
    %v5922 = vor.u32 %v5918, %v5921
    %v5923 = vrot.slane %v5922, 4
    %v5925 = vshll.u32 %v5728, 16
    %v5927 = vrot.slane %v5925, 5
    %v5928 = vsel %vm4541, %v5923, %v5927
    %v5930 = vshrl.u32 %v5729, 16
    %v5932 = vrot.slane %v5930, 4
    %v5933 = vshll.u32 %v5729, 16
    %v5935 = vrot.slane %v5933, 5
    %v5936 = vor.u32 %v5932, %v5935
    %v5937 = vrot.slane %v5936, 4
    %v5939 = vshll.u32 %v5730, 16
    %v5941 = vrot.slane %v5939, 5
    %v5942 = vsel %vm4541, %v5937, %v5941
    %v5944 = vshrl.u32 %v5731, 16
    %v5946 = vrot.slane %v5944, 4
    %v5947 = vshll.u32 %v5731, 16
    %v5949 = vrot.slane %v5947, 5
    %v5950 = vor.u32 %v5946, %v5949
    %v5951 = vrot.slane %v5950, 4
    %v5953 = vshll.u32 %v5732, 16
    %v5955 = vrot.slane %v5953, 5
    %v5956 = vsel %vm4541, %v5951, %v5955
    %5957 = vrot.lane.b32.xlu0 %v5746, 96
    %v5958 = vpop.permute.xlu0 %5957
    %5959 = vrot.lane.b32.xlu0 %v5760, 96
    %v5960 = vpop.permute.xlu0 %5959
    %5961 = vrot.lane.b32.xlu0 %v5774, 96
    %v5962 = vpop.permute.xlu0 %5961
    %5963 = vrot.lane.b32.xlu0 %v5788, 96
    %v5964 = vpop.permute.xlu0 %5963
    %5965 = vrot.lane.b32.xlu0 %v5802, 96
    %v5966 = vpop.permute.xlu0 %5965
    %5967 = vrot.lane.b32.xlu0 %v5816, 96
    %v5968 = vpop.permute.xlu0 %5967
    %5969 = vrot.lane.b32.xlu0 %v5830, 96
    %v5970 = vpop.permute.xlu0 %5969
    %5971 = vrot.lane.b32.xlu0 %v5844, 96
    %v5972 = vpop.permute.xlu0 %5971
    %5973 = vrot.lane.b32.xlu0 %v5858, 96
    %v5974 = vpop.permute.xlu0 %5973
    %5975 = vrot.lane.b32.xlu0 %v5872, 96
    %v5976 = vpop.permute.xlu0 %5975
    %5977 = vrot.lane.b32.xlu0 %v5886, 96
    %v5978 = vpop.permute.xlu0 %5977
    %5979 = vrot.lane.b32.xlu0 %v5900, 96
    %v5980 = vpop.permute.xlu0 %5979
    %5981 = vrot.lane.b32.xlu0 %v5914, 96
    %v5982 = vpop.permute.xlu0 %5981
    %5983 = vrot.lane.b32.xlu0 %v5928, 96
    %v5984 = vpop.permute.xlu0 %5983
    %5985 = vrot.lane.b32.xlu0 %v5942, 96
    %v5986 = vpop.permute.xlu0 %5985
    %5987 = vrot.lane.b32.xlu0 %v5956, 96
    %v5988 = vpop.permute.xlu0 %5987
    %6005 = vst.msk [vmem:[#allocation4 + $0x4] sm:$0xf] %vm5107, %v5958
    %6006 = vst.msk [vmem:[#allocation4 + $0x10] sm:$0xf] %vm5107, %v5960
    %6007 = vst.msk [vmem:[#allocation4 + $0x1c] sm:$0xf] %vm5107, %v5962
    %6008 = vst.msk [vmem:[#allocation4 + $0x28] sm:$0xf] %vm5107, %v5964
    %6009 = vst.msk [vmem:[#allocation4 + $0x34] sm:$0xf] %vm5107, %v5966
    %6010 = vst.msk [vmem:[#allocation4 + $0x40] sm:$0xf] %vm5107, %v5968
    %6011 = vst.msk [vmem:[#allocation4 + $0x4c] sm:$0xf] %vm5107, %v5970
    %6012 = vst.msk [vmem:[#allocation4 + $0x58] sm:$0xf] %vm5107, %v5972
    %6013 = vst.msk [vmem:[#allocation4 + $0x64] sm:$0xf] %vm5107, %v5974
    %6014 = vst.msk [vmem:[#allocation4 + $0x70] sm:$0xf] %vm5107, %v5976
    %6015 = vst.msk [vmem:[#allocation4 + $0x7c] sm:$0xf] %vm5107, %v5978
    %6016 = vst.msk [vmem:[#allocation4 + $0x88] sm:$0xf] %vm5107, %v5980
    %6017 = vst.msk [vmem:[#allocation4 + $0x94] sm:$0xf] %vm5107, %v5982
    %6018 = vst.msk [vmem:[#allocation4 + $0xa0] sm:$0xf] %vm5107, %v5984
    %6019 = vst.msk [vmem:[#allocation4 + $0xac] sm:$0xf] %vm5107, %v5986
    %6020 = vst.msk [vmem:[#allocation4 + $0xb8] sm:$0xf] %vm5107, %v5988
    %v6021 = vld [vmem:[%s5604] sm:$0xe]
    %v6022 = vld [vmem:[%s5604 + $0x4] sm:$0x1]
    %v6023 = vld [vmem:[%s5604 + $0x8] sm:$0xe]
    %v6024 = vld [vmem:[%s5604 + $0xc] sm:$0x1]
    %v6025 = vld [vmem:[%s5604 + $0x10] sm:$0xe]
    %v6026 = vld [vmem:[%s5604 + $0x14] sm:$0x1]
    %v6027 = vld [vmem:[%s5604 + $0x18] sm:$0xe]
    %v6028 = vld [vmem:[%s5604 + $0x1c] sm:$0x1]
    %v6029 = vld [vmem:[%s5604 + $0x20] sm:$0xe]
    %v6030 = vld [vmem:[%s5604 + $0x24] sm:$0x1]
    %v6031 = vld [vmem:[%s5604 + $0x28] sm:$0xe]
    %v6032 = vld [vmem:[%s5604 + $0x2c] sm:$0x1]
    %v6033 = vld [vmem:[%s5604 + $0x30] sm:$0xe]
    %v6034 = vld [vmem:[%s5604 + $0x34] sm:$0x1]
    %v6035 = vld [vmem:[%s5604 + $0x38] sm:$0xe]
    %v6036 = vld [vmem:[%s5604 + $0x3c] sm:$0x1]
    %v6037 = vld [vmem:[%s5604 + $0x50] sm:$0xe]
    %v6038 = vld [vmem:[%s5604 + $0x54] sm:$0x1]
    %v6039 = vld [vmem:[%s5604 + $0x58] sm:$0xe]
    %v6040 = vld [vmem:[%s5604 + $0x5c] sm:$0x1]
    %v6041 = vld [vmem:[%s5604 + $0x60] sm:$0xe]
    %v6042 = vld [vmem:[%s5604 + $0x64] sm:$0x1]
    %v6043 = vld [vmem:[%s5604 + $0x68] sm:$0xe]
    %v6044 = vld [vmem:[%s5604 + $0x6c] sm:$0x1]
    %v6045 = vld [vmem:[%s5604 + $0x70] sm:$0xe]
    %v6046 = vld [vmem:[%s5604 + $0x74] sm:$0x1]
    %v6047 = vld [vmem:[%s5604 + $0x78] sm:$0xe]
    %v6048 = vld [vmem:[%s5604 + $0x7c] sm:$0x1]
    %v6049 = vld [vmem:[%s5604 + $0x80] sm:$0xe]
    %v6050 = vld [vmem:[%s5604 + $0x84] sm:$0x1]
    %v6051 = vld [vmem:[%s5604 + $0x88] sm:$0xe]
    %v6052 = vld [vmem:[%s5604 + $0x8c] sm:$0x1]
    %v6085 = vrot.slane %v6021, 5
    %v6086 = vrot.slane %v6085, 4
    %v6087 = vrot.slane %v6022, 5
    %v6088 = vsel %vm4897, %v6086, %v6087
    %v6089 = vrot.slane %v6023, 5
    %v6090 = vrot.slane %v6089, 4
    %v6091 = vrot.slane %v6024, 5
    %v6092 = vsel %vm4897, %v6090, %v6091
    %v6093 = vrot.slane %v6025, 5
    %v6094 = vrot.slane %v6093, 4
    %v6095 = vrot.slane %v6026, 5
    %v6096 = vsel %vm4897, %v6094, %v6095
    %v6097 = vrot.slane %v6027, 5
    %v6098 = vrot.slane %v6097, 4
    %v6099 = vrot.slane %v6028, 5
    %v6100 = vsel %vm4897, %v6098, %v6099
    %v6101 = vrot.slane %v6029, 5
    %v6102 = vrot.slane %v6101, 4
    %v6103 = vrot.slane %v6030, 5
    %v6104 = vsel %vm4897, %v6102, %v6103
    %v6105 = vrot.slane %v6031, 5
    %v6106 = vrot.slane %v6105, 4
    %v6107 = vrot.slane %v6032, 5
    %v6108 = vsel %vm4897, %v6106, %v6107
    %v6109 = vrot.slane %v6033, 5
    %v6110 = vrot.slane %v6109, 4
    %v6111 = vrot.slane %v6034, 5
    %v6112 = vsel %vm4897, %v6110, %v6111
    %v6113 = vrot.slane %v6035, 5
    %v6114 = vrot.slane %v6113, 4
    %v6115 = vrot.slane %v6036, 5
    %v6116 = vsel %vm4897, %v6114, %v6115
    %v6117 = vrot.slane %v6037, 5
    %v6118 = vrot.slane %v6117, 4
    %v6119 = vrot.slane %v6038, 5
    %v6120 = vsel %vm4897, %v6118, %v6119
    %v6121 = vrot.slane %v6039, 5
    %v6122 = vrot.slane %v6121, 4
    %v6123 = vrot.slane %v6040, 5
    %v6124 = vsel %vm4897, %v6122, %v6123
    %v6125 = vrot.slane %v6041, 5
    %v6126 = vrot.slane %v6125, 4
    %v6127 = vrot.slane %v6042, 5
    %v6128 = vsel %vm4897, %v6126, %v6127
    %v6129 = vrot.slane %v6043, 5
    %v6130 = vrot.slane %v6129, 4
    %v6131 = vrot.slane %v6044, 5
    %v6132 = vsel %vm4897, %v6130, %v6131
    %v6133 = vrot.slane %v6045, 5
    %v6134 = vrot.slane %v6133, 4
    %v6135 = vrot.slane %v6046, 5
    %v6136 = vsel %vm4897, %v6134, %v6135
    %v6137 = vrot.slane %v6047, 5
    %v6138 = vrot.slane %v6137, 4
    %v6139 = vrot.slane %v6048, 5
    %v6140 = vsel %vm4897, %v6138, %v6139
    %v6141 = vrot.slane %v6049, 5
    %v6142 = vrot.slane %v6141, 4
    %v6143 = vrot.slane %v6050, 5
    %v6144 = vsel %vm4897, %v6142, %v6143
    %v6145 = vrot.slane %v6051, 5
    %v6146 = vrot.slane %v6145, 4
    %v6147 = vrot.slane %v6052, 5
    %v6148 = vsel %vm4897, %v6146, %v6147
    %6165 = vst.msk [vmem:[#allocation4 + $0x8] sm:$0xf] %vm40, %v6088
    %6166 = vst.msk [vmem:[#allocation4 + $0x14] sm:$0xf] %vm40, %v6092
    %6167 = vst.msk [vmem:[#allocation4 + $0x20] sm:$0xf] %vm40, %v6096
    %6168 = vst.msk [vmem:[#allocation4 + $0x2c] sm:$0xf] %vm40, %v6100
    %6169 = vst.msk [vmem:[#allocation4 + $0x38] sm:$0xf] %vm40, %v6104
    %6170 = vst.msk [vmem:[#allocation4 + $0x44] sm:$0xf] %vm40, %v6108
    %6171 = vst.msk [vmem:[#allocation4 + $0x50] sm:$0xf] %vm40, %v6112
    %6172 = vst.msk [vmem:[#allocation4 + $0x5c] sm:$0xf] %vm40, %v6116
    %6173 = vst.msk [vmem:[#allocation4 + $0x68] sm:$0xf] %vm40, %v6120
    %6174 = vst.msk [vmem:[#allocation4 + $0x74] sm:$0xf] %vm40, %v6124
    %6175 = vst.msk [vmem:[#allocation4 + $0x80] sm:$0xf] %vm40, %v6128
    %6176 = vst.msk [vmem:[#allocation4 + $0x8c] sm:$0xf] %vm40, %v6132
    %6177 = vst.msk [vmem:[#allocation4 + $0x98] sm:$0xf] %vm40, %v6136
    %6178 = vst.msk [vmem:[#allocation4 + $0xa4] sm:$0xf] %vm40, %v6140
    %6179 = vst.msk [vmem:[#allocation4 + $0xb0] sm:$0xf] %vm40, %v6144
    %6180 = vst.msk [vmem:[#allocation4 + $0xbc] sm:$0xf] %vm40, %v6148
    %v6181 = vld [vmem:[#allocation4] sm:$0xff]
    %v6182 = vld [vmem:[#allocation4 + $0x8] sm:$0xf]
    %v6183 = vld [vmem:[#allocation4 + $0xc] sm:$0xff]
    %v6184 = vld [vmem:[#allocation4 + $0x14] sm:$0xf]
    %v6185 = vld [vmem:[#allocation4 + $0x18] sm:$0xff]
    %v6186 = vld [vmem:[#allocation4 + $0x20] sm:$0xf]
    %v6187 = vld [vmem:[#allocation4 + $0x24] sm:$0xff]
    %v6188 = vld [vmem:[#allocation4 + $0x2c] sm:$0xf]
    %v6189 = vld [vmem:[#allocation4 + $0x30] sm:$0xff]
    %v6190 = vld [vmem:[#allocation4 + $0x38] sm:$0xf]
    %v6191 = vld [vmem:[#allocation4 + $0x3c] sm:$0xff]
    %v6192 = vld [vmem:[#allocation4 + $0x44] sm:$0xf]
    %v6193 = vld [vmem:[#allocation4 + $0x48] sm:$0xff]
    %v6194 = vld [vmem:[#allocation4 + $0x50] sm:$0xf]
    %v6195 = vld [vmem:[#allocation4 + $0x54] sm:$0xff]
    %v6196 = vld [vmem:[#allocation4 + $0x5c] sm:$0xf]
    %v6197 = vld [vmem:[#allocation4 + $0x60] sm:$0xff]
    %v6198 = vld [vmem:[#allocation4 + $0x68] sm:$0xf]
    %v6199 = vld [vmem:[#allocation4 + $0x6c] sm:$0xff]
    %v6200 = vld [vmem:[#allocation4 + $0x74] sm:$0xf]
    %v6201 = vld [vmem:[#allocation4 + $0x78] sm:$0xff]
    %v6202 = vld [vmem:[#allocation4 + $0x80] sm:$0xf]
    %v6203 = vld [vmem:[#allocation4 + $0x84] sm:$0xff]
    %v6204 = vld [vmem:[#allocation4 + $0x8c] sm:$0xf]
    %v6205 = vld [vmem:[#allocation4 + $0x90] sm:$0xff]
    %v6206 = vld [vmem:[#allocation4 + $0x98] sm:$0xf]
    %v6207 = vld [vmem:[#allocation4 + $0x9c] sm:$0xff]
    %v6208 = vld [vmem:[#allocation4 + $0xa4] sm:$0xf]
    %v6209 = vld [vmem:[#allocation4 + $0xa8] sm:$0xff]
    %v6210 = vld [vmem:[#allocation4 + $0xb0] sm:$0xf]
    %v6211 = vld [vmem:[#allocation4 + $0xb4] sm:$0xff]
    %v6212 = vld [vmem:[#allocation4 + $0xbc] sm:$0xf]
    %v6213 = vld [vmem:[%s3] sm:$0xf]
    %v6214 = vld [vmem:[%s3 + $0x4] sm:$0xf]
    %v6215 = vld [vmem:[%s3 + $0x8] sm:$0xf]
    %v6216 = vld [vmem:[%s3 + $0xc] sm:$0xf]
    %v6217 = vld [vmem:[%s3 + $0x10] sm:$0xf]
    %v6218 = vld [vmem:[%s3 + $0x14] sm:$0xf]
    %v6219 = vld [vmem:[%s3 + $0x18] sm:$0xf]
    %v6220 = vld [vmem:[%s3 + $0x1c] sm:$0xf]
    %v6221 = vld [vmem:[%s3 + $0x20] sm:$0xf]
    %v6222 = vld [vmem:[%s3 + $0x24] sm:$0xf]
    %v6223 = vld [vmem:[%s3 + $0x28] sm:$0xf]
    %v6224 = vld [vmem:[%s3 + $0x2c] sm:$0xf]
    %v6225 = vld [vmem:[%s3 + $0x30] sm:$0xf]
    %v6226 = vld [vmem:[%s3 + $0x34] sm:$0xf]
    %v6227 = vld [vmem:[%s3 + $0x38] sm:$0xf]
    %v6228 = vld [vmem:[%s3 + $0x3c] sm:$0xf]
    %v6229 = vld [vmem:[%s3 + $0x40] sm:$0xf]
    %v6230 = vld [vmem:[%s3 + $0x44] sm:$0xf]
    %v6231 = vld [vmem:[%s3 + $0x48] sm:$0xf]
    %v6232 = vld [vmem:[%s3 + $0x4c] sm:$0xf]
    %v6233 = vld [vmem:[%s3 + $0x50] sm:$0xf]
    %v6234 = vld [vmem:[%s3 + $0x54] sm:$0xf]
    %v6235 = vld [vmem:[%s3 + $0x58] sm:$0xf]
    %v6236 = vld [vmem:[%s3 + $0x5c] sm:$0xf]
    %v6237 = vld [vmem:[%s3 + $0x60] sm:$0xf]
    %v6238 = vld [vmem:[%s3 + $0x64] sm:$0xf]
    %v6239 = vld [vmem:[%s3 + $0x68] sm:$0xf]
    %v6240 = vld [vmem:[%s3 + $0x6c] sm:$0xf]
    %v6241 = vld [vmem:[%s3 + $0x70] sm:$0xf]
    %v6242 = vld [vmem:[%s3 + $0x74] sm:$0xf]
    %v6243 = vld [vmem:[%s3 + $0x78] sm:$0xf]
    %v6244 = vld [vmem:[%s3 + $0x7c] sm:$0xf]
    %v6245 = vld [vmem:[%s3 + $0x80] sm:$0xf]
    %v6246 = vld [vmem:[%s3 + $0x84] sm:$0xf]
    %v6247 = vld [vmem:[%s3 + $0x88] sm:$0xf]
    %v6248 = vld [vmem:[%s3 + $0x8c] sm:$0xf]
    %v6249 = vld [vmem:[%s4] sm:$0x1]
    %v6251 = vlaneseq
    %v6252 = vshrl.u32 %v6251, 7
    %v6253 = vsub.s32 0, %v6252
    %v6254 = vrot.slane %v6249, %v6253
    %v6288 = vunpack.c.l.b16 %v6181
    %v6289 = vunpack.c.h.b16 %v6181
    %v6290 = vunpack.c.l.b16 %v6182
    %v6291 = vunpack.c.l.b16 %v6183
    %v6292 = vunpack.c.h.b16 %v6183
    %v6293 = vunpack.c.l.b16 %v6184
    %v6294 = vunpack.c.l.b16 %v6185
    %v6295 = vunpack.c.h.b16 %v6185
    %v6296 = vunpack.c.l.b16 %v6186
    %v6297 = vunpack.c.l.b16 %v6187
    %v6298 = vunpack.c.h.b16 %v6187
    %v6299 = vunpack.c.l.b16 %v6188
    %v6300 = vunpack.c.l.b16 %v6189
    %v6301 = vunpack.c.h.b16 %v6189
    %v6302 = vunpack.c.l.b16 %v6190
    %v6303 = vunpack.c.l.b16 %v6191
    %v6304 = vunpack.c.h.b16 %v6191
    %v6305 = vunpack.c.l.b16 %v6192
    %v6306 = vunpack.c.l.b16 %v6193
    %v6307 = vunpack.c.h.b16 %v6193
    %v6308 = vunpack.c.l.b16 %v6194
    %v6309 = vunpack.c.l.b16 %v6195
    %v6310 = vunpack.c.h.b16 %v6195
    %v6311 = vunpack.c.l.b16 %v6196
    %v6312 = vunpack.c.l.b16 %v6197
    %v6313 = vunpack.c.h.b16 %v6197
    %v6314 = vunpack.c.l.b16 %v6198
    %v6315 = vunpack.c.l.b16 %v6199
    %v6316 = vunpack.c.h.b16 %v6199
    %v6317 = vunpack.c.l.b16 %v6200
    %v6318 = vunpack.c.l.b16 %v6201
    %v6319 = vunpack.c.h.b16 %v6201
    %v6320 = vunpack.c.l.b16 %v6202
    %v6321 = vunpack.c.l.b16 %v6203
    %v6322 = vunpack.c.h.b16 %v6203
    %v6323 = vunpack.c.l.b16 %v6204
    %v6324 = vunpack.c.l.b16 %v6205
    %v6325 = vunpack.c.h.b16 %v6205
    %v6326 = vunpack.c.l.b16 %v6206
    %v6327 = vunpack.c.l.b16 %v6207
    %v6328 = vunpack.c.h.b16 %v6207
    %v6329 = vunpack.c.l.b16 %v6208
    %v6330 = vunpack.c.l.b16 %v6209
    %v6331 = vunpack.c.h.b16 %v6209
    %v6332 = vunpack.c.l.b16 %v6210
    %v6333 = vunpack.c.l.b16 %v6211
    %v6334 = vunpack.c.h.b16 %v6211
    %v6335 = vunpack.c.l.b16 %v6212
    %v6336 = vpack.c.b16 %v6291, %v6288
    %v6337 = vpack.c.b16 %v6292, %v6289
    %v6338 = vpack.c.b16 %v6293, %v6290
    %v6339 = vpack.c.b16 %v6297, %v6294
    %v6340 = vpack.c.b16 %v6298, %v6295
    %v6341 = vpack.c.b16 %v6299, %v6296
    %v6342 = vpack.c.b16 %v6303, %v6300
    %v6343 = vpack.c.b16 %v6304, %v6301
    %v6344 = vpack.c.b16 %v6305, %v6302
    %v6345 = vpack.c.b16 %v6309, %v6306
    %v6346 = vpack.c.b16 %v6310, %v6307
    %v6347 = vpack.c.b16 %v6311, %v6308
    %v6348 = vpack.c.b16 %v6315, %v6312
    %v6349 = vpack.c.b16 %v6316, %v6313
    %v6350 = vpack.c.b16 %v6317, %v6314
    %v6351 = vpack.c.b16 %v6321, %v6318
    %v6352 = vpack.c.b16 %v6322, %v6319
    %v6353 = vpack.c.b16 %v6323, %v6320
    %v6354 = vpack.c.b16 %v6327, %v6324
    %v6355 = vpack.c.b16 %v6328, %v6325
    %v6356 = vpack.c.b16 %v6329, %v6326
    %v6357 = vpack.c.b16 %v6333, %v6330
    %v6358 = vpack.c.b16 %v6334, %v6331
    %v6359 = vpack.c.b16 %v6335, %v6332
    %v6412 = vunpack.c.l.b16 %v6213
    %v6413 = vunpack.c.l.b16 %v6214
    %v6414 = vunpack.c.l.b16 %v6215
    %v6415 = vunpack.c.l.b16 %v6216
    %v6416 = vunpack.c.l.b16 %v6217
    %v6417 = vunpack.c.l.b16 %v6218
    %v6418 = vunpack.c.l.b16 %v6219
    %v6419 = vunpack.c.l.b16 %v6220
    %v6420 = vunpack.c.l.b16 %v6221
    %v6421 = vunpack.c.l.b16 %v6222
    %v6422 = vunpack.c.l.b16 %v6223
    %v6423 = vunpack.c.l.b16 %v6224
    %v6424 = vunpack.c.l.b16 %v6225
    %v6425 = vunpack.c.l.b16 %v6226
    %v6426 = vunpack.c.l.b16 %v6227
    %v6427 = vunpack.c.l.b16 %v6228
    %v6428 = vunpack.c.l.b16 %v6229
    %v6429 = vunpack.c.l.b16 %v6230
    %v6430 = vunpack.c.l.b16 %v6231
    %v6431 = vunpack.c.l.b16 %v6232
    %v6432 = vunpack.c.l.b16 %v6233
    %v6433 = vunpack.c.l.b16 %v6234
    %v6434 = vunpack.c.l.b16 %v6235
    %v6435 = vunpack.c.l.b16 %v6236
    %v6436 = vunpack.c.l.b16 %v6237
    %v6437 = vunpack.c.l.b16 %v6238
    %v6438 = vunpack.c.l.b16 %v6239
    %v6439 = vunpack.c.l.b16 %v6240
    %v6440 = vunpack.c.l.b16 %v6241
    %v6441 = vunpack.c.l.b16 %v6242
    %v6442 = vunpack.c.l.b16 %v6243
    %v6443 = vunpack.c.l.b16 %v6244
    %v6444 = vunpack.c.l.b16 %v6245
    %v6445 = vunpack.c.l.b16 %v6246
    %v6446 = vunpack.c.l.b16 %v6247
    %v6447 = vunpack.c.l.b16 %v6248
    %v6448 = vpack.c.b16 %v6413, %v6412
    %v6449 = vpack.c.b16 %v6415, %v6414
    %v6450 = vpack.c.b16 %v6417, %v6416
    %v6451 = vpack.c.b16 %v6419, %v6418
    %v6452 = vpack.c.b16 %v6421, %v6420
    %v6453 = vpack.c.b16 %v6423, %v6422
    %v6454 = vpack.c.b16 %v6425, %v6424
    %v6455 = vpack.c.b16 %v6427, %v6426
    %v6456 = vpack.c.b16 %v6429, %v6428
    %v6457 = vpack.c.b16 %v6431, %v6430
    %v6458 = vpack.c.b16 %v6433, %v6432
    %v6459 = vpack.c.b16 %v6435, %v6434
    %v6460 = vpack.c.b16 %v6437, %v6436
    %v6461 = vpack.c.b16 %v6439, %v6438
    %v6462 = vpack.c.b16 %v6441, %v6440
    %v6463 = vpack.c.b16 %v6443, %v6442
    %v6464 = vpack.c.b16 %v6445, %v6444
    %v6465 = vpack.c.b16 %v6447, %v6446
    %vm6484 = vcmask 261120
    %v6486 = vsel %vm6484, %v6338, 0
    %v6489 = vsel %vm6484, %v6341, 0
    %v6492 = vsel %vm6484, %v6344, 0
    %v6495 = vsel %vm6484, %v6347, 0
    %v6498 = vsel %vm6484, %v6350, 0
    %v6501 = vsel %vm6484, %v6353, 0
    %v6504 = vsel %vm6484, %v6356, 0
    %v6507 = vsel %vm6484, %v6359, 0
    %6509 = vmatprep.subr.bf16.mxu0 0
    %6510 = vmatpush1.bf16.msra.mxu0 %v6448
    %6511 = vmatprep.subr.bf16.mxu0 0
    %6512 = vmatpush1.bf16.msra.mxu0 %v6449
    %6513 = vmatprep.subr.bf16.mxu0 0
    %6514 = vmatpush1.bf16.msra.mxu0 %v6450
    %6515 = vmatprep.subr.bf16.mxu0 0
    %6516 = vmatpush1.bf16.msra.mxu0 %v6451
    %6517 = vmatprep.subr.bf16.mxu0 0
    %6518 = vmatpush1.bf16.msra.mxu0 %v6452
    %6519 = vmatprep.subr.bf16.mxu0 0
    %6520 = vmatpush1.bf16.msra.mxu0 %v6453
    %6521 = vmatprep.subr.bf16.mxu0 0
    %6522 = vmatpush1.bf16.msra.mxu0 %v6454
    %6523 = vmatprep.subr.bf16.mxu0 0
    %6524 = vmatpush1.bf16.msra.mxu0 %v6455
    %6525 = vmatprep.subr.bf16.mxu0 0
    %6526 = vmatpush1.bf16.msra.mxu0 %v6456
    %6527 = vmatprep.subr.bf16.mxu0 0
    %6528 = vmatpush1.bf16.msra.mxu0 %v6457
    %6529 = vmatprep.subr.bf16.mxu0 0
    %6530 = vmatpush1.bf16.msra.mxu0 %v6458
    %6531 = vmatprep.subr.bf16.mxu0 0
    %6532 = vmatpush1.bf16.msra.mxu0 %v6459
    %6533 = vmatprep.subr.bf16.mxu0 0
    %6534 = vmatpush1.bf16.msra.mxu0 %v6460
    %6535 = vmatprep.subr.bf16.mxu0 0
    %6536 = vmatpush1.bf16.msra.mxu0 %v6461
    %6537 = vmatprep.subr.bf16.mxu0 0
    %6538 = vmatpush1.bf16.msra.mxu0 %v6462
    %6539 = vmatprep.subr.bf16.mxu0 0
    %6540 = vmatpush1.bf16.msra.mxu0 %v6463
    %6541 = vmatprep.mubr.bf16.mxu0 %v6337
    %6542 = vmatmul.mubr.bf16.gmra.mrb[0].mxu0 %v6336
    %v6543 = vpop.f32.mrb[0].mxu0
    %v6544 = vadd.f32 %v6254, %v6543
    %v6545 = vpop.f32.mrb[0].mxu0
    %v6546 = vpop.f32.mrb[0].mxu0
    %v6547 = vadd.f32 %v6254, %v6546
    %v6548 = vpop.f32.mrb[0].mxu0
    %6549 = vmatprep.mubr.bf16.mxu0 %v6340
    %6550 = vmatmul.mubr.bf16.gmra.mrb[0].mxu0 %v6339
    %v6551 = vpop.f32.mrb[0].mxu0
    %v6552 = vadd.f32 %v6254, %v6551
    %v6553 = vpop.f32.mrb[0].mxu0
    %v6554 = vpop.f32.mrb[0].mxu0
    %v6555 = vadd.f32 %v6254, %v6554
    %v6556 = vpop.f32.mrb[0].mxu0
    %6557 = vmatprep.mubr.bf16.mxu0 %v6343
    %6558 = vmatmul.mubr.bf16.gmra.mrb[0].mxu0 %v6342
    %v6559 = vpop.f32.mrb[0].mxu0
    %v6560 = vadd.f32 %v6254, %v6559
    %v6561 = vpop.f32.mrb[0].mxu0
    %v6562 = vpop.f32.mrb[0].mxu0
    %v6563 = vadd.f32 %v6254, %v6562
    %v6564 = vpop.f32.mrb[0].mxu0
    %6565 = vmatprep.mubr.bf16.mxu0 %v6346
    %6566 = vmatmul.mubr.bf16.gmra.mrb[0].mxu0 %v6345
    %v6567 = vpop.f32.mrb[0].mxu0
    %v6568 = vadd.f32 %v6254, %v6567
    %v6569 = vpop.f32.mrb[0].mxu0
    %v6570 = vpop.f32.mrb[0].mxu0
    %v6571 = vadd.f32 %v6254, %v6570
    %v6572 = vpop.f32.mrb[0].mxu0
    %6573 = vmatprep.mubr.bf16.mxu0 %v6349
    %6574 = vmatmul.mubr.bf16.gmra.mrb[0].mxu0 %v6348
    %v6575 = vpop.f32.mrb[0].mxu0
    %v6576 = vadd.f32 %v6254, %v6575
    %v6577 = vpop.f32.mrb[0].mxu0
    %v6578 = vpop.f32.mrb[0].mxu0
    %v6579 = vadd.f32 %v6254, %v6578
    %v6580 = vpop.f32.mrb[0].mxu0
    %6581 = vmatprep.mubr.bf16.mxu0 %v6352
    %6582 = vmatmul.mubr.bf16.gmra.mrb[0].mxu0 %v6351
    %v6583 = vpop.f32.mrb[0].mxu0
    %v6584 = vadd.f32 %v6254, %v6583
    %v6585 = vpop.f32.mrb[0].mxu0
    %v6586 = vpop.f32.mrb[0].mxu0
    %v6587 = vadd.f32 %v6254, %v6586
    %v6588 = vpop.f32.mrb[0].mxu0
    %6589 = vmatprep.mubr.bf16.mxu0 %v6355
    %6590 = vmatmul.mubr.bf16.gmra.mrb[0].mxu0 %v6354
    %v6591 = vpop.f32.mrb[0].mxu0
    %v6592 = vadd.f32 %v6254, %v6591
    %v6593 = vpop.f32.mrb[0].mxu0
    %v6594 = vpop.f32.mrb[0].mxu0
    %v6595 = vadd.f32 %v6254, %v6594
    %v6596 = vpop.f32.mrb[0].mxu0
    %6597 = vmatprep.mubr.bf16.mxu0 %v6358
    %6598 = vmatmul.mubr.bf16.gmra.mrb[0].mxu0 %v6357
    %v6599 = vpop.f32.mrb[0].mxu0
    %v6600 = vadd.f32 %v6254, %v6599
    %v6601 = vpop.f32.mrb[0].mxu0
    %v6602 = vpop.f32.mrb[0].mxu0
    %v6603 = vadd.f32 %v6254, %v6602
    %v6604 = vpop.f32.mrb[0].mxu0
    %6605 = vdwg.mxu0
    %6606 = vmatprep.subr.bf16.mxu0 0
    %6607 = vmatpush1.bf16.msra.mxu0 %v6464
    %6608 = vmatprep.subr.bf16.mxu0 0
    %6609 = vmatpush1.bf16.msra.mxu0 %v6465
    %6610 = vmatprep.subr.bf16.mxu0 0
    %6611 = vmatpush1.bf16.msra.mxu0 0
    %6612 = vmatprep.subr.bf16.mxu0 0
    %6613 = vmatpush1.bf16.msra.mxu0 0
    %6614 = vmatprep.subr.bf16.mxu0 0
    %6615 = vmatpush1.bf16.msra.mxu0 0
    %6616 = vmatprep.subr.bf16.mxu0 0
    %6617 = vmatpush1.bf16.msra.mxu0 0
    %6618 = vmatprep.subr.bf16.mxu0 0
    %6619 = vmatpush1.bf16.msra.mxu0 0
    %6620 = vmatprep.subr.bf16.mxu0 0
    %6621 = vmatpush1.bf16.msra.mxu0 0
    %6622 = vmatprep.subr.bf16.mxu0 0
    %6623 = vmatpush1.bf16.msra.mxu0 0
    %6624 = vmatprep.subr.bf16.mxu0 0
    %6625 = vmatpush1.bf16.msra.mxu0 0
    %6626 = vmatprep.subr.bf16.mxu0 0
    %6627 = vmatpush1.bf16.msra.mxu0 0
    %6628 = vmatprep.subr.bf16.mxu0 0
    %6629 = vmatpush1.bf16.msra.mxu0 0
    %6630 = vmatprep.subr.bf16.mxu0 0
    %6631 = vmatpush1.bf16.msra.mxu0 0
    %6632 = vmatprep.subr.bf16.mxu0 0
    %6633 = vmatpush1.bf16.msra.mxu0 0
    %6634 = vmatprep.subr.bf16.mxu0 0
    %6635 = vmatpush1.bf16.msra.mxu0 0
    %6636 = vmatprep.subr.bf16.mxu0 0
    %6637 = vmatpush1.bf16.msra.mxu0 0
    %6638 = vmatprep.mubr.bf16.mxu0 0
    %6639 = vmatmul.mubr.bf16.gmra.mrb[0].mxu0 %v6486
    %v6640 = vpop.f32.mrb[0].mxu0
    %v6641 = vadd.f32 %v6544, %v6640
    %v6642 = vpop.f32.mrb[0].mxu0
    %v6643 = vpop.f32.mrb[0].mxu0
    %v6644 = vadd.f32 %v6547, %v6643
    %v6645 = vpop.f32.mrb[0].mxu0
    %6646 = vmatprep.mubr.bf16.mxu0 0
    %6647 = vmatmul.mubr.bf16.gmra.mrb[0].mxu0 %v6489
    %v6648 = vpop.f32.mrb[0].mxu0
    %v6649 = vadd.f32 %v6552, %v6648
    %v6650 = vpop.f32.mrb[0].mxu0
    %v6651 = vpop.f32.mrb[0].mxu0
    %v6652 = vadd.f32 %v6555, %v6651
    %v6653 = vpop.f32.mrb[0].mxu0
    %6654 = vmatprep.mubr.bf16.mxu0 0
    %6655 = vmatmul.mubr.bf16.gmra.mrb[0].mxu0 %v6492
    %v6656 = vpop.f32.mrb[0].mxu0
    %v6657 = vadd.f32 %v6560, %v6656
    %v6658 = vpop.f32.mrb[0].mxu0
    %v6659 = vpop.f32.mrb[0].mxu0
    %v6660 = vadd.f32 %v6563, %v6659
    %v6661 = vpop.f32.mrb[0].mxu0
    %6662 = vmatprep.mubr.bf16.mxu0 0
    %6663 = vmatmul.mubr.bf16.gmra.mrb[0].mxu0 %v6495
    %v6664 = vpop.f32.mrb[0].mxu0
    %v6665 = vadd.f32 %v6568, %v6664
    %v6666 = vpop.f32.mrb[0].mxu0
    %v6667 = vpop.f32.mrb[0].mxu0
    %v6668 = vadd.f32 %v6571, %v6667
    %v6669 = vpop.f32.mrb[0].mxu0
    %6670 = vmatprep.mubr.bf16.mxu0 0
    %6671 = vmatmul.mubr.bf16.gmra.mrb[0].mxu0 %v6498
    %v6672 = vpop.f32.mrb[0].mxu0
    %v6673 = vadd.f32 %v6576, %v6672
    %v6674 = vpop.f32.mrb[0].mxu0
    %v6675 = vpop.f32.mrb[0].mxu0
    %v6676 = vadd.f32 %v6579, %v6675
    %v6677 = vpop.f32.mrb[0].mxu0
    %6678 = vmatprep.mubr.bf16.mxu0 0
    %6679 = vmatmul.mubr.bf16.gmra.mrb[0].mxu0 %v6501
    %v6680 = vpop.f32.mrb[0].mxu0
    %v6681 = vadd.f32 %v6584, %v6680
    %v6682 = vpop.f32.mrb[0].mxu0
    %v6683 = vpop.f32.mrb[0].mxu0
    %v6684 = vadd.f32 %v6587, %v6683
    %v6685 = vpop.f32.mrb[0].mxu0
    %6686 = vmatprep.mubr.bf16.mxu0 0
    %6687 = vmatmul.mubr.bf16.gmra.mrb[0].mxu0 %v6504
    %v6688 = vpop.f32.mrb[0].mxu0
    %v6689 = vadd.f32 %v6592, %v6688
    %v6690 = vpop.f32.mrb[0].mxu0
    %v6691 = vpop.f32.mrb[0].mxu0
    %v6692 = vadd.f32 %v6595, %v6691
    %v6693 = vpop.f32.mrb[0].mxu0
    %6694 = vmatprep.mubr.bf16.mxu0 0
    %6695 = vmatmul.mubr.bf16.gmra.mrb[0].mxu0 %v6507
    %v6696 = vpop.f32.mrb[0].mxu0
    %v6697 = vadd.f32 %v6600, %v6696
    %v6698 = vpop.f32.mrb[0].mxu0
    %v6699 = vpop.f32.mrb[0].mxu0
    %v6700 = vadd.f32 %v6603, %v6699
    %v6701 = vpop.f32.mrb[0].mxu0
    %6702 = vdwg.mxu0
    %v6703 = vmax.f32 %v6641, 0.0
    %v6704 = vmax.f32 %v6644, 0.0
    %v6705 = vmax.f32 %v6649, 0.0
    %v6706 = vmax.f32 %v6652, 0.0
    %v6707 = vmax.f32 %v6657, 0.0
    %v6708 = vmax.f32 %v6660, 0.0
    %v6709 = vmax.f32 %v6665, 0.0
    %v6710 = vmax.f32 %v6668, 0.0
    %v6711 = vmax.f32 %v6673, 0.0
    %v6712 = vmax.f32 %v6676, 0.0
    %v6713 = vmax.f32 %v6681, 0.0
    %v6714 = vmax.f32 %v6684, 0.0
    %v6715 = vmax.f32 %v6689, 0.0
    %v6716 = vmax.f32 %v6692, 0.0
    %v6717 = vmax.f32 %v6697, 0.0
    %v6718 = vmax.f32 %v6700, 0.0
    %v6735 = vcombine.high %v6703, %v6703
    %v6737 = vunpack.c.l.s4 1983009808
    %v6738 = vunpack.c.0.s8 %v6737
    %v6739 = vlaneseq
    %v6740 = vshrl.u32 %v6739, 7
    %v6741 = vsub.s32 %v6738, %v6740
    %v6742 = vrot.slane %v6703, %v6741
    %v6744 = vunpack.c.l.s4 1983009808
    %v6745 = vunpack.c.0.s8 %v6744
    %v6746 = vlaneseq
    %v6747 = vshrl.u32 %v6746, 7
    %v6748 = vsub.s32 %v6745, %v6747
    %v6749 = vrot.slane %v6735, %v6748
    %v6750 = vcombine.high %v6742, %v6742
    %v6751 = vcombine.high %v6749, %v6749
    %v6752 = vcombine.high %v6704, %v6704
    %v6754 = vunpack.c.l.s4 1983009808
    %v6755 = vunpack.c.0.s8 %v6754
    %v6756 = vlaneseq
    %v6757 = vshrl.u32 %v6756, 7
    %v6758 = vsub.s32 %v6755, %v6757
    %v6759 = vrot.slane %v6704, %v6758
    %v6761 = vunpack.c.l.s4 1983009808
    %v6762 = vunpack.c.0.s8 %v6761
    %v6763 = vlaneseq
    %v6764 = vshrl.u32 %v6763, 7
    %v6765 = vsub.s32 %v6762, %v6764
    %v6766 = vrot.slane %v6752, %v6765
    %v6767 = vcombine.high %v6759, %v6759
    %v6768 = vcombine.high %v6766, %v6766
    %v6769 = vcombine.high %v6705, %v6705
    %v6771 = vunpack.c.l.s4 1983009808
    %v6772 = vunpack.c.0.s8 %v6771
    %v6773 = vlaneseq
    %v6774 = vshrl.u32 %v6773, 7
    %v6775 = vsub.s32 %v6772, %v6774
    %v6776 = vrot.slane %v6705, %v6775
    %v6778 = vunpack.c.l.s4 1983009808
    %v6779 = vunpack.c.0.s8 %v6778
    %v6780 = vlaneseq
    %v6781 = vshrl.u32 %v6780, 7
    %v6782 = vsub.s32 %v6779, %v6781
    %v6783 = vrot.slane %v6769, %v6782
    %v6784 = vcombine.high %v6776, %v6776
    %v6785 = vcombine.high %v6783, %v6783
    %v6786 = vcombine.high %v6706, %v6706
    %v6788 = vunpack.c.l.s4 1983009808
    %v6789 = vunpack.c.0.s8 %v6788
    %v6790 = vlaneseq
    %v6791 = vshrl.u32 %v6790, 7
    %v6792 = vsub.s32 %v6789, %v6791
    %v6793 = vrot.slane %v6706, %v6792
    %v6795 = vunpack.c.l.s4 1983009808
    %v6796 = vunpack.c.0.s8 %v6795
    %v6797 = vlaneseq
    %v6798 = vshrl.u32 %v6797, 7
    %v6799 = vsub.s32 %v6796, %v6798
    %v6800 = vrot.slane %v6786, %v6799
    %v6801 = vcombine.high %v6793, %v6793
    %v6802 = vcombine.high %v6800, %v6800
    %v6803 = vcombine.high %v6707, %v6707
    %v6805 = vunpack.c.l.s4 1983009808
    %v6806 = vunpack.c.0.s8 %v6805
    %v6807 = vlaneseq
    %v6808 = vshrl.u32 %v6807, 7
    %v6809 = vsub.s32 %v6806, %v6808
    %v6810 = vrot.slane %v6707, %v6809
    %v6812 = vunpack.c.l.s4 1983009808
    %v6813 = vunpack.c.0.s8 %v6812
    %v6814 = vlaneseq
    %v6815 = vshrl.u32 %v6814, 7
    %v6816 = vsub.s32 %v6813, %v6815
    %v6817 = vrot.slane %v6803, %v6816
    %v6818 = vcombine.high %v6810, %v6810
    %v6819 = vcombine.high %v6817, %v6817
    %v6820 = vcombine.high %v6708, %v6708
    %v6822 = vunpack.c.l.s4 1983009808
    %v6823 = vunpack.c.0.s8 %v6822
    %v6824 = vlaneseq
    %v6825 = vshrl.u32 %v6824, 7
    %v6826 = vsub.s32 %v6823, %v6825
    %v6827 = vrot.slane %v6708, %v6826
    %v6829 = vunpack.c.l.s4 1983009808
    %v6830 = vunpack.c.0.s8 %v6829
    %v6831 = vlaneseq
    %v6832 = vshrl.u32 %v6831, 7
    %v6833 = vsub.s32 %v6830, %v6832
    %v6834 = vrot.slane %v6820, %v6833
    %v6835 = vcombine.high %v6827, %v6827
    %v6836 = vcombine.high %v6834, %v6834
    %v6837 = vcombine.high %v6709, %v6709
    %v6839 = vunpack.c.l.s4 1983009808
    %v6840 = vunpack.c.0.s8 %v6839
    %v6841 = vlaneseq
    %v6842 = vshrl.u32 %v6841, 7
    %v6843 = vsub.s32 %v6840, %v6842
    %v6844 = vrot.slane %v6709, %v6843
    %v6846 = vunpack.c.l.s4 1983009808
    %v6847 = vunpack.c.0.s8 %v6846
    %v6848 = vlaneseq
    %v6849 = vshrl.u32 %v6848, 7
    %v6850 = vsub.s32 %v6847, %v6849
    %v6851 = vrot.slane %v6837, %v6850
    %v6852 = vcombine.high %v6844, %v6844
    %v6853 = vcombine.high %v6851, %v6851
    %v6854 = vcombine.high %v6710, %v6710
    %v6856 = vunpack.c.l.s4 1983009808
    %v6857 = vunpack.c.0.s8 %v6856
    %v6858 = vlaneseq
    %v6859 = vshrl.u32 %v6858, 7
    %v6860 = vsub.s32 %v6857, %v6859
    %v6861 = vrot.slane %v6710, %v6860
    %v6863 = vunpack.c.l.s4 1983009808
    %v6864 = vunpack.c.0.s8 %v6863
    %v6865 = vlaneseq
    %v6866 = vshrl.u32 %v6865, 7
    %v6867 = vsub.s32 %v6864, %v6866
    %v6868 = vrot.slane %v6854, %v6867
    %v6869 = vcombine.high %v6861, %v6861
    %v6870 = vcombine.high %v6868, %v6868
    %v6871 = vcombine.high %v6711, %v6711
    %v6873 = vunpack.c.l.s4 1983009808
    %v6874 = vunpack.c.0.s8 %v6873
    %v6875 = vlaneseq
    %v6876 = vshrl.u32 %v6875, 7
    %v6877 = vsub.s32 %v6874, %v6876
    %v6878 = vrot.slane %v6711, %v6877
    %v6880 = vunpack.c.l.s4 1983009808
    %v6881 = vunpack.c.0.s8 %v6880
    %v6882 = vlaneseq
    %v6883 = vshrl.u32 %v6882, 7
    %v6884 = vsub.s32 %v6881, %v6883
    %v6885 = vrot.slane %v6871, %v6884
    %v6886 = vcombine.high %v6878, %v6878
    %v6887 = vcombine.high %v6885, %v6885
    %v6888 = vcombine.high %v6712, %v6712
    %v6890 = vunpack.c.l.s4 1983009808
    %v6891 = vunpack.c.0.s8 %v6890
    %v6892 = vlaneseq
    %v6893 = vshrl.u32 %v6892, 7
    %v6894 = vsub.s32 %v6891, %v6893
    %v6895 = vrot.slane %v6712, %v6894
    %v6897 = vunpack.c.l.s4 1983009808
    %v6898 = vunpack.c.0.s8 %v6897
    %v6899 = vlaneseq
    %v6900 = vshrl.u32 %v6899, 7
    %v6901 = vsub.s32 %v6898, %v6900
    %v6902 = vrot.slane %v6888, %v6901
    %v6903 = vcombine.high %v6895, %v6895
    %v6904 = vcombine.high %v6902, %v6902
    %v6905 = vcombine.high %v6713, %v6713
    %v6907 = vunpack.c.l.s4 1983009808
    %v6908 = vunpack.c.0.s8 %v6907
    %v6909 = vlaneseq
    %v6910 = vshrl.u32 %v6909, 7
    %v6911 = vsub.s32 %v6908, %v6910
    %v6912 = vrot.slane %v6713, %v6911
    %v6914 = vunpack.c.l.s4 1983009808
    %v6915 = vunpack.c.0.s8 %v6914
    %v6916 = vlaneseq
    %v6917 = vshrl.u32 %v6916, 7
    %v6918 = vsub.s32 %v6915, %v6917
    %v6919 = vrot.slane %v6905, %v6918
    %v6920 = vcombine.high %v6912, %v6912
    %v6921 = vcombine.high %v6919, %v6919
    %v6922 = vcombine.high %v6714, %v6714
    %v6924 = vunpack.c.l.s4 1983009808
    %v6925 = vunpack.c.0.s8 %v6924
    %v6926 = vlaneseq
    %v6927 = vshrl.u32 %v6926, 7
    %v6928 = vsub.s32 %v6925, %v6927
    %v6929 = vrot.slane %v6714, %v6928
    %v6931 = vunpack.c.l.s4 1983009808
    %v6932 = vunpack.c.0.s8 %v6931
    %v6933 = vlaneseq
    %v6934 = vshrl.u32 %v6933, 7
    %v6935 = vsub.s32 %v6932, %v6934
    %v6936 = vrot.slane %v6922, %v6935
    %v6937 = vcombine.high %v6929, %v6929
    %v6938 = vcombine.high %v6936, %v6936
    %v6939 = vcombine.high %v6715, %v6715
    %v6941 = vunpack.c.l.s4 1983009808
    %v6942 = vunpack.c.0.s8 %v6941
    %v6943 = vlaneseq
    %v6944 = vshrl.u32 %v6943, 7
    %v6945 = vsub.s32 %v6942, %v6944
    %v6946 = vrot.slane %v6715, %v6945
    %v6948 = vunpack.c.l.s4 1983009808
    %v6949 = vunpack.c.0.s8 %v6948
    %v6950 = vlaneseq
    %v6951 = vshrl.u32 %v6950, 7
    %v6952 = vsub.s32 %v6949, %v6951
    %v6953 = vrot.slane %v6939, %v6952
    %v6954 = vcombine.high %v6946, %v6946
    %v6955 = vcombine.high %v6953, %v6953
    %v6956 = vcombine.high %v6716, %v6716
    %v6958 = vunpack.c.l.s4 1983009808
    %v6959 = vunpack.c.0.s8 %v6958
    %v6960 = vlaneseq
    %v6961 = vshrl.u32 %v6960, 7
    %v6962 = vsub.s32 %v6959, %v6961
    %v6963 = vrot.slane %v6716, %v6962
    %v6965 = vunpack.c.l.s4 1983009808
    %v6966 = vunpack.c.0.s8 %v6965
    %v6967 = vlaneseq
    %v6968 = vshrl.u32 %v6967, 7
    %v6969 = vsub.s32 %v6966, %v6968
    %v6970 = vrot.slane %v6956, %v6969
    %v6971 = vcombine.high %v6963, %v6963
    %v6972 = vcombine.high %v6970, %v6970
    %v6973 = vcombine.high %v6717, %v6717
    %v6975 = vunpack.c.l.s4 1983009808
    %v6976 = vunpack.c.0.s8 %v6975
    %v6977 = vlaneseq
    %v6978 = vshrl.u32 %v6977, 7
    %v6979 = vsub.s32 %v6976, %v6978
    %v6980 = vrot.slane %v6717, %v6979
    %v6982 = vunpack.c.l.s4 1983009808
    %v6983 = vunpack.c.0.s8 %v6982
    %v6984 = vlaneseq
    %v6985 = vshrl.u32 %v6984, 7
    %v6986 = vsub.s32 %v6983, %v6985
    %v6987 = vrot.slane %v6973, %v6986
    %v6988 = vcombine.high %v6980, %v6980
    %v6989 = vcombine.high %v6987, %v6987
    %v6990 = vcombine.high %v6718, %v6718
    %v6992 = vunpack.c.l.s4 1983009808
    %v6993 = vunpack.c.0.s8 %v6992
    %v6994 = vlaneseq
    %v6995 = vshrl.u32 %v6994, 7
    %v6996 = vsub.s32 %v6993, %v6995
    %v6997 = vrot.slane %v6718, %v6996
    %v6999 = vunpack.c.l.s4 1983009808
    %v7000 = vunpack.c.0.s8 %v6999
    %v7001 = vlaneseq
    %v7002 = vshrl.u32 %v7001, 7
    %v7003 = vsub.s32 %v7000, %v7002
    %v7004 = vrot.slane %v6990, %v7003
    %v7005 = vcombine.high %v6997, %v6997
    %v7006 = vcombine.high %v7004, %v7004
    %v7071 = vrot.slane %v6742, 7
    %v7072 = vrot.slane %v7071, 2
    %v7073 = vrot.slane %v6750, 7
    %v7074 = vrot.slane %v7073, 2
    %v7075 = vrot.slane %v6749, 7
    %v7076 = vrot.slane %v7075, 2
    %v7077 = vrot.slane %v6751, 7
    %v7078 = vrot.slane %v7077, 2
    %v7079 = vrot.slane %v6759, 7
    %v7080 = vrot.slane %v7079, 2
    %v7081 = vrot.slane %v6767, 7
    %v7082 = vrot.slane %v7081, 2
    %v7083 = vrot.slane %v6766, 7
    %v7084 = vrot.slane %v7083, 2
    %v7085 = vrot.slane %v6768, 7
    %v7086 = vrot.slane %v7085, 2
    %v7087 = vrot.slane %v6776, 7
    %v7088 = vrot.slane %v7087, 2
    %v7089 = vrot.slane %v6784, 7
    %v7090 = vrot.slane %v7089, 2
    %v7091 = vrot.slane %v6783, 7
    %v7092 = vrot.slane %v7091, 2
    %v7093 = vrot.slane %v6785, 7
    %v7094 = vrot.slane %v7093, 2
    %v7095 = vrot.slane %v6793, 7
    %v7096 = vrot.slane %v7095, 2
    %v7097 = vrot.slane %v6801, 7
    %v7098 = vrot.slane %v7097, 2
    %v7099 = vrot.slane %v6800, 7
    %v7100 = vrot.slane %v7099, 2
    %v7101 = vrot.slane %v6802, 7
    %v7102 = vrot.slane %v7101, 2
    %v7103 = vrot.slane %v6810, 7
    %v7104 = vrot.slane %v7103, 2
    %v7105 = vrot.slane %v6818, 7
    %v7106 = vrot.slane %v7105, 2
    %v7107 = vrot.slane %v6817, 7
    %v7108 = vrot.slane %v7107, 2
    %v7109 = vrot.slane %v6819, 7
    %v7110 = vrot.slane %v7109, 2
    %v7111 = vrot.slane %v6827, 7
    %v7112 = vrot.slane %v7111, 2
    %v7113 = vrot.slane %v6835, 7
    %v7114 = vrot.slane %v7113, 2
    %v7115 = vrot.slane %v6834, 7
    %v7116 = vrot.slane %v7115, 2
    %v7117 = vrot.slane %v6836, 7
    %v7118 = vrot.slane %v7117, 2
    %v7119 = vrot.slane %v6844, 7
    %v7120 = vrot.slane %v7119, 2
    %v7121 = vrot.slane %v6852, 7
    %v7122 = vrot.slane %v7121, 2
    %v7123 = vrot.slane %v6851, 7
    %v7124 = vrot.slane %v7123, 2
    %v7125 = vrot.slane %v6853, 7
    %v7126 = vrot.slane %v7125, 2
    %v7127 = vrot.slane %v6861, 7
    %v7128 = vrot.slane %v7127, 2
    %v7129 = vrot.slane %v6869, 7
    %v7130 = vrot.slane %v7129, 2
    %v7131 = vrot.slane %v6868, 7
    %v7132 = vrot.slane %v7131, 2
    %v7133 = vrot.slane %v6870, 7
    %v7134 = vrot.slane %v7133, 2
    %v7135 = vrot.slane %v6878, 7
    %v7136 = vrot.slane %v7135, 2
    %v7137 = vrot.slane %v6886, 7
    %v7138 = vrot.slane %v7137, 2
    %v7139 = vrot.slane %v6885, 7
    %v7140 = vrot.slane %v7139, 2
    %v7141 = vrot.slane %v6887, 7
    %v7142 = vrot.slane %v7141, 2
    %v7143 = vrot.slane %v6895, 7
    %v7144 = vrot.slane %v7143, 2
    %v7145 = vrot.slane %v6903, 7
    %v7146 = vrot.slane %v7145, 2
    %v7147 = vrot.slane %v6902, 7
    %v7148 = vrot.slane %v7147, 2
    %v7149 = vrot.slane %v6904, 7
    %v7150 = vrot.slane %v7149, 2
    %v7151 = vrot.slane %v6912, 7
    %v7152 = vrot.slane %v7151, 2
    %v7153 = vrot.slane %v6920, 7
    %v7154 = vrot.slane %v7153, 2
    %v7155 = vrot.slane %v6919, 7
    %v7156 = vrot.slane %v7155, 2
    %v7157 = vrot.slane %v6921, 7
    %v7158 = vrot.slane %v7157, 2
    %v7159 = vrot.slane %v6929, 7
    %v7160 = vrot.slane %v7159, 2
    %v7161 = vrot.slane %v6937, 7
    %v7162 = vrot.slane %v7161, 2
    %v7163 = vrot.slane %v6936, 7
    %v7164 = vrot.slane %v7163, 2
    %v7165 = vrot.slane %v6938, 7
    %v7166 = vrot.slane %v7165, 2
    %v7167 = vrot.slane %v6946, 7
    %v7168 = vrot.slane %v7167, 2
    %v7169 = vrot.slane %v6954, 7
    %v7170 = vrot.slane %v7169, 2
    %v7171 = vrot.slane %v6953, 7
    %v7172 = vrot.slane %v7171, 2
    %v7173 = vrot.slane %v6955, 7
    %v7174 = vrot.slane %v7173, 2
    %v7175 = vrot.slane %v6963, 7
    %v7176 = vrot.slane %v7175, 2
    %v7177 = vrot.slane %v6971, 7
    %v7178 = vrot.slane %v7177, 2
    %v7179 = vrot.slane %v6970, 7
    %v7180 = vrot.slane %v7179, 2
    %v7181 = vrot.slane %v6972, 7
    %v7182 = vrot.slane %v7181, 2
    %v7183 = vrot.slane %v6980, 7
    %v7184 = vrot.slane %v7183, 2
    %v7185 = vrot.slane %v6988, 7
    %v7186 = vrot.slane %v7185, 2
    %v7187 = vrot.slane %v6987, 7
    %v7188 = vrot.slane %v7187, 2
    %v7189 = vrot.slane %v6989, 7
    %v7190 = vrot.slane %v7189, 2
    %v7191 = vrot.slane %v6997, 7
    %v7192 = vrot.slane %v7191, 2
    %v7193 = vrot.slane %v7005, 7
    %v7194 = vrot.slane %v7193, 2
    %v7195 = vrot.slane %v7004, 7
    %v7196 = vrot.slane %v7195, 2
    %v7197 = vrot.slane %v7006, 7
    %v7198 = vrot.slane %v7197, 2
    %v7263 = vmax.f32 %v6742, %v7072
    %v7264 = vmax.f32 %v6750, %v7074
    %v7265 = vmax.f32 %v6749, %v7076
    %v7266 = vmax.f32 %v6751, %v7078
    %v7267 = vmax.f32 %v6759, %v7080
    %v7268 = vmax.f32 %v6767, %v7082
    %v7269 = vmax.f32 %v6766, %v7084
    %v7270 = vmax.f32 %v6768, %v7086
    %v7271 = vmax.f32 %v6776, %v7088
    %v7272 = vmax.f32 %v6784, %v7090
    %v7273 = vmax.f32 %v6783, %v7092
    %v7274 = vmax.f32 %v6785, %v7094
    %v7275 = vmax.f32 %v6793, %v7096
    %v7276 = vmax.f32 %v6801, %v7098
    %v7277 = vmax.f32 %v6800, %v7100
    %v7278 = vmax.f32 %v6802, %v7102
    %v7279 = vmax.f32 %v6810, %v7104
    %v7280 = vmax.f32 %v6818, %v7106
    %v7281 = vmax.f32 %v6817, %v7108
    %v7282 = vmax.f32 %v6819, %v7110
    %v7283 = vmax.f32 %v6827, %v7112
    %v7284 = vmax.f32 %v6835, %v7114
    %v7285 = vmax.f32 %v6834, %v7116
    %v7286 = vmax.f32 %v6836, %v7118
    %v7287 = vmax.f32 %v6844, %v7120
    %v7288 = vmax.f32 %v6852, %v7122
    %v7289 = vmax.f32 %v6851, %v7124
    %v7290 = vmax.f32 %v6853, %v7126
    %v7291 = vmax.f32 %v6861, %v7128
    %v7292 = vmax.f32 %v6869, %v7130
    %v7293 = vmax.f32 %v6868, %v7132
    %v7294 = vmax.f32 %v6870, %v7134
    %v7295 = vmax.f32 %v6878, %v7136
    %v7296 = vmax.f32 %v6886, %v7138
    %v7297 = vmax.f32 %v6885, %v7140
    %v7298 = vmax.f32 %v6887, %v7142
    %v7299 = vmax.f32 %v6895, %v7144
    %v7300 = vmax.f32 %v6903, %v7146
    %v7301 = vmax.f32 %v6902, %v7148
    %v7302 = vmax.f32 %v6904, %v7150
    %v7303 = vmax.f32 %v6912, %v7152
    %v7304 = vmax.f32 %v6920, %v7154
    %v7305 = vmax.f32 %v6919, %v7156
    %v7306 = vmax.f32 %v6921, %v7158
    %v7307 = vmax.f32 %v6929, %v7160
    %v7308 = vmax.f32 %v6937, %v7162
    %v7309 = vmax.f32 %v6936, %v7164
    %v7310 = vmax.f32 %v6938, %v7166
    %v7311 = vmax.f32 %v6946, %v7168
    %v7312 = vmax.f32 %v6954, %v7170
    %v7313 = vmax.f32 %v6953, %v7172
    %v7314 = vmax.f32 %v6955, %v7174
    %v7315 = vmax.f32 %v6963, %v7176
    %v7316 = vmax.f32 %v6971, %v7178
    %v7317 = vmax.f32 %v6970, %v7180
    %v7318 = vmax.f32 %v6972, %v7182
    %v7319 = vmax.f32 %v6980, %v7184
    %v7320 = vmax.f32 %v6988, %v7186
    %v7321 = vmax.f32 %v6987, %v7188
    %v7322 = vmax.f32 %v6989, %v7190
    %v7323 = vmax.f32 %v6997, %v7192
    %v7324 = vmax.f32 %v7005, %v7194
    %v7325 = vmax.f32 %v7004, %v7196
    %v7326 = vmax.f32 %v7006, %v7198
    %v7327 = vmax.f32 %v7263, %v7267
    %v7328 = vmax.f32 %v7264, %v7268
    %v7329 = vmax.f32 %v7265, %v7269
    %v7330 = vmax.f32 %v7266, %v7270
    %v7331 = vmax.f32 %v7271, %v7275
    %v7332 = vmax.f32 %v7272, %v7276
    %v7333 = vmax.f32 %v7273, %v7277
    %v7334 = vmax.f32 %v7274, %v7278
    %v7335 = vmax.f32 %v7279, %v7283
    %v7336 = vmax.f32 %v7280, %v7284
    %v7337 = vmax.f32 %v7281, %v7285
    %v7338 = vmax.f32 %v7282, %v7286
    %v7339 = vmax.f32 %v7287, %v7291
    %v7340 = vmax.f32 %v7288, %v7292
    %v7341 = vmax.f32 %v7289, %v7293
    %v7342 = vmax.f32 %v7290, %v7294
    %v7343 = vmax.f32 %v7295, %v7299
    %v7344 = vmax.f32 %v7296, %v7300
    %v7345 = vmax.f32 %v7297, %v7301
    %v7346 = vmax.f32 %v7298, %v7302
    %v7347 = vmax.f32 %v7303, %v7307
    %v7348 = vmax.f32 %v7304, %v7308
    %v7349 = vmax.f32 %v7305, %v7309
    %v7350 = vmax.f32 %v7306, %v7310
    %v7351 = vmax.f32 %v7311, %v7315
    %v7352 = vmax.f32 %v7312, %v7316
    %v7353 = vmax.f32 %v7313, %v7317
    %v7354 = vmax.f32 %v7314, %v7318
    %v7355 = vmax.f32 %v7319, %v7323
    %v7356 = vmax.f32 %v7320, %v7324
    %v7357 = vmax.f32 %v7321, %v7325
    %v7358 = vmax.f32 %v7322, %v7326
    %v7359 = vpack.c.bf16 %v7327, %v7327
    %v7360 = vpack.c.bf16 %v7328, %v7328
    %v7361 = vpack.c.bf16 %v7329, %v7329
    %v7362 = vpack.c.bf16 %v7330, %v7330
    %v7363 = vpack.c.bf16 %v7331, %v7331
    %v7364 = vpack.c.bf16 %v7332, %v7332
    %v7365 = vpack.c.bf16 %v7333, %v7333
    %v7366 = vpack.c.bf16 %v7334, %v7334
    %v7367 = vpack.c.bf16 %v7335, %v7335
    %v7368 = vpack.c.bf16 %v7336, %v7336
    %v7369 = vpack.c.bf16 %v7337, %v7337
    %v7370 = vpack.c.bf16 %v7338, %v7338
    %v7371 = vpack.c.bf16 %v7339, %v7339
    %v7372 = vpack.c.bf16 %v7340, %v7340
    %v7373 = vpack.c.bf16 %v7341, %v7341
    %v7374 = vpack.c.bf16 %v7342, %v7342
    %v7375 = vpack.c.bf16 %v7343, %v7343
    %v7376 = vpack.c.bf16 %v7344, %v7344
    %v7377 = vpack.c.bf16 %v7345, %v7345
    %v7378 = vpack.c.bf16 %v7346, %v7346
    %v7379 = vpack.c.bf16 %v7347, %v7347
    %v7380 = vpack.c.bf16 %v7348, %v7348
    %v7381 = vpack.c.bf16 %v7349, %v7349
    %v7382 = vpack.c.bf16 %v7350, %v7350
    %v7383 = vpack.c.bf16 %v7351, %v7351
    %v7384 = vpack.c.bf16 %v7352, %v7352
    %v7385 = vpack.c.bf16 %v7353, %v7353
    %v7386 = vpack.c.bf16 %v7354, %v7354
    %v7387 = vpack.c.bf16 %v7355, %v7355
    %v7388 = vpack.c.bf16 %v7356, %v7356
    %v7389 = vpack.c.bf16 %v7357, %v7357
    %v7390 = vpack.c.bf16 %v7358, %v7358
    %v7423 = vunpack.c.l.b16 %v7359
    %v7424 = vunpack.c.l.b16 %v7360
    %v7425 = vunpack.c.l.b16 %v7361
    %v7426 = vunpack.c.l.b16 %v7362
    %v7427 = vunpack.c.l.b16 %v7363
    %v7428 = vunpack.c.l.b16 %v7364
    %v7429 = vunpack.c.l.b16 %v7365
    %v7430 = vunpack.c.l.b16 %v7366
    %v7431 = vunpack.c.l.b16 %v7367
    %v7432 = vunpack.c.l.b16 %v7368
    %v7433 = vunpack.c.l.b16 %v7369
    %v7434 = vunpack.c.l.b16 %v7370
    %v7435 = vunpack.c.l.b16 %v7371
    %v7436 = vunpack.c.l.b16 %v7372
    %v7437 = vunpack.c.l.b16 %v7373
    %v7438 = vunpack.c.l.b16 %v7374
    %v7439 = vunpack.c.l.b16 %v7375
    %v7440 = vunpack.c.l.b16 %v7376
    %v7441 = vunpack.c.l.b16 %v7377
    %v7442 = vunpack.c.l.b16 %v7378
    %v7443 = vunpack.c.l.b16 %v7379
    %v7444 = vunpack.c.l.b16 %v7380
    %v7445 = vunpack.c.l.b16 %v7381
    %v7446 = vunpack.c.l.b16 %v7382
    %v7447 = vunpack.c.l.b16 %v7383
    %v7448 = vunpack.c.l.b16 %v7384
    %v7449 = vunpack.c.l.b16 %v7385
    %v7450 = vunpack.c.l.b16 %v7386
    %v7451 = vunpack.c.l.b16 %v7387
    %v7452 = vunpack.c.l.b16 %v7388
    %v7453 = vunpack.c.l.b16 %v7389
    %v7454 = vunpack.c.l.b16 %v7390
    %v7455 = vpack.c.b16 %v7423, %v7423
    %v7456 = vpack.c.b16 %v7424, %v7424
    %v7457 = vpack.c.b16 %v7425, %v7425
    %v7458 = vpack.c.b16 %v7426, %v7426
    %v7459 = vpack.c.b16 %v7427, %v7427
    %v7460 = vpack.c.b16 %v7428, %v7428
    %v7461 = vpack.c.b16 %v7429, %v7429
    %v7462 = vpack.c.b16 %v7430, %v7430
    %v7463 = vpack.c.b16 %v7431, %v7431
    %v7464 = vpack.c.b16 %v7432, %v7432
    %v7465 = vpack.c.b16 %v7433, %v7433
    %v7466 = vpack.c.b16 %v7434, %v7434
    %v7467 = vpack.c.b16 %v7435, %v7435
    %v7468 = vpack.c.b16 %v7436, %v7436
    %v7469 = vpack.c.b16 %v7437, %v7437
    %v7470 = vpack.c.b16 %v7438, %v7438
    %v7471 = vpack.c.b16 %v7439, %v7439
    %v7472 = vpack.c.b16 %v7440, %v7440
    %v7473 = vpack.c.b16 %v7441, %v7441
    %v7474 = vpack.c.b16 %v7442, %v7442
    %v7475 = vpack.c.b16 %v7443, %v7443
    %v7476 = vpack.c.b16 %v7444, %v7444
    %v7477 = vpack.c.b16 %v7445, %v7445
    %v7478 = vpack.c.b16 %v7446, %v7446
    %v7479 = vpack.c.b16 %v7447, %v7447
    %v7480 = vpack.c.b16 %v7448, %v7448
    %v7481 = vpack.c.b16 %v7449, %v7449
    %v7482 = vpack.c.b16 %v7450, %v7450
    %v7483 = vpack.c.b16 %v7451, %v7451
    %v7484 = vpack.c.b16 %v7452, %v7452
    %v7485 = vpack.c.b16 %v7453, %v7453
    %v7486 = vpack.c.b16 %v7454, %v7454
    %v7487 = vunpack.c.l.b16 %v7455
    %v7488 = vunpack.c.l.b16 %v7456
    %v7489 = vunpack.c.l.b16 %v7457
    %v7490 = vunpack.c.l.b16 %v7458
    %v7491 = vunpack.c.l.b16 %v7459
    %v7492 = vunpack.c.l.b16 %v7460
    %v7493 = vunpack.c.l.b16 %v7461
    %v7494 = vunpack.c.l.b16 %v7462
    %v7495 = vunpack.c.l.b16 %v7463
    %v7496 = vunpack.c.l.b16 %v7464
    %v7497 = vunpack.c.l.b16 %v7465
    %v7498 = vunpack.c.l.b16 %v7466
    %v7499 = vunpack.c.l.b16 %v7467
    %v7500 = vunpack.c.l.b16 %v7468
    %v7501 = vunpack.c.l.b16 %v7469
    %v7502 = vunpack.c.l.b16 %v7470
    %v7503 = vunpack.c.l.b16 %v7471
    %v7504 = vunpack.c.l.b16 %v7472
    %v7505 = vunpack.c.l.b16 %v7473
    %v7506 = vunpack.c.l.b16 %v7474
    %v7507 = vunpack.c.l.b16 %v7475
    %v7508 = vunpack.c.l.b16 %v7476
    %v7509 = vunpack.c.l.b16 %v7477
    %v7510 = vunpack.c.l.b16 %v7478
    %v7511 = vunpack.c.l.b16 %v7479
    %v7512 = vunpack.c.l.b16 %v7480
    %v7513 = vunpack.c.l.b16 %v7481
    %v7514 = vunpack.c.l.b16 %v7482
    %v7515 = vunpack.c.l.b16 %v7483
    %v7516 = vunpack.c.l.b16 %v7484
    %v7517 = vunpack.c.l.b16 %v7485
    %v7518 = vunpack.c.l.b16 %v7486
    %v7519 = vrot.slane %v7488, 7
    %vm7520 = vcmask 1041409
    %v7521 = vsel %vm7520, %v7519, %v7487
    %v7522 = vrot.slane %v7489, 6
    %v7523 = vsel %vm4100, %v7522, %v7521
    %v7524 = vrot.slane %v7490, 5
    %v7525 = vsel %vm4103, %v7524, %v7523
    %v7526 = vrot.slane %v7492, 7
    %v7527 = vsel %vm7520, %v7526, %v7491
    %v7528 = vrot.slane %v7493, 6
    %v7529 = vsel %vm4100, %v7528, %v7527
    %v7530 = vrot.slane %v7494, 5
    %v7531 = vsel %vm4103, %v7530, %v7529
    %v7532 = vrot.slane %v7496, 7
    %v7533 = vsel %vm7520, %v7532, %v7495
    %v7534 = vrot.slane %v7497, 6
    %v7535 = vsel %vm4100, %v7534, %v7533
    %v7536 = vrot.slane %v7498, 5
    %v7537 = vsel %vm4103, %v7536, %v7535
    %v7538 = vrot.slane %v7500, 7
    %v7539 = vsel %vm7520, %v7538, %v7499
    %v7540 = vrot.slane %v7501, 6
    %v7541 = vsel %vm4100, %v7540, %v7539
    %v7542 = vrot.slane %v7502, 5
    %v7543 = vsel %vm4103, %v7542, %v7541
    %v7544 = vrot.slane %v7504, 7
    %v7545 = vsel %vm7520, %v7544, %v7503
    %v7546 = vrot.slane %v7505, 6
    %v7547 = vsel %vm4100, %v7546, %v7545
    %v7548 = vrot.slane %v7506, 5
    %v7549 = vsel %vm4103, %v7548, %v7547
    %v7550 = vrot.slane %v7508, 7
    %v7551 = vsel %vm7520, %v7550, %v7507
    %v7552 = vrot.slane %v7509, 6
    %v7553 = vsel %vm4100, %v7552, %v7551
    %v7554 = vrot.slane %v7510, 5
    %v7555 = vsel %vm4103, %v7554, %v7553
    %v7556 = vrot.slane %v7512, 7
    %v7557 = vsel %vm7520, %v7556, %v7511
    %v7558 = vrot.slane %v7513, 6
    %v7559 = vsel %vm4100, %v7558, %v7557
    %v7560 = vrot.slane %v7514, 5
    %v7561 = vsel %vm4103, %v7560, %v7559
    %v7562 = vrot.slane %v7516, 7
    %v7563 = vsel %vm7520, %v7562, %v7515
    %v7564 = vrot.slane %v7517, 6
    %v7565 = vsel %vm4100, %v7564, %v7563
    %v7566 = vrot.slane %v7518, 5
    %v7567 = vsel %vm4103, %v7566, %v7565
    %v7568 = vpack.c.b16 %v7525, %v7525
    %v7569 = vpack.c.b16 %v7531, %v7531
    %v7570 = vpack.c.b16 %v7537, %v7537
    %v7571 = vpack.c.b16 %v7543, %v7543
    %v7572 = vpack.c.b16 %v7549, %v7549
    %v7573 = vpack.c.b16 %v7555, %v7555
    %v7574 = vpack.c.b16 %v7561, %v7561
    %v7575 = vpack.c.b16 %v7567, %v7567
    %vm7584 = vcmask 517120
    %7585 = vst.msk [vmem:[#allocation3] sm:$0x3] %vm7584, %v7568
    %7586 = vst.msk [vmem:[#allocation3 + $0x4] sm:$0x3] %vm7584, %v7569
    %7587 = vst.msk [vmem:[#allocation3 + $0x8] sm:$0x3] %vm7584, %v7570
    %7588 = vst.msk [vmem:[#allocation3 + $0xc] sm:$0x3] %vm7584, %v7571
    %7589 = vst.msk [vmem:[#allocation3 + $0x14] sm:$0x3] %vm7584, %v7572
    %7590 = vst.msk [vmem:[#allocation3 + $0x18] sm:$0x3] %vm7584, %v7573
    %7591 = vst.msk [vmem:[#allocation3 + $0x1c] sm:$0x3] %vm7584, %v7574
    %7592 = vst.msk [vmem:[#allocation3 + $0x20] sm:$0x3] %vm7584, %v7575
    %v7593 = vld [vmem:[#allocation3] sm:$0x3]
    %v7594 = vld [vmem:[#allocation3 + $0x4] sm:$0x3]
    %v7595 = vld [vmem:[#allocation3 + $0x8] sm:$0x3]
    %v7596 = vld [vmem:[#allocation3 + $0xc] sm:$0x3]
    %v7597 = vld [vmem:[#allocation3 + $0x14] sm:$0x3]
    %v7598 = vld [vmem:[#allocation3 + $0x18] sm:$0x3]
    %v7599 = vld [vmem:[#allocation3 + $0x1c] sm:$0x3]
    %v7600 = vld [vmem:[#allocation3 + $0x20] sm:$0x3]
    %7601 = vst.msk [vmem:[#allocation5] sm:$0x3] %vm7584, %v7593
    %7602 = vst.msk [vmem:[#allocation5 + $0x4] sm:$0x3] %vm7584, %v7594
    %7603 = vst.msk [vmem:[#allocation5 + $0x8] sm:$0x3] %vm7584, %v7595
    %7604 = vst.msk [vmem:[#allocation5 + $0xc] sm:$0x3] %vm7584, %v7596
    %7605 = vst.msk [vmem:[#allocation5 + $0x10] sm:$0x3] %vm7584, %v7597
    %7606 = vst.msk [vmem:[#allocation5 + $0x14] sm:$0x3] %vm7584, %v7598
    %7607 = vst.msk [vmem:[#allocation5 + $0x18] sm:$0x3] %vm7584, %v7599
    %7608 = vst.msk [vmem:[#allocation5 + $0x1c] sm:$0x3] %vm7584, %v7600
    %v7609 = vld [vmem:[#allocation3] sm:$0x7]
    %v7610 = vld [vmem:[#allocation3 + $0x4] sm:$0x7]
    %v7611 = vld [vmem:[#allocation3 + $0x8] sm:$0x7]
    %v7612 = vld [vmem:[#allocation3 + $0xc] sm:$0x7]
    %v7613 = vld [vmem:[#allocation3 + $0x14] sm:$0x7]
    %v7614 = vld [vmem:[#allocation3 + $0x18] sm:$0x7]
    %v7615 = vld [vmem:[#allocation3 + $0x1c] sm:$0x7]
    %v7616 = vld [vmem:[#allocation3 + $0x20] sm:$0x7]
    %v7626 = vunpack.c.l.s4 1983009808
    %v7627 = vunpack.c.0.s8 %v7626
    %v7628 = vlaneseq
    %v7629 = vshrl.u32 %v7628, 7
    %v7630 = vsub.s32 %v7627, %v7629
    %v7631 = vrot.slane %v7609, %v7630
    %v7632 = vcombine.high %v7631, %v7631
    %v7634 = vunpack.c.l.s4 1983009808
    %v7635 = vunpack.c.0.s8 %v7634
    %v7636 = vlaneseq
    %v7637 = vshrl.u32 %v7636, 7
    %v7638 = vsub.s32 %v7635, %v7637
    %v7639 = vrot.slane %v7610, %v7638
    %v7640 = vcombine.high %v7639, %v7639
    %v7642 = vunpack.c.l.s4 1983009808
    %v7643 = vunpack.c.0.s8 %v7642
    %v7644 = vlaneseq
    %v7645 = vshrl.u32 %v7644, 7
    %v7646 = vsub.s32 %v7643, %v7645
    %v7647 = vrot.slane %v7611, %v7646
    %v7648 = vcombine.high %v7647, %v7647
    %v7650 = vunpack.c.l.s4 1983009808
    %v7651 = vunpack.c.0.s8 %v7650
    %v7652 = vlaneseq
    %v7653 = vshrl.u32 %v7652, 7
    %v7654 = vsub.s32 %v7651, %v7653
    %v7655 = vrot.slane %v7612, %v7654
    %v7656 = vcombine.high %v7655, %v7655
    %v7658 = vunpack.c.l.s4 1983009808
    %v7659 = vunpack.c.0.s8 %v7658
    %v7660 = vlaneseq
    %v7661 = vshrl.u32 %v7660, 7
    %v7662 = vsub.s32 %v7659, %v7661
    %v7663 = vrot.slane %v7613, %v7662
    %v7664 = vcombine.high %v7663, %v7663
    %v7666 = vunpack.c.l.s4 1983009808
    %v7667 = vunpack.c.0.s8 %v7666
    %v7668 = vlaneseq
    %v7669 = vshrl.u32 %v7668, 7
    %v7670 = vsub.s32 %v7667, %v7669
    %v7671 = vrot.slane %v7614, %v7670
    %v7672 = vcombine.high %v7671, %v7671
    %v7674 = vunpack.c.l.s4 1983009808
    %v7675 = vunpack.c.0.s8 %v7674
    %v7676 = vlaneseq
    %v7677 = vshrl.u32 %v7676, 7
    %v7678 = vsub.s32 %v7675, %v7677
    %v7679 = vrot.slane %v7615, %v7678
    %v7680 = vcombine.high %v7679, %v7679
    %v7682 = vunpack.c.l.s4 1983009808
    %v7683 = vunpack.c.0.s8 %v7682
    %v7684 = vlaneseq
    %v7685 = vshrl.u32 %v7684, 7
    %v7686 = vsub.s32 %v7683, %v7685
    %v7687 = vrot.slane %v7616, %v7686
    %v7688 = vcombine.high %v7687, %v7687
    %vm7689 = vsmask.f32 1280
    %vm7690 = vsmask.f32 3336
    %vm7691 = vmor %vm7689, %vm7690
    %vm7692 = vsmask.f32 5392
    %vm7693 = vmor %vm7691, %vm7692
    %vm7694 = vsmask.f32 7448
    %vm7695 = vmor %vm7693, %vm7694
    %v7697 = vshrl.u32 %v7631, 16
    %v7699 = vrot.slane %v7697, 6
    %v7700 = vshll.u32 %v7631, 16
    %v7702 = vrot.slane %v7700, 7
    %v7703 = vor.u32 %v7699, %v7702
    %v7704 = vrot.slane %v7703, 2
    %v7706 = vshll.u32 %v7632, 16
    %v7708 = vrot.slane %v7706, 7
    %v7709 = vsel %vm7695, %v7704, %v7708
    %v7711 = vshrl.u32 %v7639, 16
    %v7713 = vrot.slane %v7711, 6
    %v7714 = vshll.u32 %v7639, 16
    %v7716 = vrot.slane %v7714, 7
    %v7717 = vor.u32 %v7713, %v7716
    %v7718 = vrot.slane %v7717, 2
    %v7720 = vshll.u32 %v7640, 16
    %v7722 = vrot.slane %v7720, 7
    %v7723 = vsel %vm7695, %v7718, %v7722
    %v7725 = vshrl.u32 %v7647, 16
    %v7727 = vrot.slane %v7725, 6
    %v7728 = vshll.u32 %v7647, 16
    %v7730 = vrot.slane %v7728, 7
    %v7731 = vor.u32 %v7727, %v7730
    %v7732 = vrot.slane %v7731, 2
    %v7734 = vshll.u32 %v7648, 16
    %v7736 = vrot.slane %v7734, 7
    %v7737 = vsel %vm7695, %v7732, %v7736
    %v7739 = vshrl.u32 %v7655, 16
    %v7741 = vrot.slane %v7739, 6
    %v7742 = vshll.u32 %v7655, 16
    %v7744 = vrot.slane %v7742, 7
    %v7745 = vor.u32 %v7741, %v7744
    %v7746 = vrot.slane %v7745, 2
    %v7748 = vshll.u32 %v7656, 16
    %v7750 = vrot.slane %v7748, 7
    %v7751 = vsel %vm7695, %v7746, %v7750
    %v7753 = vshrl.u32 %v7663, 16
    %v7755 = vrot.slane %v7753, 6
    %v7756 = vshll.u32 %v7663, 16
    %v7758 = vrot.slane %v7756, 7
    %v7759 = vor.u32 %v7755, %v7758
    %v7760 = vrot.slane %v7759, 2
    %v7762 = vshll.u32 %v7664, 16
    %v7764 = vrot.slane %v7762, 7
    %v7765 = vsel %vm7695, %v7760, %v7764
    %v7767 = vshrl.u32 %v7671, 16
    %v7769 = vrot.slane %v7767, 6
    %v7770 = vshll.u32 %v7671, 16
    %v7772 = vrot.slane %v7770, 7
    %v7773 = vor.u32 %v7769, %v7772
    %v7774 = vrot.slane %v7773, 2
    %v7776 = vshll.u32 %v7672, 16
    %v7778 = vrot.slane %v7776, 7
    %v7779 = vsel %vm7695, %v7774, %v7778
    %v7781 = vshrl.u32 %v7679, 16
    %v7783 = vrot.slane %v7781, 6
    %v7784 = vshll.u32 %v7679, 16
    %v7786 = vrot.slane %v7784, 7
    %v7787 = vor.u32 %v7783, %v7786
    %v7788 = vrot.slane %v7787, 2
    %v7790 = vshll.u32 %v7680, 16
    %v7792 = vrot.slane %v7790, 7
    %v7793 = vsel %vm7695, %v7788, %v7792
    %v7795 = vshrl.u32 %v7687, 16
    %v7797 = vrot.slane %v7795, 6
    %v7798 = vshll.u32 %v7687, 16
    %v7800 = vrot.slane %v7798, 7
    %v7801 = vor.u32 %v7797, %v7800
    %v7802 = vrot.slane %v7801, 2
    %v7804 = vshll.u32 %v7688, 16
    %v7806 = vrot.slane %v7804, 7
    %v7807 = vsel %vm7695, %v7802, %v7806
    %7808 = vrot.lane.b32.xlu0 %v7709, 64
    %v7809 = vpop.permute.xlu0 %7808
    %7810 = vrot.lane.b32.xlu0 %v7723, 64
    %v7811 = vpop.permute.xlu0 %7810
    %7812 = vrot.lane.b32.xlu0 %v7737, 64
    %v7813 = vpop.permute.xlu0 %7812
    %7814 = vrot.lane.b32.xlu0 %v7751, 64
    %v7815 = vpop.permute.xlu0 %7814
    %7816 = vrot.lane.b32.xlu0 %v7765, 64
    %v7817 = vpop.permute.xlu0 %7816
    %7818 = vrot.lane.b32.xlu0 %v7779, 64
    %v7819 = vpop.permute.xlu0 %7818
    %7820 = vrot.lane.b32.xlu0 %v7793, 64
    %v7821 = vpop.permute.xlu0 %7820
    %7822 = vrot.lane.b32.xlu0 %v7807, 64
    %v7823 = vpop.permute.xlu0 %7822
    %vm7832 = vcmask 1041920
    %7833 = vst.msk [vmem:[#allocation5] sm:$0x3] %vm7832, %v7809
    %7834 = vst.msk [vmem:[#allocation5 + $0x4] sm:$0x3] %vm7832, %v7811
    %7835 = vst.msk [vmem:[#allocation5 + $0x8] sm:$0x3] %vm7832, %v7813
    %7836 = vst.msk [vmem:[#allocation5 + $0xc] sm:$0x3] %vm7832, %v7815
    %7837 = vst.msk [vmem:[#allocation5 + $0x10] sm:$0x3] %vm7832, %v7817
    %7838 = vst.msk [vmem:[#allocation5 + $0x14] sm:$0x3] %vm7832, %v7819
    %7839 = vst.msk [vmem:[#allocation5 + $0x18] sm:$0x3] %vm7832, %v7821
    %7840 = vst.msk [vmem:[#allocation5 + $0x1c] sm:$0x3] %vm7832, %v7823
    %s7841 = scalar_lea.vmem [#allocation3], 4
    %v7842 = vld [vmem:[%s7841] sm:$0x3]
    %v7843 = vld [vmem:[%s7841 + $0x4] sm:$0x3]
    %v7844 = vld [vmem:[%s7841 + $0x8] sm:$0x3]
    %v7845 = vld [vmem:[%s7841 + $0xc] sm:$0x3]
    %v7846 = vld [vmem:[%s7841 + $0x14] sm:$0x3]
    %v7847 = vld [vmem:[%s7841 + $0x18] sm:$0x3]
    %v7848 = vld [vmem:[%s7841 + $0x1c] sm:$0x3]
    %v7849 = vld [vmem:[%s7841 + $0x20] sm:$0x3]
    %7850 = vst.msk [vmem:[#allocation5 + $0x2] sm:$0x3] %vm7584, %v7842
    %7851 = vst.msk [vmem:[#allocation5 + $0x6] sm:$0x3] %vm7584, %v7843
    %7852 = vst.msk [vmem:[#allocation5 + $0xa] sm:$0x3] %vm7584, %v7844
    %7853 = vst.msk [vmem:[#allocation5 + $0xe] sm:$0x3] %vm7584, %v7845
    %7854 = vst.msk [vmem:[#allocation5 + $0x12] sm:$0x3] %vm7584, %v7846
    %7855 = vst.msk [vmem:[#allocation5 + $0x16] sm:$0x3] %vm7584, %v7847
    %7856 = vst.msk [vmem:[#allocation5 + $0x1a] sm:$0x3] %vm7584, %v7848
    %7857 = vst.msk [vmem:[#allocation5 + $0x1e] sm:$0x3] %vm7584, %v7849
    %v7858 = vld [vmem:[%s7841] sm:$0x7]
    %v7859 = vld [vmem:[%s7841 + $0x4] sm:$0x7]
    %v7860 = vld [vmem:[%s7841 + $0x8] sm:$0x7]
    %v7861 = vld [vmem:[%s7841 + $0xc] sm:$0x7]
    %v7862 = vld [vmem:[%s7841 + $0x14] sm:$0x7]
    %v7863 = vld [vmem:[%s7841 + $0x18] sm:$0x7]
    %v7864 = vld [vmem:[%s7841 + $0x1c] sm:$0x7]
    %v7865 = vld [vmem:[%s7841 + $0x20] sm:$0x7]
    %v7875 = vunpack.c.l.s4 1983009808
    %v7876 = vunpack.c.0.s8 %v7875
    %v7877 = vlaneseq
    %v7878 = vshrl.u32 %v7877, 7
    %v7879 = vsub.s32 %v7876, %v7878
    %v7880 = vrot.slane %v7858, %v7879
    %v7881 = vcombine.high %v7880, %v7880
    %v7883 = vunpack.c.l.s4 1983009808
    %v7884 = vunpack.c.0.s8 %v7883
    %v7885 = vlaneseq
    %v7886 = vshrl.u32 %v7885, 7
    %v7887 = vsub.s32 %v7884, %v7886
    %v7888 = vrot.slane %v7859, %v7887
    %v7889 = vcombine.high %v7888, %v7888
    %v7891 = vunpack.c.l.s4 1983009808
    %v7892 = vunpack.c.0.s8 %v7891
    %v7893 = vlaneseq
    %v7894 = vshrl.u32 %v7893, 7
    %v7895 = vsub.s32 %v7892, %v7894
    %v7896 = vrot.slane %v7860, %v7895
    %v7897 = vcombine.high %v7896, %v7896
    %v7899 = vunpack.c.l.s4 1983009808
    %v7900 = vunpack.c.0.s8 %v7899
    %v7901 = vlaneseq
    %v7902 = vshrl.u32 %v7901, 7
    %v7903 = vsub.s32 %v7900, %v7902
    %v7904 = vrot.slane %v7861, %v7903
    %v7905 = vcombine.high %v7904, %v7904
    %v7907 = vunpack.c.l.s4 1983009808
    %v7908 = vunpack.c.0.s8 %v7907
    %v7909 = vlaneseq
    %v7910 = vshrl.u32 %v7909, 7
    %v7911 = vsub.s32 %v7908, %v7910
    %v7912 = vrot.slane %v7862, %v7911
    %v7913 = vcombine.high %v7912, %v7912
    %v7915 = vunpack.c.l.s4 1983009808
    %v7916 = vunpack.c.0.s8 %v7915
    %v7917 = vlaneseq
    %v7918 = vshrl.u32 %v7917, 7
    %v7919 = vsub.s32 %v7916, %v7918
    %v7920 = vrot.slane %v7863, %v7919
    %v7921 = vcombine.high %v7920, %v7920
    %v7923 = vunpack.c.l.s4 1983009808
    %v7924 = vunpack.c.0.s8 %v7923
    %v7925 = vlaneseq
    %v7926 = vshrl.u32 %v7925, 7
    %v7927 = vsub.s32 %v7924, %v7926
    %v7928 = vrot.slane %v7864, %v7927
    %v7929 = vcombine.high %v7928, %v7928
    %v7931 = vunpack.c.l.s4 1983009808
    %v7932 = vunpack.c.0.s8 %v7931
    %v7933 = vlaneseq
    %v7934 = vshrl.u32 %v7933, 7
    %v7935 = vsub.s32 %v7932, %v7934
    %v7936 = vrot.slane %v7865, %v7935
    %v7937 = vcombine.high %v7936, %v7936
    %v7939 = vshrl.u32 %v7880, 16
    %v7941 = vrot.slane %v7939, 6
    %v7942 = vshll.u32 %v7880, 16
    %v7944 = vrot.slane %v7942, 7
    %v7945 = vor.u32 %v7941, %v7944
    %v7946 = vrot.slane %v7945, 2
    %v7948 = vshll.u32 %v7881, 16
    %v7950 = vrot.slane %v7948, 7
    %v7951 = vsel %vm7695, %v7946, %v7950
    %v7953 = vshrl.u32 %v7888, 16
    %v7955 = vrot.slane %v7953, 6
    %v7956 = vshll.u32 %v7888, 16
    %v7958 = vrot.slane %v7956, 7
    %v7959 = vor.u32 %v7955, %v7958
    %v7960 = vrot.slane %v7959, 2
    %v7962 = vshll.u32 %v7889, 16
    %v7964 = vrot.slane %v7962, 7
    %v7965 = vsel %vm7695, %v7960, %v7964
    %v7967 = vshrl.u32 %v7896, 16
    %v7969 = vrot.slane %v7967, 6
    %v7970 = vshll.u32 %v7896, 16
    %v7972 = vrot.slane %v7970, 7
    %v7973 = vor.u32 %v7969, %v7972
    %v7974 = vrot.slane %v7973, 2
    %v7976 = vshll.u32 %v7897, 16
    %v7978 = vrot.slane %v7976, 7
    %v7979 = vsel %vm7695, %v7974, %v7978
    %v7981 = vshrl.u32 %v7904, 16
    %v7983 = vrot.slane %v7981, 6
    %v7984 = vshll.u32 %v7904, 16
    %v7986 = vrot.slane %v7984, 7
    %v7987 = vor.u32 %v7983, %v7986
    %v7988 = vrot.slane %v7987, 2
    %v7990 = vshll.u32 %v7905, 16
    %v7992 = vrot.slane %v7990, 7
    %v7993 = vsel %vm7695, %v7988, %v7992
    %v7995 = vshrl.u32 %v7912, 16
    %v7997 = vrot.slane %v7995, 6
    %v7998 = vshll.u32 %v7912, 16
    %v8000 = vrot.slane %v7998, 7
    %v8001 = vor.u32 %v7997, %v8000
    %v8002 = vrot.slane %v8001, 2
    %v8004 = vshll.u32 %v7913, 16
    %v8006 = vrot.slane %v8004, 7
    %v8007 = vsel %vm7695, %v8002, %v8006
    %v8009 = vshrl.u32 %v7920, 16
    %v8011 = vrot.slane %v8009, 6
    %v8012 = vshll.u32 %v7920, 16
    %v8014 = vrot.slane %v8012, 7
    %v8015 = vor.u32 %v8011, %v8014
    %v8016 = vrot.slane %v8015, 2
    %v8018 = vshll.u32 %v7921, 16
    %v8020 = vrot.slane %v8018, 7
    %v8021 = vsel %vm7695, %v8016, %v8020
    %v8023 = vshrl.u32 %v7928, 16
    %v8025 = vrot.slane %v8023, 6
    %v8026 = vshll.u32 %v7928, 16
    %v8028 = vrot.slane %v8026, 7
    %v8029 = vor.u32 %v8025, %v8028
    %v8030 = vrot.slane %v8029, 2
    %v8032 = vshll.u32 %v7929, 16
    %v8034 = vrot.slane %v8032, 7
    %v8035 = vsel %vm7695, %v8030, %v8034
    %v8037 = vshrl.u32 %v7936, 16
    %v8039 = vrot.slane %v8037, 6
    %v8040 = vshll.u32 %v7936, 16
    %v8042 = vrot.slane %v8040, 7
    %v8043 = vor.u32 %v8039, %v8042
    %v8044 = vrot.slane %v8043, 2
    %v8046 = vshll.u32 %v7937, 16
    %v8048 = vrot.slane %v8046, 7
    %v8049 = vsel %vm7695, %v8044, %v8048
    %8050 = vrot.lane.b32.xlu0 %v7951, 64
    %v8051 = vpop.permute.xlu0 %8050
    %8052 = vrot.lane.b32.xlu0 %v7965, 64
    %v8053 = vpop.permute.xlu0 %8052
    %8054 = vrot.lane.b32.xlu0 %v7979, 64
    %v8055 = vpop.permute.xlu0 %8054
    %8056 = vrot.lane.b32.xlu0 %v7993, 64
    %v8057 = vpop.permute.xlu0 %8056
    %8058 = vrot.lane.b32.xlu0 %v8007, 64
    %v8059 = vpop.permute.xlu0 %8058
    %8060 = vrot.lane.b32.xlu0 %v8021, 64
    %v8061 = vpop.permute.xlu0 %8060
    %8062 = vrot.lane.b32.xlu0 %v8035, 64
    %v8063 = vpop.permute.xlu0 %8062
    %8064 = vrot.lane.b32.xlu0 %v8049, 64
    %v8065 = vpop.permute.xlu0 %8064
    %8074 = vst.msk [vmem:[#allocation5 + $0x2] sm:$0x3] %vm7832, %v8051
    %8075 = vst.msk [vmem:[#allocation5 + $0x6] sm:$0x3] %vm7832, %v8053
    %8076 = vst.msk [vmem:[#allocation5 + $0xa] sm:$0x3] %vm7832, %v8055
    %8077 = vst.msk [vmem:[#allocation5 + $0xe] sm:$0x3] %vm7832, %v8057
    %8078 = vst.msk [vmem:[#allocation5 + $0x12] sm:$0x3] %vm7832, %v8059
    %8079 = vst.msk [vmem:[#allocation5 + $0x16] sm:$0x3] %vm7832, %v8061
    %8080 = vst.msk [vmem:[#allocation5 + $0x1a] sm:$0x3] %vm7832, %v8063
    %8081 = vst.msk [vmem:[#allocation5 + $0x1e] sm:$0x3] %vm7832, %v8065
    %v8082 = vld [vmem:[#allocation5] sm:$0xf]
    %v8083 = vld [vmem:[#allocation5 + $0x4] sm:$0xf]
    %v8084 = vld [vmem:[#allocation5 + $0x8] sm:$0xf]
    %v8085 = vld [vmem:[#allocation5 + $0xc] sm:$0xf]
    %v8086 = vld [vmem:[#allocation5 + $0x10] sm:$0xf]
    %v8087 = vld [vmem:[#allocation5 + $0x14] sm:$0xf]
    %v8088 = vld [vmem:[#allocation5 + $0x18] sm:$0xf]
    %v8089 = vld [vmem:[#allocation5 + $0x1c] sm:$0xf]
    %v8090 = vld [vmem:[%s5] sm:$0xf]
    %v8091 = vld [vmem:[%s5 + $0x4] sm:$0xf]
    %v8092 = vld [vmem:[%s5 + $0x8] sm:$0xf]
    %v8093 = vld [vmem:[%s5 + $0xc] sm:$0xf]
    %v8094 = vld [vmem:[%s5 + $0x10] sm:$0xf]
    %v8095 = vld [vmem:[%s5 + $0x14] sm:$0xf]
    %v8096 = vld [vmem:[%s5 + $0x18] sm:$0xf]
    %v8097 = vld [vmem:[%s5 + $0x1c] sm:$0xf]
    %v8098 = vld [vmem:[%s5 + $0x20] sm:$0xf]
    %v8099 = vld [vmem:[%s5 + $0x24] sm:$0xf]
    %v8100 = vld [vmem:[%s5 + $0x28] sm:$0xf]
    %v8101 = vld [vmem:[%s5 + $0x2c] sm:$0xf]
    %v8102 = vld [vmem:[%s5 + $0x30] sm:$0xf]
    %v8103 = vld [vmem:[%s5 + $0x34] sm:$0xf]
    %v8104 = vld [vmem:[%s5 + $0x38] sm:$0xf]
    %v8105 = vld [vmem:[%s5 + $0x3c] sm:$0xf]
    %v8106 = vld [vmem:[%s5 + $0x40] sm:$0xf]
    %v8107 = vld [vmem:[%s5 + $0x44] sm:$0xf]
    %v8108 = vld [vmem:[%s5 + $0x48] sm:$0xf]
    %v8109 = vld [vmem:[%s5 + $0x4c] sm:$0xf]
    %v8110 = vld [vmem:[%s5 + $0x50] sm:$0xf]
    %v8111 = vld [vmem:[%s5 + $0x54] sm:$0xf]
    %v8112 = vld [vmem:[%s5 + $0x58] sm:$0xf]
    %v8113 = vld [vmem:[%s5 + $0x5c] sm:$0xf]
    %v8114 = vld [vmem:[%s5 + $0x60] sm:$0xf]
    %v8115 = vld [vmem:[%s5 + $0x64] sm:$0xf]
    %v8116 = vld [vmem:[%s5 + $0x68] sm:$0xf]
    %v8117 = vld [vmem:[%s5 + $0x6c] sm:$0xf]
    %v8118 = vld [vmem:[%s5 + $0x70] sm:$0xf]
    %v8119 = vld [vmem:[%s5 + $0x74] sm:$0xf]
    %v8120 = vld [vmem:[%s5 + $0x78] sm:$0xf]
    %v8121 = vld [vmem:[%s5 + $0x7c] sm:$0xf]
    %v8122 = vld [vmem:[%s6] sm:$0x1]
    %v8124 = vlaneseq
    %v8125 = vshrl.u32 %v8124, 7
    %v8126 = vsub.s32 0, %v8125
    %v8127 = vrot.slane %v8122, %v8126
    %v8137 = vcombine.low %v8082, %v8083
    %v8138 = vcombine.low %v8084, %v8085
    %v8140 = vunpack.c.l.s4 1983009808
    %v8141 = vunpack.c.0.s8 %v8140
    %v8142 = vlaneseq
    %v8143 = vshrl.u32 %v8142, 7
    %v8144 = vsub.s32 %v8141, %v8143
    %v8145 = vrot.slane %v8137, %v8144
    %v8147 = vunpack.c.l.s4 1983009808
    %v8148 = vunpack.c.0.s8 %v8147
    %v8149 = vlaneseq
    %v8150 = vshrl.u32 %v8149, 7
    %v8151 = vsub.s32 %v8148, %v8150
    %v8152 = vrot.slane %v8138, %v8151
    %v8153 = vcombine.low %v8145, %v8152
    %v8154 = vcombine.high %v8145, %v8152
    %v8155 = vcombine.low %v8086, %v8087
    %v8156 = vcombine.low %v8088, %v8089
    %v8158 = vunpack.c.l.s4 1983009808
    %v8159 = vunpack.c.0.s8 %v8158
    %v8160 = vlaneseq
    %v8161 = vshrl.u32 %v8160, 7
    %v8162 = vsub.s32 %v8159, %v8161
    %v8163 = vrot.slane %v8155, %v8162
    %v8165 = vunpack.c.l.s4 1983009808
    %v8166 = vunpack.c.0.s8 %v8165
    %v8167 = vlaneseq
    %v8168 = vshrl.u32 %v8167, 7
    %v8169 = vsub.s32 %v8166, %v8168
    %v8170 = vrot.slane %v8156, %v8169
    %v8171 = vcombine.low %v8163, %v8170
    %v8172 = vcombine.high %v8163, %v8170
    %v8209 = vunpack.c.l.b16 %v8090
    %v8210 = vunpack.c.l.b16 %v8091
    %v8211 = vunpack.c.l.b16 %v8092
    %v8212 = vunpack.c.l.b16 %v8093
    %v8213 = vunpack.c.l.b16 %v8094
    %v8214 = vunpack.c.l.b16 %v8095
    %v8215 = vunpack.c.l.b16 %v8096
    %v8216 = vunpack.c.l.b16 %v8097
    %v8217 = vunpack.c.l.b16 %v8098
    %v8218 = vunpack.c.l.b16 %v8099
    %v8219 = vunpack.c.l.b16 %v8100
    %v8220 = vunpack.c.l.b16 %v8101
    %v8221 = vunpack.c.l.b16 %v8102
    %v8222 = vunpack.c.l.b16 %v8103
    %v8223 = vunpack.c.l.b16 %v8104
    %v8224 = vunpack.c.l.b16 %v8105
    %v8225 = vunpack.c.l.b16 %v8106
    %v8226 = vunpack.c.l.b16 %v8107
    %v8227 = vunpack.c.l.b16 %v8108
    %v8228 = vunpack.c.l.b16 %v8109
    %v8229 = vunpack.c.l.b16 %v8110
    %v8230 = vunpack.c.l.b16 %v8111
    %v8231 = vunpack.c.l.b16 %v8112
    %v8232 = vunpack.c.l.b16 %v8113
    %v8233 = vunpack.c.l.b16 %v8114
    %v8234 = vunpack.c.l.b16 %v8115
    %v8235 = vunpack.c.l.b16 %v8116
    %v8236 = vunpack.c.l.b16 %v8117
    %v8237 = vunpack.c.l.b16 %v8118
    %v8238 = vunpack.c.l.b16 %v8119
    %v8239 = vunpack.c.l.b16 %v8120
    %v8240 = vunpack.c.l.b16 %v8121
    %v8241 = vpack.c.b16 %v8210, %v8209
    %v8242 = vpack.c.b16 %v8212, %v8211
    %v8243 = vpack.c.b16 %v8214, %v8213
    %v8244 = vpack.c.b16 %v8216, %v8215
    %v8245 = vpack.c.b16 %v8218, %v8217
    %v8246 = vpack.c.b16 %v8220, %v8219
    %v8247 = vpack.c.b16 %v8222, %v8221
    %v8248 = vpack.c.b16 %v8224, %v8223
    %v8249 = vpack.c.b16 %v8226, %v8225
    %v8250 = vpack.c.b16 %v8228, %v8227
    %v8251 = vpack.c.b16 %v8230, %v8229
    %v8252 = vpack.c.b16 %v8232, %v8231
    %v8253 = vpack.c.b16 %v8234, %v8233
    %v8254 = vpack.c.b16 %v8236, %v8235
    %v8255 = vpack.c.b16 %v8238, %v8237
    %v8256 = vpack.c.b16 %v8240, %v8239
    %8273 = vmatprep.subr.bf16.mxu0 0
    %8274 = vmatpush1.bf16.msra.mxu0 %v8241
    %8275 = vmatprep.subr.bf16.mxu0 0
    %8276 = vmatpush1.bf16.msra.mxu0 %v8242
    %8277 = vmatprep.subr.bf16.mxu0 0
    %8278 = vmatpush1.bf16.msra.mxu0 %v8243
    %8279 = vmatprep.subr.bf16.mxu0 0
    %8280 = vmatpush1.bf16.msra.mxu0 %v8244
    %8281 = vmatprep.subr.bf16.mxu0 0
    %8282 = vmatpush1.bf16.msra.mxu0 %v8245
    %8283 = vmatprep.subr.bf16.mxu0 0
    %8284 = vmatpush1.bf16.msra.mxu0 %v8246
    %8285 = vmatprep.subr.bf16.mxu0 0
    %8286 = vmatpush1.bf16.msra.mxu0 %v8247
    %8287 = vmatprep.subr.bf16.mxu0 0
    %8288 = vmatpush1.bf16.msra.mxu0 %v8248
    %8289 = vmatprep.subr.bf16.mxu0 0
    %8290 = vmatpush1.bf16.msra.mxu0 %v8249
    %8291 = vmatprep.subr.bf16.mxu0 0
    %8292 = vmatpush1.bf16.msra.mxu0 %v8250
    %8293 = vmatprep.subr.bf16.mxu0 0
    %8294 = vmatpush1.bf16.msra.mxu0 %v8251
    %8295 = vmatprep.subr.bf16.mxu0 0
    %8296 = vmatpush1.bf16.msra.mxu0 %v8252
    %8297 = vmatprep.subr.bf16.mxu0 0
    %8298 = vmatpush1.bf16.msra.mxu0 %v8253
    %8299 = vmatprep.subr.bf16.mxu0 0
    %8300 = vmatpush1.bf16.msra.mxu0 %v8254
    %8301 = vmatprep.subr.bf16.mxu0 0
    %8302 = vmatpush1.bf16.msra.mxu0 %v8255
    %8303 = vmatprep.subr.bf16.mxu0 0
    %8304 = vmatpush1.bf16.msra.mxu0 %v8256
    %8305 = vmatprep.mubr.bf16.mxu0 %v8154
    %8306 = vmatmul.mubr.bf16.gmra.mrb[0].mxu0 %v8153
    %v8307 = vpop.f32.mrb[0].mxu0
    %v8308 = vadd.f32 %v8127, %v8307
    %v8309 = vpop.f32.mrb[0].mxu0
    %v8310 = vpop.f32.mrb[0].mxu0
    %v8311 = vadd.f32 %v8127, %v8310
    %v8312 = vpop.f32.mrb[0].mxu0
    %8313 = vmatprep.mubr.bf16.mxu0 %v8172
    %8314 = vmatmul.mubr.bf16.gmra.mrb[0].mxu0 %v8171
    %v8315 = vpop.f32.mrb[0].mxu0
    %v8316 = vadd.f32 %v8127, %v8315
    %v8317 = vpop.f32.mrb[0].mxu0
    %v8318 = vpop.f32.mrb[0].mxu0
    %v8319 = vadd.f32 %v8127, %v8318
    %v8320 = vpop.f32.mrb[0].mxu0
    %8321 = vdwg.mxu0
    %v8322 = vmax.f32 %v8308, 0.0
    %v8323 = vmax.f32 %v8311, 0.0
    %v8324 = vmax.f32 %v8316, 0.0
    %v8325 = vmax.f32 %v8319, 0.0
    %v8330 = vcombine.high %v8322, %v8322
    %v8332 = vunpack.c.l.s4 1983009808
    %v8333 = vunpack.c.0.s8 %v8332
    %v8334 = vlaneseq
    %v8335 = vshrl.u32 %v8334, 7
    %v8336 = vsub.s32 %v8333, %v8335
    %v8337 = vrot.slane %v8322, %v8336
    %v8339 = vunpack.c.l.s4 1983009808
    %v8340 = vunpack.c.0.s8 %v8339
    %v8341 = vlaneseq
    %v8342 = vshrl.u32 %v8341, 7
    %v8343 = vsub.s32 %v8340, %v8342
    %v8344 = vrot.slane %v8330, %v8343
    %v8345 = vcombine.high %v8337, %v8337
    %v8346 = vcombine.high %v8344, %v8344
    %v8347 = vcombine.high %v8323, %v8323
    %v8349 = vunpack.c.l.s4 1983009808
    %v8350 = vunpack.c.0.s8 %v8349
    %v8351 = vlaneseq
    %v8352 = vshrl.u32 %v8351, 7
    %v8353 = vsub.s32 %v8350, %v8352
    %v8354 = vrot.slane %v8323, %v8353
    %v8356 = vunpack.c.l.s4 1983009808
    %v8357 = vunpack.c.0.s8 %v8356
    %v8358 = vlaneseq
    %v8359 = vshrl.u32 %v8358, 7
    %v8360 = vsub.s32 %v8357, %v8359
    %v8361 = vrot.slane %v8347, %v8360
    %v8362 = vcombine.high %v8354, %v8354
    %v8363 = vcombine.high %v8361, %v8361
    %v8364 = vcombine.high %v8324, %v8324
    %v8366 = vunpack.c.l.s4 1983009808
    %v8367 = vunpack.c.0.s8 %v8366
    %v8368 = vlaneseq
    %v8369 = vshrl.u32 %v8368, 7
    %v8370 = vsub.s32 %v8367, %v8369
    %v8371 = vrot.slane %v8324, %v8370
    %v8373 = vunpack.c.l.s4 1983009808
    %v8374 = vunpack.c.0.s8 %v8373
    %v8375 = vlaneseq
    %v8376 = vshrl.u32 %v8375, 7
    %v8377 = vsub.s32 %v8374, %v8376
    %v8378 = vrot.slane %v8364, %v8377
    %v8379 = vcombine.high %v8371, %v8371
    %v8380 = vcombine.high %v8378, %v8378
    %v8381 = vcombine.high %v8325, %v8325
    %v8383 = vunpack.c.l.s4 1983009808
    %v8384 = vunpack.c.0.s8 %v8383
    %v8385 = vlaneseq
    %v8386 = vshrl.u32 %v8385, 7
    %v8387 = vsub.s32 %v8384, %v8386
    %v8388 = vrot.slane %v8325, %v8387
    %v8390 = vunpack.c.l.s4 1983009808
    %v8391 = vunpack.c.0.s8 %v8390
    %v8392 = vlaneseq
    %v8393 = vshrl.u32 %v8392, 7
    %v8394 = vsub.s32 %v8391, %v8393
    %v8395 = vrot.slane %v8381, %v8394
    %v8396 = vcombine.high %v8388, %v8388
    %v8397 = vcombine.high %v8395, %v8395
    %v8414 = vrot.slane %v8337, 7
    %v8415 = vrot.slane %v8414, 2
    %v8416 = vrot.slane %v8345, 7
    %v8417 = vrot.slane %v8416, 2
    %v8418 = vrot.slane %v8344, 7
    %v8419 = vrot.slane %v8418, 2
    %v8420 = vrot.slane %v8346, 7
    %v8421 = vrot.slane %v8420, 2
    %v8422 = vrot.slane %v8354, 7
    %v8423 = vrot.slane %v8422, 2
    %v8424 = vrot.slane %v8362, 7
    %v8425 = vrot.slane %v8424, 2
    %v8426 = vrot.slane %v8361, 7
    %v8427 = vrot.slane %v8426, 2
    %v8428 = vrot.slane %v8363, 7
    %v8429 = vrot.slane %v8428, 2
    %v8430 = vrot.slane %v8371, 7
    %v8431 = vrot.slane %v8430, 2
    %v8432 = vrot.slane %v8379, 7
    %v8433 = vrot.slane %v8432, 2
    %v8434 = vrot.slane %v8378, 7
    %v8435 = vrot.slane %v8434, 2
    %v8436 = vrot.slane %v8380, 7
    %v8437 = vrot.slane %v8436, 2
    %v8438 = vrot.slane %v8388, 7
    %v8439 = vrot.slane %v8438, 2
    %v8440 = vrot.slane %v8396, 7
    %v8441 = vrot.slane %v8440, 2
    %v8442 = vrot.slane %v8395, 7
    %v8443 = vrot.slane %v8442, 2
    %v8444 = vrot.slane %v8397, 7
    %v8445 = vrot.slane %v8444, 2
    %v8462 = vmax.f32 %v8337, %v8415
    %v8463 = vmax.f32 %v8345, %v8417
    %v8464 = vmax.f32 %v8344, %v8419
    %v8465 = vmax.f32 %v8346, %v8421
    %v8466 = vmax.f32 %v8354, %v8423
    %v8467 = vmax.f32 %v8362, %v8425
    %v8468 = vmax.f32 %v8361, %v8427
    %v8469 = vmax.f32 %v8363, %v8429
    %v8470 = vmax.f32 %v8371, %v8431
    %v8471 = vmax.f32 %v8379, %v8433
    %v8472 = vmax.f32 %v8378, %v8435
    %v8473 = vmax.f32 %v8380, %v8437
    %v8474 = vmax.f32 %v8388, %v8439
    %v8475 = vmax.f32 %v8396, %v8441
    %v8476 = vmax.f32 %v8395, %v8443
    %v8477 = vmax.f32 %v8397, %v8445
    %v8478 = vmax.f32 %v8462, %v8464
    %v8479 = vmax.f32 %v8463, %v8465
    %v8480 = vmax.f32 %v8466, %v8468
    %v8481 = vmax.f32 %v8467, %v8469
    %v8482 = vmax.f32 %v8470, %v8472
    %v8483 = vmax.f32 %v8471, %v8473
    %v8484 = vmax.f32 %v8474, %v8476
    %v8485 = vmax.f32 %v8475, %v8477
    %v8486 = vpack.c.bf16 %v8478, %v8478
    %v8487 = vpack.c.bf16 %v8482, %v8482
    %v8491 = vunpack.c.l.s4 1966171168
    %v8492 = vunpack.c.0.s8 %v8491
    %v8493 = vlaneseq
    %v8494 = vshrl.u32 %v8493, 7
    %v8495 = vsub.s32 %v8492, %v8494
    %v8496 = vrot.slane %v8486, %v8495
    %v8498 = vunpack.c.l.s4 1966171168
    %v8499 = vunpack.c.0.s8 %v8498
    %v8500 = vlaneseq
    %v8501 = vshrl.u32 %v8500, 7
    %v8502 = vsub.s32 %v8499, %v8501
    %v8503 = vrot.slane %v8496, %v8502
    %v8505 = vunpack.c.l.s4 1966171168
    %v8506 = vunpack.c.0.s8 %v8505
    %v8507 = vlaneseq
    %v8508 = vshrl.u32 %v8507, 7
    %v8509 = vsub.s32 %v8506, %v8508
    %v8510 = vrot.slane %v8487, %v8509
    %v8512 = vunpack.c.l.s4 1966171168
    %v8513 = vunpack.c.0.s8 %v8512
    %v8514 = vlaneseq
    %v8515 = vshrl.u32 %v8514, 7
    %v8516 = vsub.s32 %v8513, %v8515
    %v8517 = vrot.slane %v8510, %v8516
    %v8519 = vunpack.c.l.s4 1935823168
    %v8520 = vunpack.c.0.s8 %v8519
    %v8521 = vlaneseq
    %v8522 = vshrl.u32 %v8521, 7
    %v8523 = vsub.s32 %v8520, %v8522
    %v8524 = vrot.slane %v8503, %v8523
    %v8526 = vunpack.c.l.s4 1935823168
    %v8527 = vunpack.c.0.s8 %v8526
    %v8528 = vlaneseq
    %v8529 = vshrl.u32 %v8528, 7
    %v8530 = vsub.s32 %v8527, %v8529
    %v8531 = vrot.slane %v8524, %v8530
    %v8533 = vunpack.c.l.s4 1935823168
    %v8534 = vunpack.c.0.s8 %v8533
    %v8535 = vlaneseq
    %v8536 = vshrl.u32 %v8535, 7
    %v8537 = vsub.s32 %v8534, %v8536
    %v8538 = vrot.slane %v8517, %v8537
    %v8540 = vunpack.c.l.s4 1935823168
    %v8541 = vunpack.c.0.s8 %v8540
    %v8542 = vlaneseq
    %v8543 = vshrl.u32 %v8542, 7
    %v8544 = vsub.s32 %v8541, %v8543
    %v8545 = vrot.slane %v8538, %v8544
    %v8546 = vunpack.c.l.b16 %v8531
    %v8547 = vunpack.c.l.b16 %v8545
    %v8548 = vrot.slane %v8547, 7
    %v8549 = vsel %vm7520, %v8548, %v8546
    %v8550 = vpack.c.b16 %v8549, %v8549
    %v8552 = vunpack.c.l.s4 1966171168
    %v8553 = vunpack.c.0.s8 %v8552
    %v8554 = vlaneseq
    %v8555 = vshrl.u32 %v8554, 7
    %v8556 = vsub.s32 %v8553, %v8555
    %v8557 = vrot.slane %v8550, %v8556
    %v8559 = vunpack.c.l.s4 1966171168
    %v8560 = vunpack.c.0.s8 %v8559
    %v8561 = vlaneseq
    %v8562 = vshrl.u32 %v8561, 7
    %v8563 = vsub.s32 %v8560, %v8562
    %v8564 = vrot.slane %v8557, %v8563
    %8566 = vst [vmem:[#allocation6] sm:$0x1] %v8564
    %v8567 = vpack.c.bf16 %v8479, %v8479
    %v8568 = vpack.c.bf16 %v8483, %v8483
    %v8572 = vunpack.c.l.s4 1966171168
    %v8573 = vunpack.c.0.s8 %v8572
    %v8574 = vlaneseq
    %v8575 = vshrl.u32 %v8574, 7
    %v8576 = vsub.s32 %v8573, %v8575
    %v8577 = vrot.slane %v8567, %v8576
    %v8579 = vunpack.c.l.s4 1966171168
    %v8580 = vunpack.c.0.s8 %v8579
    %v8581 = vlaneseq
    %v8582 = vshrl.u32 %v8581, 7
    %v8583 = vsub.s32 %v8580, %v8582
    %v8584 = vrot.slane %v8577, %v8583
    %v8586 = vunpack.c.l.s4 1966171168
    %v8587 = vunpack.c.0.s8 %v8586
    %v8588 = vlaneseq
    %v8589 = vshrl.u32 %v8588, 7
    %v8590 = vsub.s32 %v8587, %v8589
    %v8591 = vrot.slane %v8568, %v8590
    %v8593 = vunpack.c.l.s4 1966171168
    %v8594 = vunpack.c.0.s8 %v8593
    %v8595 = vlaneseq
    %v8596 = vshrl.u32 %v8595, 7
    %v8597 = vsub.s32 %v8594, %v8596
    %v8598 = vrot.slane %v8591, %v8597
    %v8600 = vunpack.c.l.s4 1935823168
    %v8601 = vunpack.c.0.s8 %v8600
    %v8602 = vlaneseq
    %v8603 = vshrl.u32 %v8602, 7
    %v8604 = vsub.s32 %v8601, %v8603
    %v8605 = vrot.slane %v8584, %v8604
    %v8607 = vunpack.c.l.s4 1935823168
    %v8608 = vunpack.c.0.s8 %v8607
    %v8609 = vlaneseq
    %v8610 = vshrl.u32 %v8609, 7
    %v8611 = vsub.s32 %v8608, %v8610
    %v8612 = vrot.slane %v8605, %v8611
    %v8614 = vunpack.c.l.s4 1935823168
    %v8615 = vunpack.c.0.s8 %v8614
    %v8616 = vlaneseq
    %v8617 = vshrl.u32 %v8616, 7
    %v8618 = vsub.s32 %v8615, %v8617
    %v8619 = vrot.slane %v8598, %v8618
    %v8621 = vunpack.c.l.s4 1935823168
    %v8622 = vunpack.c.0.s8 %v8621
    %v8623 = vlaneseq
    %v8624 = vshrl.u32 %v8623, 7
    %v8625 = vsub.s32 %v8622, %v8624
    %v8626 = vrot.slane %v8619, %v8625
    %v8627 = vunpack.c.l.b16 %v8612
    %v8628 = vunpack.c.l.b16 %v8626
    %v8629 = vrot.slane %v8628, 7
    %v8630 = vsel %vm7520, %v8629, %v8627
    %v8631 = vpack.c.b16 %v8630, %v8630
    %v8633 = vunpack.c.l.s4 1966171168
    %v8634 = vunpack.c.0.s8 %v8633
    %v8635 = vlaneseq
    %v8636 = vshrl.u32 %v8635, 7
    %v8637 = vsub.s32 %v8634, %v8636
    %v8638 = vrot.slane %v8631, %v8637
    %v8640 = vunpack.c.l.s4 1966171168
    %v8641 = vunpack.c.0.s8 %v8640
    %v8642 = vlaneseq
    %v8643 = vshrl.u32 %v8642, 7
    %v8644 = vsub.s32 %v8641, %v8643
    %v8645 = vrot.slane %v8638, %v8644
    %8647 = vst [vmem:[#allocation6 + $0x1] sm:$0x1] %v8645
    %v8648 = vpack.c.bf16 %v8480, %v8480
    %v8649 = vpack.c.bf16 %v8484, %v8484
    %v8653 = vunpack.c.l.s4 1966171168
    %v8654 = vunpack.c.0.s8 %v8653
    %v8655 = vlaneseq
    %v8656 = vshrl.u32 %v8655, 7
    %v8657 = vsub.s32 %v8654, %v8656
    %v8658 = vrot.slane %v8648, %v8657
    %v8660 = vunpack.c.l.s4 1966171168
    %v8661 = vunpack.c.0.s8 %v8660
    %v8662 = vlaneseq
    %v8663 = vshrl.u32 %v8662, 7
    %v8664 = vsub.s32 %v8661, %v8663
    %v8665 = vrot.slane %v8658, %v8664
    %v8667 = vunpack.c.l.s4 1966171168
    %v8668 = vunpack.c.0.s8 %v8667
    %v8669 = vlaneseq
    %v8670 = vshrl.u32 %v8669, 7
    %v8671 = vsub.s32 %v8668, %v8670
    %v8672 = vrot.slane %v8649, %v8671
    %v8674 = vunpack.c.l.s4 1966171168
    %v8675 = vunpack.c.0.s8 %v8674
    %v8676 = vlaneseq
    %v8677 = vshrl.u32 %v8676, 7
    %v8678 = vsub.s32 %v8675, %v8677
    %v8679 = vrot.slane %v8672, %v8678
    %v8681 = vunpack.c.l.s4 1935823168
    %v8682 = vunpack.c.0.s8 %v8681
    %v8683 = vlaneseq
    %v8684 = vshrl.u32 %v8683, 7
    %v8685 = vsub.s32 %v8682, %v8684
    %v8686 = vrot.slane %v8665, %v8685
    %v8688 = vunpack.c.l.s4 1935823168
    %v8689 = vunpack.c.0.s8 %v8688
    %v8690 = vlaneseq
    %v8691 = vshrl.u32 %v8690, 7
    %v8692 = vsub.s32 %v8689, %v8691
    %v8693 = vrot.slane %v8686, %v8692
    %v8695 = vunpack.c.l.s4 1935823168
    %v8696 = vunpack.c.0.s8 %v8695
    %v8697 = vlaneseq
    %v8698 = vshrl.u32 %v8697, 7
    %v8699 = vsub.s32 %v8696, %v8698
    %v8700 = vrot.slane %v8679, %v8699
    %v8702 = vunpack.c.l.s4 1935823168
    %v8703 = vunpack.c.0.s8 %v8702
    %v8704 = vlaneseq
    %v8705 = vshrl.u32 %v8704, 7
    %v8706 = vsub.s32 %v8703, %v8705
    %v8707 = vrot.slane %v8700, %v8706
    %v8708 = vunpack.c.l.b16 %v8693
    %v8709 = vunpack.c.l.b16 %v8707
    %v8710 = vrot.slane %v8709, 7
    %v8711 = vsel %vm7520, %v8710, %v8708
    %v8712 = vpack.c.b16 %v8711, %v8711
    %v8714 = vunpack.c.l.s4 1966171168
    %v8715 = vunpack.c.0.s8 %v8714
    %v8716 = vlaneseq
    %v8717 = vshrl.u32 %v8716, 7
    %v8718 = vsub.s32 %v8715, %v8717
    %v8719 = vrot.slane %v8712, %v8718
    %v8721 = vunpack.c.l.s4 1966171168
    %v8722 = vunpack.c.0.s8 %v8721
    %v8723 = vlaneseq
    %v8724 = vshrl.u32 %v8723, 7
    %v8725 = vsub.s32 %v8722, %v8724
    %v8726 = vrot.slane %v8719, %v8725
    %8728 = vst [vmem:[#allocation6 + $0x2] sm:$0x1] %v8726
    %v8729 = vpack.c.bf16 %v8481, %v8481
    %v8730 = vpack.c.bf16 %v8485, %v8485
    %v8734 = vunpack.c.l.s4 1966171168
    %v8735 = vunpack.c.0.s8 %v8734
    %v8736 = vlaneseq
    %v8737 = vshrl.u32 %v8736, 7
    %v8738 = vsub.s32 %v8735, %v8737
    %v8739 = vrot.slane %v8729, %v8738
    %v8741 = vunpack.c.l.s4 1966171168
    %v8742 = vunpack.c.0.s8 %v8741
    %v8743 = vlaneseq
    %v8744 = vshrl.u32 %v8743, 7
    %v8745 = vsub.s32 %v8742, %v8744
    %v8746 = vrot.slane %v8739, %v8745
    %v8748 = vunpack.c.l.s4 1966171168
    %v8749 = vunpack.c.0.s8 %v8748
    %v8750 = vlaneseq
    %v8751 = vshrl.u32 %v8750, 7
    %v8752 = vsub.s32 %v8749, %v8751
    %v8753 = vrot.slane %v8730, %v8752
    %v8755 = vunpack.c.l.s4 1966171168
    %v8756 = vunpack.c.0.s8 %v8755
    %v8757 = vlaneseq
    %v8758 = vshrl.u32 %v8757, 7
    %v8759 = vsub.s32 %v8756, %v8758
    %v8760 = vrot.slane %v8753, %v8759
    %v8762 = vunpack.c.l.s4 1935823168
    %v8763 = vunpack.c.0.s8 %v8762
    %v8764 = vlaneseq
    %v8765 = vshrl.u32 %v8764, 7
    %v8766 = vsub.s32 %v8763, %v8765
    %v8767 = vrot.slane %v8746, %v8766
    %v8769 = vunpack.c.l.s4 1935823168
    %v8770 = vunpack.c.0.s8 %v8769
    %v8771 = vlaneseq
    %v8772 = vshrl.u32 %v8771, 7
    %v8773 = vsub.s32 %v8770, %v8772
    %v8774 = vrot.slane %v8767, %v8773
    %v8776 = vunpack.c.l.s4 1935823168
    %v8777 = vunpack.c.0.s8 %v8776
    %v8778 = vlaneseq
    %v8779 = vshrl.u32 %v8778, 7
    %v8780 = vsub.s32 %v8777, %v8779
    %v8781 = vrot.slane %v8760, %v8780
    %v8783 = vunpack.c.l.s4 1935823168
    %v8784 = vunpack.c.0.s8 %v8783
    %v8785 = vlaneseq
    %v8786 = vshrl.u32 %v8785, 7
    %v8787 = vsub.s32 %v8784, %v8786
    %v8788 = vrot.slane %v8781, %v8787
    %v8789 = vunpack.c.l.b16 %v8774
    %v8790 = vunpack.c.l.b16 %v8788
    %v8791 = vrot.slane %v8790, 7
    %v8792 = vsel %vm7520, %v8791, %v8789
    %v8793 = vpack.c.b16 %v8792, %v8792
    %v8795 = vunpack.c.l.s4 1966171168
    %v8796 = vunpack.c.0.s8 %v8795
    %v8797 = vlaneseq
    %v8798 = vshrl.u32 %v8797, 7
    %v8799 = vsub.s32 %v8796, %v8798
    %v8800 = vrot.slane %v8793, %v8799
    %v8802 = vunpack.c.l.s4 1966171168
    %v8803 = vunpack.c.0.s8 %v8802
    %v8804 = vlaneseq
    %v8805 = vshrl.u32 %v8804, 7
    %v8806 = vsub.s32 %v8803, %v8805
    %v8807 = vrot.slane %v8800, %v8806
    %8809 = vst [vmem:[#allocation6 + $0x3] sm:$0x1] %v8807
    %v8810 = vld [vmem:[#allocation6] sm:$0xf]
    %v8811 = vld [vmem:[%s7] sm:$0xff]
    %v8812 = vld [vmem:[%s7 + $0x8] sm:$0xff]
    %v8813 = vld [vmem:[%s7 + $0x10] sm:$0xff]
    %v8814 = vld [vmem:[%s7 + $0x18] sm:$0xff]
    %v8815 = vld [vmem:[%s7 + $0x20] sm:$0xff]
    %v8816 = vld [vmem:[%s7 + $0x28] sm:$0xff]
    %v8817 = vld [vmem:[%s7 + $0x30] sm:$0xff]
    %v8818 = vld [vmem:[%s7 + $0x38] sm:$0xff]
    %v8819 = vld [vmem:[%s7 + $0x40] sm:$0xff]
    %v8820 = vld [vmem:[%s7 + $0x48] sm:$0xff]
    %v8821 = vld [vmem:[%s7 + $0x50] sm:$0xff]
    %v8822 = vld [vmem:[%s7 + $0x58] sm:$0xff]
    %v8823 = vld [vmem:[%s7 + $0x60] sm:$0xff]
    %v8824 = vld [vmem:[%s7 + $0x68] sm:$0xff]
    %v8825 = vld [vmem:[%s7 + $0x70] sm:$0xff]
    %v8826 = vld [vmem:[%s7 + $0x78] sm:$0xff]
    %v8827 = vld [vmem:[%s7 + $0x80] sm:$0xff]
    %v8828 = vld [vmem:[%s7 + $0x88] sm:$0xff]
    %v8829 = vld [vmem:[%s7 + $0x90] sm:$0xff]
    %v8830 = vld [vmem:[%s7 + $0x98] sm:$0xff]
    %v8831 = vld [vmem:[%s7 + $0xa0] sm:$0xff]
    %v8832 = vld [vmem:[%s7 + $0xa8] sm:$0xff]
    %v8833 = vld [vmem:[%s7 + $0xb0] sm:$0xff]
    %v8834 = vld [vmem:[%s7 + $0xb8] sm:$0xff]
    %v8835 = vld [vmem:[%s7 + $0xc0] sm:$0xff]
    %v8836 = vld [vmem:[%s7 + $0xc8] sm:$0xff]
    %v8837 = vld [vmem:[%s7 + $0xd0] sm:$0xff]
    %v8838 = vld [vmem:[%s7 + $0xd8] sm:$0xff]
    %v8839 = vld [vmem:[%s7 + $0xe0] sm:$0xff]
    %v8840 = vld [vmem:[%s7 + $0xe8] sm:$0xff]
    %v8841 = vld [vmem:[%s7 + $0xf0] sm:$0xff]
    %v8842 = vld [vmem:[%s7 + $0xf8] sm:$0xff]
    %v8843 = vld [vmem:[%s7 + $0x100] sm:$0xff]
    %v8844 = vld [vmem:[%s7 + $0x108] sm:$0xff]
    %v8845 = vld [vmem:[%s7 + $0x110] sm:$0xff]
    %v8846 = vld [vmem:[%s7 + $0x118] sm:$0xff]
    %v8847 = vld [vmem:[%s7 + $0x120] sm:$0xff]
    %v8848 = vld [vmem:[%s7 + $0x128] sm:$0xff]
    %v8849 = vld [vmem:[%s7 + $0x130] sm:$0xff]
    %v8850 = vld [vmem:[%s7 + $0x138] sm:$0xff]
    %v8851 = vld [vmem:[%s7 + $0x140] sm:$0xff]
    %v8852 = vld [vmem:[%s7 + $0x148] sm:$0xff]
    %v8853 = vld [vmem:[%s7 + $0x150] sm:$0xff]
    %v8854 = vld [vmem:[%s7 + $0x158] sm:$0xff]
    %v8855 = vld [vmem:[%s7 + $0x160] sm:$0xff]
    %v8856 = vld [vmem:[%s7 + $0x168] sm:$0xff]
    %v8857 = vld [vmem:[%s7 + $0x170] sm:$0xff]
    %v8858 = vld [vmem:[%s7 + $0x178] sm:$0xff]
    %v8859 = vld [vmem:[%s7 + $0x180] sm:$0xff]
    %v8860 = vld [vmem:[%s7 + $0x188] sm:$0xff]
    %v8861 = vld [vmem:[%s7 + $0x190] sm:$0xff]
    %v8862 = vld [vmem:[%s7 + $0x198] sm:$0xff]
    %v8863 = vld [vmem:[%s7 + $0x1a0] sm:$0xff]
    %v8864 = vld [vmem:[%s7 + $0x1a8] sm:$0xff]
    %v8865 = vld [vmem:[%s7 + $0x1b0] sm:$0xff]
    %v8866 = vld [vmem:[%s7 + $0x1b8] sm:$0xff]
    %v8867 = vld [vmem:[%s7 + $0x1c0] sm:$0xff]
    %v8868 = vld [vmem:[%s7 + $0x1c8] sm:$0xff]
    %v8869 = vld [vmem:[%s7 + $0x1d0] sm:$0xff]
    %v8870 = vld [vmem:[%s7 + $0x1d8] sm:$0xff]
    %v8871 = vld [vmem:[%s7 + $0x1e0] sm:$0xff]
    %v8872 = vld [vmem:[%s7 + $0x1e8] sm:$0xff]
    %v8873 = vld [vmem:[%s7 + $0x1f0] sm:$0xff]
    %v8874 = vld [vmem:[%s7 + $0x1f8] sm:$0xff]
    %v8875 = vld [vmem:[%s7 + $0x200] sm:$0xff]
    %v8876 = vld [vmem:[%s7 + $0x208] sm:$0xff]
    %v8877 = vld [vmem:[%s7 + $0x210] sm:$0xff]
    %v8878 = vld [vmem:[%s7 + $0x218] sm:$0xff]
    %v8879 = vld [vmem:[%s7 + $0x220] sm:$0xff]
    %v8880 = vld [vmem:[%s7 + $0x228] sm:$0xff]
    %v8881 = vld [vmem:[%s7 + $0x230] sm:$0xff]
    %v8882 = vld [vmem:[%s7 + $0x238] sm:$0xff]
    %v8883 = vld [vmem:[%s7 + $0x240] sm:$0xff]
    %v8884 = vld [vmem:[%s7 + $0x248] sm:$0xff]
    %v8885 = vld [vmem:[%s7 + $0x250] sm:$0xff]
    %v8886 = vld [vmem:[%s7 + $0x258] sm:$0xff]
    %v8887 = vld [vmem:[%s7 + $0x260] sm:$0xff]
    %v8888 = vld [vmem:[%s7 + $0x268] sm:$0xff]
    %v8889 = vld [vmem:[%s7 + $0x270] sm:$0xff]
    %v8890 = vld [vmem:[%s7 + $0x278] sm:$0xff]
    %v8891 = vld [vmem:[%s7 + $0x280] sm:$0xff]
    %v8892 = vld [vmem:[%s7 + $0x288] sm:$0xff]
    %v8893 = vld [vmem:[%s7 + $0x290] sm:$0xff]
    %v8894 = vld [vmem:[%s7 + $0x298] sm:$0xff]
    %v8895 = vld [vmem:[%s7 + $0x2a0] sm:$0xff]
    %v8896 = vld [vmem:[%s7 + $0x2a8] sm:$0xff]
    %v8897 = vld [vmem:[%s7 + $0x2b0] sm:$0xff]
    %v8898 = vld [vmem:[%s7 + $0x2b8] sm:$0xff]
    %v8899 = vld [vmem:[%s7 + $0x2c0] sm:$0xff]
    %v8900 = vld [vmem:[%s7 + $0x2c8] sm:$0xff]
    %v8901 = vld [vmem:[%s7 + $0x2d0] sm:$0xff]
    %v8902 = vld [vmem:[%s7 + $0x2d8] sm:$0xff]
    %v8903 = vld [vmem:[%s7 + $0x2e0] sm:$0xff]
    %v8904 = vld [vmem:[%s7 + $0x2e8] sm:$0xff]
    %v8905 = vld [vmem:[%s7 + $0x2f0] sm:$0xff]
    %v8906 = vld [vmem:[%s7 + $0x2f8] sm:$0xff]
    %v8907 = vld [vmem:[%s7 + $0x300] sm:$0xff]
    %v8908 = vld [vmem:[%s7 + $0x308] sm:$0xff]
    %v8909 = vld [vmem:[%s7 + $0x310] sm:$0xff]
    %v8910 = vld [vmem:[%s7 + $0x318] sm:$0xff]
    %v8911 = vld [vmem:[%s7 + $0x320] sm:$0xff]
    %v8912 = vld [vmem:[%s7 + $0x328] sm:$0xff]
    %v8913 = vld [vmem:[%s7 + $0x330] sm:$0xff]
    %v8914 = vld [vmem:[%s7 + $0x338] sm:$0xff]
    %v8915 = vld [vmem:[%s7 + $0x340] sm:$0xff]
    %v8916 = vld [vmem:[%s7 + $0x348] sm:$0xff]
    %v8917 = vld [vmem:[%s7 + $0x350] sm:$0xff]
    %v8918 = vld [vmem:[%s7 + $0x358] sm:$0xff]
    %v8919 = vld [vmem:[%s7 + $0x360] sm:$0xff]
    %v8920 = vld [vmem:[%s7 + $0x368] sm:$0xff]
    %v8921 = vld [vmem:[%s7 + $0x370] sm:$0xff]
    %v8922 = vld [vmem:[%s7 + $0x378] sm:$0xff]
    %v8923 = vld [vmem:[%s7 + $0x380] sm:$0xff]
    %v8924 = vld [vmem:[%s7 + $0x388] sm:$0xff]
    %v8925 = vld [vmem:[%s7 + $0x390] sm:$0xff]
    %v8926 = vld [vmem:[%s7 + $0x398] sm:$0xff]
    %v8927 = vld [vmem:[%s7 + $0x3a0] sm:$0xff]
    %v8928 = vld [vmem:[%s7 + $0x3a8] sm:$0xff]
    %v8929 = vld [vmem:[%s7 + $0x3b0] sm:$0xff]
    %v8930 = vld [vmem:[%s7 + $0x3b8] sm:$0xff]
    %v8931 = vld [vmem:[%s7 + $0x3c0] sm:$0xff]
    %v8932 = vld [vmem:[%s7 + $0x3c8] sm:$0xff]
    %v8933 = vld [vmem:[%s7 + $0x3d0] sm:$0xff]
    %v8934 = vld [vmem:[%s7 + $0x3d8] sm:$0xff]
    %v8935 = vld [vmem:[%s7 + $0x3e0] sm:$0xff]
    %v8936 = vld [vmem:[%s7 + $0x3e8] sm:$0xff]
    %v8937 = vld [vmem:[%s7 + $0x3f0] sm:$0xff]
    %v8938 = vld [vmem:[%s7 + $0x3f8] sm:$0xff]
    %v8939 = vld [vmem:[%s7 + $0x400] sm:$0xff]
    %v8940 = vld [vmem:[%s7 + $0x408] sm:$0xff]
    %v8941 = vld [vmem:[%s7 + $0x410] sm:$0xff]
    %v8942 = vld [vmem:[%s7 + $0x418] sm:$0xff]
    %v8943 = vld [vmem:[%s7 + $0x420] sm:$0xff]
    %v8944 = vld [vmem:[%s7 + $0x428] sm:$0xff]
    %v8945 = vld [vmem:[%s7 + $0x430] sm:$0xff]
    %v8946 = vld [vmem:[%s7 + $0x438] sm:$0xff]
    %v8947 = vld [vmem:[%s7 + $0x440] sm:$0xff]
    %v8948 = vld [vmem:[%s7 + $0x448] sm:$0xff]
    %v8949 = vld [vmem:[%s7 + $0x450] sm:$0xff]
    %v8950 = vld [vmem:[%s7 + $0x458] sm:$0xff]
    %v8951 = vld [vmem:[%s7 + $0x460] sm:$0xff]
    %v8952 = vld [vmem:[%s7 + $0x468] sm:$0xff]
    %v8953 = vld [vmem:[%s7 + $0x470] sm:$0xff]
    %v8954 = vld [vmem:[%s7 + $0x478] sm:$0xff]
    %v8955 = vld [vmem:[%s7 + $0x480] sm:$0xff]
    %v8956 = vld [vmem:[%s7 + $0x488] sm:$0xff]
    %v8957 = vld [vmem:[%s7 + $0x490] sm:$0xff]
    %v8958 = vld [vmem:[%s7 + $0x498] sm:$0xff]
    %v8959 = vld [vmem:[%s7 + $0x4a0] sm:$0xff]
    %v8960 = vld [vmem:[%s7 + $0x4a8] sm:$0xff]
    %v8961 = vld [vmem:[%s7 + $0x4b0] sm:$0xff]
    %v8962 = vld [vmem:[%s7 + $0x4b8] sm:$0xff]
    %v8963 = vld [vmem:[%s7 + $0x4c0] sm:$0xff]
    %v8964 = vld [vmem:[%s7 + $0x4c8] sm:$0xff]
    %v8965 = vld [vmem:[%s7 + $0x4d0] sm:$0xff]
    %v8966 = vld [vmem:[%s7 + $0x4d8] sm:$0xff]
    %v8967 = vld [vmem:[%s7 + $0x4e0] sm:$0xff]
    %v8968 = vld [vmem:[%s7 + $0x4e8] sm:$0xff]
    %v8969 = vld [vmem:[%s7 + $0x4f0] sm:$0xff]
    %v8970 = vld [vmem:[%s7 + $0x4f8] sm:$0xff]
    %v8971 = vld [vmem:[%s7 + $0x500] sm:$0xff]
    %v8972 = vld [vmem:[%s7 + $0x508] sm:$0xff]
    %v8973 = vld [vmem:[%s7 + $0x510] sm:$0xff]
    %v8974 = vld [vmem:[%s7 + $0x518] sm:$0xff]
    %v8975 = vld [vmem:[%s7 + $0x520] sm:$0xff]
    %v8976 = vld [vmem:[%s7 + $0x528] sm:$0xff]
    %v8977 = vld [vmem:[%s7 + $0x530] sm:$0xff]
    %v8978 = vld [vmem:[%s7 + $0x538] sm:$0xff]
    %v8979 = vld [vmem:[%s7 + $0x540] sm:$0xff]
    %v8980 = vld [vmem:[%s7 + $0x548] sm:$0xff]
    %v8981 = vld [vmem:[%s7 + $0x550] sm:$0xff]
    %v8982 = vld [vmem:[%s7 + $0x558] sm:$0xff]
    %v8983 = vld [vmem:[%s7 + $0x560] sm:$0xff]
    %v8984 = vld [vmem:[%s7 + $0x568] sm:$0xff]
    %v8985 = vld [vmem:[%s7 + $0x570] sm:$0xff]
    %v8986 = vld [vmem:[%s7 + $0x578] sm:$0xff]
    %v8987 = vld [vmem:[%s7 + $0x580] sm:$0xff]
    %v8988 = vld [vmem:[%s7 + $0x588] sm:$0xff]
    %v8989 = vld [vmem:[%s7 + $0x590] sm:$0xff]
    %v8990 = vld [vmem:[%s7 + $0x598] sm:$0xff]
    %v8991 = vld [vmem:[%s7 + $0x5a0] sm:$0xff]
    %v8992 = vld [vmem:[%s7 + $0x5a8] sm:$0xff]
    %v8993 = vld [vmem:[%s7 + $0x5b0] sm:$0xff]
    %v8994 = vld [vmem:[%s7 + $0x5b8] sm:$0xff]
    %v8995 = vld [vmem:[%s7 + $0x5c0] sm:$0xff]
    %v8996 = vld [vmem:[%s7 + $0x5c8] sm:$0xff]
    %v8997 = vld [vmem:[%s7 + $0x5d0] sm:$0xff]
    %v8998 = vld [vmem:[%s7 + $0x5d8] sm:$0xff]
    %v8999 = vld [vmem:[%s7 + $0x5e0] sm:$0xff]
    %v9000 = vld [vmem:[%s7 + $0x5e8] sm:$0xff]
    %v9001 = vld [vmem:[%s7 + $0x5f0] sm:$0xff]
    %v9002 = vld [vmem:[%s7 + $0x5f8] sm:$0xff]
    %v9003 = vld [vmem:[%s7 + $0x600] sm:$0xff]
    %v9004 = vld [vmem:[%s7 + $0x608] sm:$0xff]
    %v9005 = vld [vmem:[%s7 + $0x610] sm:$0xff]
    %v9006 = vld [vmem:[%s7 + $0x618] sm:$0xff]
    %v9007 = vld [vmem:[%s7 + $0x620] sm:$0xff]
    %v9008 = vld [vmem:[%s7 + $0x628] sm:$0xff]
    %v9009 = vld [vmem:[%s7 + $0x630] sm:$0xff]
    %v9010 = vld [vmem:[%s7 + $0x638] sm:$0xff]
    %v9011 = vld [vmem:[%s7 + $0x640] sm:$0xff]
    %v9012 = vld [vmem:[%s7 + $0x648] sm:$0xff]
    %v9013 = vld [vmem:[%s7 + $0x650] sm:$0xff]
    %v9014 = vld [vmem:[%s7 + $0x658] sm:$0xff]
    %v9015 = vld [vmem:[%s7 + $0x660] sm:$0xff]
    %v9016 = vld [vmem:[%s7 + $0x668] sm:$0xff]
    %v9017 = vld [vmem:[%s7 + $0x670] sm:$0xff]
    %v9018 = vld [vmem:[%s7 + $0x678] sm:$0xff]
    %v9019 = vld [vmem:[%s7 + $0x680] sm:$0xff]
    %v9020 = vld [vmem:[%s7 + $0x688] sm:$0xff]
    %v9021 = vld [vmem:[%s7 + $0x690] sm:$0xff]
    %v9022 = vld [vmem:[%s7 + $0x698] sm:$0xff]
    %v9023 = vld [vmem:[%s7 + $0x6a0] sm:$0xff]
    %v9024 = vld [vmem:[%s7 + $0x6a8] sm:$0xff]
    %v9025 = vld [vmem:[%s7 + $0x6b0] sm:$0xff]
    %v9026 = vld [vmem:[%s7 + $0x6b8] sm:$0xff]
    %v9027 = vld [vmem:[%s7 + $0x6c0] sm:$0xff]
    %v9028 = vld [vmem:[%s7 + $0x6c8] sm:$0xff]
    %v9029 = vld [vmem:[%s7 + $0x6d0] sm:$0xff]
    %v9030 = vld [vmem:[%s7 + $0x6d8] sm:$0xff]
    %v9031 = vld [vmem:[%s7 + $0x6e0] sm:$0xff]
    %v9032 = vld [vmem:[%s7 + $0x6e8] sm:$0xff]
    %v9033 = vld [vmem:[%s7 + $0x6f0] sm:$0xff]
    %v9034 = vld [vmem:[%s7 + $0x6f8] sm:$0xff]
    %v9035 = vld [vmem:[%s7 + $0x700] sm:$0xff]
    %v9036 = vld [vmem:[%s7 + $0x708] sm:$0xff]
    %v9037 = vld [vmem:[%s7 + $0x710] sm:$0xff]
    %v9038 = vld [vmem:[%s7 + $0x718] sm:$0xff]
    %v9039 = vld [vmem:[%s7 + $0x720] sm:$0xff]
    %v9040 = vld [vmem:[%s7 + $0x728] sm:$0xff]
    %v9041 = vld [vmem:[%s7 + $0x730] sm:$0xff]
    %v9042 = vld [vmem:[%s7 + $0x738] sm:$0xff]
    %v9043 = vld [vmem:[%s7 + $0x740] sm:$0xff]
    %v9044 = vld [vmem:[%s7 + $0x748] sm:$0xff]
    %v9045 = vld [vmem:[%s7 + $0x750] sm:$0xff]
    %v9046 = vld [vmem:[%s7 + $0x758] sm:$0xff]
    %v9047 = vld [vmem:[%s7 + $0x760] sm:$0xff]
    %v9048 = vld [vmem:[%s7 + $0x768] sm:$0xff]
    %v9049 = vld [vmem:[%s7 + $0x770] sm:$0xff]
    %v9050 = vld [vmem:[%s7 + $0x778] sm:$0xff]
    %v9051 = vld [vmem:[%s7 + $0x780] sm:$0xff]
    %v9052 = vld [vmem:[%s7 + $0x788] sm:$0xff]
    %v9053 = vld [vmem:[%s7 + $0x790] sm:$0xff]
    %v9054 = vld [vmem:[%s7 + $0x798] sm:$0xff]
    %v9055 = vld [vmem:[%s7 + $0x7a0] sm:$0xff]
    %v9056 = vld [vmem:[%s7 + $0x7a8] sm:$0xff]
    %v9057 = vld [vmem:[%s7 + $0x7b0] sm:$0xff]
    %v9058 = vld [vmem:[%s7 + $0x7b8] sm:$0xff]
    %v9059 = vld [vmem:[%s7 + $0x7c0] sm:$0xff]
    %v9060 = vld [vmem:[%s7 + $0x7c8] sm:$0xff]
    %v9061 = vld [vmem:[%s7 + $0x7d0] sm:$0xff]
    %v9062 = vld [vmem:[%s7 + $0x7d8] sm:$0xff]
    %v9063 = vld [vmem:[%s7 + $0x7e0] sm:$0xff]
    %v9064 = vld [vmem:[%s7 + $0x7e8] sm:$0xff]
    %v9065 = vld [vmem:[%s7 + $0x7f0] sm:$0xff]
    %v9066 = vld [vmem:[%s7 + $0x7f8] sm:$0xff]
    %v9067 = vld [vmem:[%s8] sm:$0xff]
    %v9069 = vlaneseq
    %v9070 = vshrl.u32 %v9069, 7
    %v9071 = vsub.s32 0, %v9070
    %v9072 = vrot.slane %v9067, %v9071
    %v9073 = vlaneseq
    %v9074 = vshrl.u32 %v9073, 7
    %v9075 = vsub.s32 1, %v9074
    %v9076 = vrot.slane %v9067, %v9075
    %v9077 = vlaneseq
    %v9078 = vshrl.u32 %v9077, 7
    %v9079 = vsub.s32 2, %v9078
    %v9080 = vrot.slane %v9067, %v9079
    %v9081 = vlaneseq
    %v9082 = vshrl.u32 %v9081, 7
    %v9083 = vsub.s32 3, %v9082
    %v9084 = vrot.slane %v9067, %v9083
    %v9085 = vlaneseq
    %v9086 = vshrl.u32 %v9085, 7
    %v9087 = vsub.s32 4, %v9086
    %v9088 = vrot.slane %v9067, %v9087
    %v9089 = vlaneseq
    %v9090 = vshrl.u32 %v9089, 7
    %v9091 = vsub.s32 5, %v9090
    %v9092 = vrot.slane %v9067, %v9091
    %v9093 = vlaneseq
    %v9094 = vshrl.u32 %v9093, 7
    %v9095 = vsub.s32 6, %v9094
    %v9096 = vrot.slane %v9067, %v9095
    %v9097 = vlaneseq
    %v9098 = vshrl.u32 %v9097, 7
    %v9099 = vsub.s32 7, %v9098
    %v9100 = vrot.slane %v9067, %v9099
    %v9111 = vunpack.c.l.s4 1966171168
    %v9112 = vunpack.c.0.s8 %v9111
    %v9113 = vlaneseq
    %v9114 = vshrl.u32 %v9113, 7
    %v9115 = vsub.s32 %v9112, %v9114
    %v9116 = vrot.slane %v8810, %v9115
    %v9117 = vcombine.high %v9116, %v9116
    %v9119 = vunpack.c.l.s4 1966171168
    %v9120 = vunpack.c.0.s8 %v9119
    %v9121 = vlaneseq
    %v9122 = vshrl.u32 %v9121, 7
    %v9123 = vsub.s32 %v9120, %v9122
    %v9124 = vrot.slane %v9116, %v9123
    %v9126 = vunpack.c.l.s4 1966171168
    %v9127 = vunpack.c.0.s8 %v9126
    %v9128 = vlaneseq
    %v9129 = vshrl.u32 %v9128, 7
    %v9130 = vsub.s32 %v9127, %v9129
    %v9131 = vrot.slane %v9117, %v9130
    %v9132 = vcombine.high %v9124, %v9124
    %v9133 = vcombine.high %v9131, %v9131
    %v9394 = vunpack.c.l.b16 %v8811
    %v9395 = vunpack.c.h.b16 %v8811
    %v9396 = vunpack.c.l.b16 %v8812
    %v9397 = vunpack.c.h.b16 %v8812
    %v9398 = vunpack.c.l.b16 %v8813
    %v9399 = vunpack.c.h.b16 %v8813
    %v9400 = vunpack.c.l.b16 %v8814
    %v9401 = vunpack.c.h.b16 %v8814
    %v9402 = vunpack.c.l.b16 %v8815
    %v9403 = vunpack.c.h.b16 %v8815
    %v9404 = vunpack.c.l.b16 %v8816
    %v9405 = vunpack.c.h.b16 %v8816
    %v9406 = vunpack.c.l.b16 %v8817
    %v9407 = vunpack.c.h.b16 %v8817
    %v9408 = vunpack.c.l.b16 %v8818
    %v9409 = vunpack.c.h.b16 %v8818
    %v9410 = vunpack.c.l.b16 %v8819
    %v9411 = vunpack.c.h.b16 %v8819
    %v9412 = vunpack.c.l.b16 %v8820
    %v9413 = vunpack.c.h.b16 %v8820
    %v9414 = vunpack.c.l.b16 %v8821
    %v9415 = vunpack.c.h.b16 %v8821
    %v9416 = vunpack.c.l.b16 %v8822
    %v9417 = vunpack.c.h.b16 %v8822
    %v9418 = vunpack.c.l.b16 %v8823
    %v9419 = vunpack.c.h.b16 %v8823
    %v9420 = vunpack.c.l.b16 %v8824
    %v9421 = vunpack.c.h.b16 %v8824
    %v9422 = vunpack.c.l.b16 %v8825
    %v9423 = vunpack.c.h.b16 %v8825
    %v9424 = vunpack.c.l.b16 %v8826
    %v9425 = vunpack.c.h.b16 %v8826
    %v9426 = vunpack.c.l.b16 %v8827
    %v9427 = vunpack.c.h.b16 %v8827
    %v9428 = vunpack.c.l.b16 %v8828
    %v9429 = vunpack.c.h.b16 %v8828
    %v9430 = vunpack.c.l.b16 %v8829
    %v9431 = vunpack.c.h.b16 %v8829
    %v9432 = vunpack.c.l.b16 %v8830
    %v9433 = vunpack.c.h.b16 %v8830
    %v9434 = vunpack.c.l.b16 %v8831
    %v9435 = vunpack.c.h.b16 %v8831
    %v9436 = vunpack.c.l.b16 %v8832
    %v9437 = vunpack.c.h.b16 %v8832
    %v9438 = vunpack.c.l.b16 %v8833
    %v9439 = vunpack.c.h.b16 %v8833
    %v9440 = vunpack.c.l.b16 %v8834
    %v9441 = vunpack.c.h.b16 %v8834
    %v9442 = vunpack.c.l.b16 %v8835
    %v9443 = vunpack.c.h.b16 %v8835
    %v9444 = vunpack.c.l.b16 %v8836
    %v9445 = vunpack.c.h.b16 %v8836
    %v9446 = vunpack.c.l.b16 %v8837
    %v9447 = vunpack.c.h.b16 %v8837
    %v9448 = vunpack.c.l.b16 %v8838
    %v9449 = vunpack.c.h.b16 %v8838
    %v9450 = vunpack.c.l.b16 %v8839
    %v9451 = vunpack.c.h.b16 %v8839
    %v9452 = vunpack.c.l.b16 %v8840
    %v9453 = vunpack.c.h.b16 %v8840
    %v9454 = vunpack.c.l.b16 %v8841
    %v9455 = vunpack.c.h.b16 %v8841
    %v9456 = vunpack.c.l.b16 %v8842
    %v9457 = vunpack.c.h.b16 %v8842
    %v9458 = vunpack.c.l.b16 %v8843
    %v9459 = vunpack.c.h.b16 %v8843
    %v9460 = vunpack.c.l.b16 %v8844
    %v9461 = vunpack.c.h.b16 %v8844
    %v9462 = vunpack.c.l.b16 %v8845
    %v9463 = vunpack.c.h.b16 %v8845
    %v9464 = vunpack.c.l.b16 %v8846
    %v9465 = vunpack.c.h.b16 %v8846
    %v9466 = vunpack.c.l.b16 %v8847
    %v9467 = vunpack.c.h.b16 %v8847
    %v9468 = vunpack.c.l.b16 %v8848
    %v9469 = vunpack.c.h.b16 %v8848
    %v9470 = vunpack.c.l.b16 %v8849
    %v9471 = vunpack.c.h.b16 %v8849
    %v9472 = vunpack.c.l.b16 %v8850
    %v9473 = vunpack.c.h.b16 %v8850
    %v9474 = vunpack.c.l.b16 %v8851
    %v9475 = vunpack.c.h.b16 %v8851
    %v9476 = vunpack.c.l.b16 %v8852
    %v9477 = vunpack.c.h.b16 %v8852
    %v9478 = vunpack.c.l.b16 %v8853
    %v9479 = vunpack.c.h.b16 %v8853
    %v9480 = vunpack.c.l.b16 %v8854
    %v9481 = vunpack.c.h.b16 %v8854
    %v9482 = vunpack.c.l.b16 %v8855
    %v9483 = vunpack.c.h.b16 %v8855
    %v9484 = vunpack.c.l.b16 %v8856
    %v9485 = vunpack.c.h.b16 %v8856
    %v9486 = vunpack.c.l.b16 %v8857
    %v9487 = vunpack.c.h.b16 %v8857
    %v9488 = vunpack.c.l.b16 %v8858
    %v9489 = vunpack.c.h.b16 %v8858
    %v9490 = vunpack.c.l.b16 %v8859
    %v9491 = vunpack.c.h.b16 %v8859
    %v9492 = vunpack.c.l.b16 %v8860
    %v9493 = vunpack.c.h.b16 %v8860
    %v9494 = vunpack.c.l.b16 %v8861
    %v9495 = vunpack.c.h.b16 %v8861
    %v9496 = vunpack.c.l.b16 %v8862
    %v9497 = vunpack.c.h.b16 %v8862
    %v9498 = vunpack.c.l.b16 %v8863
    %v9499 = vunpack.c.h.b16 %v8863
    %v9500 = vunpack.c.l.b16 %v8864
    %v9501 = vunpack.c.h.b16 %v8864
    %v9502 = vunpack.c.l.b16 %v8865
    %v9503 = vunpack.c.h.b16 %v8865
    %v9504 = vunpack.c.l.b16 %v8866
    %v9505 = vunpack.c.h.b16 %v8866
    %v9506 = vunpack.c.l.b16 %v8867
    %v9507 = vunpack.c.h.b16 %v8867
    %v9508 = vunpack.c.l.b16 %v8868
    %v9509 = vunpack.c.h.b16 %v8868
    %v9510 = vunpack.c.l.b16 %v8869
    %v9511 = vunpack.c.h.b16 %v8869
    %v9512 = vunpack.c.l.b16 %v8870
    %v9513 = vunpack.c.h.b16 %v8870
    %v9514 = vunpack.c.l.b16 %v8871
    %v9515 = vunpack.c.h.b16 %v8871
    %v9516 = vunpack.c.l.b16 %v8872
    %v9517 = vunpack.c.h.b16 %v8872
    %v9518 = vunpack.c.l.b16 %v8873
    %v9519 = vunpack.c.h.b16 %v8873
    %v9520 = vunpack.c.l.b16 %v8874
    %v9521 = vunpack.c.h.b16 %v8874
    %v9522 = vunpack.c.l.b16 %v8875
    %v9523 = vunpack.c.h.b16 %v8875
    %v9524 = vunpack.c.l.b16 %v8876
    %v9525 = vunpack.c.h.b16 %v8876
    %v9526 = vunpack.c.l.b16 %v8877
    %v9527 = vunpack.c.h.b16 %v8877
    %v9528 = vunpack.c.l.b16 %v8878
    %v9529 = vunpack.c.h.b16 %v8878
    %v9530 = vunpack.c.l.b16 %v8879
    %v9531 = vunpack.c.h.b16 %v8879
    %v9532 = vunpack.c.l.b16 %v8880
    %v9533 = vunpack.c.h.b16 %v8880
    %v9534 = vunpack.c.l.b16 %v8881
    %v9535 = vunpack.c.h.b16 %v8881
    %v9536 = vunpack.c.l.b16 %v8882
    %v9537 = vunpack.c.h.b16 %v8882
    %v9538 = vunpack.c.l.b16 %v8883
    %v9539 = vunpack.c.h.b16 %v8883
    %v9540 = vunpack.c.l.b16 %v8884
    %v9541 = vunpack.c.h.b16 %v8884
    %v9542 = vunpack.c.l.b16 %v8885
    %v9543 = vunpack.c.h.b16 %v8885
    %v9544 = vunpack.c.l.b16 %v8886
    %v9545 = vunpack.c.h.b16 %v8886
    %v9546 = vunpack.c.l.b16 %v8887
    %v9547 = vunpack.c.h.b16 %v8887
    %v9548 = vunpack.c.l.b16 %v8888
    %v9549 = vunpack.c.h.b16 %v8888
    %v9550 = vunpack.c.l.b16 %v8889
    %v9551 = vunpack.c.h.b16 %v8889
    %v9552 = vunpack.c.l.b16 %v8890
    %v9553 = vunpack.c.h.b16 %v8890
    %v9554 = vunpack.c.l.b16 %v8891
    %v9555 = vunpack.c.h.b16 %v8891
    %v9556 = vunpack.c.l.b16 %v8892
    %v9557 = vunpack.c.h.b16 %v8892
    %v9558 = vunpack.c.l.b16 %v8893
    %v9559 = vunpack.c.h.b16 %v8893
    %v9560 = vunpack.c.l.b16 %v8894
    %v9561 = vunpack.c.h.b16 %v8894
    %v9562 = vunpack.c.l.b16 %v8895
    %v9563 = vunpack.c.h.b16 %v8895
    %v9564 = vunpack.c.l.b16 %v8896
    %v9565 = vunpack.c.h.b16 %v8896
    %v9566 = vunpack.c.l.b16 %v8897
    %v9567 = vunpack.c.h.b16 %v8897
    %v9568 = vunpack.c.l.b16 %v8898
    %v9569 = vunpack.c.h.b16 %v8898
    %v9570 = vunpack.c.l.b16 %v8899
    %v9571 = vunpack.c.h.b16 %v8899
    %v9572 = vunpack.c.l.b16 %v8900
    %v9573 = vunpack.c.h.b16 %v8900
    %v9574 = vunpack.c.l.b16 %v8901
    %v9575 = vunpack.c.h.b16 %v8901
    %v9576 = vunpack.c.l.b16 %v8902
    %v9577 = vunpack.c.h.b16 %v8902
    %v9578 = vunpack.c.l.b16 %v8903
    %v9579 = vunpack.c.h.b16 %v8903
    %v9580 = vunpack.c.l.b16 %v8904
    %v9581 = vunpack.c.h.b16 %v8904
    %v9582 = vunpack.c.l.b16 %v8905
    %v9583 = vunpack.c.h.b16 %v8905
    %v9584 = vunpack.c.l.b16 %v8906
    %v9585 = vunpack.c.h.b16 %v8906
    %v9586 = vunpack.c.l.b16 %v8907
    %v9587 = vunpack.c.h.b16 %v8907
    %v9588 = vunpack.c.l.b16 %v8908
    %v9589 = vunpack.c.h.b16 %v8908
    %v9590 = vunpack.c.l.b16 %v8909
    %v9591 = vunpack.c.h.b16 %v8909
    %v9592 = vunpack.c.l.b16 %v8910
    %v9593 = vunpack.c.h.b16 %v8910
    %v9594 = vunpack.c.l.b16 %v8911
    %v9595 = vunpack.c.h.b16 %v8911
    %v9596 = vunpack.c.l.b16 %v8912
    %v9597 = vunpack.c.h.b16 %v8912
    %v9598 = vunpack.c.l.b16 %v8913
    %v9599 = vunpack.c.h.b16 %v8913
    %v9600 = vunpack.c.l.b16 %v8914
    %v9601 = vunpack.c.h.b16 %v8914
    %v9602 = vunpack.c.l.b16 %v8915
    %v9603 = vunpack.c.h.b16 %v8915
    %v9604 = vunpack.c.l.b16 %v8916
    %v9605 = vunpack.c.h.b16 %v8916
    %v9606 = vunpack.c.l.b16 %v8917
    %v9607 = vunpack.c.h.b16 %v8917
    %v9608 = vunpack.c.l.b16 %v8918
    %v9609 = vunpack.c.h.b16 %v8918
    %v9610 = vunpack.c.l.b16 %v8919
    %v9611 = vunpack.c.h.b16 %v8919
    %v9612 = vunpack.c.l.b16 %v8920
    %v9613 = vunpack.c.h.b16 %v8920
    %v9614 = vunpack.c.l.b16 %v8921
    %v9615 = vunpack.c.h.b16 %v8921
    %v9616 = vunpack.c.l.b16 %v8922
    %v9617 = vunpack.c.h.b16 %v8922
    %v9618 = vunpack.c.l.b16 %v8923
    %v9619 = vunpack.c.h.b16 %v8923
    %v9620 = vunpack.c.l.b16 %v8924
    %v9621 = vunpack.c.h.b16 %v8924
    %v9622 = vunpack.c.l.b16 %v8925
    %v9623 = vunpack.c.h.b16 %v8925
    %v9624 = vunpack.c.l.b16 %v8926
    %v9625 = vunpack.c.h.b16 %v8926
    %v9626 = vunpack.c.l.b16 %v8927
    %v9627 = vunpack.c.h.b16 %v8927
    %v9628 = vunpack.c.l.b16 %v8928
    %v9629 = vunpack.c.h.b16 %v8928
    %v9630 = vunpack.c.l.b16 %v8929
    %v9631 = vunpack.c.h.b16 %v8929
    %v9632 = vunpack.c.l.b16 %v8930
    %v9633 = vunpack.c.h.b16 %v8930
    %v9634 = vunpack.c.l.b16 %v8931
    %v9635 = vunpack.c.h.b16 %v8931
    %v9636 = vunpack.c.l.b16 %v8932
    %v9637 = vunpack.c.h.b16 %v8932
    %v9638 = vunpack.c.l.b16 %v8933
    %v9639 = vunpack.c.h.b16 %v8933
    %v9640 = vunpack.c.l.b16 %v8934
    %v9641 = vunpack.c.h.b16 %v8934
    %v9642 = vunpack.c.l.b16 %v8935
    %v9643 = vunpack.c.h.b16 %v8935
    %v9644 = vunpack.c.l.b16 %v8936
    %v9645 = vunpack.c.h.b16 %v8936
    %v9646 = vunpack.c.l.b16 %v8937
    %v9647 = vunpack.c.h.b16 %v8937
    %v9648 = vunpack.c.l.b16 %v8938
    %v9649 = vunpack.c.h.b16 %v8938
    %v9650 = vunpack.c.l.b16 %v8939
    %v9651 = vunpack.c.h.b16 %v8939
    %v9652 = vunpack.c.l.b16 %v8940
    %v9653 = vunpack.c.h.b16 %v8940
    %v9654 = vunpack.c.l.b16 %v8941
    %v9655 = vunpack.c.h.b16 %v8941
    %v9656 = vunpack.c.l.b16 %v8942
    %v9657 = vunpack.c.h.b16 %v8942
    %v9658 = vunpack.c.l.b16 %v8943
    %v9659 = vunpack.c.h.b16 %v8943
    %v9660 = vunpack.c.l.b16 %v8944
    %v9661 = vunpack.c.h.b16 %v8944
    %v9662 = vunpack.c.l.b16 %v8945
    %v9663 = vunpack.c.h.b16 %v8945
    %v9664 = vunpack.c.l.b16 %v8946
    %v9665 = vunpack.c.h.b16 %v8946
    %v9666 = vunpack.c.l.b16 %v8947
    %v9667 = vunpack.c.h.b16 %v8947
    %v9668 = vunpack.c.l.b16 %v8948
    %v9669 = vunpack.c.h.b16 %v8948
    %v9670 = vunpack.c.l.b16 %v8949
    %v9671 = vunpack.c.h.b16 %v8949
    %v9672 = vunpack.c.l.b16 %v8950
    %v9673 = vunpack.c.h.b16 %v8950
    %v9674 = vunpack.c.l.b16 %v8951
    %v9675 = vunpack.c.h.b16 %v8951
    %v9676 = vunpack.c.l.b16 %v8952
    %v9677 = vunpack.c.h.b16 %v8952
    %v9678 = vunpack.c.l.b16 %v8953
    %v9679 = vunpack.c.h.b16 %v8953
    %v9680 = vunpack.c.l.b16 %v8954
    %v9681 = vunpack.c.h.b16 %v8954
    %v9682 = vunpack.c.l.b16 %v8955
    %v9683 = vunpack.c.h.b16 %v8955
    %v9684 = vunpack.c.l.b16 %v8956
    %v9685 = vunpack.c.h.b16 %v8956
    %v9686 = vunpack.c.l.b16 %v8957
    %v9687 = vunpack.c.h.b16 %v8957
    %v9688 = vunpack.c.l.b16 %v8958
    %v9689 = vunpack.c.h.b16 %v8958
    %v9690 = vunpack.c.l.b16 %v8959
    %v9691 = vunpack.c.h.b16 %v8959
    %v9692 = vunpack.c.l.b16 %v8960
    %v9693 = vunpack.c.h.b16 %v8960
    %v9694 = vunpack.c.l.b16 %v8961
    %v9695 = vunpack.c.h.b16 %v8961
    %v9696 = vunpack.c.l.b16 %v8962
    %v9697 = vunpack.c.h.b16 %v8962
    %v9698 = vunpack.c.l.b16 %v8963
    %v9699 = vunpack.c.h.b16 %v8963
    %v9700 = vunpack.c.l.b16 %v8964
    %v9701 = vunpack.c.h.b16 %v8964
    %v9702 = vunpack.c.l.b16 %v8965
    %v9703 = vunpack.c.h.b16 %v8965
    %v9704 = vunpack.c.l.b16 %v8966
    %v9705 = vunpack.c.h.b16 %v8966
    %v9706 = vunpack.c.l.b16 %v8967
    %v9707 = vunpack.c.h.b16 %v8967
    %v9708 = vunpack.c.l.b16 %v8968
    %v9709 = vunpack.c.h.b16 %v8968
    %v9710 = vunpack.c.l.b16 %v8969
    %v9711 = vunpack.c.h.b16 %v8969
    %v9712 = vunpack.c.l.b16 %v8970
    %v9713 = vunpack.c.h.b16 %v8970
    %v9714 = vunpack.c.l.b16 %v8971
    %v9715 = vunpack.c.h.b16 %v8971
    %v9716 = vunpack.c.l.b16 %v8972
    %v9717 = vunpack.c.h.b16 %v8972
    %v9718 = vunpack.c.l.b16 %v8973
    %v9719 = vunpack.c.h.b16 %v8973
    %v9720 = vunpack.c.l.b16 %v8974
    %v9721 = vunpack.c.h.b16 %v8974
    %v9722 = vunpack.c.l.b16 %v8975
    %v9723 = vunpack.c.h.b16 %v8975
    %v9724 = vunpack.c.l.b16 %v8976
    %v9725 = vunpack.c.h.b16 %v8976
    %v9726 = vunpack.c.l.b16 %v8977
    %v9727 = vunpack.c.h.b16 %v8977
    %v9728 = vunpack.c.l.b16 %v8978
    %v9729 = vunpack.c.h.b16 %v8978
    %v9730 = vunpack.c.l.b16 %v8979
    %v9731 = vunpack.c.h.b16 %v8979
    %v9732 = vunpack.c.l.b16 %v8980
    %v9733 = vunpack.c.h.b16 %v8980
    %v9734 = vunpack.c.l.b16 %v8981
    %v9735 = vunpack.c.h.b16 %v8981
    %v9736 = vunpack.c.l.b16 %v8982
    %v9737 = vunpack.c.h.b16 %v8982
    %v9738 = vunpack.c.l.b16 %v8983
    %v9739 = vunpack.c.h.b16 %v8983
    %v9740 = vunpack.c.l.b16 %v8984
    %v9741 = vunpack.c.h.b16 %v8984
    %v9742 = vunpack.c.l.b16 %v8985
    %v9743 = vunpack.c.h.b16 %v8985
    %v9744 = vunpack.c.l.b16 %v8986
    %v9745 = vunpack.c.h.b16 %v8986
    %v9746 = vunpack.c.l.b16 %v8987
    %v9747 = vunpack.c.h.b16 %v8987
    %v9748 = vunpack.c.l.b16 %v8988
    %v9749 = vunpack.c.h.b16 %v8988
    %v9750 = vunpack.c.l.b16 %v8989
    %v9751 = vunpack.c.h.b16 %v8989
    %v9752 = vunpack.c.l.b16 %v8990
    %v9753 = vunpack.c.h.b16 %v8990
    %v9754 = vunpack.c.l.b16 %v8991
    %v9755 = vunpack.c.h.b16 %v8991
    %v9756 = vunpack.c.l.b16 %v8992
    %v9757 = vunpack.c.h.b16 %v8992
    %v9758 = vunpack.c.l.b16 %v8993
    %v9759 = vunpack.c.h.b16 %v8993
    %v9760 = vunpack.c.l.b16 %v8994
    %v9761 = vunpack.c.h.b16 %v8994
    %v9762 = vunpack.c.l.b16 %v8995
    %v9763 = vunpack.c.h.b16 %v8995
    %v9764 = vunpack.c.l.b16 %v8996
    %v9765 = vunpack.c.h.b16 %v8996
    %v9766 = vunpack.c.l.b16 %v8997
    %v9767 = vunpack.c.h.b16 %v8997
    %v9768 = vunpack.c.l.b16 %v8998
    %v9769 = vunpack.c.h.b16 %v8998
    %v9770 = vunpack.c.l.b16 %v8999
    %v9771 = vunpack.c.h.b16 %v8999
    %v9772 = vunpack.c.l.b16 %v9000
    %v9773 = vunpack.c.h.b16 %v9000
    %v9774 = vunpack.c.l.b16 %v9001
    %v9775 = vunpack.c.h.b16 %v9001
    %v9776 = vunpack.c.l.b16 %v9002
    %v9777 = vunpack.c.h.b16 %v9002
    %v9778 = vunpack.c.l.b16 %v9003
    %v9779 = vunpack.c.h.b16 %v9003
    %v9780 = vunpack.c.l.b16 %v9004
    %v9781 = vunpack.c.h.b16 %v9004
    %v9782 = vunpack.c.l.b16 %v9005
    %v9783 = vunpack.c.h.b16 %v9005
    %v9784 = vunpack.c.l.b16 %v9006
    %v9785 = vunpack.c.h.b16 %v9006
    %v9786 = vunpack.c.l.b16 %v9007
    %v9787 = vunpack.c.h.b16 %v9007
    %v9788 = vunpack.c.l.b16 %v9008
    %v9789 = vunpack.c.h.b16 %v9008
    %v9790 = vunpack.c.l.b16 %v9009
    %v9791 = vunpack.c.h.b16 %v9009
    %v9792 = vunpack.c.l.b16 %v9010
    %v9793 = vunpack.c.h.b16 %v9010
    %v9794 = vunpack.c.l.b16 %v9011
    %v9795 = vunpack.c.h.b16 %v9011
    %v9796 = vunpack.c.l.b16 %v9012
    %v9797 = vunpack.c.h.b16 %v9012
    %v9798 = vunpack.c.l.b16 %v9013
    %v9799 = vunpack.c.h.b16 %v9013
    %v9800 = vunpack.c.l.b16 %v9014
    %v9801 = vunpack.c.h.b16 %v9014
    %v9802 = vunpack.c.l.b16 %v9015
    %v9803 = vunpack.c.h.b16 %v9015
    %v9804 = vunpack.c.l.b16 %v9016
    %v9805 = vunpack.c.h.b16 %v9016
    %v9806 = vunpack.c.l.b16 %v9017
    %v9807 = vunpack.c.h.b16 %v9017
    %v9808 = vunpack.c.l.b16 %v9018
    %v9809 = vunpack.c.h.b16 %v9018
    %v9810 = vunpack.c.l.b16 %v9019
    %v9811 = vunpack.c.h.b16 %v9019
    %v9812 = vunpack.c.l.b16 %v9020
    %v9813 = vunpack.c.h.b16 %v9020
    %v9814 = vunpack.c.l.b16 %v9021
    %v9815 = vunpack.c.h.b16 %v9021
    %v9816 = vunpack.c.l.b16 %v9022
    %v9817 = vunpack.c.h.b16 %v9022
    %v9818 = vunpack.c.l.b16 %v9023
    %v9819 = vunpack.c.h.b16 %v9023
    %v9820 = vunpack.c.l.b16 %v9024
    %v9821 = vunpack.c.h.b16 %v9024
    %v9822 = vunpack.c.l.b16 %v9025
    %v9823 = vunpack.c.h.b16 %v9025
    %v9824 = vunpack.c.l.b16 %v9026
    %v9825 = vunpack.c.h.b16 %v9026
    %v9826 = vunpack.c.l.b16 %v9027
    %v9827 = vunpack.c.h.b16 %v9027
    %v9828 = vunpack.c.l.b16 %v9028
    %v9829 = vunpack.c.h.b16 %v9028
    %v9830 = vunpack.c.l.b16 %v9029
    %v9831 = vunpack.c.h.b16 %v9029
    %v9832 = vunpack.c.l.b16 %v9030
    %v9833 = vunpack.c.h.b16 %v9030
    %v9834 = vunpack.c.l.b16 %v9031
    %v9835 = vunpack.c.h.b16 %v9031
    %v9836 = vunpack.c.l.b16 %v9032
    %v9837 = vunpack.c.h.b16 %v9032
    %v9838 = vunpack.c.l.b16 %v9033
    %v9839 = vunpack.c.h.b16 %v9033
    %v9840 = vunpack.c.l.b16 %v9034
    %v9841 = vunpack.c.h.b16 %v9034
    %v9842 = vunpack.c.l.b16 %v9035
    %v9843 = vunpack.c.h.b16 %v9035
    %v9844 = vunpack.c.l.b16 %v9036
    %v9845 = vunpack.c.h.b16 %v9036
    %v9846 = vunpack.c.l.b16 %v9037
    %v9847 = vunpack.c.h.b16 %v9037
    %v9848 = vunpack.c.l.b16 %v9038
    %v9849 = vunpack.c.h.b16 %v9038
    %v9850 = vunpack.c.l.b16 %v9039
    %v9851 = vunpack.c.h.b16 %v9039
    %v9852 = vunpack.c.l.b16 %v9040
    %v9853 = vunpack.c.h.b16 %v9040
    %v9854 = vunpack.c.l.b16 %v9041
    %v9855 = vunpack.c.h.b16 %v9041
    %v9856 = vunpack.c.l.b16 %v9042
    %v9857 = vunpack.c.h.b16 %v9042
    %v9858 = vunpack.c.l.b16 %v9043
    %v9859 = vunpack.c.h.b16 %v9043
    %v9860 = vunpack.c.l.b16 %v9044
    %v9861 = vunpack.c.h.b16 %v9044
    %v9862 = vunpack.c.l.b16 %v9045
    %v9863 = vunpack.c.h.b16 %v9045
    %v9864 = vunpack.c.l.b16 %v9046
    %v9865 = vunpack.c.h.b16 %v9046
    %v9866 = vunpack.c.l.b16 %v9047
    %v9867 = vunpack.c.h.b16 %v9047
    %v9868 = vunpack.c.l.b16 %v9048
    %v9869 = vunpack.c.h.b16 %v9048
    %v9870 = vunpack.c.l.b16 %v9049
    %v9871 = vunpack.c.h.b16 %v9049
    %v9872 = vunpack.c.l.b16 %v9050
    %v9873 = vunpack.c.h.b16 %v9050
    %v9874 = vunpack.c.l.b16 %v9051
    %v9875 = vunpack.c.h.b16 %v9051
    %v9876 = vunpack.c.l.b16 %v9052
    %v9877 = vunpack.c.h.b16 %v9052
    %v9878 = vunpack.c.l.b16 %v9053
    %v9879 = vunpack.c.h.b16 %v9053
    %v9880 = vunpack.c.l.b16 %v9054
    %v9881 = vunpack.c.h.b16 %v9054
    %v9882 = vunpack.c.l.b16 %v9055
    %v9883 = vunpack.c.h.b16 %v9055
    %v9884 = vunpack.c.l.b16 %v9056
    %v9885 = vunpack.c.h.b16 %v9056
    %v9886 = vunpack.c.l.b16 %v9057
    %v9887 = vunpack.c.h.b16 %v9057
    %v9888 = vunpack.c.l.b16 %v9058
    %v9889 = vunpack.c.h.b16 %v9058
    %v9890 = vunpack.c.l.b16 %v9059
    %v9891 = vunpack.c.h.b16 %v9059
    %v9892 = vunpack.c.l.b16 %v9060
    %v9893 = vunpack.c.h.b16 %v9060
    %v9894 = vunpack.c.l.b16 %v9061
    %v9895 = vunpack.c.h.b16 %v9061
    %v9896 = vunpack.c.l.b16 %v9062
    %v9897 = vunpack.c.h.b16 %v9062
    %v9898 = vunpack.c.l.b16 %v9063
    %v9899 = vunpack.c.h.b16 %v9063
    %v9900 = vunpack.c.l.b16 %v9064
    %v9901 = vunpack.c.h.b16 %v9064
    %v9902 = vunpack.c.l.b16 %v9065
    %v9903 = vunpack.c.h.b16 %v9065
    %v9904 = vunpack.c.l.b16 %v9066
    %v9905 = vunpack.c.h.b16 %v9066
    %v9906 = vpack.c.b16 %v9402, %v9394
    %v9907 = vpack.c.b16 %v9403, %v9395
    %v9908 = vpack.c.b16 %v9404, %v9396
    %v9909 = vpack.c.b16 %v9405, %v9397
    %v9910 = vpack.c.b16 %v9406, %v9398
    %v9911 = vpack.c.b16 %v9407, %v9399
    %v9912 = vpack.c.b16 %v9408, %v9400
    %v9913 = vpack.c.b16 %v9409, %v9401
    %v9914 = vpack.c.b16 %v9418, %v9410
    %v9915 = vpack.c.b16 %v9419, %v9411
    %v9916 = vpack.c.b16 %v9420, %v9412
    %v9917 = vpack.c.b16 %v9421, %v9413
    %v9918 = vpack.c.b16 %v9422, %v9414
    %v9919 = vpack.c.b16 %v9423, %v9415
    %v9920 = vpack.c.b16 %v9424, %v9416
    %v9921 = vpack.c.b16 %v9425, %v9417
    %v9922 = vpack.c.b16 %v9434, %v9426
    %v9923 = vpack.c.b16 %v9435, %v9427
    %v9924 = vpack.c.b16 %v9436, %v9428
    %v9925 = vpack.c.b16 %v9437, %v9429
    %v9926 = vpack.c.b16 %v9438, %v9430
    %v9927 = vpack.c.b16 %v9439, %v9431
    %v9928 = vpack.c.b16 %v9440, %v9432
    %v9929 = vpack.c.b16 %v9441, %v9433
    %v9930 = vpack.c.b16 %v9450, %v9442
    %v9931 = vpack.c.b16 %v9451, %v9443
    %v9932 = vpack.c.b16 %v9452, %v9444
    %v9933 = vpack.c.b16 %v9453, %v9445
    %v9934 = vpack.c.b16 %v9454, %v9446
    %v9935 = vpack.c.b16 %v9455, %v9447
    %v9936 = vpack.c.b16 %v9456, %v9448
    %v9937 = vpack.c.b16 %v9457, %v9449
    %v9938 = vpack.c.b16 %v9466, %v9458
    %v9939 = vpack.c.b16 %v9467, %v9459
    %v9940 = vpack.c.b16 %v9468, %v9460
    %v9941 = vpack.c.b16 %v9469, %v9461
    %v9942 = vpack.c.b16 %v9470, %v9462
    %v9943 = vpack.c.b16 %v9471, %v9463
    %v9944 = vpack.c.b16 %v9472, %v9464
    %v9945 = vpack.c.b16 %v9473, %v9465
    %v9946 = vpack.c.b16 %v9482, %v9474
    %v9947 = vpack.c.b16 %v9483, %v9475
    %v9948 = vpack.c.b16 %v9484, %v9476
    %v9949 = vpack.c.b16 %v9485, %v9477
    %v9950 = vpack.c.b16 %v9486, %v9478
    %v9951 = vpack.c.b16 %v9487, %v9479
    %v9952 = vpack.c.b16 %v9488, %v9480
    %v9953 = vpack.c.b16 %v9489, %v9481
    %v9954 = vpack.c.b16 %v9498, %v9490
    %v9955 = vpack.c.b16 %v9499, %v9491
    %v9956 = vpack.c.b16 %v9500, %v9492
    %v9957 = vpack.c.b16 %v9501, %v9493
    %v9958 = vpack.c.b16 %v9502, %v9494
    %v9959 = vpack.c.b16 %v9503, %v9495
    %v9960 = vpack.c.b16 %v9504, %v9496
    %v9961 = vpack.c.b16 %v9505, %v9497
    %v9962 = vpack.c.b16 %v9514, %v9506
    %v9963 = vpack.c.b16 %v9515, %v9507
    %v9964 = vpack.c.b16 %v9516, %v9508
    %v9965 = vpack.c.b16 %v9517, %v9509
    %v9966 = vpack.c.b16 %v9518, %v9510
    %v9967 = vpack.c.b16 %v9519, %v9511
    %v9968 = vpack.c.b16 %v9520, %v9512
    %v9969 = vpack.c.b16 %v9521, %v9513
    %v9970 = vpack.c.b16 %v9530, %v9522
    %v9971 = vpack.c.b16 %v9531, %v9523
    %v9972 = vpack.c.b16 %v9532, %v9524
    %v9973 = vpack.c.b16 %v9533, %v9525
    %v9974 = vpack.c.b16 %v9534, %v9526
    %v9975 = vpack.c.b16 %v9535, %v9527
    %v9976 = vpack.c.b16 %v9536, %v9528
    %v9977 = vpack.c.b16 %v9537, %v9529
    %v9978 = vpack.c.b16 %v9546, %v9538
    %v9979 = vpack.c.b16 %v9547, %v9539
    %v9980 = vpack.c.b16 %v9548, %v9540
    %v9981 = vpack.c.b16 %v9549, %v9541
    %v9982 = vpack.c.b16 %v9550, %v9542
    %v9983 = vpack.c.b16 %v9551, %v9543
    %v9984 = vpack.c.b16 %v9552, %v9544
    %v9985 = vpack.c.b16 %v9553, %v9545
    %v9986 = vpack.c.b16 %v9562, %v9554
    %v9987 = vpack.c.b16 %v9563, %v9555
    %v9988 = vpack.c.b16 %v9564, %v9556
    %v9989 = vpack.c.b16 %v9565, %v9557
    %v9990 = vpack.c.b16 %v9566, %v9558
    %v9991 = vpack.c.b16 %v9567, %v9559
    %v9992 = vpack.c.b16 %v9568, %v9560
    %v9993 = vpack.c.b16 %v9569, %v9561
    %v9994 = vpack.c.b16 %v9578, %v9570
    %v9995 = vpack.c.b16 %v9579, %v9571
    %v9996 = vpack.c.b16 %v9580, %v9572
    %v9997 = vpack.c.b16 %v9581, %v9573
    %v9998 = vpack.c.b16 %v9582, %v9574
    %v9999 = vpack.c.b16 %v9583, %v9575
    %v10000 = vpack.c.b16 %v9584, %v9576
    %v10001 = vpack.c.b16 %v9585, %v9577
    %v10002 = vpack.c.b16 %v9594, %v9586
    %v10003 = vpack.c.b16 %v9595, %v9587
    %v10004 = vpack.c.b16 %v9596, %v9588
    %v10005 = vpack.c.b16 %v9597, %v9589
    %v10006 = vpack.c.b16 %v9598, %v9590
    %v10007 = vpack.c.b16 %v9599, %v9591
    %v10008 = vpack.c.b16 %v9600, %v9592
    %v10009 = vpack.c.b16 %v9601, %v9593
    %v10010 = vpack.c.b16 %v9610, %v9602
    %v10011 = vpack.c.b16 %v9611, %v9603
    %v10012 = vpack.c.b16 %v9612, %v9604
    %v10013 = vpack.c.b16 %v9613, %v9605
    %v10014 = vpack.c.b16 %v9614, %v9606
    %v10015 = vpack.c.b16 %v9615, %v9607
    %v10016 = vpack.c.b16 %v9616, %v9608
    %v10017 = vpack.c.b16 %v9617, %v9609
    %v10018 = vpack.c.b16 %v9626, %v9618
    %v10019 = vpack.c.b16 %v9627, %v9619
    %v10020 = vpack.c.b16 %v9628, %v9620
    %v10021 = vpack.c.b16 %v9629, %v9621
    %v10022 = vpack.c.b16 %v9630, %v9622
    %v10023 = vpack.c.b16 %v9631, %v9623
    %v10024 = vpack.c.b16 %v9632, %v9624
    %v10025 = vpack.c.b16 %v9633, %v9625
    %v10026 = vpack.c.b16 %v9642, %v9634
    %v10027 = vpack.c.b16 %v9643, %v9635
    %v10028 = vpack.c.b16 %v9644, %v9636
    %v10029 = vpack.c.b16 %v9645, %v9637
    %v10030 = vpack.c.b16 %v9646, %v9638
    %v10031 = vpack.c.b16 %v9647, %v9639
    %v10032 = vpack.c.b16 %v9648, %v9640
    %v10033 = vpack.c.b16 %v9649, %v9641
    %v10034 = vpack.c.b16 %v9658, %v9650
    %v10035 = vpack.c.b16 %v9659, %v9651
    %v10036 = vpack.c.b16 %v9660, %v9652
    %v10037 = vpack.c.b16 %v9661, %v9653
    %v10038 = vpack.c.b16 %v9662, %v9654
    %v10039 = vpack.c.b16 %v9663, %v9655
    %v10040 = vpack.c.b16 %v9664, %v9656
    %v10041 = vpack.c.b16 %v9665, %v9657
    %v10042 = vpack.c.b16 %v9674, %v9666
    %v10043 = vpack.c.b16 %v9675, %v9667
    %v10044 = vpack.c.b16 %v9676, %v9668
    %v10045 = vpack.c.b16 %v9677, %v9669
    %v10046 = vpack.c.b16 %v9678, %v9670
    %v10047 = vpack.c.b16 %v9679, %v9671
    %v10048 = vpack.c.b16 %v9680, %v9672
    %v10049 = vpack.c.b16 %v9681, %v9673
    %v10050 = vpack.c.b16 %v9690, %v9682
    %v10051 = vpack.c.b16 %v9691, %v9683
    %v10052 = vpack.c.b16 %v9692, %v9684
    %v10053 = vpack.c.b16 %v9693, %v9685
    %v10054 = vpack.c.b16 %v9694, %v9686
    %v10055 = vpack.c.b16 %v9695, %v9687
    %v10056 = vpack.c.b16 %v9696, %v9688
    %v10057 = vpack.c.b16 %v9697, %v9689
    %v10058 = vpack.c.b16 %v9706, %v9698
    %v10059 = vpack.c.b16 %v9707, %v9699
    %v10060 = vpack.c.b16 %v9708, %v9700
    %v10061 = vpack.c.b16 %v9709, %v9701
    %v10062 = vpack.c.b16 %v9710, %v9702
    %v10063 = vpack.c.b16 %v9711, %v9703
    %v10064 = vpack.c.b16 %v9712, %v9704
    %v10065 = vpack.c.b16 %v9713, %v9705
    %v10066 = vpack.c.b16 %v9722, %v9714
    %v10067 = vpack.c.b16 %v9723, %v9715
    %v10068 = vpack.c.b16 %v9724, %v9716
    %v10069 = vpack.c.b16 %v9725, %v9717
    %v10070 = vpack.c.b16 %v9726, %v9718
    %v10071 = vpack.c.b16 %v9727, %v9719
    %v10072 = vpack.c.b16 %v9728, %v9720
    %v10073 = vpack.c.b16 %v9729, %v9721
    %v10074 = vpack.c.b16 %v9738, %v9730
    %v10075 = vpack.c.b16 %v9739, %v9731
    %v10076 = vpack.c.b16 %v9740, %v9732
    %v10077 = vpack.c.b16 %v9741, %v9733
    %v10078 = vpack.c.b16 %v9742, %v9734
    %v10079 = vpack.c.b16 %v9743, %v9735
    %v10080 = vpack.c.b16 %v9744, %v9736
    %v10081 = vpack.c.b16 %v9745, %v9737
    %v10082 = vpack.c.b16 %v9754, %v9746
    %v10083 = vpack.c.b16 %v9755, %v9747
    %v10084 = vpack.c.b16 %v9756, %v9748
    %v10085 = vpack.c.b16 %v9757, %v9749
    %v10086 = vpack.c.b16 %v9758, %v9750
    %v10087 = vpack.c.b16 %v9759, %v9751
    %v10088 = vpack.c.b16 %v9760, %v9752
    %v10089 = vpack.c.b16 %v9761, %v9753
    %v10090 = vpack.c.b16 %v9770, %v9762
    %v10091 = vpack.c.b16 %v9771, %v9763
    %v10092 = vpack.c.b16 %v9772, %v9764
    %v10093 = vpack.c.b16 %v9773, %v9765
    %v10094 = vpack.c.b16 %v9774, %v9766
    %v10095 = vpack.c.b16 %v9775, %v9767
    %v10096 = vpack.c.b16 %v9776, %v9768
    %v10097 = vpack.c.b16 %v9777, %v9769
    %v10098 = vpack.c.b16 %v9786, %v9778
    %v10099 = vpack.c.b16 %v9787, %v9779
    %v10100 = vpack.c.b16 %v9788, %v9780
    %v10101 = vpack.c.b16 %v9789, %v9781
    %v10102 = vpack.c.b16 %v9790, %v9782
    %v10103 = vpack.c.b16 %v9791, %v9783
    %v10104 = vpack.c.b16 %v9792, %v9784
    %v10105 = vpack.c.b16 %v9793, %v9785
    %v10106 = vpack.c.b16 %v9802, %v9794
    %v10107 = vpack.c.b16 %v9803, %v9795
    %v10108 = vpack.c.b16 %v9804, %v9796
    %v10109 = vpack.c.b16 %v9805, %v9797
    %v10110 = vpack.c.b16 %v9806, %v9798
    %v10111 = vpack.c.b16 %v9807, %v9799
    %v10112 = vpack.c.b16 %v9808, %v9800
    %v10113 = vpack.c.b16 %v9809, %v9801
    %v10114 = vpack.c.b16 %v9818, %v9810
    %v10115 = vpack.c.b16 %v9819, %v9811
    %v10116 = vpack.c.b16 %v9820, %v9812
    %v10117 = vpack.c.b16 %v9821, %v9813
    %v10118 = vpack.c.b16 %v9822, %v9814
    %v10119 = vpack.c.b16 %v9823, %v9815
    %v10120 = vpack.c.b16 %v9824, %v9816
    %v10121 = vpack.c.b16 %v9825, %v9817
    %v10122 = vpack.c.b16 %v9834, %v9826
    %v10123 = vpack.c.b16 %v9835, %v9827
    %v10124 = vpack.c.b16 %v9836, %v9828
    %v10125 = vpack.c.b16 %v9837, %v9829
    %v10126 = vpack.c.b16 %v9838, %v9830
    %v10127 = vpack.c.b16 %v9839, %v9831
    %v10128 = vpack.c.b16 %v9840, %v9832
    %v10129 = vpack.c.b16 %v9841, %v9833
    %v10130 = vpack.c.b16 %v9850, %v9842
    %v10131 = vpack.c.b16 %v9851, %v9843
    %v10132 = vpack.c.b16 %v9852, %v9844
    %v10133 = vpack.c.b16 %v9853, %v9845
    %v10134 = vpack.c.b16 %v9854, %v9846
    %v10135 = vpack.c.b16 %v9855, %v9847
    %v10136 = vpack.c.b16 %v9856, %v9848
    %v10137 = vpack.c.b16 %v9857, %v9849
    %v10138 = vpack.c.b16 %v9866, %v9858
    %v10139 = vpack.c.b16 %v9867, %v9859
    %v10140 = vpack.c.b16 %v9868, %v9860
    %v10141 = vpack.c.b16 %v9869, %v9861
    %v10142 = vpack.c.b16 %v9870, %v9862
    %v10143 = vpack.c.b16 %v9871, %v9863
    %v10144 = vpack.c.b16 %v9872, %v9864
    %v10145 = vpack.c.b16 %v9873, %v9865
    %v10146 = vpack.c.b16 %v9882, %v9874
    %v10147 = vpack.c.b16 %v9883, %v9875
    %v10148 = vpack.c.b16 %v9884, %v9876
    %v10149 = vpack.c.b16 %v9885, %v9877
    %v10150 = vpack.c.b16 %v9886, %v9878
    %v10151 = vpack.c.b16 %v9887, %v9879
    %v10152 = vpack.c.b16 %v9888, %v9880
    %v10153 = vpack.c.b16 %v9889, %v9881
    %v10154 = vpack.c.b16 %v9898, %v9890
    %v10155 = vpack.c.b16 %v9899, %v9891
    %v10156 = vpack.c.b16 %v9900, %v9892
    %v10157 = vpack.c.b16 %v9901, %v9893
    %v10158 = vpack.c.b16 %v9902, %v9894
    %v10159 = vpack.c.b16 %v9903, %v9895
    %v10160 = vpack.c.b16 %v9904, %v9896
    %v10161 = vpack.c.b16 %v9905, %v9897
    %10418 = vmatprep.subr.bf16.mxu0 %v9907
    %10419 = vmatpush1.bf16.msra.mxu0 %v9906
    %10420 = vmatprep.subr.bf16.mxu0 %v9915
    %10421 = vmatpush1.bf16.msra.mxu0 %v9914
    %10422 = vmatprep.subr.bf16.mxu0 %v9923
    %10423 = vmatpush1.bf16.msra.mxu0 %v9922
    %10424 = vmatprep.subr.bf16.mxu0 %v9931
    %10425 = vmatpush1.bf16.msra.mxu0 %v9930
    %10426 = vmatprep.subr.bf16.mxu0 %v9939
    %10427 = vmatpush1.bf16.msra.mxu0 %v9938
    %10428 = vmatprep.subr.bf16.mxu0 %v9947
    %10429 = vmatpush1.bf16.msra.mxu0 %v9946
    %10430 = vmatprep.subr.bf16.mxu0 %v9955
    %10431 = vmatpush1.bf16.msra.mxu0 %v9954
    %10432 = vmatprep.subr.bf16.mxu0 %v9963
    %10433 = vmatpush1.bf16.msra.mxu0 %v9962
    %10434 = vmatprep.subr.bf16.mxu0 %v9971
    %10435 = vmatpush1.bf16.msra.mxu0 %v9970
    %10436 = vmatprep.subr.bf16.mxu0 %v9979
    %10437 = vmatpush1.bf16.msra.mxu0 %v9978
    %10438 = vmatprep.subr.bf16.mxu0 %v9987
    %10439 = vmatpush1.bf16.msra.mxu0 %v9986
    %10440 = vmatprep.subr.bf16.mxu0 %v9995
    %10441 = vmatpush1.bf16.msra.mxu0 %v9994
    %10442 = vmatprep.subr.bf16.mxu0 %v10003
    %10443 = vmatpush1.bf16.msra.mxu0 %v10002
    %10444 = vmatprep.subr.bf16.mxu0 %v10011
    %10445 = vmatpush1.bf16.msra.mxu0 %v10010
    %10446 = vmatprep.subr.bf16.mxu0 %v10019
    %10447 = vmatpush1.bf16.msra.mxu0 %v10018
    %10448 = vmatprep.subr.bf16.mxu0 %v10027
    %10449 = vmatpush1.bf16.msra.mxu0 %v10026
    %10450 = vmatprep.mubr.bf16.mxu0 %v9131
    %10451 = vmatmul.mubr.bf16.gmra.mrb[0].mxu0 %v9124
    %v10452 = vpop.f32.mrb[0].mxu0
    %v10453 = vadd.f32 %v9072, %v10452
    %v10454 = vpop.f32.mrb[0].mxu0
    %v10455 = vadd.f32 %v9076, %v10454
    %v10456 = vpop.f32.mrb[0].mxu0
    %v10457 = vpop.f32.mrb[0].mxu0
    %10458 = vdwg.mxu0
    %10459 = vmatprep.subr.bf16.mxu0 %v10035
    %10460 = vmatpush1.bf16.msra.mxu0 %v10034
    %10461 = vmatprep.subr.bf16.mxu0 %v10043
    %10462 = vmatpush1.bf16.msra.mxu0 %v10042
    %10463 = vmatprep.subr.bf16.mxu0 %v10051
    %10464 = vmatpush1.bf16.msra.mxu0 %v10050
    %10465 = vmatprep.subr.bf16.mxu0 %v10059
    %10466 = vmatpush1.bf16.msra.mxu0 %v10058
    %10467 = vmatprep.subr.bf16.mxu0 %v10067
    %10468 = vmatpush1.bf16.msra.mxu0 %v10066
    %10469 = vmatprep.subr.bf16.mxu0 %v10075
    %10470 = vmatpush1.bf16.msra.mxu0 %v10074
    %10471 = vmatprep.subr.bf16.mxu0 %v10083
    %10472 = vmatpush1.bf16.msra.mxu0 %v10082
    %10473 = vmatprep.subr.bf16.mxu0 %v10091
    %10474 = vmatpush1.bf16.msra.mxu0 %v10090
    %10475 = vmatprep.subr.bf16.mxu0 %v10099
    %10476 = vmatpush1.bf16.msra.mxu0 %v10098
    %10477 = vmatprep.subr.bf16.mxu0 %v10107
    %10478 = vmatpush1.bf16.msra.mxu0 %v10106
    %10479 = vmatprep.subr.bf16.mxu0 %v10115
    %10480 = vmatpush1.bf16.msra.mxu0 %v10114
    %10481 = vmatprep.subr.bf16.mxu0 %v10123
    %10482 = vmatpush1.bf16.msra.mxu0 %v10122
    %10483 = vmatprep.subr.bf16.mxu0 %v10131
    %10484 = vmatpush1.bf16.msra.mxu0 %v10130
    %10485 = vmatprep.subr.bf16.mxu0 %v10139
    %10486 = vmatpush1.bf16.msra.mxu0 %v10138
    %10487 = vmatprep.subr.bf16.mxu0 %v10147
    %10488 = vmatpush1.bf16.msra.mxu0 %v10146
    %10489 = vmatprep.subr.bf16.mxu0 %v10155
    %10490 = vmatpush1.bf16.msra.mxu0 %v10154
    %10491 = vmatprep.mubr.bf16.mxu0 %v9133
    %10492 = vmatmul.mubr.bf16.gmra.mrb[0].mxu0 %v9132
    %v10493 = vpop.f32.mrb[0].mxu0
    %v10494 = vadd.f32 %v10453, %v10493
    %v10495 = vpop.f32.mrb[0].mxu0
    %v10496 = vadd.f32 %v10455, %v10495
    %v10497 = vpop.f32.mrb[0].mxu0
    %v10498 = vpop.f32.mrb[0].mxu0
    %10499 = vdwg.mxu0
    %10500 = vmatprep.subr.bf16.mxu0 %v9909
    %10501 = vmatpush1.bf16.msra.mxu0 %v9908
    %10502 = vmatprep.subr.bf16.mxu0 %v9917
    %10503 = vmatpush1.bf16.msra.mxu0 %v9916
    %10504 = vmatprep.subr.bf16.mxu0 %v9925
    %10505 = vmatpush1.bf16.msra.mxu0 %v9924
    %10506 = vmatprep.subr.bf16.mxu0 %v9933
    %10507 = vmatpush1.bf16.msra.mxu0 %v9932
    %10508 = vmatprep.subr.bf16.mxu0 %v9941
    %10509 = vmatpush1.bf16.msra.mxu0 %v9940
    %10510 = vmatprep.subr.bf16.mxu0 %v9949
    %10511 = vmatpush1.bf16.msra.mxu0 %v9948
    %10512 = vmatprep.subr.bf16.mxu0 %v9957
    %10513 = vmatpush1.bf16.msra.mxu0 %v9956
    %10514 = vmatprep.subr.bf16.mxu0 %v9965
    %10515 = vmatpush1.bf16.msra.mxu0 %v9964
    %10516 = vmatprep.subr.bf16.mxu0 %v9973
    %10517 = vmatpush1.bf16.msra.mxu0 %v9972
    %10518 = vmatprep.subr.bf16.mxu0 %v9981
    %10519 = vmatpush1.bf16.msra.mxu0 %v9980
    %10520 = vmatprep.subr.bf16.mxu0 %v9989
    %10521 = vmatpush1.bf16.msra.mxu0 %v9988
    %10522 = vmatprep.subr.bf16.mxu0 %v9997
    %10523 = vmatpush1.bf16.msra.mxu0 %v9996
    %10524 = vmatprep.subr.bf16.mxu0 %v10005
    %10525 = vmatpush1.bf16.msra.mxu0 %v10004
    %10526 = vmatprep.subr.bf16.mxu0 %v10013
    %10527 = vmatpush1.bf16.msra.mxu0 %v10012
    %10528 = vmatprep.subr.bf16.mxu0 %v10021
    %10529 = vmatpush1.bf16.msra.mxu0 %v10020
    %10530 = vmatprep.subr.bf16.mxu0 %v10029
    %10531 = vmatpush1.bf16.msra.mxu0 %v10028
    %10532 = vmatprep.mubr.bf16.mxu0 %v9131
    %10533 = vmatmul.mubr.bf16.gmra.mrb[0].mxu0 %v9124
    %v10534 = vpop.f32.mrb[0].mxu0
    %v10535 = vadd.f32 %v9080, %v10534
    %v10536 = vpop.f32.mrb[0].mxu0
    %v10537 = vadd.f32 %v9084, %v10536
    %v10538 = vpop.f32.mrb[0].mxu0
    %v10539 = vpop.f32.mrb[0].mxu0
    %10540 = vdwg.mxu0
    %10541 = vmatprep.subr.bf16.mxu0 %v10037
    %10542 = vmatpush1.bf16.msra.mxu0 %v10036
    %10543 = vmatprep.subr.bf16.mxu0 %v10045
    %10544 = vmatpush1.bf16.msra.mxu0 %v10044
    %10545 = vmatprep.subr.bf16.mxu0 %v10053
    %10546 = vmatpush1.bf16.msra.mxu0 %v10052
    %10547 = vmatprep.subr.bf16.mxu0 %v10061
    %10548 = vmatpush1.bf16.msra.mxu0 %v10060
    %10549 = vmatprep.subr.bf16.mxu0 %v10069
    %10550 = vmatpush1.bf16.msra.mxu0 %v10068
    %10551 = vmatprep.subr.bf16.mxu0 %v10077
    %10552 = vmatpush1.bf16.msra.mxu0 %v10076
    %10553 = vmatprep.subr.bf16.mxu0 %v10085
    %10554 = vmatpush1.bf16.msra.mxu0 %v10084
    %10555 = vmatprep.subr.bf16.mxu0 %v10093
    %10556 = vmatpush1.bf16.msra.mxu0 %v10092
    %10557 = vmatprep.subr.bf16.mxu0 %v10101
    %10558 = vmatpush1.bf16.msra.mxu0 %v10100
    %10559 = vmatprep.subr.bf16.mxu0 %v10109
    %10560 = vmatpush1.bf16.msra.mxu0 %v10108
    %10561 = vmatprep.subr.bf16.mxu0 %v10117
    %10562 = vmatpush1.bf16.msra.mxu0 %v10116
    %10563 = vmatprep.subr.bf16.mxu0 %v10125
    %10564 = vmatpush1.bf16.msra.mxu0 %v10124
    %10565 = vmatprep.subr.bf16.mxu0 %v10133
    %10566 = vmatpush1.bf16.msra.mxu0 %v10132
    %10567 = vmatprep.subr.bf16.mxu0 %v10141
    %10568 = vmatpush1.bf16.msra.mxu0 %v10140
    %10569 = vmatprep.subr.bf16.mxu0 %v10149
    %10570 = vmatpush1.bf16.msra.mxu0 %v10148
    %10571 = vmatprep.subr.bf16.mxu0 %v10157
    %10572 = vmatpush1.bf16.msra.mxu0 %v10156
    %10573 = vmatprep.mubr.bf16.mxu0 %v9133
    %10574 = vmatmul.mubr.bf16.gmra.mrb[0].mxu0 %v9132
    %v10575 = vpop.f32.mrb[0].mxu0
    %v10576 = vadd.f32 %v10535, %v10575
    %v10577 = vpop.f32.mrb[0].mxu0
    %v10578 = vadd.f32 %v10537, %v10577
    %v10579 = vpop.f32.mrb[0].mxu0
    %v10580 = vpop.f32.mrb[0].mxu0
    %10581 = vdwg.mxu0
    %10582 = vmatprep.subr.bf16.mxu0 %v9911
    %10583 = vmatpush1.bf16.msra.mxu0 %v9910
    %10584 = vmatprep.subr.bf16.mxu0 %v9919
    %10585 = vmatpush1.bf16.msra.mxu0 %v9918
    %10586 = vmatprep.subr.bf16.mxu0 %v9927
    %10587 = vmatpush1.bf16.msra.mxu0 %v9926
    %10588 = vmatprep.subr.bf16.mxu0 %v9935
    %10589 = vmatpush1.bf16.msra.mxu0 %v9934
    %10590 = vmatprep.subr.bf16.mxu0 %v9943
    %10591 = vmatpush1.bf16.msra.mxu0 %v9942
    %10592 = vmatprep.subr.bf16.mxu0 %v9951
    %10593 = vmatpush1.bf16.msra.mxu0 %v9950
    %10594 = vmatprep.subr.bf16.mxu0 %v9959
    %10595 = vmatpush1.bf16.msra.mxu0 %v9958
    %10596 = vmatprep.subr.bf16.mxu0 %v9967
    %10597 = vmatpush1.bf16.msra.mxu0 %v9966
    %10598 = vmatprep.subr.bf16.mxu0 %v9975
    %10599 = vmatpush1.bf16.msra.mxu0 %v9974
    %10600 = vmatprep.subr.bf16.mxu0 %v9983
    %10601 = vmatpush1.bf16.msra.mxu0 %v9982
    %10602 = vmatprep.subr.bf16.mxu0 %v9991
    %10603 = vmatpush1.bf16.msra.mxu0 %v9990
    %10604 = vmatprep.subr.bf16.mxu0 %v9999
    %10605 = vmatpush1.bf16.msra.mxu0 %v9998
    %10606 = vmatprep.subr.bf16.mxu0 %v10007
    %10607 = vmatpush1.bf16.msra.mxu0 %v10006
    %10608 = vmatprep.subr.bf16.mxu0 %v10015
    %10609 = vmatpush1.bf16.msra.mxu0 %v10014
    %10610 = vmatprep.subr.bf16.mxu0 %v10023
    %10611 = vmatpush1.bf16.msra.mxu0 %v10022
    %10612 = vmatprep.subr.bf16.mxu0 %v10031
    %10613 = vmatpush1.bf16.msra.mxu0 %v10030
    %10614 = vmatprep.mubr.bf16.mxu0 %v9131
    %10615 = vmatmul.mubr.bf16.gmra.mrb[0].mxu0 %v9124
    %v10616 = vpop.f32.mrb[0].mxu0
    %v10617 = vadd.f32 %v9088, %v10616
    %v10618 = vpop.f32.mrb[0].mxu0
    %v10619 = vadd.f32 %v9092, %v10618
    %v10620 = vpop.f32.mrb[0].mxu0
    %v10621 = vpop.f32.mrb[0].mxu0
    %10622 = vdwg.mxu0
    %10623 = vmatprep.subr.bf16.mxu0 %v10039
    %10624 = vmatpush1.bf16.msra.mxu0 %v10038
    %10625 = vmatprep.subr.bf16.mxu0 %v10047
    %10626 = vmatpush1.bf16.msra.mxu0 %v10046
    %10627 = vmatprep.subr.bf16.mxu0 %v10055
    %10628 = vmatpush1.bf16.msra.mxu0 %v10054
    %10629 = vmatprep.subr.bf16.mxu0 %v10063
    %10630 = vmatpush1.bf16.msra.mxu0 %v10062
    %10631 = vmatprep.subr.bf16.mxu0 %v10071
    %10632 = vmatpush1.bf16.msra.mxu0 %v10070
    %10633 = vmatprep.subr.bf16.mxu0 %v10079
    %10634 = vmatpush1.bf16.msra.mxu0 %v10078
    %10635 = vmatprep.subr.bf16.mxu0 %v10087
    %10636 = vmatpush1.bf16.msra.mxu0 %v10086
    %10637 = vmatprep.subr.bf16.mxu0 %v10095
    %10638 = vmatpush1.bf16.msra.mxu0 %v10094
    %10639 = vmatprep.subr.bf16.mxu0 %v10103
    %10640 = vmatpush1.bf16.msra.mxu0 %v10102
    %10641 = vmatprep.subr.bf16.mxu0 %v10111
    %10642 = vmatpush1.bf16.msra.mxu0 %v10110
    %10643 = vmatprep.subr.bf16.mxu0 %v10119
    %10644 = vmatpush1.bf16.msra.mxu0 %v10118
    %10645 = vmatprep.subr.bf16.mxu0 %v10127
    %10646 = vmatpush1.bf16.msra.mxu0 %v10126
    %10647 = vmatprep.subr.bf16.mxu0 %v10135
    %10648 = vmatpush1.bf16.msra.mxu0 %v10134
    %10649 = vmatprep.subr.bf16.mxu0 %v10143
    %10650 = vmatpush1.bf16.msra.mxu0 %v10142
    %10651 = vmatprep.subr.bf16.mxu0 %v10151
    %10652 = vmatpush1.bf16.msra.mxu0 %v10150
    %10653 = vmatprep.subr.bf16.mxu0 %v10159
    %10654 = vmatpush1.bf16.msra.mxu0 %v10158
    %10655 = vmatprep.mubr.bf16.mxu0 %v9133
    %10656 = vmatmul.mubr.bf16.gmra.mrb[0].mxu0 %v9132
    %v10657 = vpop.f32.mrb[0].mxu0
    %v10658 = vadd.f32 %v10617, %v10657
    %v10659 = vpop.f32.mrb[0].mxu0
    %v10660 = vadd.f32 %v10619, %v10659
    %v10661 = vpop.f32.mrb[0].mxu0
    %v10662 = vpop.f32.mrb[0].mxu0
    %10663 = vdwg.mxu0
    %10664 = vmatprep.subr.bf16.mxu0 %v9913
    %10665 = vmatpush1.bf16.msra.mxu0 %v9912
    %10666 = vmatprep.subr.bf16.mxu0 %v9921
    %10667 = vmatpush1.bf16.msra.mxu0 %v9920
    %10668 = vmatprep.subr.bf16.mxu0 %v9929
    %10669 = vmatpush1.bf16.msra.mxu0 %v9928
    %10670 = vmatprep.subr.bf16.mxu0 %v9937
    %10671 = vmatpush1.bf16.msra.mxu0 %v9936
    %10672 = vmatprep.subr.bf16.mxu0 %v9945
    %10673 = vmatpush1.bf16.msra.mxu0 %v9944
    %10674 = vmatprep.subr.bf16.mxu0 %v9953
    %10675 = vmatpush1.bf16.msra.mxu0 %v9952
    %10676 = vmatprep.subr.bf16.mxu0 %v9961
    %10677 = vmatpush1.bf16.msra.mxu0 %v9960
    %10678 = vmatprep.subr.bf16.mxu0 %v9969
    %10679 = vmatpush1.bf16.msra.mxu0 %v9968
    %10680 = vmatprep.subr.bf16.mxu0 %v9977
    %10681 = vmatpush1.bf16.msra.mxu0 %v9976
    %10682 = vmatprep.subr.bf16.mxu0 %v9985
    %10683 = vmatpush1.bf16.msra.mxu0 %v9984
    %10684 = vmatprep.subr.bf16.mxu0 %v9993
    %10685 = vmatpush1.bf16.msra.mxu0 %v9992
    %10686 = vmatprep.subr.bf16.mxu0 %v10001
    %10687 = vmatpush1.bf16.msra.mxu0 %v10000
    %10688 = vmatprep.subr.bf16.mxu0 %v10009
    %10689 = vmatpush1.bf16.msra.mxu0 %v10008
    %10690 = vmatprep.subr.bf16.mxu0 %v10017
    %10691 = vmatpush1.bf16.msra.mxu0 %v10016
    %10692 = vmatprep.subr.bf16.mxu0 %v10025
    %10693 = vmatpush1.bf16.msra.mxu0 %v10024
    %10694 = vmatprep.subr.bf16.mxu0 %v10033
    %10695 = vmatpush1.bf16.msra.mxu0 %v10032
    %10696 = vmatprep.mubr.bf16.mxu0 %v9131
    %10697 = vmatmul.mubr.bf16.gmra.mrb[0].mxu0 %v9124
    %v10698 = vpop.f32.mrb[0].mxu0
    %v10699 = vadd.f32 %v9096, %v10698
    %v10700 = vpop.f32.mrb[0].mxu0
    %v10701 = vadd.f32 %v9100, %v10700
    %v10702 = vpop.f32.mrb[0].mxu0
    %v10703 = vpop.f32.mrb[0].mxu0
    %10704 = vdwg.mxu0
    %10705 = vmatprep.subr.bf16.mxu0 %v10041
    %10706 = vmatpush1.bf16.msra.mxu0 %v10040
    %10707 = vmatprep.subr.bf16.mxu0 %v10049
    %10708 = vmatpush1.bf16.msra.mxu0 %v10048
    %10709 = vmatprep.subr.bf16.mxu0 %v10057
    %10710 = vmatpush1.bf16.msra.mxu0 %v10056
    %10711 = vmatprep.subr.bf16.mxu0 %v10065
    %10712 = vmatpush1.bf16.msra.mxu0 %v10064
    %10713 = vmatprep.subr.bf16.mxu0 %v10073
    %10714 = vmatpush1.bf16.msra.mxu0 %v10072
    %10715 = vmatprep.subr.bf16.mxu0 %v10081
    %10716 = vmatpush1.bf16.msra.mxu0 %v10080
    %10717 = vmatprep.subr.bf16.mxu0 %v10089
    %10718 = vmatpush1.bf16.msra.mxu0 %v10088
    %10719 = vmatprep.subr.bf16.mxu0 %v10097
    %10720 = vmatpush1.bf16.msra.mxu0 %v10096
    %10721 = vmatprep.subr.bf16.mxu0 %v10105
    %10722 = vmatpush1.bf16.msra.mxu0 %v10104
    %10723 = vmatprep.subr.bf16.mxu0 %v10113
    %10724 = vmatpush1.bf16.msra.mxu0 %v10112
    %10725 = vmatprep.subr.bf16.mxu0 %v10121
    %10726 = vmatpush1.bf16.msra.mxu0 %v10120
    %10727 = vmatprep.subr.bf16.mxu0 %v10129
    %10728 = vmatpush1.bf16.msra.mxu0 %v10128
    %10729 = vmatprep.subr.bf16.mxu0 %v10137
    %10730 = vmatpush1.bf16.msra.mxu0 %v10136
    %10731 = vmatprep.subr.bf16.mxu0 %v10145
    %10732 = vmatpush1.bf16.msra.mxu0 %v10144
    %10733 = vmatprep.subr.bf16.mxu0 %v10153
    %10734 = vmatpush1.bf16.msra.mxu0 %v10152
    %10735 = vmatprep.subr.bf16.mxu0 %v10161
    %10736 = vmatpush1.bf16.msra.mxu0 %v10160
    %10737 = vmatprep.mubr.bf16.mxu0 %v9133
    %10738 = vmatmul.mubr.bf16.gmra.mrb[0].mxu0 %v9132
    %v10739 = vpop.f32.mrb[0].mxu0
    %v10740 = vadd.f32 %v10699, %v10739
    %v10741 = vpop.f32.mrb[0].mxu0
    %v10742 = vadd.f32 %v10701, %v10741
    %v10743 = vpop.f32.mrb[0].mxu0
    %v10744 = vpop.f32.mrb[0].mxu0
    %10745 = vdwg.mxu0
    %v10746 = vpack.c.bf16 %v10494, %v10494
    %v10747 = vpack.c.bf16 %v10496, %v10496
    %v10748 = vpack.c.bf16 %v10576, %v10576
    %v10749 = vpack.c.bf16 %v10578, %v10578
    %v10750 = vpack.c.bf16 %v10658, %v10658
    %v10751 = vpack.c.bf16 %v10660, %v10660
    %v10752 = vpack.c.bf16 %v10740, %v10740
    %v10753 = vpack.c.bf16 %v10742, %v10742
    %v10754 = vld [vmem:[%s9] sm:$0xf]
    %v10755 = vld [vmem:[%s9 + $0x4] sm:$0xf]
    %v10756 = vld [vmem:[%s9 + $0x8] sm:$0xf]
    %v10757 = vld [vmem:[%s9 + $0xc] sm:$0xf]
    %v10758 = vld [vmem:[%s9 + $0x10] sm:$0xf]
    %v10759 = vld [vmem:[%s9 + $0x14] sm:$0xf]
    %v10760 = vld [vmem:[%s9 + $0x18] sm:$0xf]
    %v10761 = vld [vmem:[%s9 + $0x1c] sm:$0xf]
    %v10762 = vld [vmem:[%s9 + $0x20] sm:$0xf]
    %v10763 = vld [vmem:[%s9 + $0x24] sm:$0xf]
    %v10764 = vld [vmem:[%s9 + $0x28] sm:$0xf]
    %v10765 = vld [vmem:[%s9 + $0x2c] sm:$0xf]
    %v10766 = vld [vmem:[%s9 + $0x30] sm:$0xf]
    %v10767 = vld [vmem:[%s9 + $0x34] sm:$0xf]
    %v10768 = vld [vmem:[%s9 + $0x38] sm:$0xf]
    %v10769 = vld [vmem:[%s9 + $0x3c] sm:$0xf]
    %v10770 = vld [vmem:[%s9 + $0x40] sm:$0xf]
    %v10771 = vld [vmem:[%s9 + $0x44] sm:$0xf]
    %v10772 = vld [vmem:[%s9 + $0x48] sm:$0xf]
    %v10773 = vld [vmem:[%s9 + $0x4c] sm:$0xf]
    %v10774 = vld [vmem:[%s9 + $0x50] sm:$0xf]
    %v10775 = vld [vmem:[%s9 + $0x54] sm:$0xf]
    %v10776 = vld [vmem:[%s9 + $0x58] sm:$0xf]
    %v10777 = vld [vmem:[%s9 + $0x5c] sm:$0xf]
    %v10778 = vld [vmem:[%s9 + $0x60] sm:$0xf]
    %v10779 = vld [vmem:[%s9 + $0x64] sm:$0xf]
    %v10780 = vld [vmem:[%s9 + $0x68] sm:$0xf]
    %v10781 = vld [vmem:[%s9 + $0x6c] sm:$0xf]
    %v10782 = vld [vmem:[%s9 + $0x70] sm:$0xf]
    %v10783 = vld [vmem:[%s9 + $0x74] sm:$0xf]
    %v10784 = vld [vmem:[%s9 + $0x78] sm:$0xf]
    %v10785 = vld [vmem:[%s9 + $0x7c] sm:$0xf]
    %v10786 = vld [vmem:[%s9 + $0x80] sm:$0xf]
    %v10787 = vld [vmem:[%s9 + $0x84] sm:$0xf]
    %v10788 = vld [vmem:[%s9 + $0x88] sm:$0xf]
    %v10789 = vld [vmem:[%s9 + $0x8c] sm:$0xf]
    %v10790 = vld [vmem:[%s9 + $0x90] sm:$0xf]
    %v10791 = vld [vmem:[%s9 + $0x94] sm:$0xf]
    %v10792 = vld [vmem:[%s9 + $0x98] sm:$0xf]
    %v10793 = vld [vmem:[%s9 + $0x9c] sm:$0xf]
    %v10794 = vld [vmem:[%s9 + $0xa0] sm:$0xf]
    %v10795 = vld [vmem:[%s9 + $0xa4] sm:$0xf]
    %v10796 = vld [vmem:[%s9 + $0xa8] sm:$0xf]
    %v10797 = vld [vmem:[%s9 + $0xac] sm:$0xf]
    %v10798 = vld [vmem:[%s9 + $0xb0] sm:$0xf]
    %v10799 = vld [vmem:[%s9 + $0xb4] sm:$0xf]
    %v10800 = vld [vmem:[%s9 + $0xb8] sm:$0xf]
    %v10801 = vld [vmem:[%s9 + $0xbc] sm:$0xf]
    %v10802 = vld [vmem:[%s9 + $0xc0] sm:$0xf]
    %v10803 = vld [vmem:[%s9 + $0xc4] sm:$0xf]
    %v10804 = vld [vmem:[%s9 + $0xc8] sm:$0xf]
    %v10805 = vld [vmem:[%s9 + $0xcc] sm:$0xf]
    %v10806 = vld [vmem:[%s9 + $0xd0] sm:$0xf]
    %v10807 = vld [vmem:[%s9 + $0xd4] sm:$0xf]
    %v10808 = vld [vmem:[%s9 + $0xd8] sm:$0xf]
    %v10809 = vld [vmem:[%s9 + $0xdc] sm:$0xf]
    %v10810 = vld [vmem:[%s9 + $0xe0] sm:$0xf]
    %v10811 = vld [vmem:[%s9 + $0xe4] sm:$0xf]
    %v10812 = vld [vmem:[%s9 + $0xe8] sm:$0xf]
    %v10813 = vld [vmem:[%s9 + $0xec] sm:$0xf]
    %v10814 = vld [vmem:[%s9 + $0xf0] sm:$0xf]
    %v10815 = vld [vmem:[%s9 + $0xf4] sm:$0xf]
    %v10816 = vld [vmem:[%s9 + $0xf8] sm:$0xf]
    %v10817 = vld [vmem:[%s9 + $0xfc] sm:$0xf]
    %v10818 = vld [vmem:[%s9 + $0x100] sm:$0xf]
    %v10819 = vld [vmem:[%s9 + $0x104] sm:$0xf]
    %v10820 = vld [vmem:[%s9 + $0x108] sm:$0xf]
    %v10821 = vld [vmem:[%s9 + $0x10c] sm:$0xf]
    %v10822 = vld [vmem:[%s9 + $0x110] sm:$0xf]
    %v10823 = vld [vmem:[%s9 + $0x114] sm:$0xf]
    %v10824 = vld [vmem:[%s9 + $0x118] sm:$0xf]
    %v10825 = vld [vmem:[%s9 + $0x11c] sm:$0xf]
    %v10826 = vld [vmem:[%s9 + $0x120] sm:$0xf]
    %v10827 = vld [vmem:[%s9 + $0x124] sm:$0xf]
    %v10828 = vld [vmem:[%s9 + $0x128] sm:$0xf]
    %v10829 = vld [vmem:[%s9 + $0x12c] sm:$0xf]
    %v10830 = vld [vmem:[%s9 + $0x130] sm:$0xf]
    %v10831 = vld [vmem:[%s9 + $0x134] sm:$0xf]
    %v10832 = vld [vmem:[%s9 + $0x138] sm:$0xf]
    %v10833 = vld [vmem:[%s9 + $0x13c] sm:$0xf]
    %v10834 = vld [vmem:[%s9 + $0x140] sm:$0xf]
    %v10835 = vld [vmem:[%s9 + $0x144] sm:$0xf]
    %v10836 = vld [vmem:[%s9 + $0x148] sm:$0xf]
    %v10837 = vld [vmem:[%s9 + $0x14c] sm:$0xf]
    %v10838 = vld [vmem:[%s9 + $0x150] sm:$0xf]
    %v10839 = vld [vmem:[%s9 + $0x154] sm:$0xf]
    %v10840 = vld [vmem:[%s9 + $0x158] sm:$0xf]
    %v10841 = vld [vmem:[%s9 + $0x15c] sm:$0xf]
    %v10842 = vld [vmem:[%s9 + $0x160] sm:$0xf]
    %v10843 = vld [vmem:[%s9 + $0x164] sm:$0xf]
    %v10844 = vld [vmem:[%s9 + $0x168] sm:$0xf]
    %v10845 = vld [vmem:[%s9 + $0x16c] sm:$0xf]
    %v10846 = vld [vmem:[%s9 + $0x170] sm:$0xf]
    %v10847 = vld [vmem:[%s9 + $0x174] sm:$0xf]
    %v10848 = vld [vmem:[%s9 + $0x178] sm:$0xf]
    %v10849 = vld [vmem:[%s9 + $0x17c] sm:$0xf]
    %v10850 = vld [vmem:[%s9 + $0x180] sm:$0xf]
    %v10851 = vld [vmem:[%s9 + $0x184] sm:$0xf]
    %v10852 = vld [vmem:[%s9 + $0x188] sm:$0xf]
    %v10853 = vld [vmem:[%s9 + $0x18c] sm:$0xf]
    %v10854 = vld [vmem:[%s9 + $0x190] sm:$0xf]
    %v10855 = vld [vmem:[%s9 + $0x194] sm:$0xf]
    %v10856 = vld [vmem:[%s9 + $0x198] sm:$0xf]
    %v10857 = vld [vmem:[%s9 + $0x19c] sm:$0xf]
    %v10858 = vld [vmem:[%s9 + $0x1a0] sm:$0xf]
    %v10859 = vld [vmem:[%s9 + $0x1a4] sm:$0xf]
    %v10860 = vld [vmem:[%s9 + $0x1a8] sm:$0xf]
    %v10861 = vld [vmem:[%s9 + $0x1ac] sm:$0xf]
    %v10862 = vld [vmem:[%s9 + $0x1b0] sm:$0xf]
    %v10863 = vld [vmem:[%s9 + $0x1b4] sm:$0xf]
    %v10864 = vld [vmem:[%s9 + $0x1b8] sm:$0xf]
    %v10865 = vld [vmem:[%s9 + $0x1bc] sm:$0xf]
    %v10866 = vld [vmem:[%s9 + $0x1c0] sm:$0xf]
    %v10867 = vld [vmem:[%s9 + $0x1c4] sm:$0xf]
    %v10868 = vld [vmem:[%s9 + $0x1c8] sm:$0xf]
    %v10869 = vld [vmem:[%s9 + $0x1cc] sm:$0xf]
    %v10870 = vld [vmem:[%s9 + $0x1d0] sm:$0xf]
    %v10871 = vld [vmem:[%s9 + $0x1d4] sm:$0xf]
    %v10872 = vld [vmem:[%s9 + $0x1d8] sm:$0xf]
    %v10873 = vld [vmem:[%s9 + $0x1dc] sm:$0xf]
    %v10874 = vld [vmem:[%s9 + $0x1e0] sm:$0xf]
    %v10875 = vld [vmem:[%s9 + $0x1e4] sm:$0xf]
    %v10876 = vld [vmem:[%s9 + $0x1e8] sm:$0xf]
    %v10877 = vld [vmem:[%s9 + $0x1ec] sm:$0xf]
    %v10878 = vld [vmem:[%s9 + $0x1f0] sm:$0xf]
    %v10879 = vld [vmem:[%s10] sm:$0x1]
    %v10881 = vlaneseq
    %v10882 = vshrl.u32 %v10881, 7
    %v10883 = vsub.s32 0, %v10882
    %v10884 = vrot.slane %v10879, %v10883
    %v11011 = vunpack.c.l.b16 %v10754
    %v11012 = vunpack.c.l.b16 %v10755
    %v11013 = vunpack.c.l.b16 %v10756
    %v11014 = vunpack.c.l.b16 %v10757
    %v11015 = vunpack.c.l.b16 %v10758
    %v11016 = vunpack.c.l.b16 %v10759
    %v11017 = vunpack.c.l.b16 %v10760
    %v11018 = vunpack.c.l.b16 %v10761
    %v11019 = vunpack.c.l.b16 %v10762
    %v11020 = vunpack.c.l.b16 %v10763
    %v11021 = vunpack.c.l.b16 %v10764
    %v11022 = vunpack.c.l.b16 %v10765
    %v11023 = vunpack.c.l.b16 %v10766
    %v11024 = vunpack.c.l.b16 %v10767
    %v11025 = vunpack.c.l.b16 %v10768
    %v11026 = vunpack.c.l.b16 %v10769
    %v11027 = vunpack.c.l.b16 %v10770
    %v11028 = vunpack.c.l.b16 %v10771
    %v11029 = vunpack.c.l.b16 %v10772
    %v11030 = vunpack.c.l.b16 %v10773
    %v11031 = vunpack.c.l.b16 %v10774
    %v11032 = vunpack.c.l.b16 %v10775
    %v11033 = vunpack.c.l.b16 %v10776
    %v11034 = vunpack.c.l.b16 %v10777
    %v11035 = vunpack.c.l.b16 %v10778
    %v11036 = vunpack.c.l.b16 %v10779
    %v11037 = vunpack.c.l.b16 %v10780
    %v11038 = vunpack.c.l.b16 %v10781
    %v11039 = vunpack.c.l.b16 %v10782
    %v11040 = vunpack.c.l.b16 %v10783
    %v11041 = vunpack.c.l.b16 %v10784
    %v11042 = vunpack.c.l.b16 %v10785
    %v11043 = vunpack.c.l.b16 %v10786
    %v11044 = vunpack.c.l.b16 %v10787
    %v11045 = vunpack.c.l.b16 %v10788
    %v11046 = vunpack.c.l.b16 %v10789
    %v11047 = vunpack.c.l.b16 %v10790
    %v11048 = vunpack.c.l.b16 %v10791
    %v11049 = vunpack.c.l.b16 %v10792
    %v11050 = vunpack.c.l.b16 %v10793
    %v11051 = vunpack.c.l.b16 %v10794
    %v11052 = vunpack.c.l.b16 %v10795
    %v11053 = vunpack.c.l.b16 %v10796
    %v11054 = vunpack.c.l.b16 %v10797
    %v11055 = vunpack.c.l.b16 %v10798
    %v11056 = vunpack.c.l.b16 %v10799
    %v11057 = vunpack.c.l.b16 %v10800
    %v11058 = vunpack.c.l.b16 %v10801
    %v11059 = vunpack.c.l.b16 %v10802
    %v11060 = vunpack.c.l.b16 %v10803
    %v11061 = vunpack.c.l.b16 %v10804
    %v11062 = vunpack.c.l.b16 %v10805
    %v11063 = vunpack.c.l.b16 %v10806
    %v11064 = vunpack.c.l.b16 %v10807
    %v11065 = vunpack.c.l.b16 %v10808
    %v11066 = vunpack.c.l.b16 %v10809
    %v11067 = vunpack.c.l.b16 %v10810
    %v11068 = vunpack.c.l.b16 %v10811
    %v11069 = vunpack.c.l.b16 %v10812
    %v11070 = vunpack.c.l.b16 %v10813
    %v11071 = vunpack.c.l.b16 %v10814
    %v11072 = vunpack.c.l.b16 %v10815
    %v11073 = vunpack.c.l.b16 %v10816
    %v11074 = vunpack.c.l.b16 %v10817
    %v11075 = vunpack.c.l.b16 %v10818
    %v11076 = vunpack.c.l.b16 %v10819
    %v11077 = vunpack.c.l.b16 %v10820
    %v11078 = vunpack.c.l.b16 %v10821
    %v11079 = vunpack.c.l.b16 %v10822
    %v11080 = vunpack.c.l.b16 %v10823
    %v11081 = vunpack.c.l.b16 %v10824
    %v11082 = vunpack.c.l.b16 %v10825
    %v11083 = vunpack.c.l.b16 %v10826
    %v11084 = vunpack.c.l.b16 %v10827
    %v11085 = vunpack.c.l.b16 %v10828
    %v11086 = vunpack.c.l.b16 %v10829
    %v11087 = vunpack.c.l.b16 %v10830
    %v11088 = vunpack.c.l.b16 %v10831
    %v11089 = vunpack.c.l.b16 %v10832
    %v11090 = vunpack.c.l.b16 %v10833
    %v11091 = vunpack.c.l.b16 %v10834
    %v11092 = vunpack.c.l.b16 %v10835
    %v11093 = vunpack.c.l.b16 %v10836
    %v11094 = vunpack.c.l.b16 %v10837
    %v11095 = vunpack.c.l.b16 %v10838
    %v11096 = vunpack.c.l.b16 %v10839
    %v11097 = vunpack.c.l.b16 %v10840
    %v11098 = vunpack.c.l.b16 %v10841
    %v11099 = vunpack.c.l.b16 %v10842
    %v11100 = vunpack.c.l.b16 %v10843
    %v11101 = vunpack.c.l.b16 %v10844
    %v11102 = vunpack.c.l.b16 %v10845
    %v11103 = vunpack.c.l.b16 %v10846
    %v11104 = vunpack.c.l.b16 %v10847
    %v11105 = vunpack.c.l.b16 %v10848
    %v11106 = vunpack.c.l.b16 %v10849
    %v11107 = vunpack.c.l.b16 %v10850
    %v11108 = vunpack.c.l.b16 %v10851
    %v11109 = vunpack.c.l.b16 %v10852
    %v11110 = vunpack.c.l.b16 %v10853
    %v11111 = vunpack.c.l.b16 %v10854
    %v11112 = vunpack.c.l.b16 %v10855
    %v11113 = vunpack.c.l.b16 %v10856
    %v11114 = vunpack.c.l.b16 %v10857
    %v11115 = vunpack.c.l.b16 %v10858
    %v11116 = vunpack.c.l.b16 %v10859
    %v11117 = vunpack.c.l.b16 %v10860
    %v11118 = vunpack.c.l.b16 %v10861
    %v11119 = vunpack.c.l.b16 %v10862
    %v11120 = vunpack.c.l.b16 %v10863
    %v11121 = vunpack.c.l.b16 %v10864
    %v11122 = vunpack.c.l.b16 %v10865
    %v11123 = vunpack.c.l.b16 %v10866
    %v11124 = vunpack.c.l.b16 %v10867
    %v11125 = vunpack.c.l.b16 %v10868
    %v11126 = vunpack.c.l.b16 %v10869
    %v11127 = vunpack.c.l.b16 %v10870
    %v11128 = vunpack.c.l.b16 %v10871
    %v11129 = vunpack.c.l.b16 %v10872
    %v11130 = vunpack.c.l.b16 %v10873
    %v11131 = vunpack.c.l.b16 %v10874
    %v11132 = vunpack.c.l.b16 %v10875
    %v11133 = vunpack.c.l.b16 %v10876
    %v11134 = vunpack.c.l.b16 %v10877
    %v11135 = vunpack.c.l.b16 %v10878
    %v11136 = vpack.c.b16 %v11012, %v11011
    %v11137 = vpack.c.b16 %v11014, %v11013
    %v11138 = vpack.c.b16 %v11016, %v11015
    %v11139 = vpack.c.b16 %v11018, %v11017
    %v11140 = vpack.c.b16 %v11020, %v11019
    %v11141 = vpack.c.b16 %v11022, %v11021
    %v11142 = vpack.c.b16 %v11024, %v11023
    %v11143 = vpack.c.b16 %v11026, %v11025
    %v11144 = vpack.c.b16 %v11028, %v11027
    %v11145 = vpack.c.b16 %v11030, %v11029
    %v11146 = vpack.c.b16 %v11032, %v11031
    %v11147 = vpack.c.b16 %v11034, %v11033
    %v11148 = vpack.c.b16 %v11036, %v11035
    %v11149 = vpack.c.b16 %v11038, %v11037
    %v11150 = vpack.c.b16 %v11040, %v11039
    %v11151 = vpack.c.b16 %v11042, %v11041
    %v11152 = vpack.c.b16 %v11044, %v11043
    %v11153 = vpack.c.b16 %v11046, %v11045
    %v11154 = vpack.c.b16 %v11048, %v11047
    %v11155 = vpack.c.b16 %v11050, %v11049
    %v11156 = vpack.c.b16 %v11052, %v11051
    %v11157 = vpack.c.b16 %v11054, %v11053
    %v11158 = vpack.c.b16 %v11056, %v11055
    %v11159 = vpack.c.b16 %v11058, %v11057
    %v11160 = vpack.c.b16 %v11060, %v11059
    %v11161 = vpack.c.b16 %v11062, %v11061
    %v11162 = vpack.c.b16 %v11064, %v11063
    %v11163 = vpack.c.b16 %v11066, %v11065
    %v11164 = vpack.c.b16 %v11068, %v11067
    %v11165 = vpack.c.b16 %v11070, %v11069
    %v11166 = vpack.c.b16 %v11072, %v11071
    %v11167 = vpack.c.b16 %v11074, %v11073
    %v11168 = vpack.c.b16 %v11076, %v11075
    %v11169 = vpack.c.b16 %v11078, %v11077
    %v11170 = vpack.c.b16 %v11080, %v11079
    %v11171 = vpack.c.b16 %v11082, %v11081
    %v11172 = vpack.c.b16 %v11084, %v11083
    %v11173 = vpack.c.b16 %v11086, %v11085
    %v11174 = vpack.c.b16 %v11088, %v11087
    %v11175 = vpack.c.b16 %v11090, %v11089
    %v11176 = vpack.c.b16 %v11092, %v11091
    %v11177 = vpack.c.b16 %v11094, %v11093
    %v11178 = vpack.c.b16 %v11096, %v11095
    %v11179 = vpack.c.b16 %v11098, %v11097
    %v11180 = vpack.c.b16 %v11100, %v11099
    %v11181 = vpack.c.b16 %v11102, %v11101
    %v11182 = vpack.c.b16 %v11104, %v11103
    %v11183 = vpack.c.b16 %v11106, %v11105
    %v11184 = vpack.c.b16 %v11108, %v11107
    %v11185 = vpack.c.b16 %v11110, %v11109
    %v11186 = vpack.c.b16 %v11112, %v11111
    %v11187 = vpack.c.b16 %v11114, %v11113
    %v11188 = vpack.c.b16 %v11116, %v11115
    %v11189 = vpack.c.b16 %v11118, %v11117
    %v11190 = vpack.c.b16 %v11120, %v11119
    %v11191 = vpack.c.b16 %v11122, %v11121
    %v11192 = vpack.c.b16 %v11124, %v11123
    %v11193 = vpack.c.b16 %v11126, %v11125
    %v11194 = vpack.c.b16 %v11128, %v11127
    %v11195 = vpack.c.b16 %v11130, %v11129
    %v11196 = vpack.c.b16 %v11132, %v11131
    %v11197 = vpack.c.b16 %v11134, %v11133
    %v11198 = vpack.c.b16 %v11135, %v11135
    %vm11261 = vcmask 850944
    %v11263 = vsel %vm11261, %v10753, 0
    %vm11265 = vcmask 1043456
    %v11267 = vsel %vm11265, %v11198, 0
    %11269 = vmatprep.subr.bf16.mxu0 0
    %11270 = vmatpush1.bf16.msra.mxu0 %v11136
    %11271 = vmatprep.subr.bf16.mxu0 0
    %11272 = vmatpush1.bf16.msra.mxu0 %v11137
    %11273 = vmatprep.subr.bf16.mxu0 0
    %11274 = vmatpush1.bf16.msra.mxu0 %v11138
    %11275 = vmatprep.subr.bf16.mxu0 0
    %11276 = vmatpush1.bf16.msra.mxu0 %v11139
    %11277 = vmatprep.subr.bf16.mxu0 0
    %11278 = vmatpush1.bf16.msra.mxu0 %v11140
    %11279 = vmatprep.subr.bf16.mxu0 0
    %11280 = vmatpush1.bf16.msra.mxu0 %v11141
    %11281 = vmatprep.subr.bf16.mxu0 0
    %11282 = vmatpush1.bf16.msra.mxu0 %v11142
    %11283 = vmatprep.subr.bf16.mxu0 0
    %11284 = vmatpush1.bf16.msra.mxu0 %v11143
    %11285 = vmatprep.subr.bf16.mxu0 0
    %11286 = vmatpush1.bf16.msra.mxu0 %v11144
    %11287 = vmatprep.subr.bf16.mxu0 0
    %11288 = vmatpush1.bf16.msra.mxu0 %v11145
    %11289 = vmatprep.subr.bf16.mxu0 0
    %11290 = vmatpush1.bf16.msra.mxu0 %v11146
    %11291 = vmatprep.subr.bf16.mxu0 0
    %11292 = vmatpush1.bf16.msra.mxu0 %v11147
    %11293 = vmatprep.subr.bf16.mxu0 0
    %11294 = vmatpush1.bf16.msra.mxu0 %v11148
    %11295 = vmatprep.subr.bf16.mxu0 0
    %11296 = vmatpush1.bf16.msra.mxu0 %v11149
    %11297 = vmatprep.subr.bf16.mxu0 0
    %11298 = vmatpush1.bf16.msra.mxu0 %v11150
    %11299 = vmatprep.subr.bf16.mxu0 0
    %11300 = vmatpush1.bf16.msra.mxu0 %v11151
    %11301 = vmatprep.mubr.bf16.mxu0 %v10747
    %11302 = vmatmul.mubr.bf16.gmra.mrb[0].mxu0 %v10746
    %v11303 = vpop.f32.mrb[0].mxu0
    %v11304 = vadd.f32 %v10884, %v11303
    %v11305 = vpop.f32.mrb[0].mxu0
    %v11306 = vpop.f32.mrb[0].mxu0
    %v11307 = vpop.f32.mrb[0].mxu0
    %11308 = vdwg.mxu0
    %11309 = vmatprep.subr.bf16.mxu0 0
    %11310 = vmatpush1.bf16.msra.mxu0 %v11152
    %11311 = vmatprep.subr.bf16.mxu0 0
    %11312 = vmatpush1.bf16.msra.mxu0 %v11153
    %11313 = vmatprep.subr.bf16.mxu0 0
    %11314 = vmatpush1.bf16.msra.mxu0 %v11154
    %11315 = vmatprep.subr.bf16.mxu0 0
    %11316 = vmatpush1.bf16.msra.mxu0 %v11155
    %11317 = vmatprep.subr.bf16.mxu0 0
    %11318 = vmatpush1.bf16.msra.mxu0 %v11156
    %11319 = vmatprep.subr.bf16.mxu0 0
    %11320 = vmatpush1.bf16.msra.mxu0 %v11157
    %11321 = vmatprep.subr.bf16.mxu0 0
    %11322 = vmatpush1.bf16.msra.mxu0 %v11158
    %11323 = vmatprep.subr.bf16.mxu0 0
    %11324 = vmatpush1.bf16.msra.mxu0 %v11159
    %11325 = vmatprep.subr.bf16.mxu0 0
    %11326 = vmatpush1.bf16.msra.mxu0 %v11160
    %11327 = vmatprep.subr.bf16.mxu0 0
    %11328 = vmatpush1.bf16.msra.mxu0 %v11161
    %11329 = vmatprep.subr.bf16.mxu0 0
    %11330 = vmatpush1.bf16.msra.mxu0 %v11162
    %11331 = vmatprep.subr.bf16.mxu0 0
    %11332 = vmatpush1.bf16.msra.mxu0 %v11163
    %11333 = vmatprep.subr.bf16.mxu0 0
    %11334 = vmatpush1.bf16.msra.mxu0 %v11164
    %11335 = vmatprep.subr.bf16.mxu0 0
    %11336 = vmatpush1.bf16.msra.mxu0 %v11165
    %11337 = vmatprep.subr.bf16.mxu0 0
    %11338 = vmatpush1.bf16.msra.mxu0 %v11166
    %11339 = vmatprep.subr.bf16.mxu0 0
    %11340 = vmatpush1.bf16.msra.mxu0 %v11167
    %11341 = vmatprep.mubr.bf16.mxu0 %v10749
    %11342 = vmatmul.mubr.bf16.gmra.mrb[0].mxu0 %v10748
    %v11343 = vpop.f32.mrb[0].mxu0
    %v11344 = vadd.f32 %v11304, %v11343
    %v11345 = vpop.f32.mrb[0].mxu0
    %v11346 = vpop.f32.mrb[0].mxu0
    %v11347 = vpop.f32.mrb[0].mxu0
    %11348 = vdwg.mxu0
    %11349 = vmatprep.subr.bf16.mxu0 0
    %11350 = vmatpush1.bf16.msra.mxu0 %v11168
    %11351 = vmatprep.subr.bf16.mxu0 0
    %11352 = vmatpush1.bf16.msra.mxu0 %v11169
    %11353 = vmatprep.subr.bf16.mxu0 0
    %11354 = vmatpush1.bf16.msra.mxu0 %v11170
    %11355 = vmatprep.subr.bf16.mxu0 0
    %11356 = vmatpush1.bf16.msra.mxu0 %v11171
    %11357 = vmatprep.subr.bf16.mxu0 0
    %11358 = vmatpush1.bf16.msra.mxu0 %v11172
    %11359 = vmatprep.subr.bf16.mxu0 0
    %11360 = vmatpush1.bf16.msra.mxu0 %v11173
    %11361 = vmatprep.subr.bf16.mxu0 0
    %11362 = vmatpush1.bf16.msra.mxu0 %v11174
    %11363 = vmatprep.subr.bf16.mxu0 0
    %11364 = vmatpush1.bf16.msra.mxu0 %v11175
    %11365 = vmatprep.subr.bf16.mxu0 0
    %11366 = vmatpush1.bf16.msra.mxu0 %v11176
    %11367 = vmatprep.subr.bf16.mxu0 0
    %11368 = vmatpush1.bf16.msra.mxu0 %v11177
    %11369 = vmatprep.subr.bf16.mxu0 0
    %11370 = vmatpush1.bf16.msra.mxu0 %v11178
    %11371 = vmatprep.subr.bf16.mxu0 0
    %11372 = vmatpush1.bf16.msra.mxu0 %v11179
    %11373 = vmatprep.subr.bf16.mxu0 0
    %11374 = vmatpush1.bf16.msra.mxu0 %v11180
    %11375 = vmatprep.subr.bf16.mxu0 0
    %11376 = vmatpush1.bf16.msra.mxu0 %v11181
    %11377 = vmatprep.subr.bf16.mxu0 0
    %11378 = vmatpush1.bf16.msra.mxu0 %v11182
    %11379 = vmatprep.subr.bf16.mxu0 0
    %11380 = vmatpush1.bf16.msra.mxu0 %v11183
    %11381 = vmatprep.mubr.bf16.mxu0 %v10751
    %11382 = vmatmul.mubr.bf16.gmra.mrb[0].mxu0 %v10750
    %v11383 = vpop.f32.mrb[0].mxu0
    %v11384 = vadd.f32 %v11344, %v11383
    %v11385 = vpop.f32.mrb[0].mxu0
    %v11386 = vpop.f32.mrb[0].mxu0
    %v11387 = vpop.f32.mrb[0].mxu0
    %11388 = vdwg.mxu0
    %11389 = vmatprep.subr.bf16.mxu0 0
    %11390 = vmatpush1.bf16.msra.mxu0 %v11184
    %11391 = vmatprep.subr.bf16.mxu0 0
    %11392 = vmatpush1.bf16.msra.mxu0 %v11185
    %11393 = vmatprep.subr.bf16.mxu0 0
    %11394 = vmatpush1.bf16.msra.mxu0 %v11186
    %11395 = vmatprep.subr.bf16.mxu0 0
    %11396 = vmatpush1.bf16.msra.mxu0 %v11187
    %11397 = vmatprep.subr.bf16.mxu0 0
    %11398 = vmatpush1.bf16.msra.mxu0 %v11188
    %11399 = vmatprep.subr.bf16.mxu0 0
    %11400 = vmatpush1.bf16.msra.mxu0 %v11189
    %11401 = vmatprep.subr.bf16.mxu0 0
    %11402 = vmatpush1.bf16.msra.mxu0 %v11190
    %11403 = vmatprep.subr.bf16.mxu0 0
    %11404 = vmatpush1.bf16.msra.mxu0 %v11191
    %11405 = vmatprep.subr.bf16.mxu0 0
    %11406 = vmatpush1.bf16.msra.mxu0 %v11192
    %11407 = vmatprep.subr.bf16.mxu0 0
    %11408 = vmatpush1.bf16.msra.mxu0 %v11193
    %11409 = vmatprep.subr.bf16.mxu0 0
    %11410 = vmatpush1.bf16.msra.mxu0 %v11194
    %11411 = vmatprep.subr.bf16.mxu0 0
    %11412 = vmatpush1.bf16.msra.mxu0 %v11195
    %11413 = vmatprep.subr.bf16.mxu0 0
    %11414 = vmatpush1.bf16.msra.mxu0 %v11196
    %11415 = vmatprep.subr.bf16.mxu0 0
    %11416 = vmatpush1.bf16.msra.mxu0 %v11197
    %11417 = vmatprep.subr.bf16.mxu0 0
    %11418 = vmatpush1.bf16.msra.mxu0 %v11267
    %11419 = vmatprep.subr.bf16.mxu0 0
    %11420 = vmatpush1.bf16.msra.mxu0 0
    %11421 = vmatprep.mubr.bf16.mxu0 %v11263
    %11422 = vmatmul.mubr.bf16.gmra.mrb[0].mxu0 %v10752
    %v11423 = vpop.f32.mrb[0].mxu0
    %v11424 = vadd.f32 %v11384, %v11423
    %v11425 = vpop.f32.mrb[0].mxu0
    %v11426 = vpop.f32.mrb[0].mxu0
    %v11427 = vpop.f32.mrb[0].mxu0
    %11428 = vdwg.mxu0
    %11429 = vst [vmem:[#allocation7] sm:$0x3] %v11424
    // Predicated region
    $region46: #{model_forward.1} parent=1 // pred_check
      _
    $region47: #{model_forward.1} parent=1 // pred_check_branch
      %11431 = sbr.rel (0) target = $region49
    $region48: #{model_forward.1} parent=1 // pred_region
      %s11433 = ssub.s32 32, 32
      %11434 = vsyncadd [#allocation8], %s11433
      %s11436 = sshll.u32 [#allocation7], 4
      %s11437 = int_to_ptr.vmem [resolvable:$true] %s11436
      %11439 = dma.vmem_to_hbm [thread:$0]  %s11437, 32, %s11, [#allocation8]
    $region49: #{model_forward.1} parent=1 // pred_fallthru
      _
    // Predicated region
    $region50: #{model_forward.1} parent=1 // pred_check
      _
    $region51: #{model_forward.1} parent=1 // pred_check_branch
      %11441 = sbr.rel (0) target = $region53
    $region52: #{model_forward.1} parent=1 // pred_region
      %11442 = dma.done [#allocation8], 32
    $region53: #{model_forward.1} parent=1 // pred_fallthru
      _
    %11443 = vsyncpa [#allocation8], 1

</llo_original>
